<compile_context>
chip_gen: v6e
topology: v6e:2x2x1
jax: 0.10.0
libtpu: 0.0.40
codegen_flags: <defaults>
</compile_context>

<pallas_src>
import jax
import jax.numpy as jnp
from jax.experimental import pallas as pl
from jax.experimental.pallas import tpu as pltpu

LEAK = 0.01          # LeakyReLU negative slope
EPS = 1e-5           # BatchNorm eps (PyTorch default)
DIL = 2              # dilation
KS = 3               # 3x3 grouped conv
PAD = (KS - 1) * DIL // 2
LANE = 128           # TPU lane width
SUBLANE = 8          # TPU sublane width


def _round_up(x, m):
    return (x + m - 1) // m * m


def _vmem_limit_bytes():
    """Per-generation scoped-VMEM limit: ~80% of physical, capped at 100 MiB.
    (v7x: 64 MiB physical -> ~51 MiB; v5e/v6e: 128 MiB -> 100 MiB.)"""
    phys = 64 * 1024 * 1024
    try:
        phys = int(getattr(pltpu.get_tpu_info(), "vmem_capacity_bytes", phys))
    except Exception:
        pass
    return min(phys * 4 // 5, 100 * 1024 * 1024)


def _bn_train_2d(x, gamma, beta):
    """PyTorch training-mode BatchNorm over the flattened N*H*W axis.
    Single-pass stats: per-channel sum and sum-of-squares together,
    var = E[x^2] - mean^2 (biased, like torch), f32 accumulation, clamped at 0
    to guard cancellation.  x: [M, C] f32; gamma/beta: [1, C] f32."""
    inv_m = 1.0 / x.shape[0]
    s = jnp.sum(x, axis=0, keepdims=True)
    ss = jnp.sum(x * x, axis=0, keepdims=True)
    mean = s * inv_m
    var = jnp.maximum(ss * inv_m - mean * mean, 0.0)
    scale = jax.lax.rsqrt(var + EPS) * gamma
    return x * scale + (beta - mean * scale)


def _leaky(x):
    return jnp.where(x >= 0.0, x, LEAK * x)


def dilated_resnext_block_kernel(
    x_ref,                      # [N, H, W, Cin]              bf16
    w1_ref,                     # [Cin, S]   conv1x1_0        bf16
    g1_ref, b1_ref,             # [1, S]     BN1 gamma/beta   f32
    w3_ref,                     # [9, S, S]  grouped 3x3 taps bf16 (block-diag)
    g3_ref, b3_ref,             # [1, S]     BN3 gamma/beta   f32
    w2_ref,                     # [S, T]     conv1x1_1        bf16
    g2_ref, b2_ref,             # [1, T]     BN2 gamma/beta   f32
    wsc_ref,                    # [Cin, T]   shortcut 1x1     bf16
    bsc_ref,                    # [1, T]     shortcut bias    f32
    g0_ref, b0_ref,             # [1, T]     bn0 gamma/beta   f32
    out_ref,                    # [N, H, W, T]                bf16
    ypad_ref,                   # VMEM scratch [N, H+2*PAD, Wa, S] bf16
):
    N, H, W, Cin = x_ref.shape
    S = g1_ref.shape[1]
    T = g0_ref.shape[1]
    M = N * H * W
    Wa = ypad_ref.shape[2]       # allocated (sublane-rounded) padded width

    # --- ConvBnR1_0: 1x1 conv -> BN -> LeakyReLU -----------------------------
    # TODO(synk): for tiny Cin (<=8) this MXU pass is mostly wasted contraction;
    # a VPU broadcast-MAC path would be better, acceptable for production Cin.
    x2 = x_ref[...].reshape(M, Cin)                                    # bf16
    y1 = jnp.dot(x2, w1_ref[...], preferred_element_type=jnp.float32)  # [M, S]
    y1 = _leaky(_bn_train_2d(y1, g1_ref[...], b1_ref[...]))            # f32

    # --- spatial zero-pad in bf16 scratch: zero halo only, write interior ---
    zdt = ypad_ref.dtype
    ypad_ref[:, 0:PAD, :, :] = jnp.zeros((N, PAD, Wa, S), zdt)
    ypad_ref[:, PAD + H:PAD + H + PAD, :, :] = jnp.zeros((N, PAD, Wa, S), zdt)
    ypad_ref[:, PAD:PAD + H, 0:PAD, :] = jnp.zeros((N, H, PAD, S), zdt)
    ypad_ref[:, PAD:PAD + H, PAD + W:PAD + W + PAD, :] = jnp.zeros((N, H, PAD, S), zdt)
    ypad_ref[:, PAD:PAD + H, PAD:PAD + W, :] = y1.reshape(N, H, W, S).astype(zdt)

    # --- grouped dilated 3x3 conv: 9 per-tap dots, accumulated in f32 --------
    # Each shifted tap feeds its dot directly (no concat buffer); the unrolled
    # accumulation lets Mosaic keep the running sum in the matmul result
    # buffer (MRB in-place accumulate on v7x) instead of a tap_cat [M,9S] slab.
    def tap_dot(t):
        ky, kx = divmod(t, KS)
        tap = ypad_ref[:, ky * DIL:ky * DIL + H, kx * DIL:kx * DIL + W, :]
        return jnp.dot(tap.reshape(M, S), w3_ref[t],
                       preferred_element_type=jnp.float32)

    y2 = tap_dot(0)
    for t in range(1, KS * KS):
        y2 = y2 + tap_dot(t)
    y2 = _leaky(_bn_train_2d(y2, g3_ref[...], b3_ref[...]))            # [M, S] f32

    # --- ConvBnR1_1: 1x1 conv -> BN (no ReLU) --------------------------------
    y3 = jnp.dot(y2.astype(w2_ref.dtype), w2_ref[...],
                 preferred_element_type=jnp.float32)                   # [M, T]
    y3 = _bn_train_2d(y3, g2_ref[...], b2_ref[...])

    # --- shortcut (deferred; reads already-resident x) -> residual -> bn0 ----
    sc = jnp.dot(x2, wsc_ref[...], preferred_element_type=jnp.float32)  # [M, T]
    o = _bn_train_2d(y3 + (sc + bsc_ref[...]), g0_ref[...], b0_ref[...])
    out_ref[...] = jnp.maximum(o, 0.0).reshape(N, H, W, T).astype(out_ref.dtype)


def dilated_resnext_block(x_nchw, params):
    """x_nchw: [N, Cin, H, W] (PyTorch layout). Returns [N, Cout, H, W] f32."""
    (w1, g1, b1, w3, g3, b3, w2, g2, b2, wsc, bsc, g0, b0) = params
    N, Cin, H, W = x_nchw.shape
    Cmid = w1.shape[1]
    Cout = w2.shape[1]
    S = _round_up(Cmid, LANE)   # lane-padded inner width
    T = _round_up(Cout, LANE)   # lane-padded output width
    f32 = jnp.float32

    x = jnp.transpose(x_nchw, (0, 2, 3, 1)).astype(jnp.bfloat16)      # -> NHWC bf16

    # Lane padding invariant: padded weight columns are zero and padded BN
    # channels use gamma=1 / beta=0, so padded lanes stay exactly 0 through
    # every BN and never contaminate statistics of real channels.
    w1p = jnp.zeros((Cin, S), f32).at[:, :Cmid].set(w1).astype(jnp.bfloat16)
    wscp = jnp.zeros((Cin, T), f32).at[:, :Cout].set(wsc).astype(jnp.bfloat16)

    def pad_gb(g, b, P):
        gp = jnp.ones((1, P), f32).at[:, :g.shape[1]].set(g)
        bp = jnp.zeros((1, P), f32).at[:, :b.shape[1]].set(b)
        return gp, bp

    g1p, b1p = pad_gb(g1, b1, S)
    g3p, b3p = pad_gb(g3, b3, S)
    g2p, b2p = pad_gb(g2, b2, T)
    g0p, b0p = pad_gb(g0, b0, T)
    bscp = jnp.zeros((1, T), f32).at[:, :Cout].set(bsc)

    # grouped dilated 3x3: [9, Cmid, Cmid] block-diag -> nine [S, S] tap mats
    w3p = jnp.zeros((KS * KS, S, S), f32).at[:, :Cmid, :Cmid].set(w3)
    w3p = w3p.astype(jnp.bfloat16)

    w2p = jnp.zeros((S, T), f32).at[:Cmid, :Cout].set(w2).astype(jnp.bfloat16)

    # Whole-array, single-buffered VMEM residency (BN batch stats need it and
    # there is no pipelining to overlap, so no double buffers are paid for).
    vmem = pl.BlockSpec(memory_space=pltpu.MemorySpace.VMEM)
    Wa = _round_up(W + 2 * PAD, SUBLANE)   # explicit sublane padding of scratch

    out = pl.pallas_call(
        dilated_resnext_block_kernel,
        out_shape=jax.ShapeDtypeStruct((N, H, W, T), jnp.bfloat16),
        in_specs=[vmem] * 14,
        out_specs=vmem,
        scratch_shapes=[pltpu.VMEM((N, H + 2 * PAD, Wa, S), jnp.bfloat16)],
        compiler_params=pltpu.CompilerParams(
            vmem_limit_bytes=_vmem_limit_bytes()),
    )(x, w1p, g1p, b1p, w3p, g3p, b3p, w2p, g2p, b2p, wscp, bscp, g0p, b0p)

    # Drop lane padding, back to NCHW f32 (slice + transpose + upcast fuse into
    # one XLA pass).
    # TODO(synk): keep NHWC / bf16 in the downstream consumer to avoid this
    # extra HBM traversal entirely.
    return jnp.transpose(out[..., :Cout].astype(f32), (0, 3, 1, 2))


def init_params(key, in_channels, bottleneck_width, cardinality, expansion):
    """Deterministic synthetic parameters matching the module's shapes."""
    Cmid = bottleneck_width * cardinality
    Cout = Cmid * expansion
    ks = jax.random.split(key, 13)

    w1 = 0.2 * jax.random.normal(ks[0], (in_channels, Cmid), jnp.float32)
    g1 = 1.0 + 0.1 * jax.random.normal(ks[1], (1, Cmid), jnp.float32)
    b1 = 0.1 * jax.random.normal(ks[2], (1, Cmid), jnp.float32)

    # grouped 3x3 conv, PyTorch weight layout [Cmid, bw, 3, 3]; expand each of
    # the 9 taps into a dense block-diagonal [Cmid, Cmid] matrix.
    wg = 0.2 * jax.random.normal(ks[3], (Cmid, bottleneck_width, KS, KS), jnp.float32)
    w3 = jnp.zeros((KS * KS, Cmid, Cmid), jnp.float32)
    for o in range(Cmid):
        g = o // bottleneck_width
        w3 = w3.at[:, g * bottleneck_width:(g + 1) * bottleneck_width, o].set(
            wg[o].reshape(bottleneck_width, KS * KS).T)
    g3 = 1.0 + 0.1 * jax.random.normal(ks[4], (1, Cmid), jnp.float32)
    b3 = 0.1 * jax.random.normal(ks[5], (1, Cmid), jnp.float32)

    w2 = 0.2 * jax.random.normal(ks[6], (Cmid, Cout), jnp.float32)
    g2 = 1.0 + 0.1 * jax.random.normal(ks[7], (1, Cout), jnp.float32)
    b2 = 0.1 * jax.random.normal(ks[8], (1, Cout), jnp.float32)

    wsc = 0.2 * jax.random.normal(ks[9], (in_channels, Cout), jnp.float32)
    bsc = 0.1 * jax.random.normal(ks[10], (1, Cout), jnp.float32)
    g0 = 1.0 + 0.1 * jax.random.normal(ks[11], (1, Cout), jnp.float32)
    b0 = 0.1 * jax.random.normal(ks[12], (1, Cout), jnp.float32)
    return (w1, g1, b1, w3, g3, b3, w2, g2, b2, wsc, bsc, g0, b0)


if __name__ == "__main__":
    key = jax.random.PRNGKey(0)
    kx, kp = jax.random.split(key)

    # Small demo config consistent with the module: in_channels=4,
    # bottleneck_width=2, cardinality=4, expansion=2, stride=1, dilation=2
    # => inner_width=8, out_channels=16.
    N, Cin, H, W = 2, 4, 16, 16
    BW, CARD, EXP = 2, 4, 2

    x = jax.random.normal(kx, (N, Cin, H, W), jnp.float32)   # NCHW, like PyTorch
    params = init_params(kp, Cin, BW, CARD, EXP)

    fwd = jax.jit(dilated_resnext_block)
    out = fwd(x, params)
    jax.block_until_ready(out)

    assert out.shape == (N, BW * CARD * EXP, H, W)
    assert bool(jnp.all(jnp.isfinite(out)))
    assert bool(jnp.all(out >= 0.0))          # final ReLU
    print("KERNEL_OK")
</pallas_src>

<mosaic_0001>
module attributes {stable_mosaic.version = 11 : i64} {
  func.func @dilated_resnext_block_kernel(%arg0: memref<2x16x16x4xbf16, #tpu.memory_space<vmem>>, %arg1: memref<4x128xbf16, #tpu.memory_space<vmem>>, %arg2: memref<1x128xf32, #tpu.memory_space<vmem>>, %arg3: memref<1x128xf32, #tpu.memory_space<vmem>>, %arg4: memref<9x128x128xbf16, #tpu.memory_space<vmem>>, %arg5: memref<1x128xf32, #tpu.memory_space<vmem>>, %arg6: memref<1x128xf32, #tpu.memory_space<vmem>>, %arg7: memref<128x128xbf16, #tpu.memory_space<vmem>>, %arg8: memref<1x128xf32, #tpu.memory_space<vmem>>, %arg9: memref<1x128xf32, #tpu.memory_space<vmem>>, %arg10: memref<4x128xbf16, #tpu.memory_space<vmem>>, %arg11: memref<1x128xf32, #tpu.memory_space<vmem>>, %arg12: memref<1x128xf32, #tpu.memory_space<vmem>>, %arg13: memref<1x128xf32, #tpu.memory_space<vmem>>, %arg14: memref<2x16x16x128xbf16, #tpu.memory_space<vmem>>, %arg15: memref<2x20x24x128xbf16, #tpu.memory_space<vmem>>) attributes {dimension_semantics = [], scalar_prefetch = 0 : i64, scratch_operands = 1 : i64, tpu.core_type = #tpu.core_type<tc>} {
    %c0 = arith.constant 0 : index
    %c0_0 = arith.constant 0 : index
    %c0_1 = arith.constant 0 : index
    %c0_2 = arith.constant 0 : index
    %0 = vector.load %arg0[%c0, %c0_0, %c0_1, %c0_2] : memref<2x16x16x4xbf16, #tpu.memory_space<vmem>>, vector<2x16x16x4xbf16>
    %1 = vector.shape_cast %0 : vector<2x16x16x4xbf16> to vector<512x4xbf16>
    %c0_3 = arith.constant 0 : index
    %c0_4 = arith.constant 0 : index
    %2 = vector.load %arg1[%c0_3, %c0_4] : memref<4x128xbf16, #tpu.memory_space<vmem>>, vector<4x128xbf16>
    %cst = arith.constant dense<0.000000e+00> : vector<512x128xf32>
    %3 = tpu.matmul %1, %2, %cst {dimension_numbers = #tpu.dot_dimension_numbers<[1], [0], [0], [1], [0, 0, 1, 1], [], []>} : vector<512x4xbf16>, vector<4x128xbf16>, vector<512x128xf32> -> vector<512x128xf32>
    %c0_5 = arith.constant 0 : index
    %c0_6 = arith.constant 0 : index
    %4 = vector.load %arg2[%c0_5, %c0_6] : memref<1x128xf32, #tpu.memory_space<vmem>>, vector<1x128xf32>
    %c0_7 = arith.constant 0 : index
    %c0_8 = arith.constant 0 : index
    %5 = vector.load %arg3[%c0_7, %c0_8] : memref<1x128xf32, #tpu.memory_space<vmem>>, vector<1x128xf32>
    %cst_9 = arith.constant dense<0.000000e+00> : vector<128xf32>
    %6 = vector.multi_reduction <add>, %3, %cst_9 [0] : vector<512x128xf32> to vector<128xf32>
    %7 = vector.shape_cast %6 : vector<128xf32> to vector<1x128xf32>
    %8 = arith.mulf %3, %3 : vector<512x128xf32>
    %cst_10 = arith.constant dense<0.000000e+00> : vector<128xf32>
    %9 = vector.multi_reduction <add>, %8, %cst_10 [0] : vector<512x128xf32> to vector<128xf32>
    %10 = vector.shape_cast %9 : vector<128xf32> to vector<1x128xf32>
    %cst_11 = arith.constant 0.001953125 : f32
    %11 = vector.broadcast %cst_11 : f32 to vector<1x128xf32>
    %12 = arith.mulf %7, %11 : vector<1x128xf32>
    %cst_12 = arith.constant 0.001953125 : f32
    %13 = vector.broadcast %cst_12 : f32 to vector<1x128xf32>
    %14 = arith.mulf %10, %13 : vector<1x128xf32>
    %15 = arith.mulf %12, %12 : vector<1x128xf32>
    %16 = arith.subf %14, %15 : vector<1x128xf32>
    %cst_13 = arith.constant 0.000000e+00 : f32
    %17 = vector.broadcast %cst_13 : f32 to vector<1x128xf32>
    %18 = arith.maximumf %16, %17 : vector<1x128xf32>
    %cst_14 = arith.constant 9.99999974E-6 : f32
    %19 = vector.broadcast %cst_14 : f32 to vector<1x128xf32>
    %20 = arith.addf %18, %19 : vector<1x128xf32>
    %21 = math.rsqrt %20 : vector<1x128xf32>
    %22 = arith.mulf %21, %4 : vector<1x128xf32>
    %23 = vector.broadcast %22 : vector<1x128xf32> to vector<512x128xf32>
    %24 = arith.mulf %3, %23 : vector<512x128xf32>
    %25 = arith.mulf %12, %22 : vector<1x128xf32>
    %26 = arith.subf %5, %25 : vector<1x128xf32>
    %27 = vector.broadcast %26 : vector<1x128xf32> to vector<512x128xf32>
    %28 = arith.addf %24, %27 : vector<512x128xf32>
    %cst_15 = arith.constant 0.000000e+00 : f32
    %29 = vector.broadcast %cst_15 : f32 to vector<512x128xf32>
    %30 = arith.cmpf oge, %28, %29 : vector<512x128xf32>
    %cst_16 = arith.constant 0.00999999977 : f32
    %31 = vector.broadcast %cst_16 : f32 to vector<512x128xf32>
    %32 = arith.mulf %31, %28 : vector<512x128xf32>
    %33 = arith.select %30, %28, %32 : vector<512x128xi1>, vector<512x128xf32>
    %cst_17 = arith.constant 0.000000e+00 : bf16
    %34 = vector.broadcast %cst_17 : bf16 to vector<2x2x24x128xbf16>
    %c0_18 = arith.constant 0 : index
    %c0_19 = arith.constant 0 : index
    %c0_20 = arith.constant 0 : index
    %c0_21 = arith.constant 0 : index
    %35 = vector.load %arg15[%c0_18, %c0_19, %c0_20, %c0_21] : memref<2x20x24x128xbf16, #tpu.memory_space<vmem>>, vector<2x2x24x128xbf16>
    tpu.vector_store %arg15[%c0_18, %c0_19, %c0_20, %c0_21], %34 {strides = array<i32>} : memref<2x20x24x128xbf16, #tpu.memory_space<vmem>>, vector<2x2x24x128xbf16>,
    %cst_22 = arith.constant 0.000000e+00 : bf16
    %36 = vector.broadcast %cst_22 : bf16 to vector<2x2x24x128xbf16>
    %c0_23 = arith.constant 0 : index
    %c18 = arith.constant 18 : index
    %c0_24 = arith.constant 0 : index
    %c0_25 = arith.constant 0 : index
    %37 = vector.load %arg15[%c0_23, %c18, %c0_24, %c0_25] : memref<2x20x24x128xbf16, #tpu.memory_space<vmem>>, vector<2x2x24x128xbf16>
    tpu.vector_store %arg15[%c0_23, %c18, %c0_24, %c0_25], %36 {strides = array<i32>} : memref<2x20x24x128xbf16, #tpu.memory_space<vmem>>, vector<2x2x24x128xbf16>,
    %cst_26 = arith.constant 0.000000e+00 : bf16
    %38 = vector.broadcast %cst_26 : bf16 to vector<2x16x2x128xbf16>
    %c0_27 = arith.constant 0 : index
    %c2 = arith.constant 2 : index
    %c0_28 = arith.constant 0 : index
    %c0_29 = arith.constant 0 : index
    %39 = vector.load %arg15[%c0_27, %c2, %c0_28, %c0_29] : memref<2x20x24x128xbf16, #tpu.memory_space<vmem>>, vector<2x16x2x128xbf16>
    tpu.vector_store %arg15[%c0_27, %c2, %c0_28, %c0_29], %38 {strides = array<i32>} : memref<2x20x24x128xbf16, #tpu.memory_space<vmem>>, vector<2x16x2x128xbf16>,
    %cst_30 = arith.constant 0.000000e+00 : bf16
    %40 = vector.broadcast %cst_30 : bf16 to vector<2x16x2x128xbf16>
    %c0_31 = arith.constant 0 : index
    %c2_32 = arith.constant 2 : index
    %c18_33 = arith.constant 18 : index
    %c0_34 = arith.constant 0 : index
    %41 = vector.load %arg15[%c0_31, %c2_32, %c18_33, %c0_34] : memref<2x20x24x128xbf16, #tpu.memory_space<vmem>>, vector<2x16x2x128xbf16>
    tpu.vector_store %arg15[%c0_31, %c2_32, %c18_33, %c0_34], %40 {strides = array<i32>} : memref<2x20x24x128xbf16, #tpu.memory_space<vmem>>, vector<2x16x2x128xbf16>,
    %42 = vector.shape_cast %33 : vector<512x128xf32> to vector<2x16x16x128xf32>
    %43 = arith.truncf %42 : vector<2x16x16x128xf32> to vector<2x16x16x128xbf16>
    %c0_35 = arith.constant 0 : index
    %c2_36 = arith.constant 2 : index
    %c2_37 = arith.constant 2 : index
    %c0_38 = arith.constant 0 : index
    %44 = vector.load %arg15[%c0_35, %c2_36, %c2_37, %c0_38] : memref<2x20x24x128xbf16, #tpu.memory_space<vmem>>, vector<2x16x16x128xbf16>
    tpu.vector_store %arg15[%c0_35, %c2_36, %c2_37, %c0_38], %43 {strides = array<i32>} : memref<2x20x24x128xbf16, #tpu.memory_space<vmem>>, vector<2x16x16x128xbf16>,
    %c0_39 = arith.constant 0 : index
    %c0_40 = arith.constant 0 : index
    %c0_41 = arith.constant 0 : index
    %c0_42 = arith.constant 0 : index
    %45 = vector.load %arg15[%c0_39, %c0_40, %c0_41, %c0_42] : memref<2x20x24x128xbf16, #tpu.memory_space<vmem>>, vector<2x16x16x128xbf16>
    %46 = vector.shape_cast %45 : vector<2x16x16x128xbf16> to vector<512x128xbf16>
    %c0_43 = arith.constant 0 : index
    %c0_44 = arith.constant 0 : index
    %c0_45 = arith.constant 0 : index
    %47 = vector.load %arg4[%c0_43, %c0_44, %c0_45] : memref<9x128x128xbf16, #tpu.memory_space<vmem>>, vector<1x128x128xbf16>
    %48 = vector.shape_cast %47 : vector<1x128x128xbf16> to vector<128x128xbf16>
    %cst_46 = arith.constant dense<0.000000e+00> : vector<512x128xf32>
    %49 = tpu.matmul %46, %48, %cst_46 {dimension_numbers = #tpu.dot_dimension_numbers<[1], [0], [0], [1], [0, 0, 1, 1], [], []>} : vector<512x128xbf16>, vector<128x128xbf16>, vector<512x128xf32> -> vector<512x128xf32>
    %c0_47 = arith.constant 0 : index
    %c0_48 = arith.constant 0 : index
    %c2_49 = arith.constant 2 : index
    %c0_50 = arith.constant 0 : index
    %50 = vector.load %arg15[%c0_47, %c0_48, %c2_49, %c0_50] : memref<2x20x24x128xbf16, #tpu.memory_space<vmem>>, vector<2x16x16x128xbf16>
    %51 = vector.shape_cast %50 : vector<2x16x16x128xbf16> to vector<512x128xbf16>
    %c1 = arith.constant 1 : index
    %c0_51 = arith.constant 0 : index
    %c0_52 = arith.constant 0 : index
    %52 = vector.load %arg4[%c1, %c0_51, %c0_52] : memref<9x128x128xbf16, #tpu.memory_space<vmem>>, vector<1x128x128xbf16>
    %53 = vector.shape_cast %52 : vector<1x128x128xbf16> to vector<128x128xbf16>
    %cst_53 = arith.constant dense<0.000000e+00> : vector<512x128xf32>
    %54 = tpu.matmul %51, %53, %cst_53 {dimension_numbers = #tpu.dot_dimension_numbers<[1], [0], [0], [1], [0, 0, 1, 1], [], []>} : vector<512x128xbf16>, vector<128x128xbf16>, vector<512x128xf32> -> vector<512x128xf32>
    %55 = arith.addf %49, %54 : vector<512x128xf32>
    %c0_54 = arith.constant 0 : index
    %c0_55 = arith.constant 0 : index
    %c4 = arith.constant 4 : index
    %c0_56 = arith.constant 0 : index
    %56 = vector.load %arg15[%c0_54, %c0_55, %c4, %c0_56] : memref<2x20x24x128xbf16, #tpu.memory_space<vmem>>, vector<2x16x16x128xbf16>
    %57 = vector.shape_cast %56 : vector<2x16x16x128xbf16> to vector<512x128xbf16>
    %c2_57 = arith.constant 2 : index
    %c0_58 = arith.constant 0 : index
    %c0_59 = arith.constant 0 : index
    %58 = vector.load %arg4[%c2_57, %c0_58, %c0_59] : memref<9x128x128xbf16, #tpu.memory_space<vmem>>, vector<1x128x128xbf16>
    %59 = vector.shape_cast %58 : vector<1x128x128xbf16> to vector<128x128xbf16>
    %cst_60 = arith.constant dense<0.000000e+00> : vector<512x128xf32>
    %60 = tpu.matmul %57, %59, %cst_60 {dimension_numbers = #tpu.dot_dimension_numbers<[1], [0], [0], [1], [0, 0, 1, 1], [], []>} : vector<512x128xbf16>, vector<128x128xbf16>, vector<512x128xf32> -> vector<512x128xf32>
    %61 = arith.addf %55, %60 : vector<512x128xf32>
    %c0_61 = arith.constant 0 : index
    %c2_62 = arith.constant 2 : index
    %c0_63 = arith.constant 0 : index
    %c0_64 = arith.constant 0 : index
    %62 = vector.load %arg15[%c0_61, %c2_62, %c0_63, %c0_64] : memref<2x20x24x128xbf16, #tpu.memory_space<vmem>>, vector<2x16x16x128xbf16>
    %63 = vector.shape_cast %62 : vector<2x16x16x128xbf16> to vector<512x128xbf16>
    %c3 = arith.constant 3 : index
    %c0_65 = arith.constant 0 : index
    %c0_66 = arith.constant 0 : index
    %64 = vector.load %arg4[%c3, %c0_65, %c0_66] : memref<9x128x128xbf16, #tpu.memory_space<vmem>>, vector<1x128x128xbf16>
    %65 = vector.shape_cast %64 : vector<1x128x128xbf16> to vector<128x128xbf16>
    %cst_67 = arith.constant dense<0.000000e+00> : vector<512x128xf32>
    %66 = tpu.matmul %63, %65, %cst_67 {dimension_numbers = #tpu.dot_dimension_numbers<[1], [0], [0], [1], [0, 0, 1, 1], [], []>} : vector<512x128xbf16>, vector<128x128xbf16>, vector<512x128xf32> -> vector<512x128xf32>
    %67 = arith.addf %61, %66 : vector<512x128xf32>
    %c0_68 = arith.constant 0 : index
    %c2_69 = arith.constant 2 : index
    %c2_70 = arith.constant 2 : index
    %c0_71 = arith.constant 0 : index
    %68 = vector.load %arg15[%c0_68, %c2_69, %c2_70, %c0_71] : memref<2x20x24x128xbf16, #tpu.memory_space<vmem>>, vector<2x16x16x128xbf16>
    %69 = vector.shape_cast %68 : vector<2x16x16x128xbf16> to vector<512x128xbf16>
    %c4_72 = arith.constant 4 : index
    %c0_73 = arith.constant 0 : index
    %c0_74 = arith.constant 0 : index
    %70 = vector.load %arg4[%c4_72, %c0_73, %c0_74] : memref<9x128x128xbf16, #tpu.memory_space<vmem>>, vector<1x128x128xbf16>
    %71 = vector.shape_cast %70 : vector<1x128x128xbf16> to vector<128x128xbf16>
    %cst_75 = arith.constant dense<0.000000e+00> : vector<512x128xf32>
    %72 = tpu.matmul %69, %71, %cst_75 {dimension_numbers = #tpu.dot_dimension_numbers<[1], [0], [0], [1], [0, 0, 1, 1], [], []>} : vector<512x128xbf16>, vector<128x128xbf16>, vector<512x128xf32> -> vector<512x128xf32>
    %73 = arith.addf %67, %72 : vector<512x128xf32>
    %c0_76 = arith.constant 0 : index
    %c2_77 = arith.constant 2 : index
    %c4_78 = arith.constant 4 : index
    %c0_79 = arith.constant 0 : index
    %74 = vector.load %arg15[%c0_76, %c2_77, %c4_78, %c0_79] : memref<2x20x24x128xbf16, #tpu.memory_space<vmem>>, vector<2x16x16x128xbf16>
    %75 = vector.shape_cast %74 : vector<2x16x16x128xbf16> to vector<512x128xbf16>
    %c5 = arith.constant 5 : index
    %c0_80 = arith.constant 0 : index
    %c0_81 = arith.constant 0 : index
    %76 = vector.load %arg4[%c5, %c0_80, %c0_81] : memref<9x128x128xbf16, #tpu.memory_space<vmem>>, vector<1x128x128xbf16>
    %77 = vector.shape_cast %76 : vector<1x128x128xbf16> to vector<128x128xbf16>
    %cst_82 = arith.constant dense<0.000000e+00> : vector<512x128xf32>
    %78 = tpu.matmul %75, %77, %cst_82 {dimension_numbers = #tpu.dot_dimension_numbers<[1], [0], [0], [1], [0, 0, 1, 1], [], []>} : vector<512x128xbf16>, vector<128x128xbf16>, vector<512x128xf32> -> vector<512x128xf32>
    %79 = arith.addf %73, %78 : vector<512x128xf32>
    %c0_83 = arith.constant 0 : index
    %c4_84 = arith.constant 4 : index
    %c0_85 = arith.constant 0 : index
    %c0_86 = arith.constant 0 : index
    %80 = vector.load %arg15[%c0_83, %c4_84, %c0_85, %c0_86] : memref<2x20x24x128xbf16, #tpu.memory_space<vmem>>, vector<2x16x16x128xbf16>
    %81 = vector.shape_cast %80 : vector<2x16x16x128xbf16> to vector<512x128xbf16>
    %c6 = arith.constant 6 : index
    %c0_87 = arith.constant 0 : index
    %c0_88 = arith.constant 0 : index
    %82 = vector.load %arg4[%c6, %c0_87, %c0_88] : memref<9x128x128xbf16, #tpu.memory_space<vmem>>, vector<1x128x128xbf16>
    %83 = vector.shape_cast %82 : vector<1x128x128xbf16> to vector<128x128xbf16>
    %cst_89 = arith.constant dense<0.000000e+00> : vector<512x128xf32>
    %84 = tpu.matmul %81, %83, %cst_89 {dimension_numbers = #tpu.dot_dimension_numbers<[1], [0], [0], [1], [0, 0, 1, 1], [], []>} : vector<512x128xbf16>, vector<128x128xbf16>, vector<512x128xf32> -> vector<512x128xf32>
    %85 = arith.addf %79, %84 : vector<512x128xf32>
    %c0_90 = arith.constant 0 : index
    %c4_91 = arith.constant 4 : index
    %c2_92 = arith.constant 2 : index
    %c0_93 = arith.constant 0 : index
    %86 = vector.load %arg15[%c0_90, %c4_91, %c2_92, %c0_93] : memref<2x20x24x128xbf16, #tpu.memory_space<vmem>>, vector<2x16x16x128xbf16>
    %87 = vector.shape_cast %86 : vector<2x16x16x128xbf16> to vector<512x128xbf16>
    %c7 = arith.constant 7 : index
    %c0_94 = arith.constant 0 : index
    %c0_95 = arith.constant 0 : index
    %88 = vector.load %arg4[%c7, %c0_94, %c0_95] : memref<9x128x128xbf16, #tpu.memory_space<vmem>>, vector<1x128x128xbf16>
    %89 = vector.shape_cast %88 : vector<1x128x128xbf16> to vector<128x128xbf16>
    %cst_96 = arith.constant dense<0.000000e+00> : vector<512x128xf32>
    %90 = tpu.matmul %87, %89, %cst_96 {dimension_numbers = #tpu.dot_dimension_numbers<[1], [0], [0], [1], [0, 0, 1, 1], [], []>} : vector<512x128xbf16>, vector<128x128xbf16>, vector<512x128xf32> -> vector<512x128xf32>
    %91 = arith.addf %85, %90 : vector<512x128xf32>
    %c0_97 = arith.constant 0 : index
    %c4_98 = arith.constant 4 : index
    %c4_99 = arith.constant 4 : index
    %c0_100 = arith.constant 0 : index
    %92 = vector.load %arg15[%c0_97, %c4_98, %c4_99, %c0_100] : memref<2x20x24x128xbf16, #tpu.memory_space<vmem>>, vector<2x16x16x128xbf16>
    %93 = vector.shape_cast %92 : vector<2x16x16x128xbf16> to vector<512x128xbf16>
    %c8 = arith.constant 8 : index
    %c0_101 = arith.constant 0 : index
    %c0_102 = arith.constant 0 : index
    %94 = vector.load %arg4[%c8, %c0_101, %c0_102] : memref<9x128x128xbf16, #tpu.memory_space<vmem>>, vector<1x128x128xbf16>
    %95 = vector.shape_cast %94 : vector<1x128x128xbf16> to vector<128x128xbf16>
    %cst_103 = arith.constant dense<0.000000e+00> : vector<512x128xf32>
    %96 = tpu.matmul %93, %95, %cst_103 {dimension_numbers = #tpu.dot_dimension_numbers<[1], [0], [0], [1], [0, 0, 1, 1], [], []>} : vector<512x128xbf16>, vector<128x128xbf16>, vector<512x128xf32> -> vector<512x128xf32>
    %97 = arith.addf %91, %96 : vector<512x128xf32>
    %c0_104 = arith.constant 0 : index
    %c0_105 = arith.constant 0 : index
    %98 = vector.load %arg5[%c0_104, %c0_105] : memref<1x128xf32, #tpu.memory_space<vmem>>, vector<1x128xf32>
    %c0_106 = arith.constant 0 : index
    %c0_107 = arith.constant 0 : index
    %99 = vector.load %arg6[%c0_106, %c0_107] : memref<1x128xf32, #tpu.memory_space<vmem>>, vector<1x128xf32>
    %cst_108 = arith.constant dense<0.000000e+00> : vector<128xf32>
    %100 = vector.multi_reduction <add>, %97, %cst_108 [0] : vector<512x128xf32> to vector<128xf32>
    %101 = vector.shape_cast %100 : vector<128xf32> to vector<1x128xf32>
    %102 = arith.mulf %97, %97 : vector<512x128xf32>
    %cst_109 = arith.constant dense<0.000000e+00> : vector<128xf32>
    %103 = vector.multi_reduction <add>, %102, %cst_109 [0] : vector<512x128xf32> to vector<128xf32>
    %104 = vector.shape_cast %103 : vector<128xf32> to vector<1x128xf32>
    %cst_110 = arith.constant 0.001953125 : f32
    %105 = vector.broadcast %cst_110 : f32 to vector<1x128xf32>
    %106 = arith.mulf %101, %105 : vector<1x128xf32>
    %cst_111 = arith.constant 0.001953125 : f32
    %107 = vector.broadcast %cst_111 : f32 to vector<1x128xf32>
    %108 = arith.mulf %104, %107 : vector<1x128xf32>
    %109 = arith.mulf %106, %106 : vector<1x128xf32>
    %110 = arith.subf %108, %109 : vector<1x128xf32>
    %cst_112 = arith.constant 0.000000e+00 : f32
    %111 = vector.broadcast %cst_112 : f32 to vector<1x128xf32>
    %112 = arith.maximumf %110, %111 : vector<1x128xf32>
    %cst_113 = arith.constant 9.99999974E-6 : f32
    %113 = vector.broadcast %cst_113 : f32 to vector<1x128xf32>
    %114 = arith.addf %112, %113 : vector<1x128xf32>
    %115 = math.rsqrt %114 : vector<1x128xf32>
    %116 = arith.mulf %115, %98 : vector<1x128xf32>
    %117 = vector.broadcast %116 : vector<1x128xf32> to vector<512x128xf32>
    %118 = arith.mulf %97, %117 : vector<512x128xf32>
    %119 = arith.mulf %106, %116 : vector<1x128xf32>
    %120 = arith.subf %99, %119 : vector<1x128xf32>
    %121 = vector.broadcast %120 : vector<1x128xf32> to vector<512x128xf32>
    %122 = arith.addf %118, %121 : vector<512x128xf32>
    %cst_114 = arith.constant 0.000000e+00 : f32
    %123 = vector.broadcast %cst_114 : f32 to vector<512x128xf32>
    %124 = arith.cmpf oge, %122, %123 : vector<512x128xf32>
    %cst_115 = arith.constant 0.00999999977 : f32
    %125 = vector.broadcast %cst_115 : f32 to vector<512x128xf32>
    %126 = arith.mulf %125, %122 : vector<512x128xf32>
    %127 = arith.select %124, %122, %126 : vector<512x128xi1>, vector<512x128xf32>
    %128 = arith.truncf %127 : vector<512x128xf32> to vector<512x128xbf16>
    %c0_116 = arith.constant 0 : index
    %c0_117 = arith.constant 0 : index
    %129 = vector.load %arg7[%c0_116, %c0_117] : memref<128x128xbf16, #tpu.memory_space<vmem>>, vector<128x128xbf16>
    %cst_118 = arith.constant dense<0.000000e+00> : vector<512x128xf32>
    %130 = tpu.matmul %128, %129, %cst_118 {dimension_numbers = #tpu.dot_dimension_numbers<[1], [0], [0], [1], [0, 0, 1, 1], [], []>} : vector<512x128xbf16>, vector<128x128xbf16>, vector<512x128xf32> -> vector<512x128xf32>
    %c0_119 = arith.constant 0 : index
    %c0_120 = arith.constant 0 : index
    %131 = vector.load %arg8[%c0_119, %c0_120] : memref<1x128xf32, #tpu.memory_space<vmem>>, vector<1x128xf32>
    %c0_121 = arith.constant 0 : index
    %c0_122 = arith.constant 0 : index
    %132 = vector.load %arg9[%c0_121, %c0_122] : memref<1x128xf32, #tpu.memory_space<vmem>>, vector<1x128xf32>
    %cst_123 = arith.constant dense<0.000000e+00> : vector<128xf32>
    %133 = vector.multi_reduction <add>, %130, %cst_123 [0] : vector<512x128xf32> to vector<128xf32>
    %134 = vector.shape_cast %133 : vector<128xf32> to vector<1x128xf32>
    %135 = arith.mulf %130, %130 : vector<512x128xf32>
    %cst_124 = arith.constant dense<0.000000e+00> : vector<128xf32>
    %136 = vector.multi_reduction <add>, %135, %cst_124 [0] : vector<512x128xf32> to vector<128xf32>
    %137 = vector.shape_cast %136 : vector<128xf32> to vector<1x128xf32>
    %cst_125 = arith.constant 0.001953125 : f32
    %138 = vector.broadcast %cst_125 : f32 to vector<1x128xf32>
    %139 = arith.mulf %134, %138 : vector<1x128xf32>
    %cst_126 = arith.constant 0.001953125 : f32
    %140 = vector.broadcast %cst_126 : f32 to vector<1x128xf32>
    %141 = arith.mulf %137, %140 : vector<1x128xf32>
    %142 = arith.mulf %139, %139 : vector<1x128xf32>
    %143 = arith.subf %141, %142 : vector<1x128xf32>
    %cst_127 = arith.constant 0.000000e+00 : f32
    %144 = vector.broadcast %cst_127 : f32 to vector<1x128xf32>
    %145 = arith.maximumf %143, %144 : vector<1x128xf32>
    %cst_128 = arith.constant 9.99999974E-6 : f32
    %146 = vector.broadcast %cst_128 : f32 to vector<1x128xf32>
    %147 = arith.addf %145, %146 : vector<1x128xf32>
    %148 = math.rsqrt %147 : vector<1x128xf32>
    %149 = arith.mulf %148, %131 : vector<1x128xf32>
    %150 = vector.broadcast %149 : vector<1x128xf32> to vector<512x128xf32>
    %151 = arith.mulf %130, %150 : vector<512x128xf32>
    %152 = arith.mulf %139, %149 : vector<1x128xf32>
    %153 = arith.subf %132, %152 : vector<1x128xf32>
    %154 = vector.broadcast %153 : vector<1x128xf32> to vector<512x128xf32>
    %155 = arith.addf %151, %154 : vector<512x128xf32>
    %c0_129 = arith.constant 0 : index
    %c0_130 = arith.constant 0 : index
    %156 = vector.load %arg10[%c0_129, %c0_130] : memref<4x128xbf16, #tpu.memory_space<vmem>>, vector<4x128xbf16>
    %cst_131 = arith.constant dense<0.000000e+00> : vector<512x128xf32>
    %157 = tpu.matmul %1, %156, %cst_131 {dimension_numbers = #tpu.dot_dimension_numbers<[1], [0], [0], [1], [0, 0, 1, 1], [], []>} : vector<512x4xbf16>, vector<4x128xbf16>, vector<512x128xf32> -> vector<512x128xf32>
    %c0_132 = arith.constant 0 : index
    %c0_133 = arith.constant 0 : index
    %158 = vector.load %arg11[%c0_132, %c0_133] : memref<1x128xf32, #tpu.memory_space<vmem>>, vector<1x128xf32>
    %159 = vector.broadcast %158 : vector<1x128xf32> to vector<512x128xf32>
    %160 = arith.addf %157, %159 : vector<512x128xf32>
    %161 = arith.addf %155, %160 : vector<512x128xf32>
    %c0_134 = arith.constant 0 : index
    %c0_135 = arith.constant 0 : index
    %162 = vector.load %arg12[%c0_134, %c0_135] : memref<1x128xf32, #tpu.memory_space<vmem>>, vector<1x128xf32>
    %c0_136 = arith.constant 0 : index
    %c0_137 = arith.constant 0 : index
    %163 = vector.load %arg13[%c0_136, %c0_137] : memref<1x128xf32, #tpu.memory_space<vmem>>, vector<1x128xf32>
    %cst_138 = arith.constant dense<0.000000e+00> : vector<128xf32>
    %164 = vector.multi_reduction <add>, %161, %cst_138 [0] : vector<512x128xf32> to vector<128xf32>
    %165 = vector.shape_cast %164 : vector<128xf32> to vector<1x128xf32>
    %166 = arith.mulf %161, %161 : vector<512x128xf32>
    %cst_139 = arith.constant dense<0.000000e+00> : vector<128xf32>
    %167 = vector.multi_reduction <add>, %166, %cst_139 [0] : vector<512x128xf32> to vector<128xf32>
    %168 = vector.shape_cast %167 : vector<128xf32> to vector<1x128xf32>
    %cst_140 = arith.constant 0.001953125 : f32
    %169 = vector.broadcast %cst_140 : f32 to vector<1x128xf32>
    %170 = arith.mulf %165, %169 : vector<1x128xf32>
    %cst_141 = arith.constant 0.001953125 : f32
    %171 = vector.broadcast %cst_141 : f32 to vector<1x128xf32>
    %172 = arith.mulf %168, %171 : vector<1x128xf32>
    %173 = arith.mulf %170, %170 : vector<1x128xf32>
    %174 = arith.subf %172, %173 : vector<1x128xf32>
    %cst_142 = arith.constant 0.000000e+00 : f32
    %175 = vector.broadcast %cst_142 : f32 to vector<1x128xf32>
    %176 = arith.maximumf %174, %175 : vector<1x128xf32>
    %cst_143 = arith.constant 9.99999974E-6 : f32
    %177 = vector.broadcast %cst_143 : f32 to vector<1x128xf32>
    %178 = arith.addf %176, %177 : vector<1x128xf32>
    %179 = math.rsqrt %178 : vector<1x128xf32>
    %180 = arith.mulf %179, %162 : vector<1x128xf32>
    %181 = vector.broadcast %180 : vector<1x128xf32> to vector<512x128xf32>
    %182 = arith.mulf %161, %181 : vector<512x128xf32>
    %183 = arith.mulf %170, %180 : vector<1x128xf32>
    %184 = arith.subf %163, %183 : vector<1x128xf32>
    %185 = vector.broadcast %184 : vector<1x128xf32> to vector<512x128xf32>
    %186 = arith.addf %182, %185 : vector<512x128xf32>
    %cst_144 = arith.constant 0.000000e+00 : f32
    %187 = vector.broadcast %cst_144 : f32 to vector<512x128xf32>
    %188 = arith.maximumf %186, %187 : vector<512x128xf32>
    %189 = vector.shape_cast %188 : vector<512x128xf32> to vector<2x16x16x128xf32>
    %190 = arith.truncf %189 : vector<2x16x16x128xf32> to vector<2x16x16x128xbf16>
    %c0_145 = arith.constant 0 : index
    %c0_146 = arith.constant 0 : index
    %c0_147 = arith.constant 0 : index
    %c0_148 = arith.constant 0 : index
    %191 = vector.load %arg14[%c0_145, %c0_146, %c0_147, %c0_148] : memref<2x16x16x128xbf16, #tpu.memory_space<vmem>>, vector<2x16x16x128xbf16>
    tpu.vector_store %arg14[%c0_145, %c0_146, %c0_147, %c0_148], %190 {strides = array<i32>} : memref<2x16x16x128xbf16, #tpu.memory_space<vmem>>, vector<2x16x16x128xbf16>,
    return
  }
}

</mosaic_0001>

<llo_original>
// kernel: dilated_resnext_block.1
$region0: #{dilated_resnext_block.1}
  #allocation0 [shape = 'u32[]', space=smem, size = 0x4, offset = 0x4, fixed_abs, tag = 'smem constant byte address 0x4 - core index']
  #allocation1 [shape = 'u32[144,128]{1,0:T(1,128)}', space=vmem, size = 0x12000, scoped, tag = 'internal scratch']
  #allocation2 [shape = 'bf16[2,20,24,128]{3,2,1,0:T(8,128)(2,1)}', space=vmem, size = 0x3c000, scoped, tag = 'scratch operand']
  %s0 = inlined_call_operand.vmem [shape: bf16[2,16,16,4], index: 0, kind: input, shape index: {}]
  %s1 = inlined_call_operand.vmem [shape: bf16[4,128], index: 1, kind: input, shape index: {}]
  %s2 = inlined_call_operand.vmem [shape: f32[1,128], index: 2, kind: input, shape index: {}]
  %s3 = inlined_call_operand.vmem [shape: f32[1,128], index: 3, kind: input, shape index: {}]
  %s4 = inlined_call_operand.vmem [shape: bf16[9,128,128], index: 4, kind: input, shape index: {}]
  %s5 = inlined_call_operand.vmem [shape: f32[1,128], index: 5, kind: input, shape index: {}]
  %s6 = inlined_call_operand.vmem [shape: f32[1,128], index: 6, kind: input, shape index: {}]
  %s7 = inlined_call_operand.vmem [shape: bf16[128,128], index: 7, kind: input, shape index: {}]
  %s8 = inlined_call_operand.vmem [shape: f32[1,128], index: 8, kind: input, shape index: {}]
  %s9 = inlined_call_operand.vmem [shape: f32[1,128], index: 9, kind: input, shape index: {}]
  %s10 = inlined_call_operand.vmem [shape: bf16[4,128], index: 10, kind: input, shape index: {}]
  %s11 = inlined_call_operand.vmem [shape: f32[1,128], index: 11, kind: input, shape index: {}]
  %s12 = inlined_call_operand.vmem [shape: f32[1,128], index: 12, kind: input, shape index: {}]
  %s13 = inlined_call_operand.vmem [shape: f32[1,128], index: 13, kind: input, shape index: {}]
  %s14 = inlined_call_operand.vmem [shape: bf16[2,16,16,128], index: 14, kind: output, shape index: {}]
  %s15 = sld [smem:[#allocation0]]
  $region66: #{dilated_resnext_block.1} parent=0
    _
  %s17 = ssub.s32 1, %s15
  %s18 = scalar_select 0, %s17, %s15
  // Predicated region
  $region2: #{dilated_resnext_block.1} parent=0 // pred_check
    _
  $region3: #{dilated_resnext_block.1} parent=0 // pred_check_branch
    %20 = sbr.rel (0) target = $region5
  $region4: #{dilated_resnext_block.1} parent=0 // pred_region
    _
  $region5: #{dilated_resnext_block.1} parent=0 // pred_fallthru
    _
  // Predicated region
  $region6: #{dilated_resnext_block.1} parent=0 // pred_check
    _
  $region7: #{dilated_resnext_block.1} parent=0 // pred_check_branch
    %22 = sbr.rel (0) target = $region9
  $region8: #{dilated_resnext_block.1} parent=0 // pred_region
    _
  $region9: #{dilated_resnext_block.1} parent=0 // pred_fallthru
    _
  // Predicated region
  $region10: #{dilated_resnext_block.1} parent=0 // pred_check
    _
  $region11: #{dilated_resnext_block.1} parent=0 // pred_check_branch
    %24 = sbr.rel (0) target = $region13
  $region12: #{dilated_resnext_block.1} parent=0 // pred_region
    _
  $region13: #{dilated_resnext_block.1} parent=0 // pred_fallthru
    _
  // Predicated region
  $region14: #{dilated_resnext_block.1} parent=0 // pred_check
    _
  $region15: #{dilated_resnext_block.1} parent=0 // pred_check_branch
    %26 = sbr.rel (0) target = $region17
  $region16: #{dilated_resnext_block.1} parent=0 // pred_region
    _
  $region17: #{dilated_resnext_block.1} parent=0 // pred_fallthru
    _
  // Predicated region
  $region18: #{dilated_resnext_block.1} parent=0 // pred_check
    _
  $region19: #{dilated_resnext_block.1} parent=0 // pred_check_branch
    %28 = sbr.rel (0) target = $region21
  $region20: #{dilated_resnext_block.1} parent=0 // pred_region
    _
  $region21: #{dilated_resnext_block.1} parent=0 // pred_fallthru
    _
  // Predicated region
  $region22: #{dilated_resnext_block.1} parent=0 // pred_check
    _
  $region23: #{dilated_resnext_block.1} parent=0 // pred_check_branch
    %30 = sbr.rel (0) target = $region25
  $region24: #{dilated_resnext_block.1} parent=0 // pred_region
    _
  $region25: #{dilated_resnext_block.1} parent=0 // pred_fallthru
    _
  // Predicated region
  $region26: #{dilated_resnext_block.1} parent=0 // pred_check
    _
  $region27: #{dilated_resnext_block.1} parent=0 // pred_check_branch
    %32 = sbr.rel (0) target = $region29
  $region28: #{dilated_resnext_block.1} parent=0 // pred_region
    _
  $region29: #{dilated_resnext_block.1} parent=0 // pred_fallthru
    _
  // Predicated region
  $region30: #{dilated_resnext_block.1} parent=0 // pred_check
    _
  $region31: #{dilated_resnext_block.1} parent=0 // pred_check_branch
    %34 = sbr.rel (0) target = $region33
  $region32: #{dilated_resnext_block.1} parent=0 // pred_region
    _
  $region33: #{dilated_resnext_block.1} parent=0 // pred_fallthru
    _
  // Predicated region
  $region34: #{dilated_resnext_block.1} parent=0 // pred_check
    _
  $region35: #{dilated_resnext_block.1} parent=0 // pred_check_branch
    %36 = sbr.rel (0) target = $region37
  $region36: #{dilated_resnext_block.1} parent=0 // pred_region
    _
  $region37: #{dilated_resnext_block.1} parent=0 // pred_fallthru
    _
  // Predicated region
  $region38: #{dilated_resnext_block.1} parent=0 // pred_check
    _
  $region39: #{dilated_resnext_block.1} parent=0 // pred_check_branch
    %38 = sbr.rel (0) target = $region41
  $region40: #{dilated_resnext_block.1} parent=0 // pred_region
    _
  $region41: #{dilated_resnext_block.1} parent=0 // pred_fallthru
    _
  // Predicated region
  $region42: #{dilated_resnext_block.1} parent=0 // pred_check
    _
  $region43: #{dilated_resnext_block.1} parent=0 // pred_check_branch
    %40 = sbr.rel (0) target = $region45
  $region44: #{dilated_resnext_block.1} parent=0 // pred_region
    _
  $region45: #{dilated_resnext_block.1} parent=0 // pred_fallthru
    _
  // Predicated region
  $region46: #{dilated_resnext_block.1} parent=0 // pred_check
    _
  $region47: #{dilated_resnext_block.1} parent=0 // pred_check_branch
    %42 = sbr.rel (0) target = $region49
  $region48: #{dilated_resnext_block.1} parent=0 // pred_region
    _
  $region49: #{dilated_resnext_block.1} parent=0 // pred_fallthru
    _
  // Predicated region
  $region50: #{dilated_resnext_block.1} parent=0 // pred_check
    _
  $region51: #{dilated_resnext_block.1} parent=0 // pred_check_branch
    %44 = sbr.rel (0) target = $region53
  $region52: #{dilated_resnext_block.1} parent=0 // pred_region
    _
  $region53: #{dilated_resnext_block.1} parent=0 // pred_fallthru
    _
  // Predicated region
  $region54: #{dilated_resnext_block.1} parent=0 // pred_check
    _
  $region55: #{dilated_resnext_block.1} parent=0 // pred_check_branch
    %46 = sbr.rel (0) target = $region57
  $region56: #{dilated_resnext_block.1} parent=0 // pred_region
    _
  $region57: #{dilated_resnext_block.1} parent=0 // pred_fallthru
    _
  %v48 = vld [vmem:[%s0] sm:$0xf]
  %v49 = vld [vmem:[%s0 + $0x4] sm:$0xf]
  %v50 = vld [vmem:[%s0 + $0x8] sm:$0xf]
  %v51 = vld [vmem:[%s0 + $0xc] sm:$0xf]
  %v52 = vld [vmem:[%s0 + $0x10] sm:$0xf]
  %v53 = vld [vmem:[%s0 + $0x14] sm:$0xf]
  %v54 = vld [vmem:[%s0 + $0x18] sm:$0xf]
  %v55 = vld [vmem:[%s0 + $0x1c] sm:$0xf]
  %v56 = vld [vmem:[%s0 + $0x20] sm:$0xf]
  %v57 = vld [vmem:[%s0 + $0x24] sm:$0xf]
  %v58 = vld [vmem:[%s0 + $0x28] sm:$0xf]
  %v59 = vld [vmem:[%s0 + $0x2c] sm:$0xf]
  %v60 = vld [vmem:[%s0 + $0x30] sm:$0xf]
  %v61 = vld [vmem:[%s0 + $0x34] sm:$0xf]
  %v62 = vld [vmem:[%s0 + $0x38] sm:$0xf]
  %v63 = vld [vmem:[%s0 + $0x3c] sm:$0xf]
  %v64 = vld [vmem:[%s0 + $0x40] sm:$0xf]
  %v65 = vld [vmem:[%s0 + $0x44] sm:$0xf]
  %v66 = vld [vmem:[%s0 + $0x48] sm:$0xf]
  %v67 = vld [vmem:[%s0 + $0x4c] sm:$0xf]
  %v68 = vld [vmem:[%s0 + $0x50] sm:$0xf]
  %v69 = vld [vmem:[%s0 + $0x54] sm:$0xf]
  %v70 = vld [vmem:[%s0 + $0x58] sm:$0xf]
  %v71 = vld [vmem:[%s0 + $0x5c] sm:$0xf]
  %v72 = vld [vmem:[%s0 + $0x60] sm:$0xf]
  %v73 = vld [vmem:[%s0 + $0x64] sm:$0xf]
  %v74 = vld [vmem:[%s0 + $0x68] sm:$0xf]
  %v75 = vld [vmem:[%s0 + $0x6c] sm:$0xf]
  %v76 = vld [vmem:[%s0 + $0x70] sm:$0xf]
  %v77 = vld [vmem:[%s0 + $0x74] sm:$0xf]
  %v78 = vld [vmem:[%s0 + $0x78] sm:$0xf]
  %v79 = vld [vmem:[%s0 + $0x7c] sm:$0xf]
  %v80 = vld [vmem:[%s0 + $0x80] sm:$0xf]
  %v81 = vld [vmem:[%s0 + $0x84] sm:$0xf]
  %v82 = vld [vmem:[%s0 + $0x88] sm:$0xf]
  %v83 = vld [vmem:[%s0 + $0x8c] sm:$0xf]
  %v84 = vld [vmem:[%s0 + $0x90] sm:$0xf]
  %v85 = vld [vmem:[%s0 + $0x94] sm:$0xf]
  %v86 = vld [vmem:[%s0 + $0x98] sm:$0xf]
  %v87 = vld [vmem:[%s0 + $0x9c] sm:$0xf]
  %v88 = vld [vmem:[%s0 + $0xa0] sm:$0xf]
  %v89 = vld [vmem:[%s0 + $0xa4] sm:$0xf]
  %v90 = vld [vmem:[%s0 + $0xa8] sm:$0xf]
  %v91 = vld [vmem:[%s0 + $0xac] sm:$0xf]
  %v92 = vld [vmem:[%s0 + $0xb0] sm:$0xf]
  %v93 = vld [vmem:[%s0 + $0xb4] sm:$0xf]
  %v94 = vld [vmem:[%s0 + $0xb8] sm:$0xf]
  %v95 = vld [vmem:[%s0 + $0xbc] sm:$0xf]
  %v96 = vld [vmem:[%s0 + $0xc0] sm:$0xf]
  %v97 = vld [vmem:[%s0 + $0xc4] sm:$0xf]
  %v98 = vld [vmem:[%s0 + $0xc8] sm:$0xf]
  %v99 = vld [vmem:[%s0 + $0xcc] sm:$0xf]
  %v100 = vld [vmem:[%s0 + $0xd0] sm:$0xf]
  %v101 = vld [vmem:[%s0 + $0xd4] sm:$0xf]
  %v102 = vld [vmem:[%s0 + $0xd8] sm:$0xf]
  %v103 = vld [vmem:[%s0 + $0xdc] sm:$0xf]
  %v104 = vld [vmem:[%s0 + $0xe0] sm:$0xf]
  %v105 = vld [vmem:[%s0 + $0xe4] sm:$0xf]
  %v106 = vld [vmem:[%s0 + $0xe8] sm:$0xf]
  %v107 = vld [vmem:[%s0 + $0xec] sm:$0xf]
  %v108 = vld [vmem:[%s0 + $0xf0] sm:$0xf]
  %v109 = vld [vmem:[%s0 + $0xf4] sm:$0xf]
  %v110 = vld [vmem:[%s0 + $0xf8] sm:$0xf]
  %v111 = vld [vmem:[%s0 + $0xfc] sm:$0xf]
  %v112 = vld [vmem:[%s1] sm:$0x3]
  %v177 = vunpack.c.l.b16 %v48
  %v178 = vunpack.c.l.b16 %v49
  %v179 = vunpack.c.l.b16 %v50
  %v180 = vunpack.c.l.b16 %v51
  %v181 = vunpack.c.l.b16 %v52
  %v182 = vunpack.c.l.b16 %v53
  %v183 = vunpack.c.l.b16 %v54
  %v184 = vunpack.c.l.b16 %v55
  %v185 = vunpack.c.l.b16 %v56
  %v186 = vunpack.c.l.b16 %v57
  %v187 = vunpack.c.l.b16 %v58
  %v188 = vunpack.c.l.b16 %v59
  %v189 = vunpack.c.l.b16 %v60
  %v190 = vunpack.c.l.b16 %v61
  %v191 = vunpack.c.l.b16 %v62
  %v192 = vunpack.c.l.b16 %v63
  %v193 = vunpack.c.l.b16 %v64
  %v194 = vunpack.c.l.b16 %v65
  %v195 = vunpack.c.l.b16 %v66
  %v196 = vunpack.c.l.b16 %v67
  %v197 = vunpack.c.l.b16 %v68
  %v198 = vunpack.c.l.b16 %v69
  %v199 = vunpack.c.l.b16 %v70
  %v200 = vunpack.c.l.b16 %v71
  %v201 = vunpack.c.l.b16 %v72
  %v202 = vunpack.c.l.b16 %v73
  %v203 = vunpack.c.l.b16 %v74
  %v204 = vunpack.c.l.b16 %v75
  %v205 = vunpack.c.l.b16 %v76
  %v206 = vunpack.c.l.b16 %v77
  %v207 = vunpack.c.l.b16 %v78
  %v208 = vunpack.c.l.b16 %v79
  %v209 = vunpack.c.l.b16 %v80
  %v210 = vunpack.c.l.b16 %v81
  %v211 = vunpack.c.l.b16 %v82
  %v212 = vunpack.c.l.b16 %v83
  %v213 = vunpack.c.l.b16 %v84
  %v214 = vunpack.c.l.b16 %v85
  %v215 = vunpack.c.l.b16 %v86
  %v216 = vunpack.c.l.b16 %v87
  %v217 = vunpack.c.l.b16 %v88
  %v218 = vunpack.c.l.b16 %v89
  %v219 = vunpack.c.l.b16 %v90
  %v220 = vunpack.c.l.b16 %v91
  %v221 = vunpack.c.l.b16 %v92
  %v222 = vunpack.c.l.b16 %v93
  %v223 = vunpack.c.l.b16 %v94
  %v224 = vunpack.c.l.b16 %v95
  %v225 = vunpack.c.l.b16 %v96
  %v226 = vunpack.c.l.b16 %v97
  %v227 = vunpack.c.l.b16 %v98
  %v228 = vunpack.c.l.b16 %v99
  %v229 = vunpack.c.l.b16 %v100
  %v230 = vunpack.c.l.b16 %v101
  %v231 = vunpack.c.l.b16 %v102
  %v232 = vunpack.c.l.b16 %v103
  %v233 = vunpack.c.l.b16 %v104
  %v234 = vunpack.c.l.b16 %v105
  %v235 = vunpack.c.l.b16 %v106
  %v236 = vunpack.c.l.b16 %v107
  %v237 = vunpack.c.l.b16 %v108
  %v238 = vunpack.c.l.b16 %v109
  %v239 = vunpack.c.l.b16 %v110
  %v240 = vunpack.c.l.b16 %v111
  %v241 = vpack.c.b16 %v178, %v177
  %v242 = vpack.c.b16 %v180, %v179
  %v243 = vpack.c.b16 %v182, %v181
  %v244 = vpack.c.b16 %v184, %v183
  %v245 = vpack.c.b16 %v186, %v185
  %v246 = vpack.c.b16 %v188, %v187
  %v247 = vpack.c.b16 %v190, %v189
  %v248 = vpack.c.b16 %v192, %v191
  %v249 = vpack.c.b16 %v194, %v193
  %v250 = vpack.c.b16 %v196, %v195
  %v251 = vpack.c.b16 %v198, %v197
  %v252 = vpack.c.b16 %v200, %v199
  %v253 = vpack.c.b16 %v202, %v201
  %v254 = vpack.c.b16 %v204, %v203
  %v255 = vpack.c.b16 %v206, %v205
  %v256 = vpack.c.b16 %v208, %v207
  %v257 = vpack.c.b16 %v210, %v209
  %v258 = vpack.c.b16 %v212, %v211
  %v259 = vpack.c.b16 %v214, %v213
  %v260 = vpack.c.b16 %v216, %v215
  %v261 = vpack.c.b16 %v218, %v217
  %v262 = vpack.c.b16 %v220, %v219
  %v263 = vpack.c.b16 %v222, %v221
  %v264 = vpack.c.b16 %v224, %v223
  %v265 = vpack.c.b16 %v226, %v225
  %v266 = vpack.c.b16 %v228, %v227
  %v267 = vpack.c.b16 %v230, %v229
  %v268 = vpack.c.b16 %v232, %v231
  %v269 = vpack.c.b16 %v234, %v233
  %v270 = vpack.c.b16 %v236, %v235
  %v271 = vpack.c.b16 %v238, %v237
  %v272 = vpack.c.b16 %v240, %v239
  %vm273 = vcmask 31744
  %v275 = vsel %vm273, %v241, 0
  %v278 = vsel %vm273, %v242, 0
  %v281 = vsel %vm273, %v243, 0
  %v284 = vsel %vm273, %v244, 0
  %v287 = vsel %vm273, %v245, 0
  %v290 = vsel %vm273, %v246, 0
  %v293 = vsel %vm273, %v247, 0
  %v296 = vsel %vm273, %v248, 0
  %v299 = vsel %vm273, %v249, 0
  %v302 = vsel %vm273, %v250, 0
  %v305 = vsel %vm273, %v251, 0
  %v308 = vsel %vm273, %v252, 0
  %v311 = vsel %vm273, %v253, 0
  %v314 = vsel %vm273, %v254, 0
  %v317 = vsel %vm273, %v255, 0
  %v320 = vsel %vm273, %v256, 0
  %v323 = vsel %vm273, %v257, 0
  %v326 = vsel %vm273, %v258, 0
  %v329 = vsel %vm273, %v259, 0
  %v332 = vsel %vm273, %v260, 0
  %v335 = vsel %vm273, %v261, 0
  %v338 = vsel %vm273, %v262, 0
  %v341 = vsel %vm273, %v263, 0
  %v344 = vsel %vm273, %v264, 0
  %v347 = vsel %vm273, %v265, 0
  %v350 = vsel %vm273, %v266, 0
  %v353 = vsel %vm273, %v267, 0
  %v356 = vsel %vm273, %v268, 0
  %v359 = vsel %vm273, %v269, 0
  %v362 = vsel %vm273, %v270, 0
  %v365 = vsel %vm273, %v271, 0
  %v368 = vsel %vm273, %v272, 0
  %vm370 = vcmask 1041408
  %v372 = vsel %vm370, %v112, 0
  %374 = vmatprep.subr.bf16.mxu0 0
  %375 = vmatpush1.bf16.msra.mxu0 0
  %376 = vmatprep.subr.bf16.mxu0 0
  %377 = vmatpush1.bf16.msra.mxu0 0
  %378 = vmatprep.subr.bf16.mxu0 0
  %379 = vmatpush1.bf16.msra.mxu0 0
  %380 = vmatprep.subr.bf16.mxu0 0
  %381 = vmatpush1.bf16.msra.mxu0 0
  %382 = vmatprep.subr.bf16.mxu0 0
  %383 = vmatpush1.bf16.msra.mxu0 0
  %384 = vmatprep.subr.bf16.mxu0 0
  %385 = vmatpush1.bf16.msra.mxu0 0
  %386 = vmatprep.subr.bf16.mxu0 0
  %387 = vmatpush1.bf16.msra.mxu0 0
  %388 = vmatprep.subr.bf16.mxu0 0
  %389 = vmatpush1.bf16.msra.mxu0 %v372
  %390 = vmatprep.subr.bf16.mxu0 0
  %391 = vmatpush2.bf16.msra.mxu0 0
  %392 = vmatprep.subr.bf16.mxu0 0
  %393 = vmatpush2.bf16.msra.mxu0 0
  %394 = vmatprep.subr.bf16.mxu0 0
  %395 = vmatpush2.bf16.msra.mxu0 0
  %396 = vmatprep.subr.bf16.mxu0 0
  %397 = vmatpush2.bf16.msra.mxu0 0
  %398 = vmatprep.subr.bf16.mxu0 0
  %399 = vmatpush2.bf16.msra.mxu0 0
  %400 = vmatprep.subr.bf16.mxu0 0
  %401 = vmatpush2.bf16.msra.mxu0 0
  %402 = vmatprep.subr.bf16.mxu0 0
  %403 = vmatpush2.bf16.msra.mxu0 0
  %404 = vmatprep.subr.bf16.mxu0 0
  %405 = vmatpush2.bf16.msra.mxu0 0
  %406 = vmatprep.mubr.bf16.mxu0 0
  %407 = vmatmul.mubr.bf16.gmra.mxu0 %v275
  %v408 = vpop.f32.mrf.mxu0
  %v409 = vadd.f32 0.0, %v408
  %v410 = vpop.f32.mrf.mxu0
  %v411 = vpop.f32.mrf.mxu0
  %v412 = vadd.f32 0.0, %v411
  %v413 = vpop.f32.mrf.mxu0
  %414 = vmatprep.mubr.bf16.mxu0 0
  %415 = vmatmul.mubr.bf16.gmra.mxu0 %v278
  %v416 = vpop.f32.mrf.mxu0
  %v417 = vadd.f32 0.0, %v416
  %v418 = vpop.f32.mrf.mxu0
  %v419 = vpop.f32.mrf.mxu0
  %v420 = vadd.f32 0.0, %v419
  %v421 = vpop.f32.mrf.mxu0
  %422 = vmatprep.mubr.bf16.mxu0 0
  %423 = vmatmul.mubr.bf16.gmra.mxu0 %v281
  %v424 = vpop.f32.mrf.mxu0
  %v425 = vadd.f32 0.0, %v424
  %v426 = vpop.f32.mrf.mxu0
  %v427 = vpop.f32.mrf.mxu0
  %v428 = vadd.f32 0.0, %v427
  %v429 = vpop.f32.mrf.mxu0
  %430 = vmatprep.mubr.bf16.mxu0 0
  %431 = vmatmul.mubr.bf16.gmra.mxu0 %v284
  %v432 = vpop.f32.mrf.mxu0
  %v433 = vadd.f32 0.0, %v432
  %v434 = vpop.f32.mrf.mxu0
  %v435 = vpop.f32.mrf.mxu0
  %v436 = vadd.f32 0.0, %v435
  %v437 = vpop.f32.mrf.mxu0
  %438 = vmatprep.mubr.bf16.mxu0 0
  %439 = vmatmul.mubr.bf16.gmra.mxu0 %v287
  %v440 = vpop.f32.mrf.mxu0
  %v441 = vadd.f32 0.0, %v440
  %v442 = vpop.f32.mrf.mxu0
  %v443 = vpop.f32.mrf.mxu0
  %v444 = vadd.f32 0.0, %v443
  %v445 = vpop.f32.mrf.mxu0
  %446 = vmatprep.mubr.bf16.mxu0 0
  %447 = vmatmul.mubr.bf16.gmra.mxu0 %v290
  %v448 = vpop.f32.mrf.mxu0
  %v449 = vadd.f32 0.0, %v448
  %v450 = vpop.f32.mrf.mxu0
  %v451 = vpop.f32.mrf.mxu0
  %v452 = vadd.f32 0.0, %v451
  %v453 = vpop.f32.mrf.mxu0
  %454 = vmatprep.mubr.bf16.mxu0 0
  %455 = vmatmul.mubr.bf16.gmra.mxu0 %v293
  %v456 = vpop.f32.mrf.mxu0
  %v457 = vadd.f32 0.0, %v456
  %v458 = vpop.f32.mrf.mxu0
  %v459 = vpop.f32.mrf.mxu0
  %v460 = vadd.f32 0.0, %v459
  %v461 = vpop.f32.mrf.mxu0
  %462 = vmatprep.mubr.bf16.mxu0 0
  %463 = vmatmul.mubr.bf16.gmra.mxu0 %v296
  %v464 = vpop.f32.mrf.mxu0
  %v465 = vadd.f32 0.0, %v464
  %v466 = vpop.f32.mrf.mxu0
  %v467 = vpop.f32.mrf.mxu0
  %v468 = vadd.f32 0.0, %v467
  %v469 = vpop.f32.mrf.mxu0
  %470 = vmatprep.mubr.bf16.mxu0 0
  %471 = vmatmul.mubr.bf16.gmra.mxu0 %v299
  %v472 = vpop.f32.mrf.mxu0
  %v473 = vadd.f32 0.0, %v472
  %v474 = vpop.f32.mrf.mxu0
  %v475 = vpop.f32.mrf.mxu0
  %v476 = vadd.f32 0.0, %v475
  %v477 = vpop.f32.mrf.mxu0
  %478 = vmatprep.mubr.bf16.mxu0 0
  %479 = vmatmul.mubr.bf16.gmra.mxu0 %v302
  %v480 = vpop.f32.mrf.mxu0
  %v481 = vadd.f32 0.0, %v480
  %v482 = vpop.f32.mrf.mxu0
  %v483 = vpop.f32.mrf.mxu0
  %v484 = vadd.f32 0.0, %v483
  %v485 = vpop.f32.mrf.mxu0
  %486 = vmatprep.mubr.bf16.mxu0 0
  %487 = vmatmul.mubr.bf16.gmra.mxu0 %v305
  %v488 = vpop.f32.mrf.mxu0
  %v489 = vadd.f32 0.0, %v488
  %v490 = vpop.f32.mrf.mxu0
  %v491 = vpop.f32.mrf.mxu0
  %v492 = vadd.f32 0.0, %v491
  %v493 = vpop.f32.mrf.mxu0
  %494 = vmatprep.mubr.bf16.mxu0 0
  %495 = vmatmul.mubr.bf16.gmra.mxu0 %v308
  %v496 = vpop.f32.mrf.mxu0
  %v497 = vadd.f32 0.0, %v496
  %v498 = vpop.f32.mrf.mxu0
  %v499 = vpop.f32.mrf.mxu0
  %v500 = vadd.f32 0.0, %v499
  %v501 = vpop.f32.mrf.mxu0
  %502 = vmatprep.mubr.bf16.mxu0 0
  %503 = vmatmul.mubr.bf16.gmra.mxu0 %v311
  %v504 = vpop.f32.mrf.mxu0
  %v505 = vadd.f32 0.0, %v504
  %v506 = vpop.f32.mrf.mxu0
  %v507 = vpop.f32.mrf.mxu0
  %v508 = vadd.f32 0.0, %v507
  %v509 = vpop.f32.mrf.mxu0
  %510 = vmatprep.mubr.bf16.mxu0 0
  %511 = vmatmul.mubr.bf16.gmra.mxu0 %v314
  %v512 = vpop.f32.mrf.mxu0
  %v513 = vadd.f32 0.0, %v512
  %v514 = vpop.f32.mrf.mxu0
  %v515 = vpop.f32.mrf.mxu0
  %v516 = vadd.f32 0.0, %v515
  %v517 = vpop.f32.mrf.mxu0
  %518 = vmatprep.mubr.bf16.mxu0 0
  %519 = vmatmul.mubr.bf16.gmra.mxu0 %v317
  %v520 = vpop.f32.mrf.mxu0
  %v521 = vadd.f32 0.0, %v520
  %v522 = vpop.f32.mrf.mxu0
  %v523 = vpop.f32.mrf.mxu0
  %v524 = vadd.f32 0.0, %v523
  %v525 = vpop.f32.mrf.mxu0
  %526 = vmatprep.mubr.bf16.mxu0 0
  %527 = vmatmul.mubr.bf16.gmra.mxu0 %v320
  %v528 = vpop.f32.mrf.mxu0
  %v529 = vadd.f32 0.0, %v528
  %v530 = vpop.f32.mrf.mxu0
  %v531 = vpop.f32.mrf.mxu0
  %v532 = vadd.f32 0.0, %v531
  %v533 = vpop.f32.mrf.mxu0
  %534 = vmatprep.mubr.bf16.mxu0 0
  %535 = vmatmul.mubr.bf16.gmra.mxu0 %v323
  %v536 = vpop.f32.mrf.mxu0
  %v537 = vadd.f32 0.0, %v536
  %v538 = vpop.f32.mrf.mxu0
  %v539 = vpop.f32.mrf.mxu0
  %v540 = vadd.f32 0.0, %v539
  %v541 = vpop.f32.mrf.mxu0
  %542 = vmatprep.mubr.bf16.mxu0 0
  %543 = vmatmul.mubr.bf16.gmra.mxu0 %v326
  %v544 = vpop.f32.mrf.mxu0
  %v545 = vadd.f32 0.0, %v544
  %v546 = vpop.f32.mrf.mxu0
  %v547 = vpop.f32.mrf.mxu0
  %v548 = vadd.f32 0.0, %v547
  %v549 = vpop.f32.mrf.mxu0
  %550 = vmatprep.mubr.bf16.mxu0 0
  %551 = vmatmul.mubr.bf16.gmra.mxu0 %v329
  %v552 = vpop.f32.mrf.mxu0
  %v553 = vadd.f32 0.0, %v552
  %v554 = vpop.f32.mrf.mxu0
  %v555 = vpop.f32.mrf.mxu0
  %v556 = vadd.f32 0.0, %v555
  %v557 = vpop.f32.mrf.mxu0
  %558 = vmatprep.mubr.bf16.mxu0 0
  %559 = vmatmul.mubr.bf16.gmra.mxu0 %v332
  %v560 = vpop.f32.mrf.mxu0
  %v561 = vadd.f32 0.0, %v560
  %v562 = vpop.f32.mrf.mxu0
  %v563 = vpop.f32.mrf.mxu0
  %v564 = vadd.f32 0.0, %v563
  %v565 = vpop.f32.mrf.mxu0
  %566 = vmatprep.mubr.bf16.mxu0 0
  %567 = vmatmul.mubr.bf16.gmra.mxu0 %v335
  %v568 = vpop.f32.mrf.mxu0
  %v569 = vadd.f32 0.0, %v568
  %v570 = vpop.f32.mrf.mxu0
  %v571 = vpop.f32.mrf.mxu0
  %v572 = vadd.f32 0.0, %v571
  %v573 = vpop.f32.mrf.mxu0
  %574 = vmatprep.mubr.bf16.mxu0 0
  %575 = vmatmul.mubr.bf16.gmra.mxu0 %v338
  %v576 = vpop.f32.mrf.mxu0
  %v577 = vadd.f32 0.0, %v576
  %v578 = vpop.f32.mrf.mxu0
  %v579 = vpop.f32.mrf.mxu0
  %v580 = vadd.f32 0.0, %v579
  %v581 = vpop.f32.mrf.mxu0
  %582 = vmatprep.mubr.bf16.mxu0 0
  %583 = vmatmul.mubr.bf16.gmra.mxu0 %v341
  %v584 = vpop.f32.mrf.mxu0
  %v585 = vadd.f32 0.0, %v584
  %v586 = vpop.f32.mrf.mxu0
  %v587 = vpop.f32.mrf.mxu0
  %v588 = vadd.f32 0.0, %v587
  %v589 = vpop.f32.mrf.mxu0
  %590 = vmatprep.mubr.bf16.mxu0 0
  %591 = vmatmul.mubr.bf16.gmra.mxu0 %v344
  %v592 = vpop.f32.mrf.mxu0
  %v593 = vadd.f32 0.0, %v592
  %v594 = vpop.f32.mrf.mxu0
  %v595 = vpop.f32.mrf.mxu0
  %v596 = vadd.f32 0.0, %v595
  %v597 = vpop.f32.mrf.mxu0
  %598 = vmatprep.mubr.bf16.mxu0 0
  %599 = vmatmul.mubr.bf16.gmra.mxu0 %v347
  %v600 = vpop.f32.mrf.mxu0
  %v601 = vadd.f32 0.0, %v600
  %v602 = vpop.f32.mrf.mxu0
  %v603 = vpop.f32.mrf.mxu0
  %v604 = vadd.f32 0.0, %v603
  %v605 = vpop.f32.mrf.mxu0
  %606 = vmatprep.mubr.bf16.mxu0 0
  %607 = vmatmul.mubr.bf16.gmra.mxu0 %v350
  %v608 = vpop.f32.mrf.mxu0
  %v609 = vadd.f32 0.0, %v608
  %v610 = vpop.f32.mrf.mxu0
  %v611 = vpop.f32.mrf.mxu0
  %v612 = vadd.f32 0.0, %v611
  %v613 = vpop.f32.mrf.mxu0
  %614 = vmatprep.mubr.bf16.mxu0 0
  %615 = vmatmul.mubr.bf16.gmra.mxu0 %v353
  %v616 = vpop.f32.mrf.mxu0
  %v617 = vadd.f32 0.0, %v616
  %v618 = vpop.f32.mrf.mxu0
  %v619 = vpop.f32.mrf.mxu0
  %v620 = vadd.f32 0.0, %v619
  %v621 = vpop.f32.mrf.mxu0
  %622 = vmatprep.mubr.bf16.mxu0 0
  %623 = vmatmul.mubr.bf16.gmra.mxu0 %v356
  %v624 = vpop.f32.mrf.mxu0
  %v625 = vadd.f32 0.0, %v624
  %v626 = vpop.f32.mrf.mxu0
  %v627 = vpop.f32.mrf.mxu0
  %v628 = vadd.f32 0.0, %v627
  %v629 = vpop.f32.mrf.mxu0
  %630 = vmatprep.mubr.bf16.mxu0 0
  %631 = vmatmul.mubr.bf16.gmra.mxu0 %v359
  %v632 = vpop.f32.mrf.mxu0
  %v633 = vadd.f32 0.0, %v632
  %v634 = vpop.f32.mrf.mxu0
  %v635 = vpop.f32.mrf.mxu0
  %v636 = vadd.f32 0.0, %v635
  %v637 = vpop.f32.mrf.mxu0
  %638 = vmatprep.mubr.bf16.mxu0 0
  %639 = vmatmul.mubr.bf16.gmra.mxu0 %v362
  %v640 = vpop.f32.mrf.mxu0
  %v641 = vadd.f32 0.0, %v640
  %v642 = vpop.f32.mrf.mxu0
  %v643 = vpop.f32.mrf.mxu0
  %v644 = vadd.f32 0.0, %v643
  %v645 = vpop.f32.mrf.mxu0
  %646 = vmatprep.mubr.bf16.mxu0 0
  %647 = vmatmul.mubr.bf16.gmra.mxu0 %v365
  %v648 = vpop.f32.mrf.mxu0
  %v649 = vadd.f32 0.0, %v648
  %v650 = vpop.f32.mrf.mxu0
  %v651 = vpop.f32.mrf.mxu0
  %v652 = vadd.f32 0.0, %v651
  %v653 = vpop.f32.mrf.mxu0
  %654 = vmatprep.mubr.bf16.mxu0 0
  %655 = vmatmul.mubr.bf16.gmra.mxu0 %v368
  %v656 = vpop.f32.mrf.mxu0
  %v657 = vadd.f32 0.0, %v656
  %v658 = vpop.f32.mrf.mxu0
  %v659 = vpop.f32.mrf.mxu0
  %v660 = vadd.f32 0.0, %v659
  %v661 = vpop.f32.mrf.mxu0
  %662 = vdwg.mxu0
  %v663 = vld [vmem:[%s2] sm:$0x1]
  %v664 = vld [vmem:[%s3] sm:$0x1]
  %v665 = vadd.f32 %v409, %v412
  %v666 = vadd.f32 %v665, %v417
  %v667 = vadd.f32 %v666, %v420
  %v668 = vadd.f32 %v667, %v425
  %v669 = vadd.f32 %v668, %v428
  %v670 = vadd.f32 %v669, %v433
  %v671 = vadd.f32 %v670, %v436
  %v672 = vadd.f32 %v671, %v441
  %v673 = vadd.f32 %v672, %v444
  %v674 = vadd.f32 %v673, %v449
  %v675 = vadd.f32 %v674, %v452
  %v676 = vadd.f32 %v675, %v457
  %v677 = vadd.f32 %v676, %v460
  %v678 = vadd.f32 %v677, %v465
  %v679 = vadd.f32 %v678, %v468
  %v680 = vadd.f32 %v679, %v473
  %v681 = vadd.f32 %v680, %v476
  %v682 = vadd.f32 %v681, %v481
  %v683 = vadd.f32 %v682, %v484
  %v684 = vadd.f32 %v683, %v489
  %v685 = vadd.f32 %v684, %v492
  %v686 = vadd.f32 %v685, %v497
  %v687 = vadd.f32 %v686, %v500
  %v688 = vadd.f32 %v687, %v505
  %v689 = vadd.f32 %v688, %v508
  %v690 = vadd.f32 %v689, %v513
  %v691 = vadd.f32 %v690, %v516
  %v692 = vadd.f32 %v691, %v521
  %v693 = vadd.f32 %v692, %v524
  %v694 = vadd.f32 %v693, %v529
  %v695 = vadd.f32 %v694, %v532
  %v696 = vadd.f32 %v695, %v537
  %v697 = vadd.f32 %v696, %v540
  %v698 = vadd.f32 %v697, %v545
  %v699 = vadd.f32 %v698, %v548
  %v700 = vadd.f32 %v699, %v553
  %v701 = vadd.f32 %v700, %v556
  %v702 = vadd.f32 %v701, %v561
  %v703 = vadd.f32 %v702, %v564
  %v704 = vadd.f32 %v703, %v569
  %v705 = vadd.f32 %v704, %v572
  %v706 = vadd.f32 %v705, %v577
  %v707 = vadd.f32 %v706, %v580
  %v708 = vadd.f32 %v707, %v585
  %v709 = vadd.f32 %v708, %v588
  %v710 = vadd.f32 %v709, %v593
  %v711 = vadd.f32 %v710, %v596
  %v712 = vadd.f32 %v711, %v601
  %v713 = vadd.f32 %v712, %v604
  %v714 = vadd.f32 %v713, %v609
  %v715 = vadd.f32 %v714, %v612
  %v716 = vadd.f32 %v715, %v617
  %v717 = vadd.f32 %v716, %v620
  %v718 = vadd.f32 %v717, %v625
  %v719 = vadd.f32 %v718, %v628
  %v720 = vadd.f32 %v719, %v633
  %v721 = vadd.f32 %v720, %v636
  %v722 = vadd.f32 %v721, %v641
  %v723 = vadd.f32 %v722, %v644
  %v724 = vadd.f32 %v723, %v649
  %v725 = vadd.f32 %v724, %v652
  %v726 = vadd.f32 %v725, %v657
  %v727 = vadd.f32 %v726, %v660
  %v728 = vrot.slane %v727, 4
  %v729 = vadd.f32 %v727, %v728
  %v730 = vrot.slane %v729, 2
  %v731 = vadd.f32 %v729, %v730
  %v732 = vrot.slane %v731, 1
  %v733 = vadd.f32 %v731, %v732
  %v734 = vmul.f32 %v409, %v409
  %v735 = vmul.f32 %v412, %v412
  %v736 = vmul.f32 %v417, %v417
  %v737 = vmul.f32 %v420, %v420
  %v738 = vmul.f32 %v425, %v425
  %v739 = vmul.f32 %v428, %v428
  %v740 = vmul.f32 %v433, %v433
  %v741 = vmul.f32 %v436, %v436
  %v742 = vmul.f32 %v441, %v441
  %v743 = vmul.f32 %v444, %v444
  %v744 = vmul.f32 %v449, %v449
  %v745 = vmul.f32 %v452, %v452
  %v746 = vmul.f32 %v457, %v457
  %v747 = vmul.f32 %v460, %v460
  %v748 = vmul.f32 %v465, %v465
  %v749 = vmul.f32 %v468, %v468
  %v750 = vmul.f32 %v473, %v473
  %v751 = vmul.f32 %v476, %v476
  %v752 = vmul.f32 %v481, %v481
  %v753 = vmul.f32 %v484, %v484
  %v754 = vmul.f32 %v489, %v489
  %v755 = vmul.f32 %v492, %v492
  %v756 = vmul.f32 %v497, %v497
  %v757 = vmul.f32 %v500, %v500
  %v758 = vmul.f32 %v505, %v505
  %v759 = vmul.f32 %v508, %v508
  %v760 = vmul.f32 %v513, %v513
  %v761 = vmul.f32 %v516, %v516
  %v762 = vmul.f32 %v521, %v521
  %v763 = vmul.f32 %v524, %v524
  %v764 = vmul.f32 %v529, %v529
  %v765 = vmul.f32 %v532, %v532
  %v766 = vmul.f32 %v537, %v537
  %v767 = vmul.f32 %v540, %v540
  %v768 = vmul.f32 %v545, %v545
  %v769 = vmul.f32 %v548, %v548
  %v770 = vmul.f32 %v553, %v553
  %v771 = vmul.f32 %v556, %v556
  %v772 = vmul.f32 %v561, %v561
  %v773 = vmul.f32 %v564, %v564
  %v774 = vmul.f32 %v569, %v569
  %v775 = vmul.f32 %v572, %v572
  %v776 = vmul.f32 %v577, %v577
  %v777 = vmul.f32 %v580, %v580
  %v778 = vmul.f32 %v585, %v585
  %v779 = vmul.f32 %v588, %v588
  %v780 = vmul.f32 %v593, %v593
  %v781 = vmul.f32 %v596, %v596
  %v782 = vmul.f32 %v601, %v601
  %v783 = vmul.f32 %v604, %v604
  %v784 = vmul.f32 %v609, %v609
  %v785 = vmul.f32 %v612, %v612
  %v786 = vmul.f32 %v617, %v617
  %v787 = vmul.f32 %v620, %v620
  %v788 = vmul.f32 %v625, %v625
  %v789 = vmul.f32 %v628, %v628
  %v790 = vmul.f32 %v633, %v633
  %v791 = vmul.f32 %v636, %v636
  %v792 = vmul.f32 %v641, %v641
  %v793 = vmul.f32 %v644, %v644
  %v794 = vmul.f32 %v649, %v649
  %v795 = vmul.f32 %v652, %v652
  %v796 = vmul.f32 %v657, %v657
  %v797 = vmul.f32 %v660, %v660
  %v798 = vadd.f32 %v734, %v735
  %v799 = vadd.f32 %v798, %v736
  %v800 = vadd.f32 %v799, %v737
  %v801 = vadd.f32 %v800, %v738
  %v802 = vadd.f32 %v801, %v739
  %v803 = vadd.f32 %v802, %v740
  %v804 = vadd.f32 %v803, %v741
  %v805 = vadd.f32 %v804, %v742
  %v806 = vadd.f32 %v805, %v743
  %v807 = vadd.f32 %v806, %v744
  %v808 = vadd.f32 %v807, %v745
  %v809 = vadd.f32 %v808, %v746
  %v810 = vadd.f32 %v809, %v747
  %v811 = vadd.f32 %v810, %v748
  %v812 = vadd.f32 %v811, %v749
  %v813 = vadd.f32 %v812, %v750
  %v814 = vadd.f32 %v813, %v751
  %v815 = vadd.f32 %v814, %v752
  %v816 = vadd.f32 %v815, %v753
  %v817 = vadd.f32 %v816, %v754
  %v818 = vadd.f32 %v817, %v755
  %v819 = vadd.f32 %v818, %v756
  %v820 = vadd.f32 %v819, %v757
  %v821 = vadd.f32 %v820, %v758
  %v822 = vadd.f32 %v821, %v759
  %v823 = vadd.f32 %v822, %v760
  %v824 = vadd.f32 %v823, %v761
  %v825 = vadd.f32 %v824, %v762
  %v826 = vadd.f32 %v825, %v763
  %v827 = vadd.f32 %v826, %v764
  %v828 = vadd.f32 %v827, %v765
  %v829 = vadd.f32 %v828, %v766
  %v830 = vadd.f32 %v829, %v767
  %v831 = vadd.f32 %v830, %v768
  %v832 = vadd.f32 %v831, %v769
  %v833 = vadd.f32 %v832, %v770
  %v834 = vadd.f32 %v833, %v771
  %v835 = vadd.f32 %v834, %v772
  %v836 = vadd.f32 %v835, %v773
  %v837 = vadd.f32 %v836, %v774
  %v838 = vadd.f32 %v837, %v775
  %v839 = vadd.f32 %v838, %v776
  %v840 = vadd.f32 %v839, %v777
  %v841 = vadd.f32 %v840, %v778
  %v842 = vadd.f32 %v841, %v779
  %v843 = vadd.f32 %v842, %v780
  %v844 = vadd.f32 %v843, %v781
  %v845 = vadd.f32 %v844, %v782
  %v846 = vadd.f32 %v845, %v783
  %v847 = vadd.f32 %v846, %v784
  %v848 = vadd.f32 %v847, %v785
  %v849 = vadd.f32 %v848, %v786
  %v850 = vadd.f32 %v849, %v787
  %v851 = vadd.f32 %v850, %v788
  %v852 = vadd.f32 %v851, %v789
  %v853 = vadd.f32 %v852, %v790
  %v854 = vadd.f32 %v853, %v791
  %v855 = vadd.f32 %v854, %v792
  %v856 = vadd.f32 %v855, %v793
  %v857 = vadd.f32 %v856, %v794
  %v858 = vadd.f32 %v857, %v795
  %v859 = vadd.f32 %v858, %v796
  %v860 = vadd.f32 %v859, %v797
  %v861 = vrot.slane %v860, 4
  %v862 = vadd.f32 %v860, %v861
  %v863 = vrot.slane %v862, 2
  %v864 = vadd.f32 %v862, %v863
  %v865 = vrot.slane %v864, 1
  %v866 = vadd.f32 %v864, %v865
  %v867 = vmul.f32 %v733, 0.001953125
  %v868 = vmul.f32 %v866, 0.001953125
  %v869 = vmul.f32 %v867, %v867
  %v870 = vsub.f32 %v868, %v869
  %v871 = vmax.f32 %v870, 0.0
  %v872 = vadd.f32 %v871, 1e-05
  %v873 = vrsqrt.pop %v872
  %v874 = vmul.f32 %v873, %v663
  %v875 = vlaneseq
  %v876 = vshrl.u32 %v875, 7
  %v877 = vsub.s32 0, %v876
  %v878 = vrot.slane %v874, %v877
  %v879 = vmul.f32 %v409, %v878
  %v880 = vmul.f32 %v412, %v878
  %v881 = vmul.f32 %v417, %v878
  %v882 = vmul.f32 %v420, %v878
  %v883 = vmul.f32 %v425, %v878
  %v884 = vmul.f32 %v428, %v878
  %v885 = vmul.f32 %v433, %v878
  %v886 = vmul.f32 %v436, %v878
  %v887 = vmul.f32 %v441, %v878
  %v888 = vmul.f32 %v444, %v878
  %v889 = vmul.f32 %v449, %v878
  %v890 = vmul.f32 %v452, %v878
  %v891 = vmul.f32 %v457, %v878
  %v892 = vmul.f32 %v460, %v878
  %v893 = vmul.f32 %v465, %v878
  %v894 = vmul.f32 %v468, %v878
  %v895 = vmul.f32 %v473, %v878
  %v896 = vmul.f32 %v476, %v878
  %v897 = vmul.f32 %v481, %v878
  %v898 = vmul.f32 %v484, %v878
  %v899 = vmul.f32 %v489, %v878
  %v900 = vmul.f32 %v492, %v878
  %v901 = vmul.f32 %v497, %v878
  %v902 = vmul.f32 %v500, %v878
  %v903 = vmul.f32 %v505, %v878
  %v904 = vmul.f32 %v508, %v878
  %v905 = vmul.f32 %v513, %v878
  %v906 = vmul.f32 %v516, %v878
  %v907 = vmul.f32 %v521, %v878
  %v908 = vmul.f32 %v524, %v878
  %v909 = vmul.f32 %v529, %v878
  %v910 = vmul.f32 %v532, %v878
  %v911 = vmul.f32 %v537, %v878
  %v912 = vmul.f32 %v540, %v878
  %v913 = vmul.f32 %v545, %v878
  %v914 = vmul.f32 %v548, %v878
  %v915 = vmul.f32 %v553, %v878
  %v916 = vmul.f32 %v556, %v878
  %v917 = vmul.f32 %v561, %v878
  %v918 = vmul.f32 %v564, %v878
  %v919 = vmul.f32 %v569, %v878
  %v920 = vmul.f32 %v572, %v878
  %v921 = vmul.f32 %v577, %v878
  %v922 = vmul.f32 %v580, %v878
  %v923 = vmul.f32 %v585, %v878
  %v924 = vmul.f32 %v588, %v878
  %v925 = vmul.f32 %v593, %v878
  %v926 = vmul.f32 %v596, %v878
  %v927 = vmul.f32 %v601, %v878
  %v928 = vmul.f32 %v604, %v878
  %v929 = vmul.f32 %v609, %v878
  %v930 = vmul.f32 %v612, %v878
  %v931 = vmul.f32 %v617, %v878
  %v932 = vmul.f32 %v620, %v878
  %v933 = vmul.f32 %v625, %v878
  %v934 = vmul.f32 %v628, %v878
  %v935 = vmul.f32 %v633, %v878
  %v936 = vmul.f32 %v636, %v878
  %v937 = vmul.f32 %v641, %v878
  %v938 = vmul.f32 %v644, %v878
  %v939 = vmul.f32 %v649, %v878
  %v940 = vmul.f32 %v652, %v878
  %v941 = vmul.f32 %v657, %v878
  %v942 = vmul.f32 %v660, %v878
  %v943 = vmul.f32 %v867, %v874
  %v944 = vsub.f32 %v664, %v943
  %v946 = vlaneseq
  %v947 = vshrl.u32 %v946, 7
  %v948 = vsub.s32 0, %v947
  %v949 = vrot.slane %v944, %v948
  %v951 = vadd.f32 %v879, %v949
  %v952 = vadd.f32 %v880, %v949
  %v953 = vadd.f32 %v881, %v949
  %v954 = vadd.f32 %v882, %v949
  %v955 = vadd.f32 %v883, %v949
  %v956 = vadd.f32 %v884, %v949
  %v957 = vadd.f32 %v885, %v949
  %v958 = vadd.f32 %v886, %v949
  %v959 = vadd.f32 %v887, %v949
  %v960 = vadd.f32 %v888, %v949
  %v961 = vadd.f32 %v889, %v949
  %v962 = vadd.f32 %v890, %v949
  %v963 = vadd.f32 %v891, %v949
  %v964 = vadd.f32 %v892, %v949
  %v965 = vadd.f32 %v893, %v949
  %v966 = vadd.f32 %v894, %v949
  %v967 = vadd.f32 %v895, %v949
  %v968 = vadd.f32 %v896, %v949
  %v969 = vadd.f32 %v897, %v949
  %v970 = vadd.f32 %v898, %v949
  %v971 = vadd.f32 %v899, %v949
  %v972 = vadd.f32 %v900, %v949
  %v973 = vadd.f32 %v901, %v949
  %v974 = vadd.f32 %v902, %v949
  %v975 = vadd.f32 %v903, %v949
  %v976 = vadd.f32 %v904, %v949
  %v977 = vadd.f32 %v905, %v949
  %v978 = vadd.f32 %v906, %v949
  %v979 = vadd.f32 %v907, %v949
  %v980 = vadd.f32 %v908, %v949
  %v981 = vadd.f32 %v909, %v949
  %v982 = vadd.f32 %v910, %v949
  %v983 = vadd.f32 %v911, %v949
  %v984 = vadd.f32 %v912, %v949
  %v985 = vadd.f32 %v913, %v949
  %v986 = vadd.f32 %v914, %v949
  %v987 = vadd.f32 %v915, %v949
  %v988 = vadd.f32 %v916, %v949
  %v989 = vadd.f32 %v917, %v949
  %v990 = vadd.f32 %v918, %v949
  %v991 = vadd.f32 %v919, %v949
  %v992 = vadd.f32 %v920, %v949
  %v993 = vadd.f32 %v921, %v949
  %v994 = vadd.f32 %v922, %v949
  %v995 = vadd.f32 %v923, %v949
  %v996 = vadd.f32 %v924, %v949
  %v997 = vadd.f32 %v925, %v949
  %v998 = vadd.f32 %v926, %v949
  %v999 = vadd.f32 %v927, %v949
  %v1000 = vadd.f32 %v928, %v949
  %v1001 = vadd.f32 %v929, %v949
  %v1002 = vadd.f32 %v930, %v949
  %v1003 = vadd.f32 %v931, %v949
  %v1004 = vadd.f32 %v932, %v949
  %v1005 = vadd.f32 %v933, %v949
  %v1006 = vadd.f32 %v934, %v949
  %v1007 = vadd.f32 %v935, %v949
  %v1008 = vadd.f32 %v936, %v949
  %v1009 = vadd.f32 %v937, %v949
  %v1010 = vadd.f32 %v938, %v949
  %v1011 = vadd.f32 %v939, %v949
  %v1012 = vadd.f32 %v940, %v949
  %v1013 = vadd.f32 %v941, %v949
  %v1014 = vadd.f32 %v942, %v949
  %vm1015 = vcmp.ge.f32.partialorder %v951, 0.0
  %vm1016 = vcmp.ge.f32.partialorder %v952, 0.0
  %vm1017 = vcmp.ge.f32.partialorder %v953, 0.0
  %vm1018 = vcmp.ge.f32.partialorder %v954, 0.0
  %vm1019 = vcmp.ge.f32.partialorder %v955, 0.0
  %vm1020 = vcmp.ge.f32.partialorder %v956, 0.0
  %vm1021 = vcmp.ge.f32.partialorder %v957, 0.0
  %vm1022 = vcmp.ge.f32.partialorder %v958, 0.0
  %vm1023 = vcmp.ge.f32.partialorder %v959, 0.0
  %vm1024 = vcmp.ge.f32.partialorder %v960, 0.0
  %vm1025 = vcmp.ge.f32.partialorder %v961, 0.0
  %vm1026 = vcmp.ge.f32.partialorder %v962, 0.0
  %vm1027 = vcmp.ge.f32.partialorder %v963, 0.0
  %vm1028 = vcmp.ge.f32.partialorder %v964, 0.0
  %vm1029 = vcmp.ge.f32.partialorder %v965, 0.0
  %vm1030 = vcmp.ge.f32.partialorder %v966, 0.0
  %vm1031 = vcmp.ge.f32.partialorder %v967, 0.0
  %vm1032 = vcmp.ge.f32.partialorder %v968, 0.0
  %vm1033 = vcmp.ge.f32.partialorder %v969, 0.0
  %vm1034 = vcmp.ge.f32.partialorder %v970, 0.0
  %vm1035 = vcmp.ge.f32.partialorder %v971, 0.0
  %vm1036 = vcmp.ge.f32.partialorder %v972, 0.0
  %vm1037 = vcmp.ge.f32.partialorder %v973, 0.0
  %vm1038 = vcmp.ge.f32.partialorder %v974, 0.0
  %vm1039 = vcmp.ge.f32.partialorder %v975, 0.0
  %vm1040 = vcmp.ge.f32.partialorder %v976, 0.0
  %vm1041 = vcmp.ge.f32.partialorder %v977, 0.0
  %vm1042 = vcmp.ge.f32.partialorder %v978, 0.0
  %vm1043 = vcmp.ge.f32.partialorder %v979, 0.0
  %vm1044 = vcmp.ge.f32.partialorder %v980, 0.0
  %vm1045 = vcmp.ge.f32.partialorder %v981, 0.0
  %vm1046 = vcmp.ge.f32.partialorder %v982, 0.0
  %vm1047 = vcmp.ge.f32.partialorder %v983, 0.0
  %vm1048 = vcmp.ge.f32.partialorder %v984, 0.0
  %vm1049 = vcmp.ge.f32.partialorder %v985, 0.0
  %vm1050 = vcmp.ge.f32.partialorder %v986, 0.0
  %vm1051 = vcmp.ge.f32.partialorder %v987, 0.0
  %vm1052 = vcmp.ge.f32.partialorder %v988, 0.0
  %vm1053 = vcmp.ge.f32.partialorder %v989, 0.0
  %vm1054 = vcmp.ge.f32.partialorder %v990, 0.0
  %vm1055 = vcmp.ge.f32.partialorder %v991, 0.0
  %vm1056 = vcmp.ge.f32.partialorder %v992, 0.0
  %vm1057 = vcmp.ge.f32.partialorder %v993, 0.0
  %vm1058 = vcmp.ge.f32.partialorder %v994, 0.0
  %vm1059 = vcmp.ge.f32.partialorder %v995, 0.0
  %vm1060 = vcmp.ge.f32.partialorder %v996, 0.0
  %vm1061 = vcmp.ge.f32.partialorder %v997, 0.0
  %vm1062 = vcmp.ge.f32.partialorder %v998, 0.0
  %vm1063 = vcmp.ge.f32.partialorder %v999, 0.0
  %vm1064 = vcmp.ge.f32.partialorder %v1000, 0.0
  %vm1065 = vcmp.ge.f32.partialorder %v1001, 0.0
  %vm1066 = vcmp.ge.f32.partialorder %v1002, 0.0
  %vm1067 = vcmp.ge.f32.partialorder %v1003, 0.0
  %vm1068 = vcmp.ge.f32.partialorder %v1004, 0.0
  %vm1069 = vcmp.ge.f32.partialorder %v1005, 0.0
  %vm1070 = vcmp.ge.f32.partialorder %v1006, 0.0
  %vm1071 = vcmp.ge.f32.partialorder %v1007, 0.0
  %vm1072 = vcmp.ge.f32.partialorder %v1008, 0.0
  %vm1073 = vcmp.ge.f32.partialorder %v1009, 0.0
  %vm1074 = vcmp.ge.f32.partialorder %v1010, 0.0
  %vm1075 = vcmp.ge.f32.partialorder %v1011, 0.0
  %vm1076 = vcmp.ge.f32.partialorder %v1012, 0.0
  %vm1077 = vcmp.ge.f32.partialorder %v1013, 0.0
  %vm1078 = vcmp.ge.f32.partialorder %v1014, 0.0
  %v1079 = vmul.f32 %v951, 0.01
  %v1080 = vmul.f32 %v952, 0.01
  %v1081 = vmul.f32 %v953, 0.01
  %v1082 = vmul.f32 %v954, 0.01
  %v1083 = vmul.f32 %v955, 0.01
  %v1084 = vmul.f32 %v956, 0.01
  %v1085 = vmul.f32 %v957, 0.01
  %v1086 = vmul.f32 %v958, 0.01
  %v1087 = vmul.f32 %v959, 0.01
  %v1088 = vmul.f32 %v960, 0.01
  %v1089 = vmul.f32 %v961, 0.01
  %v1090 = vmul.f32 %v962, 0.01
  %v1091 = vmul.f32 %v963, 0.01
  %v1092 = vmul.f32 %v964, 0.01
  %v1093 = vmul.f32 %v965, 0.01
  %v1094 = vmul.f32 %v966, 0.01
  %v1095 = vmul.f32 %v967, 0.01
  %v1096 = vmul.f32 %v968, 0.01
  %v1097 = vmul.f32 %v969, 0.01
  %v1098 = vmul.f32 %v970, 0.01
  %v1099 = vmul.f32 %v971, 0.01
  %v1100 = vmul.f32 %v972, 0.01
  %v1101 = vmul.f32 %v973, 0.01
  %v1102 = vmul.f32 %v974, 0.01
  %v1103 = vmul.f32 %v975, 0.01
  %v1104 = vmul.f32 %v976, 0.01
  %v1105 = vmul.f32 %v977, 0.01
  %v1106 = vmul.f32 %v978, 0.01
  %v1107 = vmul.f32 %v979, 0.01
  %v1108 = vmul.f32 %v980, 0.01
  %v1109 = vmul.f32 %v981, 0.01
  %v1110 = vmul.f32 %v982, 0.01
  %v1111 = vmul.f32 %v983, 0.01
  %v1112 = vmul.f32 %v984, 0.01
  %v1113 = vmul.f32 %v985, 0.01
  %v1114 = vmul.f32 %v986, 0.01
  %v1115 = vmul.f32 %v987, 0.01
  %v1116 = vmul.f32 %v988, 0.01
  %v1117 = vmul.f32 %v989, 0.01
  %v1118 = vmul.f32 %v990, 0.01
  %v1119 = vmul.f32 %v991, 0.01
  %v1120 = vmul.f32 %v992, 0.01
  %v1121 = vmul.f32 %v993, 0.01
  %v1122 = vmul.f32 %v994, 0.01
  %v1123 = vmul.f32 %v995, 0.01
  %v1124 = vmul.f32 %v996, 0.01
  %v1125 = vmul.f32 %v997, 0.01
  %v1126 = vmul.f32 %v998, 0.01
  %v1127 = vmul.f32 %v999, 0.01
  %v1128 = vmul.f32 %v1000, 0.01
  %v1129 = vmul.f32 %v1001, 0.01
  %v1130 = vmul.f32 %v1002, 0.01
  %v1131 = vmul.f32 %v1003, 0.01
  %v1132 = vmul.f32 %v1004, 0.01
  %v1133 = vmul.f32 %v1005, 0.01
  %v1134 = vmul.f32 %v1006, 0.01
  %v1135 = vmul.f32 %v1007, 0.01
  %v1136 = vmul.f32 %v1008, 0.01
  %v1137 = vmul.f32 %v1009, 0.01
  %v1138 = vmul.f32 %v1010, 0.01
  %v1139 = vmul.f32 %v1011, 0.01
  %v1140 = vmul.f32 %v1012, 0.01
  %v1141 = vmul.f32 %v1013, 0.01
  %v1142 = vmul.f32 %v1014, 0.01
  %v1143 = vsel %vm1015, %v951, %v1079
  %v1144 = vsel %vm1016, %v952, %v1080
  %v1145 = vsel %vm1017, %v953, %v1081
  %v1146 = vsel %vm1018, %v954, %v1082
  %v1147 = vsel %vm1019, %v955, %v1083
  %v1148 = vsel %vm1020, %v956, %v1084
  %v1149 = vsel %vm1021, %v957, %v1085
  %v1150 = vsel %vm1022, %v958, %v1086
  %v1151 = vsel %vm1023, %v959, %v1087
  %v1152 = vsel %vm1024, %v960, %v1088
  %v1153 = vsel %vm1025, %v961, %v1089
  %v1154 = vsel %vm1026, %v962, %v1090
  %v1155 = vsel %vm1027, %v963, %v1091
  %v1156 = vsel %vm1028, %v964, %v1092
  %v1157 = vsel %vm1029, %v965, %v1093
  %v1158 = vsel %vm1030, %v966, %v1094
  %v1159 = vsel %vm1031, %v967, %v1095
  %v1160 = vsel %vm1032, %v968, %v1096
  %v1161 = vsel %vm1033, %v969, %v1097
  %v1162 = vsel %vm1034, %v970, %v1098
  %v1163 = vsel %vm1035, %v971, %v1099
  %v1164 = vsel %vm1036, %v972, %v1100
  %v1165 = vsel %vm1037, %v973, %v1101
  %v1166 = vsel %vm1038, %v974, %v1102
  %v1167 = vsel %vm1039, %v975, %v1103
  %v1168 = vsel %vm1040, %v976, %v1104
  %v1169 = vsel %vm1041, %v977, %v1105
  %v1170 = vsel %vm1042, %v978, %v1106
  %v1171 = vsel %vm1043, %v979, %v1107
  %v1172 = vsel %vm1044, %v980, %v1108
  %v1173 = vsel %vm1045, %v981, %v1109
  %v1174 = vsel %vm1046, %v982, %v1110
  %v1175 = vsel %vm1047, %v983, %v1111
  %v1176 = vsel %vm1048, %v984, %v1112
  %v1177 = vsel %vm1049, %v985, %v1113
  %v1178 = vsel %vm1050, %v986, %v1114
  %v1179 = vsel %vm1051, %v987, %v1115
  %v1180 = vsel %vm1052, %v988, %v1116
  %v1181 = vsel %vm1053, %v989, %v1117
  %v1182 = vsel %vm1054, %v990, %v1118
  %v1183 = vsel %vm1055, %v991, %v1119
  %v1184 = vsel %vm1056, %v992, %v1120
  %v1185 = vsel %vm1057, %v993, %v1121
  %v1186 = vsel %vm1058, %v994, %v1122
  %v1187 = vsel %vm1059, %v995, %v1123
  %v1188 = vsel %vm1060, %v996, %v1124
  %v1189 = vsel %vm1061, %v997, %v1125
  %v1190 = vsel %vm1062, %v998, %v1126
  %v1191 = vsel %vm1063, %v999, %v1127
  %v1192 = vsel %vm1064, %v1000, %v1128
  %v1193 = vsel %vm1065, %v1001, %v1129
  %v1194 = vsel %vm1066, %v1002, %v1130
  %v1195 = vsel %vm1067, %v1003, %v1131
  %v1196 = vsel %vm1068, %v1004, %v1132
  %v1197 = vsel %vm1069, %v1005, %v1133
  %v1198 = vsel %vm1070, %v1006, %v1134
  %v1199 = vsel %vm1071, %v1007, %v1135
  %v1200 = vsel %vm1072, %v1008, %v1136
  %v1201 = vsel %vm1073, %v1009, %v1137
  %v1202 = vsel %vm1074, %v1010, %v1138
  %v1203 = vsel %vm1075, %v1011, %v1139
  %v1204 = vsel %vm1076, %v1012, %v1140
  %v1205 = vsel %vm1077, %v1013, %v1141
  %v1206 = vsel %vm1078, %v1014, %v1142
  %1207 = vst [vmem:[#allocation2] sm:$0xf] 0
  %1208 = vst [vmem:[#allocation2 + $0x4] sm:$0xf] 0
  %1209 = vst [vmem:[#allocation2 + $0x8] sm:$0xf] 0
  %1210 = vst [vmem:[#allocation2 + $0xc] sm:$0xf] 0
  %1211 = vst [vmem:[#allocation2 + $0x10] sm:$0xf] 0
  %1212 = vst [vmem:[#allocation2 + $0x14] sm:$0xf] 0
  %1213 = vst [vmem:[#allocation2 + $0xf0] sm:$0xf] 0
  %1214 = vst [vmem:[#allocation2 + $0xf4] sm:$0xf] 0
  %1215 = vst [vmem:[#allocation2 + $0xf8] sm:$0xf] 0
  %1216 = vst [vmem:[#allocation2 + $0xfc] sm:$0xf] 0
  %1217 = vst [vmem:[#allocation2 + $0x100] sm:$0xf] 0
  %1218 = vst [vmem:[#allocation2 + $0x104] sm:$0xf] 0
  %s1219 = scalar_lea.vmem [#allocation2], 216
  %1220 = vst [vmem:[%s1219] sm:$0xf] 0
  %1221 = vst [vmem:[%s1219 + $0x4] sm:$0xf] 0
  %1222 = vst [vmem:[%s1219 + $0x8] sm:$0xf] 0
  %1223 = vst [vmem:[%s1219 + $0xc] sm:$0xf] 0
  %1224 = vst [vmem:[%s1219 + $0x10] sm:$0xf] 0
  %1225 = vst [vmem:[%s1219 + $0x14] sm:$0xf] 0
  %1226 = vst [vmem:[%s1219 + $0xf0] sm:$0xf] 0
  %1227 = vst [vmem:[%s1219 + $0xf4] sm:$0xf] 0
  %1228 = vst [vmem:[%s1219 + $0xf8] sm:$0xf] 0
  %1229 = vst [vmem:[%s1219 + $0xfc] sm:$0xf] 0
  %1230 = vst [vmem:[%s1219 + $0x100] sm:$0xf] 0
  %1231 = vst [vmem:[%s1219 + $0x104] sm:$0xf] 0
  %s1232 = scalar_lea.vmem [#allocation2], 24
  %1233 = vst [vmem:[%s1232] sm:$0x1] 0
  %1234 = vst [vmem:[%s1232 + $0xc] sm:$0x1] 0
  %1235 = vst [vmem:[%s1232 + $0x18] sm:$0x1] 0
  %1236 = vst [vmem:[%s1232 + $0x24] sm:$0x1] 0
  %1237 = vst [vmem:[%s1232 + $0x30] sm:$0x1] 0
  %1238 = vst [vmem:[%s1232 + $0x3c] sm:$0x1] 0
  %1239 = vst [vmem:[%s1232 + $0x48] sm:$0x1] 0
  %1240 = vst [vmem:[%s1232 + $0x54] sm:$0x1] 0
  %1241 = vst [vmem:[%s1232 + $0x60] sm:$0x1] 0
  %1242 = vst [vmem:[%s1232 + $0x6c] sm:$0x1] 0
  %1243 = vst [vmem:[%s1232 + $0x78] sm:$0x1] 0
  %1244 = vst [vmem:[%s1232 + $0x84] sm:$0x1] 0
  %1245 = vst [vmem:[%s1232 + $0x90] sm:$0x1] 0
  %1246 = vst [vmem:[%s1232 + $0x9c] sm:$0x1] 0
  %1247 = vst [vmem:[%s1232 + $0xa8] sm:$0x1] 0
  %1248 = vst [vmem:[%s1232 + $0xb4] sm:$0x1] 0
  %1249 = vst [vmem:[%s1232 + $0xf0] sm:$0x1] 0
  %1250 = vst [vmem:[%s1232 + $0xfc] sm:$0x1] 0
  %1251 = vst [vmem:[%s1232 + $0x108] sm:$0x1] 0
  %1252 = vst [vmem:[%s1232 + $0x114] sm:$0x1] 0
  %1253 = vst [vmem:[%s1232 + $0x120] sm:$0x1] 0
  %1254 = vst [vmem:[%s1232 + $0x12c] sm:$0x1] 0
  %1255 = vst [vmem:[%s1232 + $0x138] sm:$0x1] 0
  %1256 = vst [vmem:[%s1232 + $0x144] sm:$0x1] 0
  %1257 = vst [vmem:[%s1232 + $0x150] sm:$0x1] 0
  %1258 = vst [vmem:[%s1232 + $0x15c] sm:$0x1] 0
  %1259 = vst [vmem:[%s1232 + $0x168] sm:$0x1] 0
  %1260 = vst [vmem:[%s1232 + $0x174] sm:$0x1] 0
  %1261 = vst [vmem:[%s1232 + $0x180] sm:$0x1] 0
  %1262 = vst [vmem:[%s1232 + $0x18c] sm:$0x1] 0
  %1263 = vst [vmem:[%s1232 + $0x198] sm:$0x1] 0
  %1264 = vst [vmem:[%s1232 + $0x1a4] sm:$0x1] 0
  %1265 = vst [vmem:[%s1232 + $0x8] sm:$0x2] 0
  %1266 = vst [vmem:[%s1232 + $0x14] sm:$0x2] 0
  %1267 = vst [vmem:[%s1232 + $0x20] sm:$0x2] 0
  %1268 = vst [vmem:[%s1232 + $0x2c] sm:$0x2] 0
  %1269 = vst [vmem:[%s1232 + $0x38] sm:$0x2] 0
  %1270 = vst [vmem:[%s1232 + $0x44] sm:$0x2] 0
  %1271 = vst [vmem:[%s1232 + $0x50] sm:$0x2] 0
  %1272 = vst [vmem:[%s1232 + $0x5c] sm:$0x2] 0
  %1273 = vst [vmem:[%s1232 + $0x68] sm:$0x2] 0
  %1274 = vst [vmem:[%s1232 + $0x74] sm:$0x2] 0
  %1275 = vst [vmem:[%s1232 + $0x80] sm:$0x2] 0
  %1276 = vst [vmem:[%s1232 + $0x8c] sm:$0x2] 0
  %1277 = vst [vmem:[%s1232 + $0x98] sm:$0x2] 0
  %1278 = vst [vmem:[%s1232 + $0xa4] sm:$0x2] 0
  %1279 = vst [vmem:[%s1232 + $0xb0] sm:$0x2] 0
  %1280 = vst [vmem:[%s1232 + $0xbc] sm:$0x2] 0
  %1281 = vst [vmem:[%s1232 + $0xf8] sm:$0x2] 0
  %1282 = vst [vmem:[%s1232 + $0x104] sm:$0x2] 0
  %1283 = vst [vmem:[%s1232 + $0x110] sm:$0x2] 0
  %1284 = vst [vmem:[%s1232 + $0x11c] sm:$0x2] 0
  %1285 = vst [vmem:[%s1232 + $0x128] sm:$0x2] 0
  %1286 = vst [vmem:[%s1232 + $0x134] sm:$0x2] 0
  %1287 = vst [vmem:[%s1232 + $0x140] sm:$0x2] 0
  %1288 = vst [vmem:[%s1232 + $0x14c] sm:$0x2] 0
  %1289 = vst [vmem:[%s1232 + $0x158] sm:$0x2] 0
  %1290 = vst [vmem:[%s1232 + $0x164] sm:$0x2] 0
  %1291 = vst [vmem:[%s1232 + $0x170] sm:$0x2] 0
  %1292 = vst [vmem:[%s1232 + $0x17c] sm:$0x2] 0
  %1293 = vst [vmem:[%s1232 + $0x188] sm:$0x2] 0
  %1294 = vst [vmem:[%s1232 + $0x194] sm:$0x2] 0
  %1295 = vst [vmem:[%s1232 + $0x1a0] sm:$0x2] 0
  %1296 = vst [vmem:[%s1232 + $0x1ac] sm:$0x2] 0
  %v1297 = vpack.c.bf16 %v1144, %v1143
  %v1298 = vpack.c.bf16 %v1146, %v1145
  %v1299 = vpack.c.bf16 %v1148, %v1147
  %v1300 = vpack.c.bf16 %v1150, %v1149
  %v1301 = vpack.c.bf16 %v1152, %v1151
  %v1302 = vpack.c.bf16 %v1154, %v1153
  %v1303 = vpack.c.bf16 %v1156, %v1155
  %v1304 = vpack.c.bf16 %v1158, %v1157
  %v1305 = vpack.c.bf16 %v1160, %v1159
  %v1306 = vpack.c.bf16 %v1162, %v1161
  %v1307 = vpack.c.bf16 %v1164, %v1163
  %v1308 = vpack.c.bf16 %v1166, %v1165
  %v1309 = vpack.c.bf16 %v1168, %v1167
  %v1310 = vpack.c.bf16 %v1170, %v1169
  %v1311 = vpack.c.bf16 %v1172, %v1171
  %v1312 = vpack.c.bf16 %v1174, %v1173
  %v1313 = vpack.c.bf16 %v1176, %v1175
  %v1314 = vpack.c.bf16 %v1178, %v1177
  %v1315 = vpack.c.bf16 %v1180, %v1179
  %v1316 = vpack.c.bf16 %v1182, %v1181
  %v1317 = vpack.c.bf16 %v1184, %v1183
  %v1318 = vpack.c.bf16 %v1186, %v1185
  %v1319 = vpack.c.bf16 %v1188, %v1187
  %v1320 = vpack.c.bf16 %v1190, %v1189
  %v1321 = vpack.c.bf16 %v1192, %v1191
  %v1322 = vpack.c.bf16 %v1194, %v1193
  %v1323 = vpack.c.bf16 %v1196, %v1195
  %v1324 = vpack.c.bf16 %v1198, %v1197
  %v1325 = vpack.c.bf16 %v1200, %v1199
  %v1326 = vpack.c.bf16 %v1202, %v1201
  %v1327 = vpack.c.bf16 %v1204, %v1203
  %v1328 = vpack.c.bf16 %v1206, %v1205
  %v1361 = vunpack.c.l.b16 %v1297
  %v1362 = vunpack.c.h.b16 %v1297
  %v1363 = vunpack.c.l.b16 %v1298
  %v1364 = vunpack.c.h.b16 %v1298
  %v1365 = vunpack.c.l.b16 %v1299
  %v1366 = vunpack.c.h.b16 %v1299
  %v1367 = vunpack.c.l.b16 %v1300
  %v1368 = vunpack.c.h.b16 %v1300
  %v1369 = vunpack.c.l.b16 %v1301
  %v1370 = vunpack.c.h.b16 %v1301
  %v1371 = vunpack.c.l.b16 %v1302
  %v1372 = vunpack.c.h.b16 %v1302
  %v1373 = vunpack.c.l.b16 %v1303
  %v1374 = vunpack.c.h.b16 %v1303
  %v1375 = vunpack.c.l.b16 %v1304
  %v1376 = vunpack.c.h.b16 %v1304
  %v1377 = vunpack.c.l.b16 %v1305
  %v1378 = vunpack.c.h.b16 %v1305
  %v1379 = vunpack.c.l.b16 %v1306
  %v1380 = vunpack.c.h.b16 %v1306
  %v1381 = vunpack.c.l.b16 %v1307
  %v1382 = vunpack.c.h.b16 %v1307
  %v1383 = vunpack.c.l.b16 %v1308
  %v1384 = vunpack.c.h.b16 %v1308
  %v1385 = vunpack.c.l.b16 %v1309
  %v1386 = vunpack.c.h.b16 %v1309
  %v1387 = vunpack.c.l.b16 %v1310
  %v1388 = vunpack.c.h.b16 %v1310
  %v1389 = vunpack.c.l.b16 %v1311
  %v1390 = vunpack.c.h.b16 %v1311
  %v1391 = vunpack.c.l.b16 %v1312
  %v1392 = vunpack.c.h.b16 %v1312
  %v1393 = vunpack.c.l.b16 %v1313
  %v1394 = vunpack.c.h.b16 %v1313
  %v1395 = vunpack.c.l.b16 %v1314
  %v1396 = vunpack.c.h.b16 %v1314
  %v1397 = vunpack.c.l.b16 %v1315
  %v1398 = vunpack.c.h.b16 %v1315
  %v1399 = vunpack.c.l.b16 %v1316
  %v1400 = vunpack.c.h.b16 %v1316
  %v1401 = vunpack.c.l.b16 %v1317
  %v1402 = vunpack.c.h.b16 %v1317
  %v1403 = vunpack.c.l.b16 %v1318
  %v1404 = vunpack.c.h.b16 %v1318
  %v1405 = vunpack.c.l.b16 %v1319
  %v1406 = vunpack.c.h.b16 %v1319
  %v1407 = vunpack.c.l.b16 %v1320
  %v1408 = vunpack.c.h.b16 %v1320
  %v1409 = vunpack.c.l.b16 %v1321
  %v1410 = vunpack.c.h.b16 %v1321
  %v1411 = vunpack.c.l.b16 %v1322
  %v1412 = vunpack.c.h.b16 %v1322
  %v1413 = vunpack.c.l.b16 %v1323
  %v1414 = vunpack.c.h.b16 %v1323
  %v1415 = vunpack.c.l.b16 %v1324
  %v1416 = vunpack.c.h.b16 %v1324
  %v1417 = vunpack.c.l.b16 %v1325
  %v1418 = vunpack.c.h.b16 %v1325
  %v1419 = vunpack.c.l.b16 %v1326
  %v1420 = vunpack.c.h.b16 %v1326
  %v1421 = vunpack.c.l.b16 %v1327
  %v1422 = vunpack.c.h.b16 %v1327
  %v1423 = vunpack.c.l.b16 %v1328
  %v1424 = vunpack.c.h.b16 %v1328
  %v1425 = vpack.c.b16 %v1361, %v1361
  %v1426 = vpack.c.b16 %v1362, %v1362
  %v1427 = vpack.c.b16 %v1363, %v1363
  %v1428 = vpack.c.b16 %v1364, %v1364
  %v1429 = vpack.c.b16 %v1365, %v1365
  %v1430 = vpack.c.b16 %v1366, %v1366
  %v1431 = vpack.c.b16 %v1367, %v1367
  %v1432 = vpack.c.b16 %v1368, %v1368
  %v1433 = vpack.c.b16 %v1369, %v1369
  %v1434 = vpack.c.b16 %v1370, %v1370
  %v1435 = vpack.c.b16 %v1371, %v1371
  %v1436 = vpack.c.b16 %v1372, %v1372
  %v1437 = vpack.c.b16 %v1373, %v1373
  %v1438 = vpack.c.b16 %v1374, %v1374
  %v1439 = vpack.c.b16 %v1375, %v1375
  %v1440 = vpack.c.b16 %v1376, %v1376
  %v1441 = vpack.c.b16 %v1377, %v1377
  %v1442 = vpack.c.b16 %v1378, %v1378
  %v1443 = vpack.c.b16 %v1379, %v1379
  %v1444 = vpack.c.b16 %v1380, %v1380
  %v1445 = vpack.c.b16 %v1381, %v1381
  %v1446 = vpack.c.b16 %v1382, %v1382
  %v1447 = vpack.c.b16 %v1383, %v1383
  %v1448 = vpack.c.b16 %v1384, %v1384
  %v1449 = vpack.c.b16 %v1385, %v1385
  %v1450 = vpack.c.b16 %v1386, %v1386
  %v1451 = vpack.c.b16 %v1387, %v1387
  %v1452 = vpack.c.b16 %v1388, %v1388
  %v1453 = vpack.c.b16 %v1389, %v1389
  %v1454 = vpack.c.b16 %v1390, %v1390
  %v1455 = vpack.c.b16 %v1391, %v1391
  %v1456 = vpack.c.b16 %v1392, %v1392
  %v1457 = vpack.c.b16 %v1393, %v1393
  %v1458 = vpack.c.b16 %v1394, %v1394
  %v1459 = vpack.c.b16 %v1395, %v1395
  %v1460 = vpack.c.b16 %v1396, %v1396
  %v1461 = vpack.c.b16 %v1397, %v1397
  %v1462 = vpack.c.b16 %v1398, %v1398
  %v1463 = vpack.c.b16 %v1399, %v1399
  %v1464 = vpack.c.b16 %v1400, %v1400
  %v1465 = vpack.c.b16 %v1401, %v1401
  %v1466 = vpack.c.b16 %v1402, %v1402
  %v1467 = vpack.c.b16 %v1403, %v1403
  %v1468 = vpack.c.b16 %v1404, %v1404
  %v1469 = vpack.c.b16 %v1405, %v1405
  %v1470 = vpack.c.b16 %v1406, %v1406
  %v1471 = vpack.c.b16 %v1407, %v1407
  %v1472 = vpack.c.b16 %v1408, %v1408
  %v1473 = vpack.c.b16 %v1409, %v1409
  %v1474 = vpack.c.b16 %v1410, %v1410
  %v1475 = vpack.c.b16 %v1411, %v1411
  %v1476 = vpack.c.b16 %v1412, %v1412
  %v1477 = vpack.c.b16 %v1413, %v1413
  %v1478 = vpack.c.b16 %v1414, %v1414
  %v1479 = vpack.c.b16 %v1415, %v1415
  %v1480 = vpack.c.b16 %v1416, %v1416
  %v1481 = vpack.c.b16 %v1417, %v1417
  %v1482 = vpack.c.b16 %v1418, %v1418
  %v1483 = vpack.c.b16 %v1419, %v1419
  %v1484 = vpack.c.b16 %v1420, %v1420
  %v1485 = vpack.c.b16 %v1421, %v1421
  %v1486 = vpack.c.b16 %v1422, %v1422
  %v1487 = vpack.c.b16 %v1423, %v1423
  %v1488 = vpack.c.b16 %v1424, %v1424
  %vm1489 = vcmask 1040384
  %vm1490 = vcmask 1044484
  %vm1491 = vmor %vm1489, %vm1490
  %v1492 = vrot.slane %v1425, 7
  %v1493 = vrot.slane %v1492, 4
  %v1494 = vrot.slane %v1426, 7
  %v1495 = vsel %vm1491, %v1493, %v1494
  %v1496 = vrot.slane %v1494, 4
  %v1497 = vrot.slane %v1427, 7
  %v1498 = vrot.slane %v1497, 4
  %v1499 = vrot.slane %v1428, 7
  %v1500 = vsel %vm1491, %v1498, %v1499
  %v1501 = vrot.slane %v1499, 4
  %v1502 = vrot.slane %v1429, 7
  %v1503 = vrot.slane %v1502, 4
  %v1504 = vrot.slane %v1430, 7
  %v1505 = vsel %vm1491, %v1503, %v1504
  %v1506 = vrot.slane %v1504, 4
  %v1507 = vrot.slane %v1431, 7
  %v1508 = vrot.slane %v1507, 4
  %v1509 = vrot.slane %v1432, 7
  %v1510 = vsel %vm1491, %v1508, %v1509
  %v1511 = vrot.slane %v1509, 4
  %v1512 = vrot.slane %v1433, 7
  %v1513 = vrot.slane %v1512, 4
  %v1514 = vrot.slane %v1434, 7
  %v1515 = vsel %vm1491, %v1513, %v1514
  %v1516 = vrot.slane %v1514, 4
  %v1517 = vrot.slane %v1435, 7
  %v1518 = vrot.slane %v1517, 4
  %v1519 = vrot.slane %v1436, 7
  %v1520 = vsel %vm1491, %v1518, %v1519
  %v1521 = vrot.slane %v1519, 4
  %v1522 = vrot.slane %v1437, 7
  %v1523 = vrot.slane %v1522, 4
  %v1524 = vrot.slane %v1438, 7
  %v1525 = vsel %vm1491, %v1523, %v1524
  %v1526 = vrot.slane %v1524, 4
  %v1527 = vrot.slane %v1439, 7
  %v1528 = vrot.slane %v1527, 4
  %v1529 = vrot.slane %v1440, 7
  %v1530 = vsel %vm1491, %v1528, %v1529
  %v1531 = vrot.slane %v1529, 4
  %v1532 = vrot.slane %v1441, 7
  %v1533 = vrot.slane %v1532, 4
  %v1534 = vrot.slane %v1442, 7
  %v1535 = vsel %vm1491, %v1533, %v1534
  %v1536 = vrot.slane %v1534, 4
  %v1537 = vrot.slane %v1443, 7
  %v1538 = vrot.slane %v1537, 4
  %v1539 = vrot.slane %v1444, 7
  %v1540 = vsel %vm1491, %v1538, %v1539
  %v1541 = vrot.slane %v1539, 4
  %v1542 = vrot.slane %v1445, 7
  %v1543 = vrot.slane %v1542, 4
  %v1544 = vrot.slane %v1446, 7
  %v1545 = vsel %vm1491, %v1543, %v1544
  %v1546 = vrot.slane %v1544, 4
  %v1547 = vrot.slane %v1447, 7
  %v1548 = vrot.slane %v1547, 4
  %v1549 = vrot.slane %v1448, 7
  %v1550 = vsel %vm1491, %v1548, %v1549
  %v1551 = vrot.slane %v1549, 4
  %v1552 = vrot.slane %v1449, 7
  %v1553 = vrot.slane %v1552, 4
  %v1554 = vrot.slane %v1450, 7
  %v1555 = vsel %vm1491, %v1553, %v1554
  %v1556 = vrot.slane %v1554, 4
  %v1557 = vrot.slane %v1451, 7
  %v1558 = vrot.slane %v1557, 4
  %v1559 = vrot.slane %v1452, 7
  %v1560 = vsel %vm1491, %v1558, %v1559
  %v1561 = vrot.slane %v1559, 4
  %v1562 = vrot.slane %v1453, 7
  %v1563 = vrot.slane %v1562, 4
  %v1564 = vrot.slane %v1454, 7
  %v1565 = vsel %vm1491, %v1563, %v1564
  %v1566 = vrot.slane %v1564, 4
  %v1567 = vrot.slane %v1455, 7
  %v1568 = vrot.slane %v1567, 4
  %v1569 = vrot.slane %v1456, 7
  %v1570 = vsel %vm1491, %v1568, %v1569
  %v1571 = vrot.slane %v1569, 4
  %v1572 = vrot.slane %v1457, 7
  %v1573 = vrot.slane %v1572, 4
  %v1574 = vrot.slane %v1458, 7
  %v1575 = vsel %vm1491, %v1573, %v1574
  %v1576 = vrot.slane %v1574, 4
  %v1577 = vrot.slane %v1459, 7
  %v1578 = vrot.slane %v1577, 4
  %v1579 = vrot.slane %v1460, 7
  %v1580 = vsel %vm1491, %v1578, %v1579
  %v1581 = vrot.slane %v1579, 4
  %v1582 = vrot.slane %v1461, 7
  %v1583 = vrot.slane %v1582, 4
  %v1584 = vrot.slane %v1462, 7
  %v1585 = vsel %vm1491, %v1583, %v1584
  %v1586 = vrot.slane %v1584, 4
  %v1587 = vrot.slane %v1463, 7
  %v1588 = vrot.slane %v1587, 4
  %v1589 = vrot.slane %v1464, 7
  %v1590 = vsel %vm1491, %v1588, %v1589
  %v1591 = vrot.slane %v1589, 4
  %v1592 = vrot.slane %v1465, 7
  %v1593 = vrot.slane %v1592, 4
  %v1594 = vrot.slane %v1466, 7
  %v1595 = vsel %vm1491, %v1593, %v1594
  %v1596 = vrot.slane %v1594, 4
  %v1597 = vrot.slane %v1467, 7
  %v1598 = vrot.slane %v1597, 4
  %v1599 = vrot.slane %v1468, 7
  %v1600 = vsel %vm1491, %v1598, %v1599
  %v1601 = vrot.slane %v1599, 4
  %v1602 = vrot.slane %v1469, 7
  %v1603 = vrot.slane %v1602, 4
  %v1604 = vrot.slane %v1470, 7
  %v1605 = vsel %vm1491, %v1603, %v1604
  %v1606 = vrot.slane %v1604, 4
  %v1607 = vrot.slane %v1471, 7
  %v1608 = vrot.slane %v1607, 4
  %v1609 = vrot.slane %v1472, 7
  %v1610 = vsel %vm1491, %v1608, %v1609
  %v1611 = vrot.slane %v1609, 4
  %v1612 = vrot.slane %v1473, 7
  %v1613 = vrot.slane %v1612, 4
  %v1614 = vrot.slane %v1474, 7
  %v1615 = vsel %vm1491, %v1613, %v1614
  %v1616 = vrot.slane %v1614, 4
  %v1617 = vrot.slane %v1475, 7
  %v1618 = vrot.slane %v1617, 4
  %v1619 = vrot.slane %v1476, 7
  %v1620 = vsel %vm1491, %v1618, %v1619
  %v1621 = vrot.slane %v1619, 4
  %v1622 = vrot.slane %v1477, 7
  %v1623 = vrot.slane %v1622, 4
  %v1624 = vrot.slane %v1478, 7
  %v1625 = vsel %vm1491, %v1623, %v1624
  %v1626 = vrot.slane %v1624, 4
  %v1627 = vrot.slane %v1479, 7
  %v1628 = vrot.slane %v1627, 4
  %v1629 = vrot.slane %v1480, 7
  %v1630 = vsel %vm1491, %v1628, %v1629
  %v1631 = vrot.slane %v1629, 4
  %v1632 = vrot.slane %v1481, 7
  %v1633 = vrot.slane %v1632, 4
  %v1634 = vrot.slane %v1482, 7
  %v1635 = vsel %vm1491, %v1633, %v1634
  %v1636 = vrot.slane %v1634, 4
  %v1637 = vrot.slane %v1483, 7
  %v1638 = vrot.slane %v1637, 4
  %v1639 = vrot.slane %v1484, 7
  %v1640 = vsel %vm1491, %v1638, %v1639
  %v1641 = vrot.slane %v1639, 4
  %v1642 = vrot.slane %v1485, 7
  %v1643 = vrot.slane %v1642, 4
  %v1644 = vrot.slane %v1486, 7
  %v1645 = vsel %vm1491, %v1643, %v1644
  %v1646 = vrot.slane %v1644, 4
  %v1647 = vrot.slane %v1487, 7
  %v1648 = vrot.slane %v1647, 4
  %v1649 = vrot.slane %v1488, 7
  %v1650 = vsel %vm1491, %v1648, %v1649
  %v1651 = vrot.slane %v1649, 4
  %1748 = vst [vmem:[%s1232] sm:$0xe] %v1492
  %1749 = vst [vmem:[%s1232 + $0x4] sm:$0xf] %v1495
  %1750 = vst [vmem:[%s1232 + $0x8] sm:$0x1] %v1496
  %1751 = vst [vmem:[%s1232 + $0xc] sm:$0xe] %v1497
  %1752 = vst [vmem:[%s1232 + $0x10] sm:$0xf] %v1500
  %1753 = vst [vmem:[%s1232 + $0x14] sm:$0x1] %v1501
  %1754 = vst [vmem:[%s1232 + $0x18] sm:$0xe] %v1502
  %1755 = vst [vmem:[%s1232 + $0x1c] sm:$0xf] %v1505
  %1756 = vst [vmem:[%s1232 + $0x20] sm:$0x1] %v1506
  %1757 = vst [vmem:[%s1232 + $0x24] sm:$0xe] %v1507
  %1758 = vst [vmem:[%s1232 + $0x28] sm:$0xf] %v1510
  %1759 = vst [vmem:[%s1232 + $0x2c] sm:$0x1] %v1511
  %1760 = vst [vmem:[%s1232 + $0x30] sm:$0xe] %v1512
  %1761 = vst [vmem:[%s1232 + $0x34] sm:$0xf] %v1515
  %1762 = vst [vmem:[%s1232 + $0x38] sm:$0x1] %v1516
  %1763 = vst [vmem:[%s1232 + $0x3c] sm:$0xe] %v1517
  %1764 = vst [vmem:[%s1232 + $0x40] sm:$0xf] %v1520
  %1765 = vst [vmem:[%s1232 + $0x44] sm:$0x1] %v1521
  %1766 = vst [vmem:[%s1232 + $0x48] sm:$0xe] %v1522
  %1767 = vst [vmem:[%s1232 + $0x4c] sm:$0xf] %v1525
  %1768 = vst [vmem:[%s1232 + $0x50] sm:$0x1] %v1526
  %1769 = vst [vmem:[%s1232 + $0x54] sm:$0xe] %v1527
  %1770 = vst [vmem:[%s1232 + $0x58] sm:$0xf] %v1530
  %1771 = vst [vmem:[%s1232 + $0x5c] sm:$0x1] %v1531
  %1772 = vst [vmem:[%s1232 + $0x60] sm:$0xe] %v1532
  %1773 = vst [vmem:[%s1232 + $0x64] sm:$0xf] %v1535
  %1774 = vst [vmem:[%s1232 + $0x68] sm:$0x1] %v1536
  %1775 = vst [vmem:[%s1232 + $0x6c] sm:$0xe] %v1537
  %1776 = vst [vmem:[%s1232 + $0x70] sm:$0xf] %v1540
  %1777 = vst [vmem:[%s1232 + $0x74] sm:$0x1] %v1541
  %1778 = vst [vmem:[%s1232 + $0x78] sm:$0xe] %v1542
  %1779 = vst [vmem:[%s1232 + $0x7c] sm:$0xf] %v1545
  %1780 = vst [vmem:[%s1232 + $0x80] sm:$0x1] %v1546
  %1781 = vst [vmem:[%s1232 + $0x84] sm:$0xe] %v1547
  %1782 = vst [vmem:[%s1232 + $0x88] sm:$0xf] %v1550
  %1783 = vst [vmem:[%s1232 + $0x8c] sm:$0x1] %v1551
  %1784 = vst [vmem:[%s1232 + $0x90] sm:$0xe] %v1552
  %1785 = vst [vmem:[%s1232 + $0x94] sm:$0xf] %v1555
  %1786 = vst [vmem:[%s1232 + $0x98] sm:$0x1] %v1556
  %1787 = vst [vmem:[%s1232 + $0x9c] sm:$0xe] %v1557
  %1788 = vst [vmem:[%s1232 + $0xa0] sm:$0xf] %v1560
  %1789 = vst [vmem:[%s1232 + $0xa4] sm:$0x1] %v1561
  %1790 = vst [vmem:[%s1232 + $0xa8] sm:$0xe] %v1562
  %1791 = vst [vmem:[%s1232 + $0xac] sm:$0xf] %v1565
  %1792 = vst [vmem:[%s1232 + $0xb0] sm:$0x1] %v1566
  %1793 = vst [vmem:[%s1232 + $0xb4] sm:$0xe] %v1567
  %1794 = vst [vmem:[%s1232 + $0xb8] sm:$0xf] %v1570
  %1795 = vst [vmem:[%s1232 + $0xbc] sm:$0x1] %v1571
  %1796 = vst [vmem:[%s1232 + $0xf0] sm:$0xe] %v1572
  %1797 = vst [vmem:[%s1232 + $0xf4] sm:$0xf] %v1575
  %1798 = vst [vmem:[%s1232 + $0xf8] sm:$0x1] %v1576
  %1799 = vst [vmem:[%s1232 + $0xfc] sm:$0xe] %v1577
  %1800 = vst [vmem:[%s1232 + $0x100] sm:$0xf] %v1580
  %1801 = vst [vmem:[%s1232 + $0x104] sm:$0x1] %v1581
  %1802 = vst [vmem:[%s1232 + $0x108] sm:$0xe] %v1582
  %1803 = vst [vmem:[%s1232 + $0x10c] sm:$0xf] %v1585
  %1804 = vst [vmem:[%s1232 + $0x110] sm:$0x1] %v1586
  %1805 = vst [vmem:[%s1232 + $0x114] sm:$0xe] %v1587
  %1806 = vst [vmem:[%s1232 + $0x118] sm:$0xf] %v1590
  %1807 = vst [vmem:[%s1232 + $0x11c] sm:$0x1] %v1591
  %1808 = vst [vmem:[%s1232 + $0x120] sm:$0xe] %v1592
  %1809 = vst [vmem:[%s1232 + $0x124] sm:$0xf] %v1595
  %1810 = vst [vmem:[%s1232 + $0x128] sm:$0x1] %v1596
  %1811 = vst [vmem:[%s1232 + $0x12c] sm:$0xe] %v1597
  %1812 = vst [vmem:[%s1232 + $0x130] sm:$0xf] %v1600
  %1813 = vst [vmem:[%s1232 + $0x134] sm:$0x1] %v1601
  %1814 = vst [vmem:[%s1232 + $0x138] sm:$0xe] %v1602
  %1815 = vst [vmem:[%s1232 + $0x13c] sm:$0xf] %v1605
  %1816 = vst [vmem:[%s1232 + $0x140] sm:$0x1] %v1606
  %1817 = vst [vmem:[%s1232 + $0x144] sm:$0xe] %v1607
  %1818 = vst [vmem:[%s1232 + $0x148] sm:$0xf] %v1610
  %1819 = vst [vmem:[%s1232 + $0x14c] sm:$0x1] %v1611
  %1820 = vst [vmem:[%s1232 + $0x150] sm:$0xe] %v1612
  %1821 = vst [vmem:[%s1232 + $0x154] sm:$0xf] %v1615
  %1822 = vst [vmem:[%s1232 + $0x158] sm:$0x1] %v1616
  %1823 = vst [vmem:[%s1232 + $0x15c] sm:$0xe] %v1617
  %1824 = vst [vmem:[%s1232 + $0x160] sm:$0xf] %v1620
  %1825 = vst [vmem:[%s1232 + $0x164] sm:$0x1] %v1621
  %1826 = vst [vmem:[%s1232 + $0x168] sm:$0xe] %v1622
  %1827 = vst [vmem:[%s1232 + $0x16c] sm:$0xf] %v1625
  %1828 = vst [vmem:[%s1232 + $0x170] sm:$0x1] %v1626
  %1829 = vst [vmem:[%s1232 + $0x174] sm:$0xe] %v1627
  %1830 = vst [vmem:[%s1232 + $0x178] sm:$0xf] %v1630
  %1831 = vst [vmem:[%s1232 + $0x17c] sm:$0x1] %v1631
  %1832 = vst [vmem:[%s1232 + $0x180] sm:$0xe] %v1632
  %1833 = vst [vmem:[%s1232 + $0x184] sm:$0xf] %v1635
  %1834 = vst [vmem:[%s1232 + $0x188] sm:$0x1] %v1636
  %1835 = vst [vmem:[%s1232 + $0x18c] sm:$0xe] %v1637
  %1836 = vst [vmem:[%s1232 + $0x190] sm:$0xf] %v1640
  %1837 = vst [vmem:[%s1232 + $0x194] sm:$0x1] %v1641
  %1838 = vst [vmem:[%s1232 + $0x198] sm:$0xe] %v1642
  %1839 = vst [vmem:[%s1232 + $0x19c] sm:$0xf] %v1645
  %1840 = vst [vmem:[%s1232 + $0x1a0] sm:$0x1] %v1646
  %1841 = vst [vmem:[%s1232 + $0x1a4] sm:$0xe] %v1647
  %1842 = vst [vmem:[%s1232 + $0x1a8] sm:$0xf] %v1650
  %1843 = vst [vmem:[%s1232 + $0x1ac] sm:$0x1] %v1651
  %v1844 = vld [vmem:[#allocation2] sm:$0xf]
  %v1845 = vld [vmem:[#allocation2 + $0x4] sm:$0xf]
  %v1846 = vld [vmem:[#allocation2 + $0xc] sm:$0xf]
  %v1847 = vld [vmem:[#allocation2 + $0x10] sm:$0xf]
  %v1848 = vld [vmem:[#allocation2 + $0x18] sm:$0xf]
  %v1849 = vld [vmem:[#allocation2 + $0x1c] sm:$0xf]
  %v1850 = vld [vmem:[#allocation2 + $0x24] sm:$0xf]
  %v1851 = vld [vmem:[#allocation2 + $0x28] sm:$0xf]
  %v1852 = vld [vmem:[#allocation2 + $0x30] sm:$0xf]
  %v1853 = vld [vmem:[#allocation2 + $0x34] sm:$0xf]
  %v1854 = vld [vmem:[#allocation2 + $0x3c] sm:$0xf]
  %v1855 = vld [vmem:[#allocation2 + $0x40] sm:$0xf]
  %v1856 = vld [vmem:[#allocation2 + $0x48] sm:$0xf]
  %v1857 = vld [vmem:[#allocation2 + $0x4c] sm:$0xf]
  %v1858 = vld [vmem:[#allocation2 + $0x54] sm:$0xf]
  %v1859 = vld [vmem:[#allocation2 + $0x58] sm:$0xf]
  %v1860 = vld [vmem:[#allocation2 + $0x60] sm:$0xf]
  %v1861 = vld [vmem:[#allocation2 + $0x64] sm:$0xf]
  %v1862 = vld [vmem:[#allocation2 + $0x6c] sm:$0xf]
  %v1863 = vld [vmem:[#allocation2 + $0x70] sm:$0xf]
  %v1864 = vld [vmem:[#allocation2 + $0x78] sm:$0xf]
  %v1865 = vld [vmem:[#allocation2 + $0x7c] sm:$0xf]
  %v1866 = vld [vmem:[#allocation2 + $0x84] sm:$0xf]
  %v1867 = vld [vmem:[#allocation2 + $0x88] sm:$0xf]
  %v1868 = vld [vmem:[#allocation2 + $0x90] sm:$0xf]
  %v1869 = vld [vmem:[#allocation2 + $0x94] sm:$0xf]
  %v1870 = vld [vmem:[#allocation2 + $0x9c] sm:$0xf]
  %v1871 = vld [vmem:[#allocation2 + $0xa0] sm:$0xf]
  %v1872 = vld [vmem:[#allocation2 + $0xa8] sm:$0xf]
  %v1873 = vld [vmem:[#allocation2 + $0xac] sm:$0xf]
  %v1874 = vld [vmem:[#allocation2 + $0xb4] sm:$0xf]
  %v1875 = vld [vmem:[#allocation2 + $0xb8] sm:$0xf]
  %v1876 = vld [vmem:[#allocation2 + $0xf0] sm:$0xf]
  %v1877 = vld [vmem:[#allocation2 + $0xf4] sm:$0xf]
  %v1878 = vld [vmem:[#allocation2 + $0xfc] sm:$0xf]
  %v1879 = vld [vmem:[#allocation2 + $0x100] sm:$0xf]
  %v1880 = vld [vmem:[#allocation2 + $0x108] sm:$0xf]
  %v1881 = vld [vmem:[#allocation2 + $0x10c] sm:$0xf]
  %v1882 = vld [vmem:[#allocation2 + $0x114] sm:$0xf]
  %v1883 = vld [vmem:[#allocation2 + $0x118] sm:$0xf]
  %v1884 = vld [vmem:[#allocation2 + $0x120] sm:$0xf]
  %v1885 = vld [vmem:[#allocation2 + $0x124] sm:$0xf]
  %v1886 = vld [vmem:[#allocation2 + $0x12c] sm:$0xf]
  %v1887 = vld [vmem:[#allocation2 + $0x130] sm:$0xf]
  %v1888 = vld [vmem:[#allocation2 + $0x138] sm:$0xf]
  %v1889 = vld [vmem:[#allocation2 + $0x13c] sm:$0xf]
  %v1890 = vld [vmem:[#allocation2 + $0x144] sm:$0xf]
  %v1891 = vld [vmem:[#allocation2 + $0x148] sm:$0xf]
  %v1892 = vld [vmem:[#allocation2 + $0x150] sm:$0xf]
  %v1893 = vld [vmem:[#allocation2 + $0x154] sm:$0xf]
  %v1894 = vld [vmem:[#allocation2 + $0x15c] sm:$0xf]
  %v1895 = vld [vmem:[#allocation2 + $0x160] sm:$0xf]
  %v1896 = vld [vmem:[#allocation2 + $0x168] sm:$0xf]
  %v1897 = vld [vmem:[#allocation2 + $0x16c] sm:$0xf]
  %v1898 = vld [vmem:[#allocation2 + $0x174] sm:$0xf]
  %v1899 = vld [vmem:[#allocation2 + $0x178] sm:$0xf]
  %v1900 = vld [vmem:[#allocation2 + $0x180] sm:$0xf]
  %v1901 = vld [vmem:[#allocation2 + $0x184] sm:$0xf]
  %v1902 = vld [vmem:[#allocation2 + $0x18c] sm:$0xf]
  %v1903 = vld [vmem:[#allocation2 + $0x190] sm:$0xf]
  %v1904 = vld [vmem:[#allocation2 + $0x198] sm:$0xf]
  %v1905 = vld [vmem:[#allocation2 + $0x19c] sm:$0xf]
  %v1906 = vld [vmem:[#allocation2 + $0x1a4] sm:$0xf]
  %v1907 = vld [vmem:[#allocation2 + $0x1a8] sm:$0xf]
  %v1908 = vld [vmem:[%s4] sm:$0xf]
  %v1909 = vld [vmem:[%s4 + $0x4] sm:$0xf]
  %v1910 = vld [vmem:[%s4 + $0x8] sm:$0xf]
  %v1911 = vld [vmem:[%s4 + $0xc] sm:$0xf]
  %v1912 = vld [vmem:[%s4 + $0x10] sm:$0xf]
  %v1913 = vld [vmem:[%s4 + $0x14] sm:$0xf]
  %v1914 = vld [vmem:[%s4 + $0x18] sm:$0xf]
  %v1915 = vld [vmem:[%s4 + $0x1c] sm:$0xf]
  %v1916 = vld [vmem:[%s4 + $0x20] sm:$0xf]
  %v1917 = vld [vmem:[%s4 + $0x24] sm:$0xf]
  %v1918 = vld [vmem:[%s4 + $0x28] sm:$0xf]
  %v1919 = vld [vmem:[%s4 + $0x2c] sm:$0xf]
  %v1920 = vld [vmem:[%s4 + $0x30] sm:$0xf]
  %v1921 = vld [vmem:[%s4 + $0x34] sm:$0xf]
  %v1922 = vld [vmem:[%s4 + $0x38] sm:$0xf]
  %v1923 = vld [vmem:[%s4 + $0x3c] sm:$0xf]
  %v1924 = vld [vmem:[#allocation2] sm:$0xe]
  %v1925 = vld [vmem:[#allocation2 + $0x8] sm:$0x1]
  %v1926 = vld [vmem:[#allocation2 + $0xc] sm:$0xe]
  %v1927 = vld [vmem:[#allocation2 + $0x14] sm:$0x1]
  %v1928 = vld [vmem:[#allocation2 + $0x18] sm:$0xe]
  %v1929 = vld [vmem:[#allocation2 + $0x20] sm:$0x1]
  %v1930 = vld [vmem:[#allocation2 + $0x24] sm:$0xe]
  %v1931 = vld [vmem:[#allocation2 + $0x2c] sm:$0x1]
  %v1932 = vld [vmem:[#allocation2 + $0x30] sm:$0xe]
  %v1933 = vld [vmem:[#allocation2 + $0x38] sm:$0x1]
  %v1934 = vld [vmem:[#allocation2 + $0x3c] sm:$0xe]
  %v1935 = vld [vmem:[#allocation2 + $0x44] sm:$0x1]
  %v1936 = vld [vmem:[#allocation2 + $0x48] sm:$0xe]
  %v1937 = vld [vmem:[#allocation2 + $0x50] sm:$0x1]
  %v1938 = vld [vmem:[#allocation2 + $0x54] sm:$0xe]
  %v1939 = vld [vmem:[#allocation2 + $0x5c] sm:$0x1]
  %v1940 = vld [vmem:[#allocation2 + $0x60] sm:$0xe]
  %v1941 = vld [vmem:[#allocation2 + $0x68] sm:$0x1]
  %v1942 = vld [vmem:[#allocation2 + $0x6c] sm:$0xe]
  %v1943 = vld [vmem:[#allocation2 + $0x74] sm:$0x1]
  %v1944 = vld [vmem:[#allocation2 + $0x78] sm:$0xe]
  %v1945 = vld [vmem:[#allocation2 + $0x80] sm:$0x1]
  %v1946 = vld [vmem:[#allocation2 + $0x84] sm:$0xe]
  %v1947 = vld [vmem:[#allocation2 + $0x8c] sm:$0x1]
  %v1948 = vld [vmem:[#allocation2 + $0x90] sm:$0xe]
  %v1949 = vld [vmem:[#allocation2 + $0x98] sm:$0x1]
  %v1950 = vld [vmem:[#allocation2 + $0x9c] sm:$0xe]
  %v1951 = vld [vmem:[#allocation2 + $0xa4] sm:$0x1]
  %v1952 = vld [vmem:[#allocation2 + $0xa8] sm:$0xe]
  %v1953 = vld [vmem:[#allocation2 + $0xb0] sm:$0x1]
  %v1954 = vld [vmem:[#allocation2 + $0xb4] sm:$0xe]
  %v1955 = vld [vmem:[#allocation2 + $0xbc] sm:$0x1]
  %v1956 = vld [vmem:[#allocation2 + $0xf0] sm:$0xe]
  %v1957 = vld [vmem:[#allocation2 + $0xf8] sm:$0x1]
  %v1958 = vld [vmem:[#allocation2 + $0xfc] sm:$0xe]
  %v1959 = vld [vmem:[#allocation2 + $0x104] sm:$0x1]
  %v1960 = vld [vmem:[#allocation2 + $0x108] sm:$0xe]
  %v1961 = vld [vmem:[#allocation2 + $0x110] sm:$0x1]
  %v1962 = vld [vmem:[#allocation2 + $0x114] sm:$0xe]
  %v1963 = vld [vmem:[#allocation2 + $0x11c] sm:$0x1]
  %v1964 = vld [vmem:[#allocation2 + $0x120] sm:$0xe]
  %v1965 = vld [vmem:[#allocation2 + $0x128] sm:$0x1]
  %v1966 = vld [vmem:[#allocation2 + $0x12c] sm:$0xe]
  %v1967 = vld [vmem:[#allocation2 + $0x134] sm:$0x1]
  %v1968 = vld [vmem:[#allocation2 + $0x138] sm:$0xe]
  %v1969 = vld [vmem:[#allocation2 + $0x140] sm:$0x1]
  %v1970 = vld [vmem:[#allocation2 + $0x144] sm:$0xe]
  %v1971 = vld [vmem:[#allocation2 + $0x14c] sm:$0x1]
  %v1972 = vld [vmem:[#allocation2 + $0x150] sm:$0xe]
  %v1973 = vld [vmem:[#allocation2 + $0x158] sm:$0x1]
  %v1974 = vld [vmem:[#allocation2 + $0x15c] sm:$0xe]
  %v1975 = vld [vmem:[#allocation2 + $0x164] sm:$0x1]
  %v1976 = vld [vmem:[#allocation2 + $0x168] sm:$0xe]
  %v1977 = vld [vmem:[#allocation2 + $0x170] sm:$0x1]
  %v1978 = vld [vmem:[#allocation2 + $0x174] sm:$0xe]
  %v1979 = vld [vmem:[#allocation2 + $0x17c] sm:$0x1]
  %v1980 = vld [vmem:[#allocation2 + $0x180] sm:$0xe]
  %v1981 = vld [vmem:[#allocation2 + $0x188] sm:$0x1]
  %v1982 = vld [vmem:[#allocation2 + $0x18c] sm:$0xe]
  %v1983 = vld [vmem:[#allocation2 + $0x194] sm:$0x1]
  %v1984 = vld [vmem:[#allocation2 + $0x198] sm:$0xe]
  %v1985 = vld [vmem:[#allocation2 + $0x1a0] sm:$0x1]
  %v1986 = vld [vmem:[#allocation2 + $0x1a4] sm:$0xe]
  %v1987 = vld [vmem:[#allocation2 + $0x1ac] sm:$0x1]
  %vm2084 = vcmask 1042432
  %vm2085 = vcmask 1046532
  %vm2086 = vmor %vm2084, %vm2085
  %v2087 = vrot.slane %v1924, 5
  %v2088 = vrot.slane %v2087, 4
  %v2089 = vrot.slane %v1845, 5
  %v2090 = vsel %vm2086, %v2088, %v2089
  %v2091 = vrot.slane %v2089, 4
  %v2092 = vrot.slane %v1925, 5
  %v2093 = vsel %vm2086, %v2091, %v2092
  %v2094 = vrot.slane %v1926, 5
  %v2095 = vrot.slane %v2094, 4
  %v2096 = vrot.slane %v1847, 5
  %v2097 = vsel %vm2086, %v2095, %v2096
  %v2098 = vrot.slane %v2096, 4
  %v2099 = vrot.slane %v1927, 5
  %v2100 = vsel %vm2086, %v2098, %v2099
  %v2101 = vrot.slane %v1928, 5
  %v2102 = vrot.slane %v2101, 4
  %v2103 = vrot.slane %v1849, 5
  %v2104 = vsel %vm2086, %v2102, %v2103
  %v2105 = vrot.slane %v2103, 4
  %v2106 = vrot.slane %v1929, 5
  %v2107 = vsel %vm2086, %v2105, %v2106
  %v2108 = vrot.slane %v1930, 5
  %v2109 = vrot.slane %v2108, 4
  %v2110 = vrot.slane %v1851, 5
  %v2111 = vsel %vm2086, %v2109, %v2110
  %v2112 = vrot.slane %v2110, 4
  %v2113 = vrot.slane %v1931, 5
  %v2114 = vsel %vm2086, %v2112, %v2113
  %v2115 = vrot.slane %v1932, 5
  %v2116 = vrot.slane %v2115, 4
  %v2117 = vrot.slane %v1853, 5
  %v2118 = vsel %vm2086, %v2116, %v2117
  %v2119 = vrot.slane %v2117, 4
  %v2120 = vrot.slane %v1933, 5
  %v2121 = vsel %vm2086, %v2119, %v2120
  %v2122 = vrot.slane %v1934, 5
  %v2123 = vrot.slane %v2122, 4
  %v2124 = vrot.slane %v1855, 5
  %v2125 = vsel %vm2086, %v2123, %v2124
  %v2126 = vrot.slane %v2124, 4
  %v2127 = vrot.slane %v1935, 5
  %v2128 = vsel %vm2086, %v2126, %v2127
  %v2129 = vrot.slane %v1936, 5
  %v2130 = vrot.slane %v2129, 4
  %v2131 = vrot.slane %v1857, 5
  %v2132 = vsel %vm2086, %v2130, %v2131
  %v2133 = vrot.slane %v2131, 4
  %v2134 = vrot.slane %v1937, 5
  %v2135 = vsel %vm2086, %v2133, %v2134
  %v2136 = vrot.slane %v1938, 5
  %v2137 = vrot.slane %v2136, 4
  %v2138 = vrot.slane %v1859, 5
  %v2139 = vsel %vm2086, %v2137, %v2138
  %v2140 = vrot.slane %v2138, 4
  %v2141 = vrot.slane %v1939, 5
  %v2142 = vsel %vm2086, %v2140, %v2141
  %v2143 = vrot.slane %v1940, 5
  %v2144 = vrot.slane %v2143, 4
  %v2145 = vrot.slane %v1861, 5
  %v2146 = vsel %vm2086, %v2144, %v2145
  %v2147 = vrot.slane %v2145, 4
  %v2148 = vrot.slane %v1941, 5
  %v2149 = vsel %vm2086, %v2147, %v2148
  %v2150 = vrot.slane %v1942, 5
  %v2151 = vrot.slane %v2150, 4
  %v2152 = vrot.slane %v1863, 5
  %v2153 = vsel %vm2086, %v2151, %v2152
  %v2154 = vrot.slane %v2152, 4
  %v2155 = vrot.slane %v1943, 5
  %v2156 = vsel %vm2086, %v2154, %v2155
  %v2157 = vrot.slane %v1944, 5
  %v2158 = vrot.slane %v2157, 4
  %v2159 = vrot.slane %v1865, 5
  %v2160 = vsel %vm2086, %v2158, %v2159
  %v2161 = vrot.slane %v2159, 4
  %v2162 = vrot.slane %v1945, 5
  %v2163 = vsel %vm2086, %v2161, %v2162
  %v2164 = vrot.slane %v1946, 5
  %v2165 = vrot.slane %v2164, 4
  %v2166 = vrot.slane %v1867, 5
  %v2167 = vsel %vm2086, %v2165, %v2166
  %v2168 = vrot.slane %v2166, 4
  %v2169 = vrot.slane %v1947, 5
  %v2170 = vsel %vm2086, %v2168, %v2169
  %v2171 = vrot.slane %v1948, 5
  %v2172 = vrot.slane %v2171, 4
  %v2173 = vrot.slane %v1869, 5
  %v2174 = vsel %vm2086, %v2172, %v2173
  %v2175 = vrot.slane %v2173, 4
  %v2176 = vrot.slane %v1949, 5
  %v2177 = vsel %vm2086, %v2175, %v2176
  %v2178 = vrot.slane %v1950, 5
  %v2179 = vrot.slane %v2178, 4
  %v2180 = vrot.slane %v1871, 5
  %v2181 = vsel %vm2086, %v2179, %v2180
  %v2182 = vrot.slane %v2180, 4
  %v2183 = vrot.slane %v1951, 5
  %v2184 = vsel %vm2086, %v2182, %v2183
  %v2185 = vrot.slane %v1952, 5
  %v2186 = vrot.slane %v2185, 4
  %v2187 = vrot.slane %v1873, 5
  %v2188 = vsel %vm2086, %v2186, %v2187
  %v2189 = vrot.slane %v2187, 4
  %v2190 = vrot.slane %v1953, 5
  %v2191 = vsel %vm2086, %v2189, %v2190
  %v2192 = vrot.slane %v1954, 5
  %v2193 = vrot.slane %v2192, 4
  %v2194 = vrot.slane %v1875, 5
  %v2195 = vsel %vm2086, %v2193, %v2194
  %v2196 = vrot.slane %v2194, 4
  %v2197 = vrot.slane %v1955, 5
  %v2198 = vsel %vm2086, %v2196, %v2197
  %v2199 = vrot.slane %v1956, 5
  %v2200 = vrot.slane %v2199, 4
  %v2201 = vrot.slane %v1877, 5
  %v2202 = vsel %vm2086, %v2200, %v2201
  %v2203 = vrot.slane %v2201, 4
  %v2204 = vrot.slane %v1957, 5
  %v2205 = vsel %vm2086, %v2203, %v2204
  %v2206 = vrot.slane %v1958, 5
  %v2207 = vrot.slane %v2206, 4
  %v2208 = vrot.slane %v1879, 5
  %v2209 = vsel %vm2086, %v2207, %v2208
  %v2210 = vrot.slane %v2208, 4
  %v2211 = vrot.slane %v1959, 5
  %v2212 = vsel %vm2086, %v2210, %v2211
  %v2213 = vrot.slane %v1960, 5
  %v2214 = vrot.slane %v2213, 4
  %v2215 = vrot.slane %v1881, 5
  %v2216 = vsel %vm2086, %v2214, %v2215
  %v2217 = vrot.slane %v2215, 4
  %v2218 = vrot.slane %v1961, 5
  %v2219 = vsel %vm2086, %v2217, %v2218
  %v2220 = vrot.slane %v1962, 5
  %v2221 = vrot.slane %v2220, 4
  %v2222 = vrot.slane %v1883, 5
  %v2223 = vsel %vm2086, %v2221, %v2222
  %v2224 = vrot.slane %v2222, 4
  %v2225 = vrot.slane %v1963, 5
  %v2226 = vsel %vm2086, %v2224, %v2225
  %v2227 = vrot.slane %v1964, 5
  %v2228 = vrot.slane %v2227, 4
  %v2229 = vrot.slane %v1885, 5
  %v2230 = vsel %vm2086, %v2228, %v2229
  %v2231 = vrot.slane %v2229, 4
  %v2232 = vrot.slane %v1965, 5
  %v2233 = vsel %vm2086, %v2231, %v2232
  %v2234 = vrot.slane %v1966, 5
  %v2235 = vrot.slane %v2234, 4
  %v2236 = vrot.slane %v1887, 5
  %v2237 = vsel %vm2086, %v2235, %v2236
  %v2238 = vrot.slane %v2236, 4
  %v2239 = vrot.slane %v1967, 5
  %v2240 = vsel %vm2086, %v2238, %v2239
  %v2241 = vrot.slane %v1968, 5
  %v2242 = vrot.slane %v2241, 4
  %v2243 = vrot.slane %v1889, 5
  %v2244 = vsel %vm2086, %v2242, %v2243
  %v2245 = vrot.slane %v2243, 4
  %v2246 = vrot.slane %v1969, 5
  %v2247 = vsel %vm2086, %v2245, %v2246
  %v2248 = vrot.slane %v1970, 5
  %v2249 = vrot.slane %v2248, 4
  %v2250 = vrot.slane %v1891, 5
  %v2251 = vsel %vm2086, %v2249, %v2250
  %v2252 = vrot.slane %v2250, 4
  %v2253 = vrot.slane %v1971, 5
  %v2254 = vsel %vm2086, %v2252, %v2253
  %v2255 = vrot.slane %v1972, 5
  %v2256 = vrot.slane %v2255, 4
  %v2257 = vrot.slane %v1893, 5
  %v2258 = vsel %vm2086, %v2256, %v2257
  %v2259 = vrot.slane %v2257, 4
  %v2260 = vrot.slane %v1973, 5
  %v2261 = vsel %vm2086, %v2259, %v2260
  %v2262 = vrot.slane %v1974, 5
  %v2263 = vrot.slane %v2262, 4
  %v2264 = vrot.slane %v1895, 5
  %v2265 = vsel %vm2086, %v2263, %v2264
  %v2266 = vrot.slane %v2264, 4
  %v2267 = vrot.slane %v1975, 5
  %v2268 = vsel %vm2086, %v2266, %v2267
  %v2269 = vrot.slane %v1976, 5
  %v2270 = vrot.slane %v2269, 4
  %v2271 = vrot.slane %v1897, 5
  %v2272 = vsel %vm2086, %v2270, %v2271
  %v2273 = vrot.slane %v2271, 4
  %v2274 = vrot.slane %v1977, 5
  %v2275 = vsel %vm2086, %v2273, %v2274
  %v2276 = vrot.slane %v1978, 5
  %v2277 = vrot.slane %v2276, 4
  %v2278 = vrot.slane %v1899, 5
  %v2279 = vsel %vm2086, %v2277, %v2278
  %v2280 = vrot.slane %v2278, 4
  %v2281 = vrot.slane %v1979, 5
  %v2282 = vsel %vm2086, %v2280, %v2281
  %v2283 = vrot.slane %v1980, 5
  %v2284 = vrot.slane %v2283, 4
  %v2285 = vrot.slane %v1901, 5
  %v2286 = vsel %vm2086, %v2284, %v2285
  %v2287 = vrot.slane %v2285, 4
  %v2288 = vrot.slane %v1981, 5
  %v2289 = vsel %vm2086, %v2287, %v2288
  %v2290 = vrot.slane %v1982, 5
  %v2291 = vrot.slane %v2290, 4
  %v2292 = vrot.slane %v1903, 5
  %v2293 = vsel %vm2086, %v2291, %v2292
  %v2294 = vrot.slane %v2292, 4
  %v2295 = vrot.slane %v1983, 5
  %v2296 = vsel %vm2086, %v2294, %v2295
  %v2297 = vrot.slane %v1984, 5
  %v2298 = vrot.slane %v2297, 4
  %v2299 = vrot.slane %v1905, 5
  %v2300 = vsel %vm2086, %v2298, %v2299
  %v2301 = vrot.slane %v2299, 4
  %v2302 = vrot.slane %v1985, 5
  %v2303 = vsel %vm2086, %v2301, %v2302
  %v2304 = vrot.slane %v1986, 5
  %v2305 = vrot.slane %v2304, 4
  %v2306 = vrot.slane %v1907, 5
  %v2307 = vsel %vm2086, %v2305, %v2306
  %v2308 = vrot.slane %v2306, 4
  %v2309 = vrot.slane %v1987, 5
  %v2310 = vsel %vm2086, %v2308, %v2309
  %s2311 = scalar_lea.vmem %s4, 64
  %v2312 = vld [vmem:[%s2311] sm:$0xf]
  %v2313 = vld [vmem:[%s2311 + $0x4] sm:$0xf]
  %v2314 = vld [vmem:[%s2311 + $0x8] sm:$0xf]
  %v2315 = vld [vmem:[%s2311 + $0xc] sm:$0xf]
  %v2316 = vld [vmem:[%s2311 + $0x10] sm:$0xf]
  %v2317 = vld [vmem:[%s2311 + $0x14] sm:$0xf]
  %v2318 = vld [vmem:[%s2311 + $0x18] sm:$0xf]
  %v2319 = vld [vmem:[%s2311 + $0x1c] sm:$0xf]
  %v2320 = vld [vmem:[%s2311 + $0x20] sm:$0xf]
  %v2321 = vld [vmem:[%s2311 + $0x24] sm:$0xf]
  %v2322 = vld [vmem:[%s2311 + $0x28] sm:$0xf]
  %v2323 = vld [vmem:[%s2311 + $0x2c] sm:$0xf]
  %v2324 = vld [vmem:[%s2311 + $0x30] sm:$0xf]
  %v2325 = vld [vmem:[%s2311 + $0x34] sm:$0xf]
  %v2326 = vld [vmem:[%s2311 + $0x38] sm:$0xf]
  %v2327 = vld [vmem:[%s2311 + $0x3c] sm:$0xf]
  %v2328 = vunpack.c.l.b16 %v2090
  %v2329 = vunpack.c.l.b16 %v2093
  %v2330 = vunpack.c.l.b16 %v2097
  %v2331 = vunpack.c.l.b16 %v2100
  %v2332 = vunpack.c.l.b16 %v2104
  %v2333 = vunpack.c.l.b16 %v2107
  %v2334 = vunpack.c.l.b16 %v2111
  %v2335 = vunpack.c.l.b16 %v2114
  %v2336 = vunpack.c.l.b16 %v2118
  %v2337 = vunpack.c.l.b16 %v2121
  %v2338 = vunpack.c.l.b16 %v2125
  %v2339 = vunpack.c.l.b16 %v2128
  %v2340 = vunpack.c.l.b16 %v2132
  %v2341 = vunpack.c.l.b16 %v2135
  %v2342 = vunpack.c.l.b16 %v2139
  %v2343 = vunpack.c.l.b16 %v2142
  %v2344 = vunpack.c.l.b16 %v2146
  %v2345 = vunpack.c.l.b16 %v2149
  %v2346 = vunpack.c.l.b16 %v2153
  %v2347 = vunpack.c.l.b16 %v2156
  %v2348 = vunpack.c.l.b16 %v2160
  %v2349 = vunpack.c.l.b16 %v2163
  %v2350 = vunpack.c.l.b16 %v2167
  %v2351 = vunpack.c.l.b16 %v2170
  %v2352 = vunpack.c.l.b16 %v2174
  %v2353 = vunpack.c.l.b16 %v2177
  %v2354 = vunpack.c.l.b16 %v2181
  %v2355 = vunpack.c.l.b16 %v2184
  %v2356 = vunpack.c.l.b16 %v2188
  %v2357 = vunpack.c.l.b16 %v2191
  %v2358 = vunpack.c.l.b16 %v2195
  %v2359 = vunpack.c.l.b16 %v2198
  %v2360 = vunpack.c.l.b16 %v2202
  %v2361 = vunpack.c.l.b16 %v2205
  %v2362 = vunpack.c.l.b16 %v2209
  %v2363 = vunpack.c.l.b16 %v2212
  %v2364 = vunpack.c.l.b16 %v2216
  %v2365 = vunpack.c.l.b16 %v2219
  %v2366 = vunpack.c.l.b16 %v2223
  %v2367 = vunpack.c.l.b16 %v2226
  %v2368 = vunpack.c.l.b16 %v2230
  %v2369 = vunpack.c.l.b16 %v2233
  %v2370 = vunpack.c.l.b16 %v2237
  %v2371 = vunpack.c.l.b16 %v2240
  %v2372 = vunpack.c.l.b16 %v2244
  %v2373 = vunpack.c.l.b16 %v2247
  %v2374 = vunpack.c.l.b16 %v2251
  %v2375 = vunpack.c.l.b16 %v2254
  %v2376 = vunpack.c.l.b16 %v2258
  %v2377 = vunpack.c.l.b16 %v2261
  %v2378 = vunpack.c.l.b16 %v2265
  %v2379 = vunpack.c.l.b16 %v2268
  %v2380 = vunpack.c.l.b16 %v2272
  %v2381 = vunpack.c.l.b16 %v2275
  %v2382 = vunpack.c.l.b16 %v2279
  %v2383 = vunpack.c.l.b16 %v2282
  %v2384 = vunpack.c.l.b16 %v2286
  %v2385 = vunpack.c.l.b16 %v2289
  %v2386 = vunpack.c.l.b16 %v2293
  %v2387 = vunpack.c.l.b16 %v2296
  %v2388 = vunpack.c.l.b16 %v2300
  %v2389 = vunpack.c.l.b16 %v2303
  %v2390 = vunpack.c.l.b16 %v2307
  %v2391 = vunpack.c.l.b16 %v2310
  %v2392 = vpack.c.b16 %v2329, %v2328
  %v2393 = vpack.c.b16 %v2331, %v2330
  %v2394 = vpack.c.b16 %v2333, %v2332
  %v2395 = vpack.c.b16 %v2335, %v2334
  %v2396 = vpack.c.b16 %v2337, %v2336
  %v2397 = vpack.c.b16 %v2339, %v2338
  %v2398 = vpack.c.b16 %v2341, %v2340
  %v2399 = vpack.c.b16 %v2343, %v2342
  %v2400 = vpack.c.b16 %v2345, %v2344
  %v2401 = vpack.c.b16 %v2347, %v2346
  %v2402 = vpack.c.b16 %v2349, %v2348
  %v2403 = vpack.c.b16 %v2351, %v2350
  %v2404 = vpack.c.b16 %v2353, %v2352
  %v2405 = vpack.c.b16 %v2355, %v2354
  %v2406 = vpack.c.b16 %v2357, %v2356
  %v2407 = vpack.c.b16 %v2359, %v2358
  %v2408 = vpack.c.b16 %v2361, %v2360
  %v2409 = vpack.c.b16 %v2363, %v2362
  %v2410 = vpack.c.b16 %v2365, %v2364
  %v2411 = vpack.c.b16 %v2367, %v2366
  %v2412 = vpack.c.b16 %v2369, %v2368
  %v2413 = vpack.c.b16 %v2371, %v2370
  %v2414 = vpack.c.b16 %v2373, %v2372
  %v2415 = vpack.c.b16 %v2375, %v2374
  %v2416 = vpack.c.b16 %v2377, %v2376
  %v2417 = vpack.c.b16 %v2379, %v2378
  %v2418 = vpack.c.b16 %v2381, %v2380
  %v2419 = vpack.c.b16 %v2383, %v2382
  %v2420 = vpack.c.b16 %v2385, %v2384
  %v2421 = vpack.c.b16 %v2387, %v2386
  %v2422 = vpack.c.b16 %v2389, %v2388
  %v2423 = vpack.c.b16 %v2391, %v2390
  %v2472 = vunpack.c.l.b16 %v2312
  %v2473 = vunpack.c.l.b16 %v2313
  %v2474 = vunpack.c.l.b16 %v2314
  %v2475 = vunpack.c.l.b16 %v2315
  %v2476 = vunpack.c.l.b16 %v2316
  %v2477 = vunpack.c.l.b16 %v2317
  %v2478 = vunpack.c.l.b16 %v2318
  %v2479 = vunpack.c.l.b16 %v2319
  %v2480 = vunpack.c.l.b16 %v2320
  %v2481 = vunpack.c.l.b16 %v2321
  %v2482 = vunpack.c.l.b16 %v2322
  %v2483 = vunpack.c.l.b16 %v2323
  %v2484 = vunpack.c.l.b16 %v2324
  %v2485 = vunpack.c.l.b16 %v2325
  %v2486 = vunpack.c.l.b16 %v2326
  %v2487 = vunpack.c.l.b16 %v2327
  %v2488 = vpack.c.b16 %v2473, %v2472
  %v2489 = vpack.c.b16 %v2475, %v2474
  %v2490 = vpack.c.b16 %v2477, %v2476
  %v2491 = vpack.c.b16 %v2479, %v2478
  %v2492 = vpack.c.b16 %v2481, %v2480
  %v2493 = vpack.c.b16 %v2483, %v2482
  %v2494 = vpack.c.b16 %v2485, %v2484
  %v2495 = vpack.c.b16 %v2487, %v2486
  %2504 = vmatprep.subr.bf16.mxu0 0
  %2505 = vmatpush1.bf16.msra.mxu0 %v2495
  %2506 = vmatprep.subr.bf16.mxu0 0
  %2507 = vmatpush1.bf16.msra.mxu0 %v2494
  %2508 = vmatprep.subr.bf16.mxu0 0
  %2509 = vmatpush1.bf16.msra.mxu0 %v2493
  %2510 = vmatprep.subr.bf16.mxu0 0
  %2511 = vmatpush1.bf16.msra.mxu0 %v2492
  %2512 = vmatprep.subr.bf16.mxu0 0
  %2513 = vmatpush1.bf16.msra.mxu0 %v2491
  %2514 = vmatprep.subr.bf16.mxu0 0
  %2515 = vmatpush1.bf16.msra.mxu0 %v2490
  %2516 = vmatprep.subr.bf16.mxu0 0
  %2517 = vmatpush1.bf16.msra.mxu0 %v2489
  %2518 = vmatprep.subr.bf16.mxu0 0
  %2519 = vmatpush1.bf16.msra.mxu0 %v2488
  %2520 = vmatprep.subr.bf16.mxu0 0
  %2521 = vmatpush2.bf16.msra.mxu0 0
  %2522 = vmatprep.subr.bf16.mxu0 0
  %2523 = vmatpush2.bf16.msra.mxu0 0
  %2524 = vmatprep.subr.bf16.mxu0 0
  %2525 = vmatpush2.bf16.msra.mxu0 0
  %2526 = vmatprep.subr.bf16.mxu0 0
  %2527 = vmatpush2.bf16.msra.mxu0 0
  %2528 = vmatprep.subr.bf16.mxu0 0
  %2529 = vmatpush2.bf16.msra.mxu0 0
  %2530 = vmatprep.subr.bf16.mxu0 0
  %2531 = vmatpush2.bf16.msra.mxu0 0
  %2532 = vmatprep.subr.bf16.mxu0 0
  %2533 = vmatpush2.bf16.msra.mxu0 0
  %2534 = vmatprep.subr.bf16.mxu0 0
  %2535 = vmatpush2.bf16.msra.mxu0 0
  %2536 = vmatprep.mubr.bf16.mxu0 0
  %2537 = vmatmul.mubr.bf16.gmra.mxu0 %v2392
  %v2538 = vpop.f32.mrf.mxu0
  %v2539 = vadd.f32 0.0, %v2538
  %v2540 = vpop.f32.mrf.mxu0
  %v2541 = vpop.f32.mrf.mxu0
  %v2542 = vadd.f32 0.0, %v2541
  %v2543 = vpop.f32.mrf.mxu0
  %2544 = vmatprep.mubr.bf16.mxu0 0
  %2545 = vmatmul.mubr.bf16.gmra.mxu0 %v2393
  %v2546 = vpop.f32.mrf.mxu0
  %v2547 = vadd.f32 0.0, %v2546
  %v2548 = vpop.f32.mrf.mxu0
  %v2549 = vpop.f32.mrf.mxu0
  %v2550 = vadd.f32 0.0, %v2549
  %v2551 = vpop.f32.mrf.mxu0
  %2552 = vmatprep.mubr.bf16.mxu0 0
  %2553 = vmatmul.mubr.bf16.gmra.mxu0 %v2394
  %v2554 = vpop.f32.mrf.mxu0
  %v2555 = vadd.f32 0.0, %v2554
  %v2556 = vpop.f32.mrf.mxu0
  %v2557 = vpop.f32.mrf.mxu0
  %v2558 = vadd.f32 0.0, %v2557
  %v2559 = vpop.f32.mrf.mxu0
  %2560 = vmatprep.mubr.bf16.mxu0 0
  %2561 = vmatmul.mubr.bf16.gmra.mxu0 %v2395
  %v2562 = vpop.f32.mrf.mxu0
  %v2563 = vadd.f32 0.0, %v2562
  %v2564 = vpop.f32.mrf.mxu0
  %v2565 = vpop.f32.mrf.mxu0
  %v2566 = vadd.f32 0.0, %v2565
  %v2567 = vpop.f32.mrf.mxu0
  %2568 = vmatprep.mubr.bf16.mxu0 0
  %2569 = vmatmul.mubr.bf16.gmra.mxu0 %v2396
  %v2570 = vpop.f32.mrf.mxu0
  %v2571 = vadd.f32 0.0, %v2570
  %v2572 = vpop.f32.mrf.mxu0
  %v2573 = vpop.f32.mrf.mxu0
  %v2574 = vadd.f32 0.0, %v2573
  %v2575 = vpop.f32.mrf.mxu0
  %2576 = vmatprep.mubr.bf16.mxu0 0
  %2577 = vmatmul.mubr.bf16.gmra.mxu0 %v2397
  %v2578 = vpop.f32.mrf.mxu0
  %v2579 = vadd.f32 0.0, %v2578
  %v2580 = vpop.f32.mrf.mxu0
  %v2581 = vpop.f32.mrf.mxu0
  %v2582 = vadd.f32 0.0, %v2581
  %v2583 = vpop.f32.mrf.mxu0
  %2584 = vmatprep.mubr.bf16.mxu0 0
  %2585 = vmatmul.mubr.bf16.gmra.mxu0 %v2398
  %v2586 = vpop.f32.mrf.mxu0
  %v2587 = vadd.f32 0.0, %v2586
  %v2588 = vpop.f32.mrf.mxu0
  %v2589 = vpop.f32.mrf.mxu0
  %v2590 = vadd.f32 0.0, %v2589
  %v2591 = vpop.f32.mrf.mxu0
  %2592 = vmatprep.mubr.bf16.mxu0 0
  %2593 = vmatmul.mubr.bf16.gmra.mxu0 %v2399
  %v2594 = vpop.f32.mrf.mxu0
  %v2595 = vadd.f32 0.0, %v2594
  %v2596 = vpop.f32.mrf.mxu0
  %v2597 = vpop.f32.mrf.mxu0
  %v2598 = vadd.f32 0.0, %v2597
  %v2599 = vpop.f32.mrf.mxu0
  %2600 = vmatprep.mubr.bf16.mxu0 0
  %2601 = vmatmul.mubr.bf16.gmra.mxu0 %v2400
  %v2602 = vpop.f32.mrf.mxu0
  %v2603 = vadd.f32 0.0, %v2602
  %v2604 = vpop.f32.mrf.mxu0
  %v2605 = vpop.f32.mrf.mxu0
  %v2606 = vadd.f32 0.0, %v2605
  %v2607 = vpop.f32.mrf.mxu0
  %2608 = vmatprep.mubr.bf16.mxu0 0
  %2609 = vmatmul.mubr.bf16.gmra.mxu0 %v2401
  %v2610 = vpop.f32.mrf.mxu0
  %v2611 = vadd.f32 0.0, %v2610
  %v2612 = vpop.f32.mrf.mxu0
  %v2613 = vpop.f32.mrf.mxu0
  %v2614 = vadd.f32 0.0, %v2613
  %v2615 = vpop.f32.mrf.mxu0
  %2616 = vmatprep.mubr.bf16.mxu0 0
  %2617 = vmatmul.mubr.bf16.gmra.mxu0 %v2402
  %v2618 = vpop.f32.mrf.mxu0
  %v2619 = vadd.f32 0.0, %v2618
  %v2620 = vpop.f32.mrf.mxu0
  %v2621 = vpop.f32.mrf.mxu0
  %v2622 = vadd.f32 0.0, %v2621
  %v2623 = vpop.f32.mrf.mxu0
  %2624 = vmatprep.mubr.bf16.mxu0 0
  %2625 = vmatmul.mubr.bf16.gmra.mxu0 %v2403
  %v2626 = vpop.f32.mrf.mxu0
  %v2627 = vadd.f32 0.0, %v2626
  %v2628 = vpop.f32.mrf.mxu0
  %v2629 = vpop.f32.mrf.mxu0
  %v2630 = vadd.f32 0.0, %v2629
  %v2631 = vpop.f32.mrf.mxu0
  %2632 = vmatprep.mubr.bf16.mxu0 0
  %2633 = vmatmul.mubr.bf16.gmra.mxu0 %v2404
  %v2634 = vpop.f32.mrf.mxu0
  %v2635 = vadd.f32 0.0, %v2634
  %v2636 = vpop.f32.mrf.mxu0
  %v2637 = vpop.f32.mrf.mxu0
  %v2638 = vadd.f32 0.0, %v2637
  %v2639 = vpop.f32.mrf.mxu0
  %2640 = vmatprep.mubr.bf16.mxu0 0
  %2641 = vmatmul.mubr.bf16.gmra.mxu0 %v2405
  %v2642 = vpop.f32.mrf.mxu0
  %v2643 = vadd.f32 0.0, %v2642
  %v2644 = vpop.f32.mrf.mxu0
  %v2645 = vpop.f32.mrf.mxu0
  %v2646 = vadd.f32 0.0, %v2645
  %v2647 = vpop.f32.mrf.mxu0
  %2648 = vmatprep.mubr.bf16.mxu0 0
  %2649 = vmatmul.mubr.bf16.gmra.mxu0 %v2406
  %v2650 = vpop.f32.mrf.mxu0
  %v2651 = vadd.f32 0.0, %v2650
  %v2652 = vpop.f32.mrf.mxu0
  %v2653 = vpop.f32.mrf.mxu0
  %v2654 = vadd.f32 0.0, %v2653
  %v2655 = vpop.f32.mrf.mxu0
  %2656 = vmatprep.mubr.bf16.mxu0 0
  %2657 = vmatmul.mubr.bf16.gmra.mxu0 %v2407
  %v2658 = vpop.f32.mrf.mxu0
  %v2659 = vadd.f32 0.0, %v2658
  %v2660 = vpop.f32.mrf.mxu0
  %v2661 = vpop.f32.mrf.mxu0
  %v2662 = vadd.f32 0.0, %v2661
  %v2663 = vpop.f32.mrf.mxu0
  %2664 = vmatprep.mubr.bf16.mxu0 0
  %2665 = vmatmul.mubr.bf16.gmra.mxu0 %v2408
  %v2666 = vpop.f32.mrf.mxu0
  %v2667 = vadd.f32 0.0, %v2666
  %v2668 = vpop.f32.mrf.mxu0
  %v2669 = vpop.f32.mrf.mxu0
  %v2670 = vadd.f32 0.0, %v2669
  %v2671 = vpop.f32.mrf.mxu0
  %2672 = vmatprep.mubr.bf16.mxu0 0
  %2673 = vmatmul.mubr.bf16.gmra.mxu0 %v2409
  %v2674 = vpop.f32.mrf.mxu0
  %v2675 = vadd.f32 0.0, %v2674
  %v2676 = vpop.f32.mrf.mxu0
  %v2677 = vpop.f32.mrf.mxu0
  %v2678 = vadd.f32 0.0, %v2677
  %v2679 = vpop.f32.mrf.mxu0
  %2680 = vmatprep.mubr.bf16.mxu0 0
  %2681 = vmatmul.mubr.bf16.gmra.mxu0 %v2410
  %v2682 = vpop.f32.mrf.mxu0
  %v2683 = vadd.f32 0.0, %v2682
  %v2684 = vpop.f32.mrf.mxu0
  %v2685 = vpop.f32.mrf.mxu0
  %v2686 = vadd.f32 0.0, %v2685
  %v2687 = vpop.f32.mrf.mxu0
  %2688 = vmatprep.mubr.bf16.mxu0 0
  %2689 = vmatmul.mubr.bf16.gmra.mxu0 %v2411
  %v2690 = vpop.f32.mrf.mxu0
  %v2691 = vadd.f32 0.0, %v2690
  %v2692 = vpop.f32.mrf.mxu0
  %v2693 = vpop.f32.mrf.mxu0
  %v2694 = vadd.f32 0.0, %v2693
  %v2695 = vpop.f32.mrf.mxu0
  %2696 = vmatprep.mubr.bf16.mxu0 0
  %2697 = vmatmul.mubr.bf16.gmra.mxu0 %v2412
  %v2698 = vpop.f32.mrf.mxu0
  %v2699 = vadd.f32 0.0, %v2698
  %v2700 = vpop.f32.mrf.mxu0
  %v2701 = vpop.f32.mrf.mxu0
  %v2702 = vadd.f32 0.0, %v2701
  %v2703 = vpop.f32.mrf.mxu0
  %2704 = vmatprep.mubr.bf16.mxu0 0
  %2705 = vmatmul.mubr.bf16.gmra.mxu0 %v2413
  %v2706 = vpop.f32.mrf.mxu0
  %v2707 = vadd.f32 0.0, %v2706
  %v2708 = vpop.f32.mrf.mxu0
  %v2709 = vpop.f32.mrf.mxu0
  %v2710 = vadd.f32 0.0, %v2709
  %v2711 = vpop.f32.mrf.mxu0
  %2712 = vmatprep.mubr.bf16.mxu0 0
  %2713 = vmatmul.mubr.bf16.gmra.mxu0 %v2414
  %v2714 = vpop.f32.mrf.mxu0
  %v2715 = vadd.f32 0.0, %v2714
  %v2716 = vpop.f32.mrf.mxu0
  %v2717 = vpop.f32.mrf.mxu0
  %v2718 = vadd.f32 0.0, %v2717
  %v2719 = vpop.f32.mrf.mxu0
  %2720 = vmatprep.mubr.bf16.mxu0 0
  %2721 = vmatmul.mubr.bf16.gmra.mxu0 %v2415
  %v2722 = vpop.f32.mrf.mxu0
  %v2723 = vadd.f32 0.0, %v2722
  %v2724 = vpop.f32.mrf.mxu0
  %v2725 = vpop.f32.mrf.mxu0
  %v2726 = vadd.f32 0.0, %v2725
  %v2727 = vpop.f32.mrf.mxu0
  %2728 = vmatprep.mubr.bf16.mxu0 0
  %2729 = vmatmul.mubr.bf16.gmra.mxu0 %v2416
  %v2730 = vpop.f32.mrf.mxu0
  %v2731 = vadd.f32 0.0, %v2730
  %v2732 = vpop.f32.mrf.mxu0
  %v2733 = vpop.f32.mrf.mxu0
  %v2734 = vadd.f32 0.0, %v2733
  %v2735 = vpop.f32.mrf.mxu0
  %2736 = vmatprep.mubr.bf16.mxu0 0
  %2737 = vmatmul.mubr.bf16.gmra.mxu0 %v2417
  %v2738 = vpop.f32.mrf.mxu0
  %v2739 = vadd.f32 0.0, %v2738
  %v2740 = vpop.f32.mrf.mxu0
  %v2741 = vpop.f32.mrf.mxu0
  %v2742 = vadd.f32 0.0, %v2741
  %v2743 = vpop.f32.mrf.mxu0
  %2744 = vmatprep.mubr.bf16.mxu0 0
  %2745 = vmatmul.mubr.bf16.gmra.mxu0 %v2418
  %v2746 = vpop.f32.mrf.mxu0
  %v2747 = vadd.f32 0.0, %v2746
  %v2748 = vpop.f32.mrf.mxu0
  %v2749 = vpop.f32.mrf.mxu0
  %v2750 = vadd.f32 0.0, %v2749
  %v2751 = vpop.f32.mrf.mxu0
  %2752 = vmatprep.mubr.bf16.mxu0 0
  %2753 = vmatmul.mubr.bf16.gmra.mxu0 %v2419
  %v2754 = vpop.f32.mrf.mxu0
  %v2755 = vadd.f32 0.0, %v2754
  %v2756 = vpop.f32.mrf.mxu0
  %v2757 = vpop.f32.mrf.mxu0
  %v2758 = vadd.f32 0.0, %v2757
  %v2759 = vpop.f32.mrf.mxu0
  %2760 = vmatprep.mubr.bf16.mxu0 0
  %2761 = vmatmul.mubr.bf16.gmra.mxu0 %v2420
  %v2762 = vpop.f32.mrf.mxu0
  %v2763 = vadd.f32 0.0, %v2762
  %v2764 = vpop.f32.mrf.mxu0
  %v2765 = vpop.f32.mrf.mxu0
  %v2766 = vadd.f32 0.0, %v2765
  %v2767 = vpop.f32.mrf.mxu0
  %2768 = vmatprep.mubr.bf16.mxu0 0
  %2769 = vmatmul.mubr.bf16.gmra.mxu0 %v2421
  %v2770 = vpop.f32.mrf.mxu0
  %v2771 = vadd.f32 0.0, %v2770
  %v2772 = vpop.f32.mrf.mxu0
  %v2773 = vpop.f32.mrf.mxu0
  %v2774 = vadd.f32 0.0, %v2773
  %v2775 = vpop.f32.mrf.mxu0
  %2776 = vmatprep.mubr.bf16.mxu0 0
  %2777 = vmatmul.mubr.bf16.gmra.mxu0 %v2422
  %v2778 = vpop.f32.mrf.mxu0
  %v2779 = vadd.f32 0.0, %v2778
  %v2780 = vpop.f32.mrf.mxu0
  %v2781 = vpop.f32.mrf.mxu0
  %v2782 = vadd.f32 0.0, %v2781
  %v2783 = vpop.f32.mrf.mxu0
  %2784 = vmatprep.mubr.bf16.mxu0 0
  %2785 = vmatmul.mubr.bf16.gmra.mxu0 %v2423
  %v2786 = vpop.f32.mrf.mxu0
  %v2787 = vadd.f32 0.0, %v2786
  %v2788 = vpop.f32.mrf.mxu0
  %v2789 = vpop.f32.mrf.mxu0
  %v2790 = vadd.f32 0.0, %v2789
  %v2791 = vpop.f32.mrf.mxu0
  %2792 = vdwg.mxu0
  %v2825 = vunpack.c.l.b16 %v1844
  %v2826 = vunpack.c.l.b16 %v1845
  %v2827 = vunpack.c.l.b16 %v1846
  %v2828 = vunpack.c.l.b16 %v1847
  %v2829 = vunpack.c.l.b16 %v1848
  %v2830 = vunpack.c.l.b16 %v1849
  %v2831 = vunpack.c.l.b16 %v1850
  %v2832 = vunpack.c.l.b16 %v1851
  %v2833 = vunpack.c.l.b16 %v1852
  %v2834 = vunpack.c.l.b16 %v1853
  %v2835 = vunpack.c.l.b16 %v1854
  %v2836 = vunpack.c.l.b16 %v1855
  %v2837 = vunpack.c.l.b16 %v1856
  %v2838 = vunpack.c.l.b16 %v1857
  %v2839 = vunpack.c.l.b16 %v1858
  %v2840 = vunpack.c.l.b16 %v1859
  %v2841 = vunpack.c.l.b16 %v1860
  %v2842 = vunpack.c.l.b16 %v1861
  %v2843 = vunpack.c.l.b16 %v1862
  %v2844 = vunpack.c.l.b16 %v1863
  %v2845 = vunpack.c.l.b16 %v1864
  %v2846 = vunpack.c.l.b16 %v1865
  %v2847 = vunpack.c.l.b16 %v1866
  %v2848 = vunpack.c.l.b16 %v1867
  %v2849 = vunpack.c.l.b16 %v1868
  %v2850 = vunpack.c.l.b16 %v1869
  %v2851 = vunpack.c.l.b16 %v1870
  %v2852 = vunpack.c.l.b16 %v1871
  %v2853 = vunpack.c.l.b16 %v1872
  %v2854 = vunpack.c.l.b16 %v1873
  %v2855 = vunpack.c.l.b16 %v1874
  %v2856 = vunpack.c.l.b16 %v1875
  %v2857 = vunpack.c.l.b16 %v1876
  %v2858 = vunpack.c.l.b16 %v1877
  %v2859 = vunpack.c.l.b16 %v1878
  %v2860 = vunpack.c.l.b16 %v1879
  %v2861 = vunpack.c.l.b16 %v1880
  %v2862 = vunpack.c.l.b16 %v1881
  %v2863 = vunpack.c.l.b16 %v1882
  %v2864 = vunpack.c.l.b16 %v1883
  %v2865 = vunpack.c.l.b16 %v1884
  %v2866 = vunpack.c.l.b16 %v1885
  %v2867 = vunpack.c.l.b16 %v1886
  %v2868 = vunpack.c.l.b16 %v1887
  %v2869 = vunpack.c.l.b16 %v1888
  %v2870 = vunpack.c.l.b16 %v1889
  %v2871 = vunpack.c.l.b16 %v1890
  %v2872 = vunpack.c.l.b16 %v1891
  %v2873 = vunpack.c.l.b16 %v1892
  %v2874 = vunpack.c.l.b16 %v1893
  %v2875 = vunpack.c.l.b16 %v1894
  %v2876 = vunpack.c.l.b16 %v1895
  %v2877 = vunpack.c.l.b16 %v1896
  %v2878 = vunpack.c.l.b16 %v1897
  %v2879 = vunpack.c.l.b16 %v1898
  %v2880 = vunpack.c.l.b16 %v1899
  %v2881 = vunpack.c.l.b16 %v1900
  %v2882 = vunpack.c.l.b16 %v1901
  %v2883 = vunpack.c.l.b16 %v1902
  %v2884 = vunpack.c.l.b16 %v1903
  %v2885 = vunpack.c.l.b16 %v1904
  %v2886 = vunpack.c.l.b16 %v1905
  %v2887 = vunpack.c.l.b16 %v1906
  %v2888 = vunpack.c.l.b16 %v1907
  %v2889 = vpack.c.b16 %v2826, %v2825
  %v2890 = vpack.c.b16 %v2828, %v2827
  %v2891 = vpack.c.b16 %v2830, %v2829
  %v2892 = vpack.c.b16 %v2832, %v2831
  %v2893 = vpack.c.b16 %v2834, %v2833
  %v2894 = vpack.c.b16 %v2836, %v2835
  %v2895 = vpack.c.b16 %v2838, %v2837
  %v2896 = vpack.c.b16 %v2840, %v2839
  %v2897 = vpack.c.b16 %v2842, %v2841
  %v2898 = vpack.c.b16 %v2844, %v2843
  %v2899 = vpack.c.b16 %v2846, %v2845
  %v2900 = vpack.c.b16 %v2848, %v2847
  %v2901 = vpack.c.b16 %v2850, %v2849
  %v2902 = vpack.c.b16 %v2852, %v2851
  %v2903 = vpack.c.b16 %v2854, %v2853
  %v2904 = vpack.c.b16 %v2856, %v2855
  %v2905 = vpack.c.b16 %v2858, %v2857
  %v2906 = vpack.c.b16 %v2860, %v2859
  %v2907 = vpack.c.b16 %v2862, %v2861
  %v2908 = vpack.c.b16 %v2864, %v2863
  %v2909 = vpack.c.b16 %v2866, %v2865
  %v2910 = vpack.c.b16 %v2868, %v2867
  %v2911 = vpack.c.b16 %v2870, %v2869
  %v2912 = vpack.c.b16 %v2872, %v2871
  %v2913 = vpack.c.b16 %v2874, %v2873
  %v2914 = vpack.c.b16 %v2876, %v2875
  %v2915 = vpack.c.b16 %v2878, %v2877
  %v2916 = vpack.c.b16 %v2880, %v2879
  %v2917 = vpack.c.b16 %v2882, %v2881
  %v2918 = vpack.c.b16 %v2884, %v2883
  %v2919 = vpack.c.b16 %v2886, %v2885
  %v2920 = vpack.c.b16 %v2888, %v2887
  %v2969 = vunpack.c.l.b16 %v1908
  %v2970 = vunpack.c.l.b16 %v1909
  %v2971 = vunpack.c.l.b16 %v1910
  %v2972 = vunpack.c.l.b16 %v1911
  %v2973 = vunpack.c.l.b16 %v1912
  %v2974 = vunpack.c.l.b16 %v1913
  %v2975 = vunpack.c.l.b16 %v1914
  %v2976 = vunpack.c.l.b16 %v1915
  %v2977 = vunpack.c.l.b16 %v1916
  %v2978 = vunpack.c.l.b16 %v1917
  %v2979 = vunpack.c.l.b16 %v1918
  %v2980 = vunpack.c.l.b16 %v1919
  %v2981 = vunpack.c.l.b16 %v1920
  %v2982 = vunpack.c.l.b16 %v1921
  %v2983 = vunpack.c.l.b16 %v1922
  %v2984 = vunpack.c.l.b16 %v1923
  %v2985 = vpack.c.b16 %v2970, %v2969
  %v2986 = vpack.c.b16 %v2972, %v2971
  %v2987 = vpack.c.b16 %v2974, %v2973
  %v2988 = vpack.c.b16 %v2976, %v2975
  %v2989 = vpack.c.b16 %v2978, %v2977
  %v2990 = vpack.c.b16 %v2980, %v2979
  %v2991 = vpack.c.b16 %v2982, %v2981
  %v2992 = vpack.c.b16 %v2984, %v2983
  %3001 = vmatprep.subr.bf16.mxu0 0
  %3002 = vmatpush1.bf16.msra.mxu0 %v2992
  %3003 = vmatprep.subr.bf16.mxu0 0
  %3004 = vmatpush1.bf16.msra.mxu0 %v2991
  %3005 = vmatprep.subr.bf16.mxu0 0
  %3006 = vmatpush1.bf16.msra.mxu0 %v2990
  %3007 = vmatprep.subr.bf16.mxu0 0
  %3008 = vmatpush1.bf16.msra.mxu0 %v2989
  %3009 = vmatprep.subr.bf16.mxu0 0
  %3010 = vmatpush1.bf16.msra.mxu0 %v2988
  %3011 = vmatprep.subr.bf16.mxu0 0
  %3012 = vmatpush1.bf16.msra.mxu0 %v2987
  %3013 = vmatprep.subr.bf16.mxu0 0
  %3014 = vmatpush1.bf16.msra.mxu0 %v2986
  %3015 = vmatprep.subr.bf16.mxu0 0
  %3016 = vmatpush1.bf16.msra.mxu0 %v2985
  %3017 = vmatprep.subr.bf16.mxu0 0
  %3018 = vmatpush2.bf16.msra.mxu0 0
  %3019 = vmatprep.subr.bf16.mxu0 0
  %3020 = vmatpush2.bf16.msra.mxu0 0
  %3021 = vmatprep.subr.bf16.mxu0 0
  %3022 = vmatpush2.bf16.msra.mxu0 0
  %3023 = vmatprep.subr.bf16.mxu0 0
  %3024 = vmatpush2.bf16.msra.mxu0 0
  %3025 = vmatprep.subr.bf16.mxu0 0
  %3026 = vmatpush2.bf16.msra.mxu0 0
  %3027 = vmatprep.subr.bf16.mxu0 0
  %3028 = vmatpush2.bf16.msra.mxu0 0
  %3029 = vmatprep.subr.bf16.mxu0 0
  %3030 = vmatpush2.bf16.msra.mxu0 0
  %3031 = vmatprep.subr.bf16.mxu0 0
  %3032 = vmatpush2.bf16.msra.mxu0 0
  %3033 = vmatprep.mubr.bf16.mxu0 0
  %3034 = vmatmul.mubr.bf16.gmra.mxu0 %v2889
  %v3035 = vpop.f32.mrf.mxu0
  %v3036 = vadd.f32 %v2539, %v3035
  %v3037 = vpop.f32.mrf.mxu0
  %v3038 = vpop.f32.mrf.mxu0
  %v3039 = vadd.f32 %v2542, %v3038
  %v3040 = vpop.f32.mrf.mxu0
  %3041 = vmatprep.mubr.bf16.mxu0 0
  %3042 = vmatmul.mubr.bf16.gmra.mxu0 %v2890
  %v3043 = vpop.f32.mrf.mxu0
  %v3044 = vadd.f32 %v2547, %v3043
  %v3045 = vpop.f32.mrf.mxu0
  %v3046 = vpop.f32.mrf.mxu0
  %v3047 = vadd.f32 %v2550, %v3046
  %v3048 = vpop.f32.mrf.mxu0
  %3049 = vmatprep.mubr.bf16.mxu0 0
  %3050 = vmatmul.mubr.bf16.gmra.mxu0 %v2891
  %v3051 = vpop.f32.mrf.mxu0
  %v3052 = vadd.f32 %v2555, %v3051
  %v3053 = vpop.f32.mrf.mxu0
  %v3054 = vpop.f32.mrf.mxu0
  %v3055 = vadd.f32 %v2558, %v3054
  %v3056 = vpop.f32.mrf.mxu0
  %3057 = vmatprep.mubr.bf16.mxu0 0
  %3058 = vmatmul.mubr.bf16.gmra.mxu0 %v2892
  %v3059 = vpop.f32.mrf.mxu0
  %v3060 = vadd.f32 %v2563, %v3059
  %v3061 = vpop.f32.mrf.mxu0
  %v3062 = vpop.f32.mrf.mxu0
  %v3063 = vadd.f32 %v2566, %v3062
  %v3064 = vpop.f32.mrf.mxu0
  %3065 = vmatprep.mubr.bf16.mxu0 0
  %3066 = vmatmul.mubr.bf16.gmra.mxu0 %v2893
  %v3067 = vpop.f32.mrf.mxu0
  %v3068 = vadd.f32 %v2571, %v3067
  %v3069 = vpop.f32.mrf.mxu0
  %v3070 = vpop.f32.mrf.mxu0
  %v3071 = vadd.f32 %v2574, %v3070
  %v3072 = vpop.f32.mrf.mxu0
  %3073 = vmatprep.mubr.bf16.mxu0 0
  %3074 = vmatmul.mubr.bf16.gmra.mxu0 %v2894
  %v3075 = vpop.f32.mrf.mxu0
  %v3076 = vadd.f32 %v2579, %v3075
  %v3077 = vpop.f32.mrf.mxu0
  %v3078 = vpop.f32.mrf.mxu0
  %v3079 = vadd.f32 %v2582, %v3078
  %v3080 = vpop.f32.mrf.mxu0
  %3081 = vmatprep.mubr.bf16.mxu0 0
  %3082 = vmatmul.mubr.bf16.gmra.mxu0 %v2895
  %v3083 = vpop.f32.mrf.mxu0
  %v3084 = vadd.f32 %v2587, %v3083
  %v3085 = vpop.f32.mrf.mxu0
  %v3086 = vpop.f32.mrf.mxu0
  %v3087 = vadd.f32 %v2590, %v3086
  %v3088 = vpop.f32.mrf.mxu0
  %3089 = vmatprep.mubr.bf16.mxu0 0
  %3090 = vmatmul.mubr.bf16.gmra.mxu0 %v2896
  %v3091 = vpop.f32.mrf.mxu0
  %v3092 = vadd.f32 %v2595, %v3091
  %v3093 = vpop.f32.mrf.mxu0
  %v3094 = vpop.f32.mrf.mxu0
  %v3095 = vadd.f32 %v2598, %v3094
  %v3096 = vpop.f32.mrf.mxu0
  %3097 = vmatprep.mubr.bf16.mxu0 0
  %3098 = vmatmul.mubr.bf16.gmra.mxu0 %v2897
  %v3099 = vpop.f32.mrf.mxu0
  %v3100 = vadd.f32 %v2603, %v3099
  %v3101 = vpop.f32.mrf.mxu0
  %v3102 = vpop.f32.mrf.mxu0
  %v3103 = vadd.f32 %v2606, %v3102
  %v3104 = vpop.f32.mrf.mxu0
  %3105 = vmatprep.mubr.bf16.mxu0 0
  %3106 = vmatmul.mubr.bf16.gmra.mxu0 %v2898
  %v3107 = vpop.f32.mrf.mxu0
  %v3108 = vadd.f32 %v2611, %v3107
  %v3109 = vpop.f32.mrf.mxu0
  %v3110 = vpop.f32.mrf.mxu0
  %v3111 = vadd.f32 %v2614, %v3110
  %v3112 = vpop.f32.mrf.mxu0
  %3113 = vmatprep.mubr.bf16.mxu0 0
  %3114 = vmatmul.mubr.bf16.gmra.mxu0 %v2899
  %v3115 = vpop.f32.mrf.mxu0
  %v3116 = vadd.f32 %v2619, %v3115
  %v3117 = vpop.f32.mrf.mxu0
  %v3118 = vpop.f32.mrf.mxu0
  %v3119 = vadd.f32 %v2622, %v3118
  %v3120 = vpop.f32.mrf.mxu0
  %3121 = vmatprep.mubr.bf16.mxu0 0
  %3122 = vmatmul.mubr.bf16.gmra.mxu0 %v2900
  %v3123 = vpop.f32.mrf.mxu0
  %v3124 = vadd.f32 %v2627, %v3123
  %v3125 = vpop.f32.mrf.mxu0
  %v3126 = vpop.f32.mrf.mxu0
  %v3127 = vadd.f32 %v2630, %v3126
  %v3128 = vpop.f32.mrf.mxu0
  %3129 = vmatprep.mubr.bf16.mxu0 0
  %3130 = vmatmul.mubr.bf16.gmra.mxu0 %v2901
  %v3131 = vpop.f32.mrf.mxu0
  %v3132 = vadd.f32 %v2635, %v3131
  %v3133 = vpop.f32.mrf.mxu0
  %v3134 = vpop.f32.mrf.mxu0
  %v3135 = vadd.f32 %v2638, %v3134
  %v3136 = vpop.f32.mrf.mxu0
  %3137 = vmatprep.mubr.bf16.mxu0 0
  %3138 = vmatmul.mubr.bf16.gmra.mxu0 %v2902
  %v3139 = vpop.f32.mrf.mxu0
  %v3140 = vadd.f32 %v2643, %v3139
  %v3141 = vpop.f32.mrf.mxu0
  %v3142 = vpop.f32.mrf.mxu0
  %v3143 = vadd.f32 %v2646, %v3142
  %v3144 = vpop.f32.mrf.mxu0
  %3145 = vmatprep.mubr.bf16.mxu0 0
  %3146 = vmatmul.mubr.bf16.gmra.mxu0 %v2903
  %v3147 = vpop.f32.mrf.mxu0
  %v3148 = vadd.f32 %v2651, %v3147
  %v3149 = vpop.f32.mrf.mxu0
  %v3150 = vpop.f32.mrf.mxu0
  %v3151 = vadd.f32 %v2654, %v3150
  %v3152 = vpop.f32.mrf.mxu0
  %3153 = vmatprep.mubr.bf16.mxu0 0
  %3154 = vmatmul.mubr.bf16.gmra.mxu0 %v2904
  %v3155 = vpop.f32.mrf.mxu0
  %v3156 = vadd.f32 %v2659, %v3155
  %v3157 = vpop.f32.mrf.mxu0
  %v3158 = vpop.f32.mrf.mxu0
  %v3159 = vadd.f32 %v2662, %v3158
  %v3160 = vpop.f32.mrf.mxu0
  %3161 = vmatprep.mubr.bf16.mxu0 0
  %3162 = vmatmul.mubr.bf16.gmra.mxu0 %v2905
  %v3163 = vpop.f32.mrf.mxu0
  %v3164 = vadd.f32 %v2667, %v3163
  %v3165 = vpop.f32.mrf.mxu0
  %v3166 = vpop.f32.mrf.mxu0
  %v3167 = vadd.f32 %v2670, %v3166
  %v3168 = vpop.f32.mrf.mxu0
  %3169 = vmatprep.mubr.bf16.mxu0 0
  %3170 = vmatmul.mubr.bf16.gmra.mxu0 %v2906
  %v3171 = vpop.f32.mrf.mxu0
  %v3172 = vadd.f32 %v2675, %v3171
  %v3173 = vpop.f32.mrf.mxu0
  %v3174 = vpop.f32.mrf.mxu0
  %v3175 = vadd.f32 %v2678, %v3174
  %v3176 = vpop.f32.mrf.mxu0
  %3177 = vmatprep.mubr.bf16.mxu0 0
  %3178 = vmatmul.mubr.bf16.gmra.mxu0 %v2907
  %v3179 = vpop.f32.mrf.mxu0
  %v3180 = vadd.f32 %v2683, %v3179
  %v3181 = vpop.f32.mrf.mxu0
  %v3182 = vpop.f32.mrf.mxu0
  %v3183 = vadd.f32 %v2686, %v3182
  %v3184 = vpop.f32.mrf.mxu0
  %3185 = vmatprep.mubr.bf16.mxu0 0
  %3186 = vmatmul.mubr.bf16.gmra.mxu0 %v2908
  %v3187 = vpop.f32.mrf.mxu0
  %v3188 = vadd.f32 %v2691, %v3187
  %v3189 = vpop.f32.mrf.mxu0
  %v3190 = vpop.f32.mrf.mxu0
  %v3191 = vadd.f32 %v2694, %v3190
  %v3192 = vpop.f32.mrf.mxu0
  %3193 = vmatprep.mubr.bf16.mxu0 0
  %3194 = vmatmul.mubr.bf16.gmra.mxu0 %v2909
  %v3195 = vpop.f32.mrf.mxu0
  %v3196 = vadd.f32 %v2699, %v3195
  %v3197 = vpop.f32.mrf.mxu0
  %v3198 = vpop.f32.mrf.mxu0
  %v3199 = vadd.f32 %v2702, %v3198
  %v3200 = vpop.f32.mrf.mxu0
  %3201 = vmatprep.mubr.bf16.mxu0 0
  %3202 = vmatmul.mubr.bf16.gmra.mxu0 %v2910
  %v3203 = vpop.f32.mrf.mxu0
  %v3204 = vadd.f32 %v2707, %v3203
  %v3205 = vpop.f32.mrf.mxu0
  %v3206 = vpop.f32.mrf.mxu0
  %v3207 = vadd.f32 %v2710, %v3206
  %v3208 = vpop.f32.mrf.mxu0
  %3209 = vmatprep.mubr.bf16.mxu0 0
  %3210 = vmatmul.mubr.bf16.gmra.mxu0 %v2911
  %v3211 = vpop.f32.mrf.mxu0
  %v3212 = vadd.f32 %v2715, %v3211
  %v3213 = vpop.f32.mrf.mxu0
  %v3214 = vpop.f32.mrf.mxu0
  %v3215 = vadd.f32 %v2718, %v3214
  %v3216 = vpop.f32.mrf.mxu0
  %3217 = vmatprep.mubr.bf16.mxu0 0
  %3218 = vmatmul.mubr.bf16.gmra.mxu0 %v2912
  %v3219 = vpop.f32.mrf.mxu0
  %v3220 = vadd.f32 %v2723, %v3219
  %v3221 = vpop.f32.mrf.mxu0
  %v3222 = vpop.f32.mrf.mxu0
  %v3223 = vadd.f32 %v2726, %v3222
  %v3224 = vpop.f32.mrf.mxu0
  %3225 = vmatprep.mubr.bf16.mxu0 0
  %3226 = vmatmul.mubr.bf16.gmra.mxu0 %v2913
  %v3227 = vpop.f32.mrf.mxu0
  %v3228 = vadd.f32 %v2731, %v3227
  %v3229 = vpop.f32.mrf.mxu0
  %v3230 = vpop.f32.mrf.mxu0
  %v3231 = vadd.f32 %v2734, %v3230
  %v3232 = vpop.f32.mrf.mxu0
  %3233 = vmatprep.mubr.bf16.mxu0 0
  %3234 = vmatmul.mubr.bf16.gmra.mxu0 %v2914
  %v3235 = vpop.f32.mrf.mxu0
  %v3236 = vadd.f32 %v2739, %v3235
  %v3237 = vpop.f32.mrf.mxu0
  %v3238 = vpop.f32.mrf.mxu0
  %v3239 = vadd.f32 %v2742, %v3238
  %v3240 = vpop.f32.mrf.mxu0
  %3241 = vmatprep.mubr.bf16.mxu0 0
  %3242 = vmatmul.mubr.bf16.gmra.mxu0 %v2915
  %v3243 = vpop.f32.mrf.mxu0
  %v3244 = vadd.f32 %v2747, %v3243
  %v3245 = vpop.f32.mrf.mxu0
  %v3246 = vpop.f32.mrf.mxu0
  %v3247 = vadd.f32 %v2750, %v3246
  %v3248 = vpop.f32.mrf.mxu0
  %3249 = vmatprep.mubr.bf16.mxu0 0
  %3250 = vmatmul.mubr.bf16.gmra.mxu0 %v2916
  %v3251 = vpop.f32.mrf.mxu0
  %v3252 = vadd.f32 %v2755, %v3251
  %v3253 = vpop.f32.mrf.mxu0
  %v3254 = vpop.f32.mrf.mxu0
  %v3255 = vadd.f32 %v2758, %v3254
  %v3256 = vpop.f32.mrf.mxu0
  %3257 = vmatprep.mubr.bf16.mxu0 0
  %3258 = vmatmul.mubr.bf16.gmra.mxu0 %v2917
  %v3259 = vpop.f32.mrf.mxu0
  %v3260 = vadd.f32 %v2763, %v3259
  %v3261 = vpop.f32.mrf.mxu0
  %v3262 = vpop.f32.mrf.mxu0
  %v3263 = vadd.f32 %v2766, %v3262
  %v3264 = vpop.f32.mrf.mxu0
  %3265 = vmatprep.mubr.bf16.mxu0 0
  %3266 = vmatmul.mubr.bf16.gmra.mxu0 %v2918
  %v3267 = vpop.f32.mrf.mxu0
  %v3268 = vadd.f32 %v2771, %v3267
  %v3269 = vpop.f32.mrf.mxu0
  %v3270 = vpop.f32.mrf.mxu0
  %v3271 = vadd.f32 %v2774, %v3270
  %v3272 = vpop.f32.mrf.mxu0
  %3273 = vmatprep.mubr.bf16.mxu0 0
  %3274 = vmatmul.mubr.bf16.gmra.mxu0 %v2919
  %v3275 = vpop.f32.mrf.mxu0
  %v3276 = vadd.f32 %v2779, %v3275
  %v3277 = vpop.f32.mrf.mxu0
  %v3278 = vpop.f32.mrf.mxu0
  %v3279 = vadd.f32 %v2782, %v3278
  %v3280 = vpop.f32.mrf.mxu0
  %3281 = vmatprep.mubr.bf16.mxu0 0
  %3282 = vmatmul.mubr.bf16.gmra.mxu0 %v2920
  %v3283 = vpop.f32.mrf.mxu0
  %v3284 = vadd.f32 %v2787, %v3283
  %v3285 = vpop.f32.mrf.mxu0
  %v3286 = vpop.f32.mrf.mxu0
  %v3287 = vadd.f32 %v2790, %v3286
  %v3288 = vpop.f32.mrf.mxu0
  %3289 = vdwg.mxu0
  %v3290 = vld [vmem:[#allocation2] sm:$0xc]
  %v3291 = vld [vmem:[#allocation2 + $0x8] sm:$0x3]
  %v3292 = vld [vmem:[#allocation2 + $0xc] sm:$0xc]
  %v3293 = vld [vmem:[#allocation2 + $0x14] sm:$0x3]
  %v3294 = vld [vmem:[#allocation2 + $0x18] sm:$0xc]
  %v3295 = vld [vmem:[#allocation2 + $0x20] sm:$0x3]
  %v3296 = vld [vmem:[#allocation2 + $0x24] sm:$0xc]
  %v3297 = vld [vmem:[#allocation2 + $0x2c] sm:$0x3]
  %v3298 = vld [vmem:[#allocation2 + $0x30] sm:$0xc]
  %v3299 = vld [vmem:[#allocation2 + $0x38] sm:$0x3]
  %v3300 = vld [vmem:[#allocation2 + $0x3c] sm:$0xc]
  %v3301 = vld [vmem:[#allocation2 + $0x44] sm:$0x3]
  %v3302 = vld [vmem:[#allocation2 + $0x48] sm:$0xc]
  %v3303 = vld [vmem:[#allocation2 + $0x50] sm:$0x3]
  %v3304 = vld [vmem:[#allocation2 + $0x54] sm:$0xc]
  %v3305 = vld [vmem:[#allocation2 + $0x5c] sm:$0x3]
  %v3306 = vld [vmem:[#allocation2 + $0x60] sm:$0xc]
  %v3307 = vld [vmem:[#allocation2 + $0x68] sm:$0x3]
  %v3308 = vld [vmem:[#allocation2 + $0x6c] sm:$0xc]
  %v3309 = vld [vmem:[#allocation2 + $0x74] sm:$0x3]
  %v3310 = vld [vmem:[#allocation2 + $0x78] sm:$0xc]
  %v3311 = vld [vmem:[#allocation2 + $0x80] sm:$0x3]
  %v3312 = vld [vmem:[#allocation2 + $0x84] sm:$0xc]
  %v3313 = vld [vmem:[#allocation2 + $0x8c] sm:$0x3]
  %v3314 = vld [vmem:[#allocation2 + $0x90] sm:$0xc]
  %v3315 = vld [vmem:[#allocation2 + $0x98] sm:$0x3]
  %v3316 = vld [vmem:[#allocation2 + $0x9c] sm:$0xc]
  %v3317 = vld [vmem:[#allocation2 + $0xa4] sm:$0x3]
  %v3318 = vld [vmem:[#allocation2 + $0xa8] sm:$0xc]
  %v3319 = vld [vmem:[#allocation2 + $0xb0] sm:$0x3]
  %v3320 = vld [vmem:[#allocation2 + $0xb4] sm:$0xc]
  %v3321 = vld [vmem:[#allocation2 + $0xbc] sm:$0x3]
  %v3322 = vld [vmem:[#allocation2 + $0xf0] sm:$0xc]
  %v3323 = vld [vmem:[#allocation2 + $0xf8] sm:$0x3]
  %v3324 = vld [vmem:[#allocation2 + $0xfc] sm:$0xc]
  %v3325 = vld [vmem:[#allocation2 + $0x104] sm:$0x3]
  %v3326 = vld [vmem:[#allocation2 + $0x108] sm:$0xc]
  %v3327 = vld [vmem:[#allocation2 + $0x110] sm:$0x3]
  %v3328 = vld [vmem:[#allocation2 + $0x114] sm:$0xc]
  %v3329 = vld [vmem:[#allocation2 + $0x11c] sm:$0x3]
  %v3330 = vld [vmem:[#allocation2 + $0x120] sm:$0xc]
  %v3331 = vld [vmem:[#allocation2 + $0x128] sm:$0x3]
  %v3332 = vld [vmem:[#allocation2 + $0x12c] sm:$0xc]
  %v3333 = vld [vmem:[#allocation2 + $0x134] sm:$0x3]
  %v3334 = vld [vmem:[#allocation2 + $0x138] sm:$0xc]
  %v3335 = vld [vmem:[#allocation2 + $0x140] sm:$0x3]
  %v3336 = vld [vmem:[#allocation2 + $0x144] sm:$0xc]
  %v3337 = vld [vmem:[#allocation2 + $0x14c] sm:$0x3]
  %v3338 = vld [vmem:[#allocation2 + $0x150] sm:$0xc]
  %v3339 = vld [vmem:[#allocation2 + $0x158] sm:$0x3]
  %v3340 = vld [vmem:[#allocation2 + $0x15c] sm:$0xc]
  %v3341 = vld [vmem:[#allocation2 + $0x164] sm:$0x3]
  %v3342 = vld [vmem:[#allocation2 + $0x168] sm:$0xc]
  %v3343 = vld [vmem:[#allocation2 + $0x170] sm:$0x3]
  %v3344 = vld [vmem:[#allocation2 + $0x174] sm:$0xc]
  %v3345 = vld [vmem:[#allocation2 + $0x17c] sm:$0x3]
  %v3346 = vld [vmem:[#allocation2 + $0x180] sm:$0xc]
  %v3347 = vld [vmem:[#allocation2 + $0x188] sm:$0x3]
  %v3348 = vld [vmem:[#allocation2 + $0x18c] sm:$0xc]
  %v3349 = vld [vmem:[#allocation2 + $0x194] sm:$0x3]
  %v3350 = vld [vmem:[#allocation2 + $0x198] sm:$0xc]
  %v3351 = vld [vmem:[#allocation2 + $0x1a0] sm:$0x3]
  %v3352 = vld [vmem:[#allocation2 + $0x1a4] sm:$0xc]
  %v3353 = vld [vmem:[#allocation2 + $0x1ac] sm:$0x3]
  %vm3418 = vcmask 1041408
  %vm3419 = vcmask 1045508
  %vm3420 = vmor %vm3418, %vm3419
  %v3421 = vrot.slane %v3290, 6
  %v3422 = vrot.slane %v3421, 4
  %v3423 = vrot.slane %v1845, 6
  %v3424 = vsel %vm3420, %v3422, %v3423
  %v3425 = vrot.slane %v3423, 4
  %v3426 = vrot.slane %v3291, 6
  %v3427 = vsel %vm3420, %v3425, %v3426
  %v3428 = vrot.slane %v3292, 6
  %v3429 = vrot.slane %v3428, 4
  %v3430 = vrot.slane %v1847, 6
  %v3431 = vsel %vm3420, %v3429, %v3430
  %v3432 = vrot.slane %v3430, 4
  %v3433 = vrot.slane %v3293, 6
  %v3434 = vsel %vm3420, %v3432, %v3433
  %v3435 = vrot.slane %v3294, 6
  %v3436 = vrot.slane %v3435, 4
  %v3437 = vrot.slane %v1849, 6
  %v3438 = vsel %vm3420, %v3436, %v3437
  %v3439 = vrot.slane %v3437, 4
  %v3440 = vrot.slane %v3295, 6
  %v3441 = vsel %vm3420, %v3439, %v3440
  %v3442 = vrot.slane %v3296, 6
  %v3443 = vrot.slane %v3442, 4
  %v3444 = vrot.slane %v1851, 6
  %v3445 = vsel %vm3420, %v3443, %v3444
  %v3446 = vrot.slane %v3444, 4
  %v3447 = vrot.slane %v3297, 6
  %v3448 = vsel %vm3420, %v3446, %v3447
  %v3449 = vrot.slane %v3298, 6
  %v3450 = vrot.slane %v3449, 4
  %v3451 = vrot.slane %v1853, 6
  %v3452 = vsel %vm3420, %v3450, %v3451
  %v3453 = vrot.slane %v3451, 4
  %v3454 = vrot.slane %v3299, 6
  %v3455 = vsel %vm3420, %v3453, %v3454
  %v3456 = vrot.slane %v3300, 6
  %v3457 = vrot.slane %v3456, 4
  %v3458 = vrot.slane %v1855, 6
  %v3459 = vsel %vm3420, %v3457, %v3458
  %v3460 = vrot.slane %v3458, 4
  %v3461 = vrot.slane %v3301, 6
  %v3462 = vsel %vm3420, %v3460, %v3461
  %v3463 = vrot.slane %v3302, 6
  %v3464 = vrot.slane %v3463, 4
  %v3465 = vrot.slane %v1857, 6
  %v3466 = vsel %vm3420, %v3464, %v3465
  %v3467 = vrot.slane %v3465, 4
  %v3468 = vrot.slane %v3303, 6
  %v3469 = vsel %vm3420, %v3467, %v3468
  %v3470 = vrot.slane %v3304, 6
  %v3471 = vrot.slane %v3470, 4
  %v3472 = vrot.slane %v1859, 6
  %v3473 = vsel %vm3420, %v3471, %v3472
  %v3474 = vrot.slane %v3472, 4
  %v3475 = vrot.slane %v3305, 6
  %v3476 = vsel %vm3420, %v3474, %v3475
  %v3477 = vrot.slane %v3306, 6
  %v3478 = vrot.slane %v3477, 4
  %v3479 = vrot.slane %v1861, 6
  %v3480 = vsel %vm3420, %v3478, %v3479
  %v3481 = vrot.slane %v3479, 4
  %v3482 = vrot.slane %v3307, 6
  %v3483 = vsel %vm3420, %v3481, %v3482
  %v3484 = vrot.slane %v3308, 6
  %v3485 = vrot.slane %v3484, 4
  %v3486 = vrot.slane %v1863, 6
  %v3487 = vsel %vm3420, %v3485, %v3486
  %v3488 = vrot.slane %v3486, 4
  %v3489 = vrot.slane %v3309, 6
  %v3490 = vsel %vm3420, %v3488, %v3489
  %v3491 = vrot.slane %v3310, 6
  %v3492 = vrot.slane %v3491, 4
  %v3493 = vrot.slane %v1865, 6
  %v3494 = vsel %vm3420, %v3492, %v3493
  %v3495 = vrot.slane %v3493, 4
  %v3496 = vrot.slane %v3311, 6
  %v3497 = vsel %vm3420, %v3495, %v3496
  %v3498 = vrot.slane %v3312, 6
  %v3499 = vrot.slane %v3498, 4
  %v3500 = vrot.slane %v1867, 6
  %v3501 = vsel %vm3420, %v3499, %v3500
  %v3502 = vrot.slane %v3500, 4
  %v3503 = vrot.slane %v3313, 6
  %v3504 = vsel %vm3420, %v3502, %v3503
  %v3505 = vrot.slane %v3314, 6
  %v3506 = vrot.slane %v3505, 4
  %v3507 = vrot.slane %v1869, 6
  %v3508 = vsel %vm3420, %v3506, %v3507
  %v3509 = vrot.slane %v3507, 4
  %v3510 = vrot.slane %v3315, 6
  %v3511 = vsel %vm3420, %v3509, %v3510
  %v3512 = vrot.slane %v3316, 6
  %v3513 = vrot.slane %v3512, 4
  %v3514 = vrot.slane %v1871, 6
  %v3515 = vsel %vm3420, %v3513, %v3514
  %v3516 = vrot.slane %v3514, 4
  %v3517 = vrot.slane %v3317, 6
  %v3518 = vsel %vm3420, %v3516, %v3517
  %v3519 = vrot.slane %v3318, 6
  %v3520 = vrot.slane %v3519, 4
  %v3521 = vrot.slane %v1873, 6
  %v3522 = vsel %vm3420, %v3520, %v3521
  %v3523 = vrot.slane %v3521, 4
  %v3524 = vrot.slane %v3319, 6
  %v3525 = vsel %vm3420, %v3523, %v3524
  %v3526 = vrot.slane %v3320, 6
  %v3527 = vrot.slane %v3526, 4
  %v3528 = vrot.slane %v1875, 6
  %v3529 = vsel %vm3420, %v3527, %v3528
  %v3530 = vrot.slane %v3528, 4
  %v3531 = vrot.slane %v3321, 6
  %v3532 = vsel %vm3420, %v3530, %v3531
  %v3533 = vrot.slane %v3322, 6
  %v3534 = vrot.slane %v3533, 4
  %v3535 = vrot.slane %v1877, 6
  %v3536 = vsel %vm3420, %v3534, %v3535
  %v3537 = vrot.slane %v3535, 4
  %v3538 = vrot.slane %v3323, 6
  %v3539 = vsel %vm3420, %v3537, %v3538
  %v3540 = vrot.slane %v3324, 6
  %v3541 = vrot.slane %v3540, 4
  %v3542 = vrot.slane %v1879, 6
  %v3543 = vsel %vm3420, %v3541, %v3542
  %v3544 = vrot.slane %v3542, 4
  %v3545 = vrot.slane %v3325, 6
  %v3546 = vsel %vm3420, %v3544, %v3545
  %v3547 = vrot.slane %v3326, 6
  %v3548 = vrot.slane %v3547, 4
  %v3549 = vrot.slane %v1881, 6
  %v3550 = vsel %vm3420, %v3548, %v3549
  %v3551 = vrot.slane %v3549, 4
  %v3552 = vrot.slane %v3327, 6
  %v3553 = vsel %vm3420, %v3551, %v3552
  %v3554 = vrot.slane %v3328, 6
  %v3555 = vrot.slane %v3554, 4
  %v3556 = vrot.slane %v1883, 6
  %v3557 = vsel %vm3420, %v3555, %v3556
  %v3558 = vrot.slane %v3556, 4
  %v3559 = vrot.slane %v3329, 6
  %v3560 = vsel %vm3420, %v3558, %v3559
  %v3561 = vrot.slane %v3330, 6
  %v3562 = vrot.slane %v3561, 4
  %v3563 = vrot.slane %v1885, 6
  %v3564 = vsel %vm3420, %v3562, %v3563
  %v3565 = vrot.slane %v3563, 4
  %v3566 = vrot.slane %v3331, 6
  %v3567 = vsel %vm3420, %v3565, %v3566
  %v3568 = vrot.slane %v3332, 6
  %v3569 = vrot.slane %v3568, 4
  %v3570 = vrot.slane %v1887, 6
  %v3571 = vsel %vm3420, %v3569, %v3570
  %v3572 = vrot.slane %v3570, 4
  %v3573 = vrot.slane %v3333, 6
  %v3574 = vsel %vm3420, %v3572, %v3573
  %v3575 = vrot.slane %v3334, 6
  %v3576 = vrot.slane %v3575, 4
  %v3577 = vrot.slane %v1889, 6
  %v3578 = vsel %vm3420, %v3576, %v3577
  %v3579 = vrot.slane %v3577, 4
  %v3580 = vrot.slane %v3335, 6
  %v3581 = vsel %vm3420, %v3579, %v3580
  %v3582 = vrot.slane %v3336, 6
  %v3583 = vrot.slane %v3582, 4
  %v3584 = vrot.slane %v1891, 6
  %v3585 = vsel %vm3420, %v3583, %v3584
  %v3586 = vrot.slane %v3584, 4
  %v3587 = vrot.slane %v3337, 6
  %v3588 = vsel %vm3420, %v3586, %v3587
  %v3589 = vrot.slane %v3338, 6
  %v3590 = vrot.slane %v3589, 4
  %v3591 = vrot.slane %v1893, 6
  %v3592 = vsel %vm3420, %v3590, %v3591
  %v3593 = vrot.slane %v3591, 4
  %v3594 = vrot.slane %v3339, 6
  %v3595 = vsel %vm3420, %v3593, %v3594
  %v3596 = vrot.slane %v3340, 6
  %v3597 = vrot.slane %v3596, 4
  %v3598 = vrot.slane %v1895, 6
  %v3599 = vsel %vm3420, %v3597, %v3598
  %v3600 = vrot.slane %v3598, 4
  %v3601 = vrot.slane %v3341, 6
  %v3602 = vsel %vm3420, %v3600, %v3601
  %v3603 = vrot.slane %v3342, 6
  %v3604 = vrot.slane %v3603, 4
  %v3605 = vrot.slane %v1897, 6
  %v3606 = vsel %vm3420, %v3604, %v3605
  %v3607 = vrot.slane %v3605, 4
  %v3608 = vrot.slane %v3343, 6
  %v3609 = vsel %vm3420, %v3607, %v3608
  %v3610 = vrot.slane %v3344, 6
  %v3611 = vrot.slane %v3610, 4
  %v3612 = vrot.slane %v1899, 6
  %v3613 = vsel %vm3420, %v3611, %v3612
  %v3614 = vrot.slane %v3612, 4
  %v3615 = vrot.slane %v3345, 6
  %v3616 = vsel %vm3420, %v3614, %v3615
  %v3617 = vrot.slane %v3346, 6
  %v3618 = vrot.slane %v3617, 4
  %v3619 = vrot.slane %v1901, 6
  %v3620 = vsel %vm3420, %v3618, %v3619
  %v3621 = vrot.slane %v3619, 4
  %v3622 = vrot.slane %v3347, 6
  %v3623 = vsel %vm3420, %v3621, %v3622
  %v3624 = vrot.slane %v3348, 6
  %v3625 = vrot.slane %v3624, 4
  %v3626 = vrot.slane %v1903, 6
  %v3627 = vsel %vm3420, %v3625, %v3626
  %v3628 = vrot.slane %v3626, 4
  %v3629 = vrot.slane %v3349, 6
  %v3630 = vsel %vm3420, %v3628, %v3629
  %v3631 = vrot.slane %v3350, 6
  %v3632 = vrot.slane %v3631, 4
  %v3633 = vrot.slane %v1905, 6
  %v3634 = vsel %vm3420, %v3632, %v3633
  %v3635 = vrot.slane %v3633, 4
  %v3636 = vrot.slane %v3351, 6
  %v3637 = vsel %vm3420, %v3635, %v3636
  %v3638 = vrot.slane %v3352, 6
  %v3639 = vrot.slane %v3638, 4
  %v3640 = vrot.slane %v1907, 6
  %v3641 = vsel %vm3420, %v3639, %v3640
  %v3642 = vrot.slane %v3640, 4
  %v3643 = vrot.slane %v3353, 6
  %v3644 = vsel %vm3420, %v3642, %v3643
  %s3645 = scalar_lea.vmem %s4, 128
  %v3646 = vld [vmem:[%s3645] sm:$0xf]
  %v3647 = vld [vmem:[%s3645 + $0x4] sm:$0xf]
  %v3648 = vld [vmem:[%s3645 + $0x8] sm:$0xf]
  %v3649 = vld [vmem:[%s3645 + $0xc] sm:$0xf]
  %v3650 = vld [vmem:[%s3645 + $0x10] sm:$0xf]
  %v3651 = vld [vmem:[%s3645 + $0x14] sm:$0xf]
  %v3652 = vld [vmem:[%s3645 + $0x18] sm:$0xf]
  %v3653 = vld [vmem:[%s3645 + $0x1c] sm:$0xf]
  %v3654 = vld [vmem:[%s3645 + $0x20] sm:$0xf]
  %v3655 = vld [vmem:[%s3645 + $0x24] sm:$0xf]
  %v3656 = vld [vmem:[%s3645 + $0x28] sm:$0xf]
  %v3657 = vld [vmem:[%s3645 + $0x2c] sm:$0xf]
  %v3658 = vld [vmem:[%s3645 + $0x30] sm:$0xf]
  %v3659 = vld [vmem:[%s3645 + $0x34] sm:$0xf]
  %v3660 = vld [vmem:[%s3645 + $0x38] sm:$0xf]
  %v3661 = vld [vmem:[%s3645 + $0x3c] sm:$0xf]
  %v3662 = vunpack.c.l.b16 %v3424
  %v3663 = vunpack.c.l.b16 %v3427
  %v3664 = vunpack.c.l.b16 %v3431
  %v3665 = vunpack.c.l.b16 %v3434
  %v3666 = vunpack.c.l.b16 %v3438
  %v3667 = vunpack.c.l.b16 %v3441
  %v3668 = vunpack.c.l.b16 %v3445
  %v3669 = vunpack.c.l.b16 %v3448
  %v3670 = vunpack.c.l.b16 %v3452
  %v3671 = vunpack.c.l.b16 %v3455
  %v3672 = vunpack.c.l.b16 %v3459
  %v3673 = vunpack.c.l.b16 %v3462
  %v3674 = vunpack.c.l.b16 %v3466
  %v3675 = vunpack.c.l.b16 %v3469
  %v3676 = vunpack.c.l.b16 %v3473
  %v3677 = vunpack.c.l.b16 %v3476
  %v3678 = vunpack.c.l.b16 %v3480
  %v3679 = vunpack.c.l.b16 %v3483
  %v3680 = vunpack.c.l.b16 %v3487
  %v3681 = vunpack.c.l.b16 %v3490
  %v3682 = vunpack.c.l.b16 %v3494
  %v3683 = vunpack.c.l.b16 %v3497
  %v3684 = vunpack.c.l.b16 %v3501
  %v3685 = vunpack.c.l.b16 %v3504
  %v3686 = vunpack.c.l.b16 %v3508
  %v3687 = vunpack.c.l.b16 %v3511
  %v3688 = vunpack.c.l.b16 %v3515
  %v3689 = vunpack.c.l.b16 %v3518
  %v3690 = vunpack.c.l.b16 %v3522
  %v3691 = vunpack.c.l.b16 %v3525
  %v3692 = vunpack.c.l.b16 %v3529
  %v3693 = vunpack.c.l.b16 %v3532
  %v3694 = vunpack.c.l.b16 %v3536
  %v3695 = vunpack.c.l.b16 %v3539
  %v3696 = vunpack.c.l.b16 %v3543
  %v3697 = vunpack.c.l.b16 %v3546
  %v3698 = vunpack.c.l.b16 %v3550
  %v3699 = vunpack.c.l.b16 %v3553
  %v3700 = vunpack.c.l.b16 %v3557
  %v3701 = vunpack.c.l.b16 %v3560
  %v3702 = vunpack.c.l.b16 %v3564
  %v3703 = vunpack.c.l.b16 %v3567
  %v3704 = vunpack.c.l.b16 %v3571
  %v3705 = vunpack.c.l.b16 %v3574
  %v3706 = vunpack.c.l.b16 %v3578
  %v3707 = vunpack.c.l.b16 %v3581
  %v3708 = vunpack.c.l.b16 %v3585
  %v3709 = vunpack.c.l.b16 %v3588
  %v3710 = vunpack.c.l.b16 %v3592
  %v3711 = vunpack.c.l.b16 %v3595
  %v3712 = vunpack.c.l.b16 %v3599
  %v3713 = vunpack.c.l.b16 %v3602
  %v3714 = vunpack.c.l.b16 %v3606
  %v3715 = vunpack.c.l.b16 %v3609
  %v3716 = vunpack.c.l.b16 %v3613
  %v3717 = vunpack.c.l.b16 %v3616
  %v3718 = vunpack.c.l.b16 %v3620
  %v3719 = vunpack.c.l.b16 %v3623
  %v3720 = vunpack.c.l.b16 %v3627
  %v3721 = vunpack.c.l.b16 %v3630
  %v3722 = vunpack.c.l.b16 %v3634
  %v3723 = vunpack.c.l.b16 %v3637
  %v3724 = vunpack.c.l.b16 %v3641
  %v3725 = vunpack.c.l.b16 %v3644
  %v3726 = vpack.c.b16 %v3663, %v3662
  %v3727 = vpack.c.b16 %v3665, %v3664
  %v3728 = vpack.c.b16 %v3667, %v3666
  %v3729 = vpack.c.b16 %v3669, %v3668
  %v3730 = vpack.c.b16 %v3671, %v3670
  %v3731 = vpack.c.b16 %v3673, %v3672
  %v3732 = vpack.c.b16 %v3675, %v3674
  %v3733 = vpack.c.b16 %v3677, %v3676
  %v3734 = vpack.c.b16 %v3679, %v3678
  %v3735 = vpack.c.b16 %v3681, %v3680
  %v3736 = vpack.c.b16 %v3683, %v3682
  %v3737 = vpack.c.b16 %v3685, %v3684
  %v3738 = vpack.c.b16 %v3687, %v3686
  %v3739 = vpack.c.b16 %v3689, %v3688
  %v3740 = vpack.c.b16 %v3691, %v3690
  %v3741 = vpack.c.b16 %v3693, %v3692
  %v3742 = vpack.c.b16 %v3695, %v3694
  %v3743 = vpack.c.b16 %v3697, %v3696
  %v3744 = vpack.c.b16 %v3699, %v3698
  %v3745 = vpack.c.b16 %v3701, %v3700
  %v3746 = vpack.c.b16 %v3703, %v3702
  %v3747 = vpack.c.b16 %v3705, %v3704
  %v3748 = vpack.c.b16 %v3707, %v3706
  %v3749 = vpack.c.b16 %v3709, %v3708
  %v3750 = vpack.c.b16 %v3711, %v3710
  %v3751 = vpack.c.b16 %v3713, %v3712
  %v3752 = vpack.c.b16 %v3715, %v3714
  %v3753 = vpack.c.b16 %v3717, %v3716
  %v3754 = vpack.c.b16 %v3719, %v3718
  %v3755 = vpack.c.b16 %v3721, %v3720
  %v3756 = vpack.c.b16 %v3723, %v3722
  %v3757 = vpack.c.b16 %v3725, %v3724
  %v3806 = vunpack.c.l.b16 %v3646
  %v3807 = vunpack.c.l.b16 %v3647
  %v3808 = vunpack.c.l.b16 %v3648
  %v3809 = vunpack.c.l.b16 %v3649
  %v3810 = vunpack.c.l.b16 %v3650
  %v3811 = vunpack.c.l.b16 %v3651
  %v3812 = vunpack.c.l.b16 %v3652
  %v3813 = vunpack.c.l.b16 %v3653
  %v3814 = vunpack.c.l.b16 %v3654
  %v3815 = vunpack.c.l.b16 %v3655
  %v3816 = vunpack.c.l.b16 %v3656
  %v3817 = vunpack.c.l.b16 %v3657
  %v3818 = vunpack.c.l.b16 %v3658
  %v3819 = vunpack.c.l.b16 %v3659
  %v3820 = vunpack.c.l.b16 %v3660
  %v3821 = vunpack.c.l.b16 %v3661
  %v3822 = vpack.c.b16 %v3807, %v3806
  %v3823 = vpack.c.b16 %v3809, %v3808
  %v3824 = vpack.c.b16 %v3811, %v3810
  %v3825 = vpack.c.b16 %v3813, %v3812
  %v3826 = vpack.c.b16 %v3815, %v3814
  %v3827 = vpack.c.b16 %v3817, %v3816
  %v3828 = vpack.c.b16 %v3819, %v3818
  %v3829 = vpack.c.b16 %v3821, %v3820
  %3838 = vmatprep.subr.bf16.mxu0 0
  %3839 = vmatpush1.bf16.msra.mxu0 %v3829
  %3840 = vmatprep.subr.bf16.mxu0 0
  %3841 = vmatpush1.bf16.msra.mxu0 %v3828
  %3842 = vmatprep.subr.bf16.mxu0 0
  %3843 = vmatpush1.bf16.msra.mxu0 %v3827
  %3844 = vmatprep.subr.bf16.mxu0 0
  %3845 = vmatpush1.bf16.msra.mxu0 %v3826
  %3846 = vmatprep.subr.bf16.mxu0 0
  %3847 = vmatpush1.bf16.msra.mxu0 %v3825
  %3848 = vmatprep.subr.bf16.mxu0 0
  %3849 = vmatpush1.bf16.msra.mxu0 %v3824
  %3850 = vmatprep.subr.bf16.mxu0 0
  %3851 = vmatpush1.bf16.msra.mxu0 %v3823
  %3852 = vmatprep.subr.bf16.mxu0 0
  %3853 = vmatpush1.bf16.msra.mxu0 %v3822
  %3854 = vmatprep.subr.bf16.mxu0 0
  %3855 = vmatpush2.bf16.msra.mxu0 0
  %3856 = vmatprep.subr.bf16.mxu0 0
  %3857 = vmatpush2.bf16.msra.mxu0 0
  %3858 = vmatprep.subr.bf16.mxu0 0
  %3859 = vmatpush2.bf16.msra.mxu0 0
  %3860 = vmatprep.subr.bf16.mxu0 0
  %3861 = vmatpush2.bf16.msra.mxu0 0
  %3862 = vmatprep.subr.bf16.mxu0 0
  %3863 = vmatpush2.bf16.msra.mxu0 0
  %3864 = vmatprep.subr.bf16.mxu0 0
  %3865 = vmatpush2.bf16.msra.mxu0 0
  %3866 = vmatprep.subr.bf16.mxu0 0
  %3867 = vmatpush2.bf16.msra.mxu0 0
  %3868 = vmatprep.subr.bf16.mxu0 0
  %3869 = vmatpush2.bf16.msra.mxu0 0
  %3870 = vmatprep.mubr.bf16.mxu0 0
  %3871 = vmatmul.mubr.bf16.gmra.mxu0 %v3726
  %v3872 = vpop.f32.mrf.mxu0
  %v3873 = vadd.f32 0.0, %v3872
  %v3874 = vpop.f32.mrf.mxu0
  %v3875 = vpop.f32.mrf.mxu0
  %v3876 = vadd.f32 0.0, %v3875
  %v3877 = vpop.f32.mrf.mxu0
  %3878 = vmatprep.mubr.bf16.mxu0 0
  %3879 = vmatmul.mubr.bf16.gmra.mxu0 %v3727
  %v3880 = vpop.f32.mrf.mxu0
  %v3881 = vadd.f32 0.0, %v3880
  %v3882 = vpop.f32.mrf.mxu0
  %v3883 = vpop.f32.mrf.mxu0
  %v3884 = vadd.f32 0.0, %v3883
  %v3885 = vpop.f32.mrf.mxu0
  %3886 = vmatprep.mubr.bf16.mxu0 0
  %3887 = vmatmul.mubr.bf16.gmra.mxu0 %v3728
  %v3888 = vpop.f32.mrf.mxu0
  %v3889 = vadd.f32 0.0, %v3888
  %v3890 = vpop.f32.mrf.mxu0
  %v3891 = vpop.f32.mrf.mxu0
  %v3892 = vadd.f32 0.0, %v3891
  %v3893 = vpop.f32.mrf.mxu0
  %3894 = vmatprep.mubr.bf16.mxu0 0
  %3895 = vmatmul.mubr.bf16.gmra.mxu0 %v3729
  %v3896 = vpop.f32.mrf.mxu0
  %v3897 = vadd.f32 0.0, %v3896
  %v3898 = vpop.f32.mrf.mxu0
  %v3899 = vpop.f32.mrf.mxu0
  %v3900 = vadd.f32 0.0, %v3899
  %v3901 = vpop.f32.mrf.mxu0
  %3902 = vmatprep.mubr.bf16.mxu0 0
  %3903 = vmatmul.mubr.bf16.gmra.mxu0 %v3730
  %v3904 = vpop.f32.mrf.mxu0
  %v3905 = vadd.f32 0.0, %v3904
  %v3906 = vpop.f32.mrf.mxu0
  %v3907 = vpop.f32.mrf.mxu0
  %v3908 = vadd.f32 0.0, %v3907
  %v3909 = vpop.f32.mrf.mxu0
  %3910 = vmatprep.mubr.bf16.mxu0 0
  %3911 = vmatmul.mubr.bf16.gmra.mxu0 %v3731
  %v3912 = vpop.f32.mrf.mxu0
  %v3913 = vadd.f32 0.0, %v3912
  %v3914 = vpop.f32.mrf.mxu0
  %v3915 = vpop.f32.mrf.mxu0
  %v3916 = vadd.f32 0.0, %v3915
  %v3917 = vpop.f32.mrf.mxu0
  %3918 = vmatprep.mubr.bf16.mxu0 0
  %3919 = vmatmul.mubr.bf16.gmra.mxu0 %v3732
  %v3920 = vpop.f32.mrf.mxu0
  %v3921 = vadd.f32 0.0, %v3920
  %v3922 = vpop.f32.mrf.mxu0
  %v3923 = vpop.f32.mrf.mxu0
  %v3924 = vadd.f32 0.0, %v3923
  %v3925 = vpop.f32.mrf.mxu0
  %3926 = vmatprep.mubr.bf16.mxu0 0
  %3927 = vmatmul.mubr.bf16.gmra.mxu0 %v3733
  %v3928 = vpop.f32.mrf.mxu0
  %v3929 = vadd.f32 0.0, %v3928
  %v3930 = vpop.f32.mrf.mxu0
  %v3931 = vpop.f32.mrf.mxu0
  %v3932 = vadd.f32 0.0, %v3931
  %v3933 = vpop.f32.mrf.mxu0
  %3934 = vmatprep.mubr.bf16.mxu0 0
  %3935 = vmatmul.mubr.bf16.gmra.mxu0 %v3734
  %v3936 = vpop.f32.mrf.mxu0
  %v3937 = vadd.f32 0.0, %v3936
  %v3938 = vpop.f32.mrf.mxu0
  %v3939 = vpop.f32.mrf.mxu0
  %v3940 = vadd.f32 0.0, %v3939
  %v3941 = vpop.f32.mrf.mxu0
  %3942 = vmatprep.mubr.bf16.mxu0 0
  %3943 = vmatmul.mubr.bf16.gmra.mxu0 %v3735
  %v3944 = vpop.f32.mrf.mxu0
  %v3945 = vadd.f32 0.0, %v3944
  %v3946 = vpop.f32.mrf.mxu0
  %v3947 = vpop.f32.mrf.mxu0
  %v3948 = vadd.f32 0.0, %v3947
  %v3949 = vpop.f32.mrf.mxu0
  %3950 = vmatprep.mubr.bf16.mxu0 0
  %3951 = vmatmul.mubr.bf16.gmra.mxu0 %v3736
  %v3952 = vpop.f32.mrf.mxu0
  %v3953 = vadd.f32 0.0, %v3952
  %v3954 = vpop.f32.mrf.mxu0
  %v3955 = vpop.f32.mrf.mxu0
  %v3956 = vadd.f32 0.0, %v3955
  %v3957 = vpop.f32.mrf.mxu0
  %3958 = vmatprep.mubr.bf16.mxu0 0
  %3959 = vmatmul.mubr.bf16.gmra.mxu0 %v3737
  %v3960 = vpop.f32.mrf.mxu0
  %v3961 = vadd.f32 0.0, %v3960
  %v3962 = vpop.f32.mrf.mxu0
  %v3963 = vpop.f32.mrf.mxu0
  %v3964 = vadd.f32 0.0, %v3963
  %v3965 = vpop.f32.mrf.mxu0
  %3966 = vmatprep.mubr.bf16.mxu0 0
  %3967 = vmatmul.mubr.bf16.gmra.mxu0 %v3738
  %v3968 = vpop.f32.mrf.mxu0
  %v3969 = vadd.f32 0.0, %v3968
  %v3970 = vpop.f32.mrf.mxu0
  %v3971 = vpop.f32.mrf.mxu0
  %v3972 = vadd.f32 0.0, %v3971
  %v3973 = vpop.f32.mrf.mxu0
  %3974 = vmatprep.mubr.bf16.mxu0 0
  %3975 = vmatmul.mubr.bf16.gmra.mxu0 %v3739
  %v3976 = vpop.f32.mrf.mxu0
  %v3977 = vadd.f32 0.0, %v3976
  %v3978 = vpop.f32.mrf.mxu0
  %v3979 = vpop.f32.mrf.mxu0
  %v3980 = vadd.f32 0.0, %v3979
  %v3981 = vpop.f32.mrf.mxu0
  %3982 = vmatprep.mubr.bf16.mxu0 0
  %3983 = vmatmul.mubr.bf16.gmra.mxu0 %v3740
  %v3984 = vpop.f32.mrf.mxu0
  %v3985 = vadd.f32 0.0, %v3984
  %v3986 = vpop.f32.mrf.mxu0
  %v3987 = vpop.f32.mrf.mxu0
  %v3988 = vadd.f32 0.0, %v3987
  %v3989 = vpop.f32.mrf.mxu0
  %3990 = vmatprep.mubr.bf16.mxu0 0
  %3991 = vmatmul.mubr.bf16.gmra.mxu0 %v3741
  %v3992 = vpop.f32.mrf.mxu0
  %v3993 = vadd.f32 0.0, %v3992
  %v3994 = vpop.f32.mrf.mxu0
  %v3995 = vpop.f32.mrf.mxu0
  %v3996 = vadd.f32 0.0, %v3995
  %v3997 = vpop.f32.mrf.mxu0
  %3998 = vmatprep.mubr.bf16.mxu0 0
  %3999 = vmatmul.mubr.bf16.gmra.mxu0 %v3742
  %v4000 = vpop.f32.mrf.mxu0
  %v4001 = vadd.f32 0.0, %v4000
  %v4002 = vpop.f32.mrf.mxu0
  %v4003 = vpop.f32.mrf.mxu0
  %v4004 = vadd.f32 0.0, %v4003
  %v4005 = vpop.f32.mrf.mxu0
  %4006 = vmatprep.mubr.bf16.mxu0 0
  %4007 = vmatmul.mubr.bf16.gmra.mxu0 %v3743
  %v4008 = vpop.f32.mrf.mxu0
  %v4009 = vadd.f32 0.0, %v4008
  %v4010 = vpop.f32.mrf.mxu0
  %v4011 = vpop.f32.mrf.mxu0
  %v4012 = vadd.f32 0.0, %v4011
  %v4013 = vpop.f32.mrf.mxu0
  %4014 = vmatprep.mubr.bf16.mxu0 0
  %4015 = vmatmul.mubr.bf16.gmra.mxu0 %v3744
  %v4016 = vpop.f32.mrf.mxu0
  %v4017 = vadd.f32 0.0, %v4016
  %v4018 = vpop.f32.mrf.mxu0
  %v4019 = vpop.f32.mrf.mxu0
  %v4020 = vadd.f32 0.0, %v4019
  %v4021 = vpop.f32.mrf.mxu0
  %4022 = vmatprep.mubr.bf16.mxu0 0
  %4023 = vmatmul.mubr.bf16.gmra.mxu0 %v3745
  %v4024 = vpop.f32.mrf.mxu0
  %v4025 = vadd.f32 0.0, %v4024
  %v4026 = vpop.f32.mrf.mxu0
  %v4027 = vpop.f32.mrf.mxu0
  %v4028 = vadd.f32 0.0, %v4027
  %v4029 = vpop.f32.mrf.mxu0
  %4030 = vmatprep.mubr.bf16.mxu0 0
  %4031 = vmatmul.mubr.bf16.gmra.mxu0 %v3746
  %v4032 = vpop.f32.mrf.mxu0
  %v4033 = vadd.f32 0.0, %v4032
  %v4034 = vpop.f32.mrf.mxu0
  %v4035 = vpop.f32.mrf.mxu0
  %v4036 = vadd.f32 0.0, %v4035
  %v4037 = vpop.f32.mrf.mxu0
  %4038 = vmatprep.mubr.bf16.mxu0 0
  %4039 = vmatmul.mubr.bf16.gmra.mxu0 %v3747
  %v4040 = vpop.f32.mrf.mxu0
  %v4041 = vadd.f32 0.0, %v4040
  %v4042 = vpop.f32.mrf.mxu0
  %v4043 = vpop.f32.mrf.mxu0
  %v4044 = vadd.f32 0.0, %v4043
  %v4045 = vpop.f32.mrf.mxu0
  %4046 = vmatprep.mubr.bf16.mxu0 0
  %4047 = vmatmul.mubr.bf16.gmra.mxu0 %v3748
  %v4048 = vpop.f32.mrf.mxu0
  %v4049 = vadd.f32 0.0, %v4048
  %v4050 = vpop.f32.mrf.mxu0
  %v4051 = vpop.f32.mrf.mxu0
  %v4052 = vadd.f32 0.0, %v4051
  %v4053 = vpop.f32.mrf.mxu0
  %4054 = vmatprep.mubr.bf16.mxu0 0
  %4055 = vmatmul.mubr.bf16.gmra.mxu0 %v3749
  %v4056 = vpop.f32.mrf.mxu0
  %v4057 = vadd.f32 0.0, %v4056
  %v4058 = vpop.f32.mrf.mxu0
  %v4059 = vpop.f32.mrf.mxu0
  %v4060 = vadd.f32 0.0, %v4059
  %v4061 = vpop.f32.mrf.mxu0
  %4062 = vmatprep.mubr.bf16.mxu0 0
  %4063 = vmatmul.mubr.bf16.gmra.mxu0 %v3750
  %v4064 = vpop.f32.mrf.mxu0
  %v4065 = vadd.f32 0.0, %v4064
  %v4066 = vpop.f32.mrf.mxu0
  %v4067 = vpop.f32.mrf.mxu0
  %v4068 = vadd.f32 0.0, %v4067
  %v4069 = vpop.f32.mrf.mxu0
  %4070 = vmatprep.mubr.bf16.mxu0 0
  %4071 = vmatmul.mubr.bf16.gmra.mxu0 %v3751
  %v4072 = vpop.f32.mrf.mxu0
  %v4073 = vadd.f32 0.0, %v4072
  %v4074 = vpop.f32.mrf.mxu0
  %v4075 = vpop.f32.mrf.mxu0
  %v4076 = vadd.f32 0.0, %v4075
  %v4077 = vpop.f32.mrf.mxu0
  %4078 = vmatprep.mubr.bf16.mxu0 0
  %4079 = vmatmul.mubr.bf16.gmra.mxu0 %v3752
  %v4080 = vpop.f32.mrf.mxu0
  %v4081 = vadd.f32 0.0, %v4080
  %v4082 = vpop.f32.mrf.mxu0
  %v4083 = vpop.f32.mrf.mxu0
  %v4084 = vadd.f32 0.0, %v4083
  %v4085 = vpop.f32.mrf.mxu0
  %4086 = vmatprep.mubr.bf16.mxu0 0
  %4087 = vmatmul.mubr.bf16.gmra.mxu0 %v3753
  %v4088 = vpop.f32.mrf.mxu0
  %v4089 = vadd.f32 0.0, %v4088
  %v4090 = vpop.f32.mrf.mxu0
  %v4091 = vpop.f32.mrf.mxu0
  %v4092 = vadd.f32 0.0, %v4091
  %v4093 = vpop.f32.mrf.mxu0
  %4094 = vmatprep.mubr.bf16.mxu0 0
  %4095 = vmatmul.mubr.bf16.gmra.mxu0 %v3754
  %v4096 = vpop.f32.mrf.mxu0
  %v4097 = vadd.f32 0.0, %v4096
  %v4098 = vpop.f32.mrf.mxu0
  %v4099 = vpop.f32.mrf.mxu0
  %v4100 = vadd.f32 0.0, %v4099
  %v4101 = vpop.f32.mrf.mxu0
  %4102 = vmatprep.mubr.bf16.mxu0 0
  %4103 = vmatmul.mubr.bf16.gmra.mxu0 %v3755
  %v4104 = vpop.f32.mrf.mxu0
  %v4105 = vadd.f32 0.0, %v4104
  %v4106 = vpop.f32.mrf.mxu0
  %v4107 = vpop.f32.mrf.mxu0
  %v4108 = vadd.f32 0.0, %v4107
  %v4109 = vpop.f32.mrf.mxu0
  %4110 = vmatprep.mubr.bf16.mxu0 0
  %4111 = vmatmul.mubr.bf16.gmra.mxu0 %v3756
  %v4112 = vpop.f32.mrf.mxu0
  %v4113 = vadd.f32 0.0, %v4112
  %v4114 = vpop.f32.mrf.mxu0
  %v4115 = vpop.f32.mrf.mxu0
  %v4116 = vadd.f32 0.0, %v4115
  %v4117 = vpop.f32.mrf.mxu0
  %4118 = vmatprep.mubr.bf16.mxu0 0
  %4119 = vmatmul.mubr.bf16.gmra.mxu0 %v3757
  %v4120 = vpop.f32.mrf.mxu0
  %v4121 = vadd.f32 0.0, %v4120
  %v4122 = vpop.f32.mrf.mxu0
  %v4123 = vpop.f32.mrf.mxu0
  %v4124 = vadd.f32 0.0, %v4123
  %v4125 = vpop.f32.mrf.mxu0
  %4126 = vdwg.mxu0
  %v4127 = vadd.f32 %v3036, %v3873
  %v4128 = vadd.f32 %v3039, %v3876
  %v4129 = vadd.f32 %v3044, %v3881
  %v4130 = vadd.f32 %v3047, %v3884
  %v4131 = vadd.f32 %v3052, %v3889
  %v4132 = vadd.f32 %v3055, %v3892
  %v4133 = vadd.f32 %v3060, %v3897
  %v4134 = vadd.f32 %v3063, %v3900
  %v4135 = vadd.f32 %v3068, %v3905
  %v4136 = vadd.f32 %v3071, %v3908
  %v4137 = vadd.f32 %v3076, %v3913
  %v4138 = vadd.f32 %v3079, %v3916
  %v4139 = vadd.f32 %v3084, %v3921
  %v4140 = vadd.f32 %v3087, %v3924
  %v4141 = vadd.f32 %v3092, %v3929
  %v4142 = vadd.f32 %v3095, %v3932
  %v4143 = vadd.f32 %v3100, %v3937
  %v4144 = vadd.f32 %v3103, %v3940
  %v4145 = vadd.f32 %v3108, %v3945
  %v4146 = vadd.f32 %v3111, %v3948
  %v4147 = vadd.f32 %v3116, %v3953
  %v4148 = vadd.f32 %v3119, %v3956
  %v4149 = vadd.f32 %v3124, %v3961
  %v4150 = vadd.f32 %v3127, %v3964
  %v4151 = vadd.f32 %v3132, %v3969
  %v4152 = vadd.f32 %v3135, %v3972
  %v4153 = vadd.f32 %v3140, %v3977
  %v4154 = vadd.f32 %v3143, %v3980
  %v4155 = vadd.f32 %v3148, %v3985
  %v4156 = vadd.f32 %v3151, %v3988
  %v4157 = vadd.f32 %v3156, %v3993
  %v4158 = vadd.f32 %v3159, %v3996
  %v4159 = vadd.f32 %v3164, %v4001
  %v4160 = vadd.f32 %v3167, %v4004
  %v4161 = vadd.f32 %v3172, %v4009
  %v4162 = vadd.f32 %v3175, %v4012
  %v4163 = vadd.f32 %v3180, %v4017
  %v4164 = vadd.f32 %v3183, %v4020
  %v4165 = vadd.f32 %v3188, %v4025
  %v4166 = vadd.f32 %v3191, %v4028
  %v4167 = vadd.f32 %v3196, %v4033
  %v4168 = vadd.f32 %v3199, %v4036
  %v4169 = vadd.f32 %v3204, %v4041
  %v4170 = vadd.f32 %v3207, %v4044
  %v4171 = vadd.f32 %v3212, %v4049
  %v4172 = vadd.f32 %v3215, %v4052
  %v4173 = vadd.f32 %v3220, %v4057
  %v4174 = vadd.f32 %v3223, %v4060
  %v4175 = vadd.f32 %v3228, %v4065
  %v4176 = vadd.f32 %v3231, %v4068
  %v4177 = vadd.f32 %v3236, %v4073
  %v4178 = vadd.f32 %v3239, %v4076
  %v4179 = vadd.f32 %v3244, %v4081
  %v4180 = vadd.f32 %v3247, %v4084
  %v4181 = vadd.f32 %v3252, %v4089
  %v4182 = vadd.f32 %v3255, %v4092
  %v4183 = vadd.f32 %v3260, %v4097
  %v4184 = vadd.f32 %v3263, %v4100
  %v4185 = vadd.f32 %v3268, %v4105
  %v4186 = vadd.f32 %v3271, %v4108
  %v4187 = vadd.f32 %v3276, %v4113
  %v4188 = vadd.f32 %v3279, %v4116
  %v4189 = vadd.f32 %v3284, %v4121
  %v4190 = vadd.f32 %v3287, %v4124
  %v4191 = vld [vmem:[%s1232] sm:$0xf]
  %v4192 = vld [vmem:[%s1232 + $0x4] sm:$0xf]
  %v4193 = vld [vmem:[%s1232 + $0xc] sm:$0xf]
  %v4194 = vld [vmem:[%s1232 + $0x10] sm:$0xf]
  %v4195 = vld [vmem:[%s1232 + $0x18] sm:$0xf]
  %v4196 = vld [vmem:[%s1232 + $0x1c] sm:$0xf]
  %v4197 = vld [vmem:[%s1232 + $0x24] sm:$0xf]
  %v4198 = vld [vmem:[%s1232 + $0x28] sm:$0xf]
  %v4199 = vld [vmem:[%s1232 + $0x30] sm:$0xf]
  %v4200 = vld [vmem:[%s1232 + $0x34] sm:$0xf]
  %v4201 = vld [vmem:[%s1232 + $0x3c] sm:$0xf]
  %v4202 = vld [vmem:[%s1232 + $0x40] sm:$0xf]
  %v4203 = vld [vmem:[%s1232 + $0x48] sm:$0xf]
  %v4204 = vld [vmem:[%s1232 + $0x4c] sm:$0xf]
  %v4205 = vld [vmem:[%s1232 + $0x54] sm:$0xf]
  %v4206 = vld [vmem:[%s1232 + $0x58] sm:$0xf]
  %v4207 = vld [vmem:[%s1232 + $0x60] sm:$0xf]
  %v4208 = vld [vmem:[%s1232 + $0x64] sm:$0xf]
  %v4209 = vld [vmem:[%s1232 + $0x6c] sm:$0xf]
  %v4210 = vld [vmem:[%s1232 + $0x70] sm:$0xf]
  %v4211 = vld [vmem:[%s1232 + $0x78] sm:$0xf]
  %v4212 = vld [vmem:[%s1232 + $0x7c] sm:$0xf]
  %v4213 = vld [vmem:[%s1232 + $0x84] sm:$0xf]
  %v4214 = vld [vmem:[%s1232 + $0x88] sm:$0xf]
  %v4215 = vld [vmem:[%s1232 + $0x90] sm:$0xf]
  %v4216 = vld [vmem:[%s1232 + $0x94] sm:$0xf]
  %v4217 = vld [vmem:[%s1232 + $0x9c] sm:$0xf]
  %v4218 = vld [vmem:[%s1232 + $0xa0] sm:$0xf]
  %v4219 = vld [vmem:[%s1232 + $0xa8] sm:$0xf]
  %v4220 = vld [vmem:[%s1232 + $0xac] sm:$0xf]
  %v4221 = vld [vmem:[%s1232 + $0xb4] sm:$0xf]
  %v4222 = vld [vmem:[%s1232 + $0xb8] sm:$0xf]
  %v4223 = vld [vmem:[%s1232 + $0xf0] sm:$0xf]
  %v4224 = vld [vmem:[%s1232 + $0xf4] sm:$0xf]
  %v4225 = vld [vmem:[%s1232 + $0xfc] sm:$0xf]
  %v4226 = vld [vmem:[%s1232 + $0x100] sm:$0xf]
  %v4227 = vld [vmem:[%s1232 + $0x108] sm:$0xf]
  %v4228 = vld [vmem:[%s1232 + $0x10c] sm:$0xf]
  %v4229 = vld [vmem:[%s1232 + $0x114] sm:$0xf]
  %v4230 = vld [vmem:[%s1232 + $0x118] sm:$0xf]
  %v4231 = vld [vmem:[%s1232 + $0x120] sm:$0xf]
  %v4232 = vld [vmem:[%s1232 + $0x124] sm:$0xf]
  %v4233 = vld [vmem:[%s1232 + $0x12c] sm:$0xf]
  %v4234 = vld [vmem:[%s1232 + $0x130] sm:$0xf]
  %v4235 = vld [vmem:[%s1232 + $0x138] sm:$0xf]
  %v4236 = vld [vmem:[%s1232 + $0x13c] sm:$0xf]
  %v4237 = vld [vmem:[%s1232 + $0x144] sm:$0xf]
  %v4238 = vld [vmem:[%s1232 + $0x148] sm:$0xf]
  %v4239 = vld [vmem:[%s1232 + $0x150] sm:$0xf]
  %v4240 = vld [vmem:[%s1232 + $0x154] sm:$0xf]
  %v4241 = vld [vmem:[%s1232 + $0x15c] sm:$0xf]
  %v4242 = vld [vmem:[%s1232 + $0x160] sm:$0xf]
  %v4243 = vld [vmem:[%s1232 + $0x168] sm:$0xf]
  %v4244 = vld [vmem:[%s1232 + $0x16c] sm:$0xf]
  %v4245 = vld [vmem:[%s1232 + $0x174] sm:$0xf]
  %v4246 = vld [vmem:[%s1232 + $0x178] sm:$0xf]
  %v4247 = vld [vmem:[%s1232 + $0x180] sm:$0xf]
  %v4248 = vld [vmem:[%s1232 + $0x184] sm:$0xf]
  %v4249 = vld [vmem:[%s1232 + $0x18c] sm:$0xf]
  %v4250 = vld [vmem:[%s1232 + $0x190] sm:$0xf]
  %v4251 = vld [vmem:[%s1232 + $0x198] sm:$0xf]
  %v4252 = vld [vmem:[%s1232 + $0x19c] sm:$0xf]
  %v4253 = vld [vmem:[%s1232 + $0x1a4] sm:$0xf]
  %v4254 = vld [vmem:[%s1232 + $0x1a8] sm:$0xf]
  %s4255 = scalar_lea.vmem %s4, 192
  %v4256 = vld [vmem:[%s4255] sm:$0xf]
  %v4257 = vld [vmem:[%s4255 + $0x4] sm:$0xf]
  %v4258 = vld [vmem:[%s4255 + $0x8] sm:$0xf]
  %v4259 = vld [vmem:[%s4255 + $0xc] sm:$0xf]
  %v4260 = vld [vmem:[%s4255 + $0x10] sm:$0xf]
  %v4261 = vld [vmem:[%s4255 + $0x14] sm:$0xf]
  %v4262 = vld [vmem:[%s4255 + $0x18] sm:$0xf]
  %v4263 = vld [vmem:[%s4255 + $0x1c] sm:$0xf]
  %v4264 = vld [vmem:[%s4255 + $0x20] sm:$0xf]
  %v4265 = vld [vmem:[%s4255 + $0x24] sm:$0xf]
  %v4266 = vld [vmem:[%s4255 + $0x28] sm:$0xf]
  %v4267 = vld [vmem:[%s4255 + $0x2c] sm:$0xf]
  %v4268 = vld [vmem:[%s4255 + $0x30] sm:$0xf]
  %v4269 = vld [vmem:[%s4255 + $0x34] sm:$0xf]
  %v4270 = vld [vmem:[%s4255 + $0x38] sm:$0xf]
  %v4271 = vld [vmem:[%s4255 + $0x3c] sm:$0xf]
  %v4336 = vunpack.c.l.b16 %v4191
  %v4337 = vunpack.c.l.b16 %v4192
  %v4338 = vunpack.c.l.b16 %v4193
  %v4339 = vunpack.c.l.b16 %v4194
  %v4340 = vunpack.c.l.b16 %v4195
  %v4341 = vunpack.c.l.b16 %v4196
  %v4342 = vunpack.c.l.b16 %v4197
  %v4343 = vunpack.c.l.b16 %v4198
  %v4344 = vunpack.c.l.b16 %v4199
  %v4345 = vunpack.c.l.b16 %v4200
  %v4346 = vunpack.c.l.b16 %v4201
  %v4347 = vunpack.c.l.b16 %v4202
  %v4348 = vunpack.c.l.b16 %v4203
  %v4349 = vunpack.c.l.b16 %v4204
  %v4350 = vunpack.c.l.b16 %v4205
  %v4351 = vunpack.c.l.b16 %v4206
  %v4352 = vunpack.c.l.b16 %v4207
  %v4353 = vunpack.c.l.b16 %v4208
  %v4354 = vunpack.c.l.b16 %v4209
  %v4355 = vunpack.c.l.b16 %v4210
  %v4356 = vunpack.c.l.b16 %v4211
  %v4357 = vunpack.c.l.b16 %v4212
  %v4358 = vunpack.c.l.b16 %v4213
  %v4359 = vunpack.c.l.b16 %v4214
  %v4360 = vunpack.c.l.b16 %v4215
  %v4361 = vunpack.c.l.b16 %v4216
  %v4362 = vunpack.c.l.b16 %v4217
  %v4363 = vunpack.c.l.b16 %v4218
  %v4364 = vunpack.c.l.b16 %v4219
  %v4365 = vunpack.c.l.b16 %v4220
  %v4366 = vunpack.c.l.b16 %v4221
  %v4367 = vunpack.c.l.b16 %v4222
  %v4368 = vunpack.c.l.b16 %v4223
  %v4369 = vunpack.c.l.b16 %v4224
  %v4370 = vunpack.c.l.b16 %v4225
  %v4371 = vunpack.c.l.b16 %v4226
  %v4372 = vunpack.c.l.b16 %v4227
  %v4373 = vunpack.c.l.b16 %v4228
  %v4374 = vunpack.c.l.b16 %v4229
  %v4375 = vunpack.c.l.b16 %v4230
  %v4376 = vunpack.c.l.b16 %v4231
  %v4377 = vunpack.c.l.b16 %v4232
  %v4378 = vunpack.c.l.b16 %v4233
  %v4379 = vunpack.c.l.b16 %v4234
  %v4380 = vunpack.c.l.b16 %v4235
  %v4381 = vunpack.c.l.b16 %v4236
  %v4382 = vunpack.c.l.b16 %v4237
  %v4383 = vunpack.c.l.b16 %v4238
  %v4384 = vunpack.c.l.b16 %v4239
  %v4385 = vunpack.c.l.b16 %v4240
  %v4386 = vunpack.c.l.b16 %v4241
  %v4387 = vunpack.c.l.b16 %v4242
  %v4388 = vunpack.c.l.b16 %v4243
  %v4389 = vunpack.c.l.b16 %v4244
  %v4390 = vunpack.c.l.b16 %v4245
  %v4391 = vunpack.c.l.b16 %v4246
  %v4392 = vunpack.c.l.b16 %v4247
  %v4393 = vunpack.c.l.b16 %v4248
  %v4394 = vunpack.c.l.b16 %v4249
  %v4395 = vunpack.c.l.b16 %v4250
  %v4396 = vunpack.c.l.b16 %v4251
  %v4397 = vunpack.c.l.b16 %v4252
  %v4398 = vunpack.c.l.b16 %v4253
  %v4399 = vunpack.c.l.b16 %v4254
  %v4400 = vpack.c.b16 %v4337, %v4336
  %v4401 = vpack.c.b16 %v4339, %v4338
  %v4402 = vpack.c.b16 %v4341, %v4340
  %v4403 = vpack.c.b16 %v4343, %v4342
  %v4404 = vpack.c.b16 %v4345, %v4344
  %v4405 = vpack.c.b16 %v4347, %v4346
  %v4406 = vpack.c.b16 %v4349, %v4348
  %v4407 = vpack.c.b16 %v4351, %v4350
  %v4408 = vpack.c.b16 %v4353, %v4352
  %v4409 = vpack.c.b16 %v4355, %v4354
  %v4410 = vpack.c.b16 %v4357, %v4356
  %v4411 = vpack.c.b16 %v4359, %v4358
  %v4412 = vpack.c.b16 %v4361, %v4360
  %v4413 = vpack.c.b16 %v4363, %v4362
  %v4414 = vpack.c.b16 %v4365, %v4364
  %v4415 = vpack.c.b16 %v4367, %v4366
  %v4416 = vpack.c.b16 %v4369, %v4368
  %v4417 = vpack.c.b16 %v4371, %v4370
  %v4418 = vpack.c.b16 %v4373, %v4372
  %v4419 = vpack.c.b16 %v4375, %v4374
  %v4420 = vpack.c.b16 %v4377, %v4376
  %v4421 = vpack.c.b16 %v4379, %v4378
  %v4422 = vpack.c.b16 %v4381, %v4380
  %v4423 = vpack.c.b16 %v4383, %v4382
  %v4424 = vpack.c.b16 %v4385, %v4384
  %v4425 = vpack.c.b16 %v4387, %v4386
  %v4426 = vpack.c.b16 %v4389, %v4388
  %v4427 = vpack.c.b16 %v4391, %v4390
  %v4428 = vpack.c.b16 %v4393, %v4392
  %v4429 = vpack.c.b16 %v4395, %v4394
  %v4430 = vpack.c.b16 %v4397, %v4396
  %v4431 = vpack.c.b16 %v4399, %v4398
  %v4480 = vunpack.c.l.b16 %v4256
  %v4481 = vunpack.c.l.b16 %v4257
  %v4482 = vunpack.c.l.b16 %v4258
  %v4483 = vunpack.c.l.b16 %v4259
  %v4484 = vunpack.c.l.b16 %v4260
  %v4485 = vunpack.c.l.b16 %v4261
  %v4486 = vunpack.c.l.b16 %v4262
  %v4487 = vunpack.c.l.b16 %v4263
  %v4488 = vunpack.c.l.b16 %v4264
  %v4489 = vunpack.c.l.b16 %v4265
  %v4490 = vunpack.c.l.b16 %v4266
  %v4491 = vunpack.c.l.b16 %v4267
  %v4492 = vunpack.c.l.b16 %v4268
  %v4493 = vunpack.c.l.b16 %v4269
  %v4494 = vunpack.c.l.b16 %v4270
  %v4495 = vunpack.c.l.b16 %v4271
  %v4496 = vpack.c.b16 %v4481, %v4480
  %v4497 = vpack.c.b16 %v4483, %v4482
  %v4498 = vpack.c.b16 %v4485, %v4484
  %v4499 = vpack.c.b16 %v4487, %v4486
  %v4500 = vpack.c.b16 %v4489, %v4488
  %v4501 = vpack.c.b16 %v4491, %v4490
  %v4502 = vpack.c.b16 %v4493, %v4492
  %v4503 = vpack.c.b16 %v4495, %v4494
  %4512 = vmatprep.subr.bf16.mxu0 0
  %4513 = vmatpush1.bf16.msra.mxu0 %v4503
  %4514 = vmatprep.subr.bf16.mxu0 0
  %4515 = vmatpush1.bf16.msra.mxu0 %v4502
  %4516 = vmatprep.subr.bf16.mxu0 0
  %4517 = vmatpush1.bf16.msra.mxu0 %v4501
  %4518 = vmatprep.subr.bf16.mxu0 0
  %4519 = vmatpush1.bf16.msra.mxu0 %v4500
  %4520 = vmatprep.subr.bf16.mxu0 0
  %4521 = vmatpush1.bf16.msra.mxu0 %v4499
  %4522 = vmatprep.subr.bf16.mxu0 0
  %4523 = vmatpush1.bf16.msra.mxu0 %v4498
  %4524 = vmatprep.subr.bf16.mxu0 0
  %4525 = vmatpush1.bf16.msra.mxu0 %v4497
  %4526 = vmatprep.subr.bf16.mxu0 0
  %4527 = vmatpush1.bf16.msra.mxu0 %v4496
  %4528 = vmatprep.subr.bf16.mxu0 0
  %4529 = vmatpush2.bf16.msra.mxu0 0
  %4530 = vmatprep.subr.bf16.mxu0 0
  %4531 = vmatpush2.bf16.msra.mxu0 0
  %4532 = vmatprep.subr.bf16.mxu0 0
  %4533 = vmatpush2.bf16.msra.mxu0 0
  %4534 = vmatprep.subr.bf16.mxu0 0
  %4535 = vmatpush2.bf16.msra.mxu0 0
  %4536 = vmatprep.subr.bf16.mxu0 0
  %4537 = vmatpush2.bf16.msra.mxu0 0
  %4538 = vmatprep.subr.bf16.mxu0 0
  %4539 = vmatpush2.bf16.msra.mxu0 0
  %4540 = vmatprep.subr.bf16.mxu0 0
  %4541 = vmatpush2.bf16.msra.mxu0 0
  %4542 = vmatprep.subr.bf16.mxu0 0
  %4543 = vmatpush2.bf16.msra.mxu0 0
  %4544 = vmatprep.mubr.bf16.mxu0 0
  %4545 = vmatmul.mubr.bf16.gmra.mxu0 %v4400
  %v4546 = vpop.f32.mrf.mxu0
  %v4547 = vadd.f32 0.0, %v4546
  %v4548 = vpop.f32.mrf.mxu0
  %v4549 = vpop.f32.mrf.mxu0
  %v4550 = vadd.f32 0.0, %v4549
  %v4551 = vpop.f32.mrf.mxu0
  %4552 = vmatprep.mubr.bf16.mxu0 0
  %4553 = vmatmul.mubr.bf16.gmra.mxu0 %v4401
  %v4554 = vpop.f32.mrf.mxu0
  %v4555 = vadd.f32 0.0, %v4554
  %v4556 = vpop.f32.mrf.mxu0
  %v4557 = vpop.f32.mrf.mxu0
  %v4558 = vadd.f32 0.0, %v4557
  %v4559 = vpop.f32.mrf.mxu0
  %4560 = vmatprep.mubr.bf16.mxu0 0
  %4561 = vmatmul.mubr.bf16.gmra.mxu0 %v4402
  %v4562 = vpop.f32.mrf.mxu0
  %v4563 = vadd.f32 0.0, %v4562
  %v4564 = vpop.f32.mrf.mxu0
  %v4565 = vpop.f32.mrf.mxu0
  %v4566 = vadd.f32 0.0, %v4565
  %v4567 = vpop.f32.mrf.mxu0
  %4568 = vmatprep.mubr.bf16.mxu0 0
  %4569 = vmatmul.mubr.bf16.gmra.mxu0 %v4403
  %v4570 = vpop.f32.mrf.mxu0
  %v4571 = vadd.f32 0.0, %v4570
  %v4572 = vpop.f32.mrf.mxu0
  %v4573 = vpop.f32.mrf.mxu0
  %v4574 = vadd.f32 0.0, %v4573
  %v4575 = vpop.f32.mrf.mxu0
  %4576 = vmatprep.mubr.bf16.mxu0 0
  %4577 = vmatmul.mubr.bf16.gmra.mxu0 %v4404
  %v4578 = vpop.f32.mrf.mxu0
  %v4579 = vadd.f32 0.0, %v4578
  %v4580 = vpop.f32.mrf.mxu0
  %v4581 = vpop.f32.mrf.mxu0
  %v4582 = vadd.f32 0.0, %v4581
  %v4583 = vpop.f32.mrf.mxu0
  %4584 = vmatprep.mubr.bf16.mxu0 0
  %4585 = vmatmul.mubr.bf16.gmra.mxu0 %v4405
  %v4586 = vpop.f32.mrf.mxu0
  %v4587 = vadd.f32 0.0, %v4586
  %v4588 = vpop.f32.mrf.mxu0
  %v4589 = vpop.f32.mrf.mxu0
  %v4590 = vadd.f32 0.0, %v4589
  %v4591 = vpop.f32.mrf.mxu0
  %4592 = vmatprep.mubr.bf16.mxu0 0
  %4593 = vmatmul.mubr.bf16.gmra.mxu0 %v4406
  %v4594 = vpop.f32.mrf.mxu0
  %v4595 = vadd.f32 0.0, %v4594
  %v4596 = vpop.f32.mrf.mxu0
  %v4597 = vpop.f32.mrf.mxu0
  %v4598 = vadd.f32 0.0, %v4597
  %v4599 = vpop.f32.mrf.mxu0
  %4600 = vmatprep.mubr.bf16.mxu0 0
  %4601 = vmatmul.mubr.bf16.gmra.mxu0 %v4407
  %v4602 = vpop.f32.mrf.mxu0
  %v4603 = vadd.f32 0.0, %v4602
  %v4604 = vpop.f32.mrf.mxu0
  %v4605 = vpop.f32.mrf.mxu0
  %v4606 = vadd.f32 0.0, %v4605
  %v4607 = vpop.f32.mrf.mxu0
  %4608 = vmatprep.mubr.bf16.mxu0 0
  %4609 = vmatmul.mubr.bf16.gmra.mxu0 %v4408
  %v4610 = vpop.f32.mrf.mxu0
  %v4611 = vadd.f32 0.0, %v4610
  %v4612 = vpop.f32.mrf.mxu0
  %v4613 = vpop.f32.mrf.mxu0
  %v4614 = vadd.f32 0.0, %v4613
  %v4615 = vpop.f32.mrf.mxu0
  %4616 = vmatprep.mubr.bf16.mxu0 0
  %4617 = vmatmul.mubr.bf16.gmra.mxu0 %v4409
  %v4618 = vpop.f32.mrf.mxu0
  %v4619 = vadd.f32 0.0, %v4618
  %v4620 = vpop.f32.mrf.mxu0
  %v4621 = vpop.f32.mrf.mxu0
  %v4622 = vadd.f32 0.0, %v4621
  %v4623 = vpop.f32.mrf.mxu0
  %4624 = vmatprep.mubr.bf16.mxu0 0
  %4625 = vmatmul.mubr.bf16.gmra.mxu0 %v4410
  %v4626 = vpop.f32.mrf.mxu0
  %v4627 = vadd.f32 0.0, %v4626
  %v4628 = vpop.f32.mrf.mxu0
  %v4629 = vpop.f32.mrf.mxu0
  %v4630 = vadd.f32 0.0, %v4629
  %v4631 = vpop.f32.mrf.mxu0
  %4632 = vmatprep.mubr.bf16.mxu0 0
  %4633 = vmatmul.mubr.bf16.gmra.mxu0 %v4411
  %v4634 = vpop.f32.mrf.mxu0
  %v4635 = vadd.f32 0.0, %v4634
  %v4636 = vpop.f32.mrf.mxu0
  %v4637 = vpop.f32.mrf.mxu0
  %v4638 = vadd.f32 0.0, %v4637
  %v4639 = vpop.f32.mrf.mxu0
  %4640 = vmatprep.mubr.bf16.mxu0 0
  %4641 = vmatmul.mubr.bf16.gmra.mxu0 %v4412
  %v4642 = vpop.f32.mrf.mxu0
  %v4643 = vadd.f32 0.0, %v4642
  %v4644 = vpop.f32.mrf.mxu0
  %v4645 = vpop.f32.mrf.mxu0
  %v4646 = vadd.f32 0.0, %v4645
  %v4647 = vpop.f32.mrf.mxu0
  %4648 = vmatprep.mubr.bf16.mxu0 0
  %4649 = vmatmul.mubr.bf16.gmra.mxu0 %v4413
  %v4650 = vpop.f32.mrf.mxu0
  %v4651 = vadd.f32 0.0, %v4650
  %v4652 = vpop.f32.mrf.mxu0
  %v4653 = vpop.f32.mrf.mxu0
  %v4654 = vadd.f32 0.0, %v4653
  %v4655 = vpop.f32.mrf.mxu0
  %4656 = vmatprep.mubr.bf16.mxu0 0
  %4657 = vmatmul.mubr.bf16.gmra.mxu0 %v4414
  %v4658 = vpop.f32.mrf.mxu0
  %v4659 = vadd.f32 0.0, %v4658
  %v4660 = vpop.f32.mrf.mxu0
  %v4661 = vpop.f32.mrf.mxu0
  %v4662 = vadd.f32 0.0, %v4661
  %v4663 = vpop.f32.mrf.mxu0
  %4664 = vmatprep.mubr.bf16.mxu0 0
  %4665 = vmatmul.mubr.bf16.gmra.mxu0 %v4415
  %v4666 = vpop.f32.mrf.mxu0
  %v4667 = vadd.f32 0.0, %v4666
  %v4668 = vpop.f32.mrf.mxu0
  %v4669 = vpop.f32.mrf.mxu0
  %v4670 = vadd.f32 0.0, %v4669
  %v4671 = vpop.f32.mrf.mxu0
  %4672 = vmatprep.mubr.bf16.mxu0 0
  %4673 = vmatmul.mubr.bf16.gmra.mxu0 %v4416
  %v4674 = vpop.f32.mrf.mxu0
  %v4675 = vadd.f32 0.0, %v4674
  %v4676 = vpop.f32.mrf.mxu0
  %v4677 = vpop.f32.mrf.mxu0
  %v4678 = vadd.f32 0.0, %v4677
  %v4679 = vpop.f32.mrf.mxu0
  %4680 = vmatprep.mubr.bf16.mxu0 0
  %4681 = vmatmul.mubr.bf16.gmra.mxu0 %v4417
  %v4682 = vpop.f32.mrf.mxu0
  %v4683 = vadd.f32 0.0, %v4682
  %v4684 = vpop.f32.mrf.mxu0
  %v4685 = vpop.f32.mrf.mxu0
  %v4686 = vadd.f32 0.0, %v4685
  %v4687 = vpop.f32.mrf.mxu0
  %4688 = vmatprep.mubr.bf16.mxu0 0
  %4689 = vmatmul.mubr.bf16.gmra.mxu0 %v4418
  %v4690 = vpop.f32.mrf.mxu0
  %v4691 = vadd.f32 0.0, %v4690
  %v4692 = vpop.f32.mrf.mxu0
  %v4693 = vpop.f32.mrf.mxu0
  %v4694 = vadd.f32 0.0, %v4693
  %v4695 = vpop.f32.mrf.mxu0
  %4696 = vmatprep.mubr.bf16.mxu0 0
  %4697 = vmatmul.mubr.bf16.gmra.mxu0 %v4419
  %v4698 = vpop.f32.mrf.mxu0
  %v4699 = vadd.f32 0.0, %v4698
  %v4700 = vpop.f32.mrf.mxu0
  %v4701 = vpop.f32.mrf.mxu0
  %v4702 = vadd.f32 0.0, %v4701
  %v4703 = vpop.f32.mrf.mxu0
  %4704 = vmatprep.mubr.bf16.mxu0 0
  %4705 = vmatmul.mubr.bf16.gmra.mxu0 %v4420
  %v4706 = vpop.f32.mrf.mxu0
  %v4707 = vadd.f32 0.0, %v4706
  %v4708 = vpop.f32.mrf.mxu0
  %v4709 = vpop.f32.mrf.mxu0
  %v4710 = vadd.f32 0.0, %v4709
  %v4711 = vpop.f32.mrf.mxu0
  %4712 = vmatprep.mubr.bf16.mxu0 0
  %4713 = vmatmul.mubr.bf16.gmra.mxu0 %v4421
  %v4714 = vpop.f32.mrf.mxu0
  %v4715 = vadd.f32 0.0, %v4714
  %v4716 = vpop.f32.mrf.mxu0
  %v4717 = vpop.f32.mrf.mxu0
  %v4718 = vadd.f32 0.0, %v4717
  %v4719 = vpop.f32.mrf.mxu0
  %4720 = vmatprep.mubr.bf16.mxu0 0
  %4721 = vmatmul.mubr.bf16.gmra.mxu0 %v4422
  %v4722 = vpop.f32.mrf.mxu0
  %v4723 = vadd.f32 0.0, %v4722
  %v4724 = vpop.f32.mrf.mxu0
  %v4725 = vpop.f32.mrf.mxu0
  %v4726 = vadd.f32 0.0, %v4725
  %v4727 = vpop.f32.mrf.mxu0
  %4728 = vmatprep.mubr.bf16.mxu0 0
  %4729 = vmatmul.mubr.bf16.gmra.mxu0 %v4423
  %v4730 = vpop.f32.mrf.mxu0
  %v4731 = vadd.f32 0.0, %v4730
  %v4732 = vpop.f32.mrf.mxu0
  %v4733 = vpop.f32.mrf.mxu0
  %v4734 = vadd.f32 0.0, %v4733
  %v4735 = vpop.f32.mrf.mxu0
  %4736 = vmatprep.mubr.bf16.mxu0 0
  %4737 = vmatmul.mubr.bf16.gmra.mxu0 %v4424
  %v4738 = vpop.f32.mrf.mxu0
  %v4739 = vadd.f32 0.0, %v4738
  %v4740 = vpop.f32.mrf.mxu0
  %v4741 = vpop.f32.mrf.mxu0
  %v4742 = vadd.f32 0.0, %v4741
  %v4743 = vpop.f32.mrf.mxu0
  %4744 = vmatprep.mubr.bf16.mxu0 0
  %4745 = vmatmul.mubr.bf16.gmra.mxu0 %v4425
  %v4746 = vpop.f32.mrf.mxu0
  %v4747 = vadd.f32 0.0, %v4746
  %v4748 = vpop.f32.mrf.mxu0
  %v4749 = vpop.f32.mrf.mxu0
  %v4750 = vadd.f32 0.0, %v4749
  %v4751 = vpop.f32.mrf.mxu0
  %4752 = vmatprep.mubr.bf16.mxu0 0
  %4753 = vmatmul.mubr.bf16.gmra.mxu0 %v4426
  %v4754 = vpop.f32.mrf.mxu0
  %v4755 = vadd.f32 0.0, %v4754
  %v4756 = vpop.f32.mrf.mxu0
  %v4757 = vpop.f32.mrf.mxu0
  %v4758 = vadd.f32 0.0, %v4757
  %v4759 = vpop.f32.mrf.mxu0
  %4760 = vmatprep.mubr.bf16.mxu0 0
  %4761 = vmatmul.mubr.bf16.gmra.mxu0 %v4427
  %v4762 = vpop.f32.mrf.mxu0
  %v4763 = vadd.f32 0.0, %v4762
  %v4764 = vpop.f32.mrf.mxu0
  %v4765 = vpop.f32.mrf.mxu0
  %v4766 = vadd.f32 0.0, %v4765
  %v4767 = vpop.f32.mrf.mxu0
  %4768 = vmatprep.mubr.bf16.mxu0 0
  %4769 = vmatmul.mubr.bf16.gmra.mxu0 %v4428
  %v4770 = vpop.f32.mrf.mxu0
  %v4771 = vadd.f32 0.0, %v4770
  %v4772 = vpop.f32.mrf.mxu0
  %v4773 = vpop.f32.mrf.mxu0
  %v4774 = vadd.f32 0.0, %v4773
  %v4775 = vpop.f32.mrf.mxu0
  %4776 = vmatprep.mubr.bf16.mxu0 0
  %4777 = vmatmul.mubr.bf16.gmra.mxu0 %v4429
  %v4778 = vpop.f32.mrf.mxu0
  %v4779 = vadd.f32 0.0, %v4778
  %v4780 = vpop.f32.mrf.mxu0
  %v4781 = vpop.f32.mrf.mxu0
  %v4782 = vadd.f32 0.0, %v4781
  %v4783 = vpop.f32.mrf.mxu0
  %4784 = vmatprep.mubr.bf16.mxu0 0
  %4785 = vmatmul.mubr.bf16.gmra.mxu0 %v4430
  %v4786 = vpop.f32.mrf.mxu0
  %v4787 = vadd.f32 0.0, %v4786
  %v4788 = vpop.f32.mrf.mxu0
  %v4789 = vpop.f32.mrf.mxu0
  %v4790 = vadd.f32 0.0, %v4789
  %v4791 = vpop.f32.mrf.mxu0
  %4792 = vmatprep.mubr.bf16.mxu0 0
  %4793 = vmatmul.mubr.bf16.gmra.mxu0 %v4431
  %v4794 = vpop.f32.mrf.mxu0
  %v4795 = vadd.f32 0.0, %v4794
  %v4796 = vpop.f32.mrf.mxu0
  %v4797 = vpop.f32.mrf.mxu0
  %v4798 = vadd.f32 0.0, %v4797
  %v4799 = vpop.f32.mrf.mxu0
  %4800 = vdwg.mxu0
  %v4801 = vadd.f32 %v4127, %v4547
  %v4802 = vadd.f32 %v4128, %v4550
  %v4803 = vadd.f32 %v4129, %v4555
  %v4804 = vadd.f32 %v4130, %v4558
  %v4805 = vadd.f32 %v4131, %v4563
  %v4806 = vadd.f32 %v4132, %v4566
  %v4807 = vadd.f32 %v4133, %v4571
  %v4808 = vadd.f32 %v4134, %v4574
  %v4809 = vadd.f32 %v4135, %v4579
  %v4810 = vadd.f32 %v4136, %v4582
  %v4811 = vadd.f32 %v4137, %v4587
  %v4812 = vadd.f32 %v4138, %v4590
  %v4813 = vadd.f32 %v4139, %v4595
  %v4814 = vadd.f32 %v4140, %v4598
  %v4815 = vadd.f32 %v4141, %v4603
  %v4816 = vadd.f32 %v4142, %v4606
  %v4817 = vadd.f32 %v4143, %v4611
  %v4818 = vadd.f32 %v4144, %v4614
  %v4819 = vadd.f32 %v4145, %v4619
  %v4820 = vadd.f32 %v4146, %v4622
  %v4821 = vadd.f32 %v4147, %v4627
  %v4822 = vadd.f32 %v4148, %v4630
  %v4823 = vadd.f32 %v4149, %v4635
  %v4824 = vadd.f32 %v4150, %v4638
  %v4825 = vadd.f32 %v4151, %v4643
  %v4826 = vadd.f32 %v4152, %v4646
  %v4827 = vadd.f32 %v4153, %v4651
  %v4828 = vadd.f32 %v4154, %v4654
  %v4829 = vadd.f32 %v4155, %v4659
  %v4830 = vadd.f32 %v4156, %v4662
  %v4831 = vadd.f32 %v4157, %v4667
  %v4832 = vadd.f32 %v4158, %v4670
  %v4833 = vadd.f32 %v4159, %v4675
  %v4834 = vadd.f32 %v4160, %v4678
  %v4835 = vadd.f32 %v4161, %v4683
  %v4836 = vadd.f32 %v4162, %v4686
  %v4837 = vadd.f32 %v4163, %v4691
  %v4838 = vadd.f32 %v4164, %v4694
  %v4839 = vadd.f32 %v4165, %v4699
  %v4840 = vadd.f32 %v4166, %v4702
  %v4841 = vadd.f32 %v4167, %v4707
  %v4842 = vadd.f32 %v4168, %v4710
  %v4843 = vadd.f32 %v4169, %v4715
  %v4844 = vadd.f32 %v4170, %v4718
  %v4845 = vadd.f32 %v4171, %v4723
  %v4846 = vadd.f32 %v4172, %v4726
  %v4847 = vadd.f32 %v4173, %v4731
  %v4848 = vadd.f32 %v4174, %v4734
  %v4849 = vadd.f32 %v4175, %v4739
  %v4850 = vadd.f32 %v4176, %v4742
  %v4851 = vadd.f32 %v4177, %v4747
  %v4852 = vadd.f32 %v4178, %v4750
  %v4853 = vadd.f32 %v4179, %v4755
  %v4854 = vadd.f32 %v4180, %v4758
  %v4855 = vadd.f32 %v4181, %v4763
  %v4856 = vadd.f32 %v4182, %v4766
  %v4857 = vadd.f32 %v4183, %v4771
  %v4858 = vadd.f32 %v4184, %v4774
  %v4859 = vadd.f32 %v4185, %v4779
  %v4860 = vadd.f32 %v4186, %v4782
  %v4861 = vadd.f32 %v4187, %v4787
  %v4862 = vadd.f32 %v4188, %v4790
  %v4863 = vadd.f32 %v4189, %v4795
  %v4864 = vadd.f32 %v4190, %v4798
  %v4865 = vld [vmem:[%s1232] sm:$0xe]
  %v4866 = vld [vmem:[%s1232 + $0x4] sm:$0xf]
  %v4867 = vld [vmem:[%s1232 + $0x8] sm:$0x1]
  %v4868 = vld [vmem:[%s1232 + $0xc] sm:$0xe]
  %v4869 = vld [vmem:[%s1232 + $0x10] sm:$0xf]
  %v4870 = vld [vmem:[%s1232 + $0x14] sm:$0x1]
  %v4871 = vld [vmem:[%s1232 + $0x18] sm:$0xe]
  %v4872 = vld [vmem:[%s1232 + $0x1c] sm:$0xf]
  %v4873 = vld [vmem:[%s1232 + $0x20] sm:$0x1]
  %v4874 = vld [vmem:[%s1232 + $0x24] sm:$0xe]
  %v4875 = vld [vmem:[%s1232 + $0x28] sm:$0xf]
  %v4876 = vld [vmem:[%s1232 + $0x2c] sm:$0x1]
  %v4877 = vld [vmem:[%s1232 + $0x30] sm:$0xe]
  %v4878 = vld [vmem:[%s1232 + $0x34] sm:$0xf]
  %v4879 = vld [vmem:[%s1232 + $0x38] sm:$0x1]
  %v4880 = vld [vmem:[%s1232 + $0x3c] sm:$0xe]
  %v4881 = vld [vmem:[%s1232 + $0x40] sm:$0xf]
  %v4882 = vld [vmem:[%s1232 + $0x44] sm:$0x1]
  %v4883 = vld [vmem:[%s1232 + $0x48] sm:$0xe]
  %v4884 = vld [vmem:[%s1232 + $0x4c] sm:$0xf]
  %v4885 = vld [vmem:[%s1232 + $0x50] sm:$0x1]
  %v4886 = vld [vmem:[%s1232 + $0x54] sm:$0xe]
  %v4887 = vld [vmem:[%s1232 + $0x58] sm:$0xf]
  %v4888 = vld [vmem:[%s1232 + $0x5c] sm:$0x1]
  %v4889 = vld [vmem:[%s1232 + $0x60] sm:$0xe]
  %v4890 = vld [vmem:[%s1232 + $0x64] sm:$0xf]
  %v4891 = vld [vmem:[%s1232 + $0x68] sm:$0x1]
  %v4892 = vld [vmem:[%s1232 + $0x6c] sm:$0xe]
  %v4893 = vld [vmem:[%s1232 + $0x70] sm:$0xf]
  %v4894 = vld [vmem:[%s1232 + $0x74] sm:$0x1]
  %v4895 = vld [vmem:[%s1232 + $0x78] sm:$0xe]
  %v4896 = vld [vmem:[%s1232 + $0x7c] sm:$0xf]
  %v4897 = vld [vmem:[%s1232 + $0x80] sm:$0x1]
  %v4898 = vld [vmem:[%s1232 + $0x84] sm:$0xe]
  %v4899 = vld [vmem:[%s1232 + $0x88] sm:$0xf]
  %v4900 = vld [vmem:[%s1232 + $0x8c] sm:$0x1]
  %v4901 = vld [vmem:[%s1232 + $0x90] sm:$0xe]
  %v4902 = vld [vmem:[%s1232 + $0x94] sm:$0xf]
  %v4903 = vld [vmem:[%s1232 + $0x98] sm:$0x1]
  %v4904 = vld [vmem:[%s1232 + $0x9c] sm:$0xe]
  %v4905 = vld [vmem:[%s1232 + $0xa0] sm:$0xf]
  %v4906 = vld [vmem:[%s1232 + $0xa4] sm:$0x1]
  %v4907 = vld [vmem:[%s1232 + $0xa8] sm:$0xe]
  %v4908 = vld [vmem:[%s1232 + $0xac] sm:$0xf]
  %v4909 = vld [vmem:[%s1232 + $0xb0] sm:$0x1]
  %v4910 = vld [vmem:[%s1232 + $0xb4] sm:$0xe]
  %v4911 = vld [vmem:[%s1232 + $0xb8] sm:$0xf]
  %v4912 = vld [vmem:[%s1232 + $0xbc] sm:$0x1]
  %v4913 = vld [vmem:[%s1232 + $0xf0] sm:$0xe]
  %v4914 = vld [vmem:[%s1232 + $0xf4] sm:$0xf]
  %v4915 = vld [vmem:[%s1232 + $0xf8] sm:$0x1]
  %v4916 = vld [vmem:[%s1232 + $0xfc] sm:$0xe]
  %v4917 = vld [vmem:[%s1232 + $0x100] sm:$0xf]
  %v4918 = vld [vmem:[%s1232 + $0x104] sm:$0x1]
  %v4919 = vld [vmem:[%s1232 + $0x108] sm:$0xe]
  %v4920 = vld [vmem:[%s1232 + $0x10c] sm:$0xf]
  %v4921 = vld [vmem:[%s1232 + $0x110] sm:$0x1]
  %v4922 = vld [vmem:[%s1232 + $0x114] sm:$0xe]
  %v4923 = vld [vmem:[%s1232 + $0x118] sm:$0xf]
  %v4924 = vld [vmem:[%s1232 + $0x11c] sm:$0x1]
  %v4925 = vld [vmem:[%s1232 + $0x120] sm:$0xe]
  %v4926 = vld [vmem:[%s1232 + $0x124] sm:$0xf]
  %v4927 = vld [vmem:[%s1232 + $0x128] sm:$0x1]
  %v4928 = vld [vmem:[%s1232 + $0x12c] sm:$0xe]
  %v4929 = vld [vmem:[%s1232 + $0x130] sm:$0xf]
  %v4930 = vld [vmem:[%s1232 + $0x134] sm:$0x1]
  %v4931 = vld [vmem:[%s1232 + $0x138] sm:$0xe]
  %v4932 = vld [vmem:[%s1232 + $0x13c] sm:$0xf]
  %v4933 = vld [vmem:[%s1232 + $0x140] sm:$0x1]
  %v4934 = vld [vmem:[%s1232 + $0x144] sm:$0xe]
  %v4935 = vld [vmem:[%s1232 + $0x148] sm:$0xf]
  %v4936 = vld [vmem:[%s1232 + $0x14c] sm:$0x1]
  %v4937 = vld [vmem:[%s1232 + $0x150] sm:$0xe]
  %v4938 = vld [vmem:[%s1232 + $0x154] sm:$0xf]
  %v4939 = vld [vmem:[%s1232 + $0x158] sm:$0x1]
  %v4940 = vld [vmem:[%s1232 + $0x15c] sm:$0xe]
  %v4941 = vld [vmem:[%s1232 + $0x160] sm:$0xf]
  %v4942 = vld [vmem:[%s1232 + $0x164] sm:$0x1]
  %v4943 = vld [vmem:[%s1232 + $0x168] sm:$0xe]
  %v4944 = vld [vmem:[%s1232 + $0x16c] sm:$0xf]
  %v4945 = vld [vmem:[%s1232 + $0x170] sm:$0x1]
  %v4946 = vld [vmem:[%s1232 + $0x174] sm:$0xe]
  %v4947 = vld [vmem:[%s1232 + $0x178] sm:$0xf]
  %v4948 = vld [vmem:[%s1232 + $0x17c] sm:$0x1]
  %v4949 = vld [vmem:[%s1232 + $0x180] sm:$0xe]
  %v4950 = vld [vmem:[%s1232 + $0x184] sm:$0xf]
  %v4951 = vld [vmem:[%s1232 + $0x188] sm:$0x1]
  %v4952 = vld [vmem:[%s1232 + $0x18c] sm:$0xe]
  %v4953 = vld [vmem:[%s1232 + $0x190] sm:$0xf]
  %v4954 = vld [vmem:[%s1232 + $0x194] sm:$0x1]
  %v4955 = vld [vmem:[%s1232 + $0x198] sm:$0xe]
  %v4956 = vld [vmem:[%s1232 + $0x19c] sm:$0xf]
  %v4957 = vld [vmem:[%s1232 + $0x1a0] sm:$0x1]
  %v4958 = vld [vmem:[%s1232 + $0x1a4] sm:$0xe]
  %v4959 = vld [vmem:[%s1232 + $0x1a8] sm:$0xf]
  %v4960 = vld [vmem:[%s1232 + $0x1ac] sm:$0x1]
  %v5057 = vrot.slane %v4865, 5
  %v5058 = vrot.slane %v5057, 4
  %v5059 = vrot.slane %v4866, 5
  %v5060 = vsel %vm2086, %v5058, %v5059
  %v5061 = vrot.slane %v5059, 4
  %v5062 = vrot.slane %v4867, 5
  %v5063 = vsel %vm2086, %v5061, %v5062
  %v5064 = vrot.slane %v4868, 5
  %v5065 = vrot.slane %v5064, 4
  %v5066 = vrot.slane %v4869, 5
  %v5067 = vsel %vm2086, %v5065, %v5066
  %v5068 = vrot.slane %v5066, 4
  %v5069 = vrot.slane %v4870, 5
  %v5070 = vsel %vm2086, %v5068, %v5069
  %v5071 = vrot.slane %v4871, 5
  %v5072 = vrot.slane %v5071, 4
  %v5073 = vrot.slane %v4872, 5
  %v5074 = vsel %vm2086, %v5072, %v5073
  %v5075 = vrot.slane %v5073, 4
  %v5076 = vrot.slane %v4873, 5
  %v5077 = vsel %vm2086, %v5075, %v5076
  %v5078 = vrot.slane %v4874, 5
  %v5079 = vrot.slane %v5078, 4
  %v5080 = vrot.slane %v4875, 5
  %v5081 = vsel %vm2086, %v5079, %v5080
  %v5082 = vrot.slane %v5080, 4
  %v5083 = vrot.slane %v4876, 5
  %v5084 = vsel %vm2086, %v5082, %v5083
  %v5085 = vrot.slane %v4877, 5
  %v5086 = vrot.slane %v5085, 4
  %v5087 = vrot.slane %v4878, 5
  %v5088 = vsel %vm2086, %v5086, %v5087
  %v5089 = vrot.slane %v5087, 4
  %v5090 = vrot.slane %v4879, 5
  %v5091 = vsel %vm2086, %v5089, %v5090
  %v5092 = vrot.slane %v4880, 5
  %v5093 = vrot.slane %v5092, 4
  %v5094 = vrot.slane %v4881, 5
  %v5095 = vsel %vm2086, %v5093, %v5094
  %v5096 = vrot.slane %v5094, 4
  %v5097 = vrot.slane %v4882, 5
  %v5098 = vsel %vm2086, %v5096, %v5097
  %v5099 = vrot.slane %v4883, 5
  %v5100 = vrot.slane %v5099, 4
  %v5101 = vrot.slane %v4884, 5
  %v5102 = vsel %vm2086, %v5100, %v5101
  %v5103 = vrot.slane %v5101, 4
  %v5104 = vrot.slane %v4885, 5
  %v5105 = vsel %vm2086, %v5103, %v5104
  %v5106 = vrot.slane %v4886, 5
  %v5107 = vrot.slane %v5106, 4
  %v5108 = vrot.slane %v4887, 5
  %v5109 = vsel %vm2086, %v5107, %v5108
  %v5110 = vrot.slane %v5108, 4
  %v5111 = vrot.slane %v4888, 5
  %v5112 = vsel %vm2086, %v5110, %v5111
  %v5113 = vrot.slane %v4889, 5
  %v5114 = vrot.slane %v5113, 4
  %v5115 = vrot.slane %v4890, 5
  %v5116 = vsel %vm2086, %v5114, %v5115
  %v5117 = vrot.slane %v5115, 4
  %v5118 = vrot.slane %v4891, 5
  %v5119 = vsel %vm2086, %v5117, %v5118
  %v5120 = vrot.slane %v4892, 5
  %v5121 = vrot.slane %v5120, 4
  %v5122 = vrot.slane %v4893, 5
  %v5123 = vsel %vm2086, %v5121, %v5122
  %v5124 = vrot.slane %v5122, 4
  %v5125 = vrot.slane %v4894, 5
  %v5126 = vsel %vm2086, %v5124, %v5125
  %v5127 = vrot.slane %v4895, 5
  %v5128 = vrot.slane %v5127, 4
  %v5129 = vrot.slane %v4896, 5
  %v5130 = vsel %vm2086, %v5128, %v5129
  %v5131 = vrot.slane %v5129, 4
  %v5132 = vrot.slane %v4897, 5
  %v5133 = vsel %vm2086, %v5131, %v5132
  %v5134 = vrot.slane %v4898, 5
  %v5135 = vrot.slane %v5134, 4
  %v5136 = vrot.slane %v4899, 5
  %v5137 = vsel %vm2086, %v5135, %v5136
  %v5138 = vrot.slane %v5136, 4
  %v5139 = vrot.slane %v4900, 5
  %v5140 = vsel %vm2086, %v5138, %v5139
  %v5141 = vrot.slane %v4901, 5
  %v5142 = vrot.slane %v5141, 4
  %v5143 = vrot.slane %v4902, 5
  %v5144 = vsel %vm2086, %v5142, %v5143
  %v5145 = vrot.slane %v5143, 4
  %v5146 = vrot.slane %v4903, 5
  %v5147 = vsel %vm2086, %v5145, %v5146
  %v5148 = vrot.slane %v4904, 5
  %v5149 = vrot.slane %v5148, 4
  %v5150 = vrot.slane %v4905, 5
  %v5151 = vsel %vm2086, %v5149, %v5150
  %v5152 = vrot.slane %v5150, 4
  %v5153 = vrot.slane %v4906, 5
  %v5154 = vsel %vm2086, %v5152, %v5153
  %v5155 = vrot.slane %v4907, 5
  %v5156 = vrot.slane %v5155, 4
  %v5157 = vrot.slane %v4908, 5
  %v5158 = vsel %vm2086, %v5156, %v5157
  %v5159 = vrot.slane %v5157, 4
  %v5160 = vrot.slane %v4909, 5
  %v5161 = vsel %vm2086, %v5159, %v5160
  %v5162 = vrot.slane %v4910, 5
  %v5163 = vrot.slane %v5162, 4
  %v5164 = vrot.slane %v4911, 5
  %v5165 = vsel %vm2086, %v5163, %v5164
  %v5166 = vrot.slane %v5164, 4
  %v5167 = vrot.slane %v4912, 5
  %v5168 = vsel %vm2086, %v5166, %v5167
  %v5169 = vrot.slane %v4913, 5
  %v5170 = vrot.slane %v5169, 4
  %v5171 = vrot.slane %v4914, 5
  %v5172 = vsel %vm2086, %v5170, %v5171
  %v5173 = vrot.slane %v5171, 4
  %v5174 = vrot.slane %v4915, 5
  %v5175 = vsel %vm2086, %v5173, %v5174
  %v5176 = vrot.slane %v4916, 5
  %v5177 = vrot.slane %v5176, 4
  %v5178 = vrot.slane %v4917, 5
  %v5179 = vsel %vm2086, %v5177, %v5178
  %v5180 = vrot.slane %v5178, 4
  %v5181 = vrot.slane %v4918, 5
  %v5182 = vsel %vm2086, %v5180, %v5181
  %v5183 = vrot.slane %v4919, 5
  %v5184 = vrot.slane %v5183, 4
  %v5185 = vrot.slane %v4920, 5
  %v5186 = vsel %vm2086, %v5184, %v5185
  %v5187 = vrot.slane %v5185, 4
  %v5188 = vrot.slane %v4921, 5
  %v5189 = vsel %vm2086, %v5187, %v5188
  %v5190 = vrot.slane %v4922, 5
  %v5191 = vrot.slane %v5190, 4
  %v5192 = vrot.slane %v4923, 5
  %v5193 = vsel %vm2086, %v5191, %v5192
  %v5194 = vrot.slane %v5192, 4
  %v5195 = vrot.slane %v4924, 5
  %v5196 = vsel %vm2086, %v5194, %v5195
  %v5197 = vrot.slane %v4925, 5
  %v5198 = vrot.slane %v5197, 4
  %v5199 = vrot.slane %v4926, 5
  %v5200 = vsel %vm2086, %v5198, %v5199
  %v5201 = vrot.slane %v5199, 4
  %v5202 = vrot.slane %v4927, 5
  %v5203 = vsel %vm2086, %v5201, %v5202
  %v5204 = vrot.slane %v4928, 5
  %v5205 = vrot.slane %v5204, 4
  %v5206 = vrot.slane %v4929, 5
  %v5207 = vsel %vm2086, %v5205, %v5206
  %v5208 = vrot.slane %v5206, 4
  %v5209 = vrot.slane %v4930, 5
  %v5210 = vsel %vm2086, %v5208, %v5209
  %v5211 = vrot.slane %v4931, 5
  %v5212 = vrot.slane %v5211, 4
  %v5213 = vrot.slane %v4932, 5
  %v5214 = vsel %vm2086, %v5212, %v5213
  %v5215 = vrot.slane %v5213, 4
  %v5216 = vrot.slane %v4933, 5
  %v5217 = vsel %vm2086, %v5215, %v5216
  %v5218 = vrot.slane %v4934, 5
  %v5219 = vrot.slane %v5218, 4
  %v5220 = vrot.slane %v4935, 5
  %v5221 = vsel %vm2086, %v5219, %v5220
  %v5222 = vrot.slane %v5220, 4
  %v5223 = vrot.slane %v4936, 5
  %v5224 = vsel %vm2086, %v5222, %v5223
  %v5225 = vrot.slane %v4937, 5
  %v5226 = vrot.slane %v5225, 4
  %v5227 = vrot.slane %v4938, 5
  %v5228 = vsel %vm2086, %v5226, %v5227
  %v5229 = vrot.slane %v5227, 4
  %v5230 = vrot.slane %v4939, 5
  %v5231 = vsel %vm2086, %v5229, %v5230
  %v5232 = vrot.slane %v4940, 5
  %v5233 = vrot.slane %v5232, 4
  %v5234 = vrot.slane %v4941, 5
  %v5235 = vsel %vm2086, %v5233, %v5234
  %v5236 = vrot.slane %v5234, 4
  %v5237 = vrot.slane %v4942, 5
  %v5238 = vsel %vm2086, %v5236, %v5237
  %v5239 = vrot.slane %v4943, 5
  %v5240 = vrot.slane %v5239, 4
  %v5241 = vrot.slane %v4944, 5
  %v5242 = vsel %vm2086, %v5240, %v5241
  %v5243 = vrot.slane %v5241, 4
  %v5244 = vrot.slane %v4945, 5
  %v5245 = vsel %vm2086, %v5243, %v5244
  %v5246 = vrot.slane %v4946, 5
  %v5247 = vrot.slane %v5246, 4
  %v5248 = vrot.slane %v4947, 5
  %v5249 = vsel %vm2086, %v5247, %v5248
  %v5250 = vrot.slane %v5248, 4
  %v5251 = vrot.slane %v4948, 5
  %v5252 = vsel %vm2086, %v5250, %v5251
  %v5253 = vrot.slane %v4949, 5
  %v5254 = vrot.slane %v5253, 4
  %v5255 = vrot.slane %v4950, 5
  %v5256 = vsel %vm2086, %v5254, %v5255
  %v5257 = vrot.slane %v5255, 4
  %v5258 = vrot.slane %v4951, 5
  %v5259 = vsel %vm2086, %v5257, %v5258
  %v5260 = vrot.slane %v4952, 5
  %v5261 = vrot.slane %v5260, 4
  %v5262 = vrot.slane %v4953, 5
  %v5263 = vsel %vm2086, %v5261, %v5262
  %v5264 = vrot.slane %v5262, 4
  %v5265 = vrot.slane %v4954, 5
  %v5266 = vsel %vm2086, %v5264, %v5265
  %v5267 = vrot.slane %v4955, 5
  %v5268 = vrot.slane %v5267, 4
  %v5269 = vrot.slane %v4956, 5
  %v5270 = vsel %vm2086, %v5268, %v5269
  %v5271 = vrot.slane %v5269, 4
  %v5272 = vrot.slane %v4957, 5
  %v5273 = vsel %vm2086, %v5271, %v5272
  %v5274 = vrot.slane %v4958, 5
  %v5275 = vrot.slane %v5274, 4
  %v5276 = vrot.slane %v4959, 5
  %v5277 = vsel %vm2086, %v5275, %v5276
  %v5278 = vrot.slane %v5276, 4
  %v5279 = vrot.slane %v4960, 5
  %v5280 = vsel %vm2086, %v5278, %v5279
  %s5281 = scalar_lea.vmem %s4, 256
  %v5282 = vld [vmem:[%s5281] sm:$0xf]
  %v5283 = vld [vmem:[%s5281 + $0x4] sm:$0xf]
  %v5284 = vld [vmem:[%s5281 + $0x8] sm:$0xf]
  %v5285 = vld [vmem:[%s5281 + $0xc] sm:$0xf]
  %v5286 = vld [vmem:[%s5281 + $0x10] sm:$0xf]
  %v5287 = vld [vmem:[%s5281 + $0x14] sm:$0xf]
  %v5288 = vld [vmem:[%s5281 + $0x18] sm:$0xf]
  %v5289 = vld [vmem:[%s5281 + $0x1c] sm:$0xf]
  %v5290 = vld [vmem:[%s5281 + $0x20] sm:$0xf]
  %v5291 = vld [vmem:[%s5281 + $0x24] sm:$0xf]
  %v5292 = vld [vmem:[%s5281 + $0x28] sm:$0xf]
  %v5293 = vld [vmem:[%s5281 + $0x2c] sm:$0xf]
  %v5294 = vld [vmem:[%s5281 + $0x30] sm:$0xf]
  %v5295 = vld [vmem:[%s5281 + $0x34] sm:$0xf]
  %v5296 = vld [vmem:[%s5281 + $0x38] sm:$0xf]
  %v5297 = vld [vmem:[%s5281 + $0x3c] sm:$0xf]
  %v5298 = vunpack.c.l.b16 %v5060
  %v5299 = vunpack.c.l.b16 %v5063
  %v5300 = vunpack.c.l.b16 %v5067
  %v5301 = vunpack.c.l.b16 %v5070
  %v5302 = vunpack.c.l.b16 %v5074
  %v5303 = vunpack.c.l.b16 %v5077
  %v5304 = vunpack.c.l.b16 %v5081
  %v5305 = vunpack.c.l.b16 %v5084
  %v5306 = vunpack.c.l.b16 %v5088
  %v5307 = vunpack.c.l.b16 %v5091
  %v5308 = vunpack.c.l.b16 %v5095
  %v5309 = vunpack.c.l.b16 %v5098
  %v5310 = vunpack.c.l.b16 %v5102
  %v5311 = vunpack.c.l.b16 %v5105
  %v5312 = vunpack.c.l.b16 %v5109
  %v5313 = vunpack.c.l.b16 %v5112
  %v5314 = vunpack.c.l.b16 %v5116
  %v5315 = vunpack.c.l.b16 %v5119
  %v5316 = vunpack.c.l.b16 %v5123
  %v5317 = vunpack.c.l.b16 %v5126
  %v5318 = vunpack.c.l.b16 %v5130
  %v5319 = vunpack.c.l.b16 %v5133
  %v5320 = vunpack.c.l.b16 %v5137
  %v5321 = vunpack.c.l.b16 %v5140
  %v5322 = vunpack.c.l.b16 %v5144
  %v5323 = vunpack.c.l.b16 %v5147
  %v5324 = vunpack.c.l.b16 %v5151
  %v5325 = vunpack.c.l.b16 %v5154
  %v5326 = vunpack.c.l.b16 %v5158
  %v5327 = vunpack.c.l.b16 %v5161
  %v5328 = vunpack.c.l.b16 %v5165
  %v5329 = vunpack.c.l.b16 %v5168
  %v5330 = vunpack.c.l.b16 %v5172
  %v5331 = vunpack.c.l.b16 %v5175
  %v5332 = vunpack.c.l.b16 %v5179
  %v5333 = vunpack.c.l.b16 %v5182
  %v5334 = vunpack.c.l.b16 %v5186
  %v5335 = vunpack.c.l.b16 %v5189
  %v5336 = vunpack.c.l.b16 %v5193
  %v5337 = vunpack.c.l.b16 %v5196
  %v5338 = vunpack.c.l.b16 %v5200
  %v5339 = vunpack.c.l.b16 %v5203
  %v5340 = vunpack.c.l.b16 %v5207
  %v5341 = vunpack.c.l.b16 %v5210
  %v5342 = vunpack.c.l.b16 %v5214
  %v5343 = vunpack.c.l.b16 %v5217
  %v5344 = vunpack.c.l.b16 %v5221
  %v5345 = vunpack.c.l.b16 %v5224
  %v5346 = vunpack.c.l.b16 %v5228
  %v5347 = vunpack.c.l.b16 %v5231
  %v5348 = vunpack.c.l.b16 %v5235
  %v5349 = vunpack.c.l.b16 %v5238
  %v5350 = vunpack.c.l.b16 %v5242
  %v5351 = vunpack.c.l.b16 %v5245
  %v5352 = vunpack.c.l.b16 %v5249
  %v5353 = vunpack.c.l.b16 %v5252
  %v5354 = vunpack.c.l.b16 %v5256
  %v5355 = vunpack.c.l.b16 %v5259
  %v5356 = vunpack.c.l.b16 %v5263
  %v5357 = vunpack.c.l.b16 %v5266
  %v5358 = vunpack.c.l.b16 %v5270
  %v5359 = vunpack.c.l.b16 %v5273
  %v5360 = vunpack.c.l.b16 %v5277
  %v5361 = vunpack.c.l.b16 %v5280
  %v5362 = vpack.c.b16 %v5299, %v5298
  %v5363 = vpack.c.b16 %v5301, %v5300
  %v5364 = vpack.c.b16 %v5303, %v5302
  %v5365 = vpack.c.b16 %v5305, %v5304
  %v5366 = vpack.c.b16 %v5307, %v5306
  %v5367 = vpack.c.b16 %v5309, %v5308
  %v5368 = vpack.c.b16 %v5311, %v5310
  %v5369 = vpack.c.b16 %v5313, %v5312
  %v5370 = vpack.c.b16 %v5315, %v5314
  %v5371 = vpack.c.b16 %v5317, %v5316
  %v5372 = vpack.c.b16 %v5319, %v5318
  %v5373 = vpack.c.b16 %v5321, %v5320
  %v5374 = vpack.c.b16 %v5323, %v5322
  %v5375 = vpack.c.b16 %v5325, %v5324
  %v5376 = vpack.c.b16 %v5327, %v5326
  %v5377 = vpack.c.b16 %v5329, %v5328
  %v5378 = vpack.c.b16 %v5331, %v5330
  %v5379 = vpack.c.b16 %v5333, %v5332
  %v5380 = vpack.c.b16 %v5335, %v5334
  %v5381 = vpack.c.b16 %v5337, %v5336
  %v5382 = vpack.c.b16 %v5339, %v5338
  %v5383 = vpack.c.b16 %v5341, %v5340
  %v5384 = vpack.c.b16 %v5343, %v5342
  %v5385 = vpack.c.b16 %v5345, %v5344
  %v5386 = vpack.c.b16 %v5347, %v5346
  %v5387 = vpack.c.b16 %v5349, %v5348
  %v5388 = vpack.c.b16 %v5351, %v5350
  %v5389 = vpack.c.b16 %v5353, %v5352
  %v5390 = vpack.c.b16 %v5355, %v5354
  %v5391 = vpack.c.b16 %v5357, %v5356
  %v5392 = vpack.c.b16 %v5359, %v5358
  %v5393 = vpack.c.b16 %v5361, %v5360
  %v5442 = vunpack.c.l.b16 %v5282
  %v5443 = vunpack.c.l.b16 %v5283
  %v5444 = vunpack.c.l.b16 %v5284
  %v5445 = vunpack.c.l.b16 %v5285
  %v5446 = vunpack.c.l.b16 %v5286
  %v5447 = vunpack.c.l.b16 %v5287
  %v5448 = vunpack.c.l.b16 %v5288
  %v5449 = vunpack.c.l.b16 %v5289
  %v5450 = vunpack.c.l.b16 %v5290
  %v5451 = vunpack.c.l.b16 %v5291
  %v5452 = vunpack.c.l.b16 %v5292
  %v5453 = vunpack.c.l.b16 %v5293
  %v5454 = vunpack.c.l.b16 %v5294
  %v5455 = vunpack.c.l.b16 %v5295
  %v5456 = vunpack.c.l.b16 %v5296
  %v5457 = vunpack.c.l.b16 %v5297
  %v5458 = vpack.c.b16 %v5443, %v5442
  %v5459 = vpack.c.b16 %v5445, %v5444
  %v5460 = vpack.c.b16 %v5447, %v5446
  %v5461 = vpack.c.b16 %v5449, %v5448
  %v5462 = vpack.c.b16 %v5451, %v5450
  %v5463 = vpack.c.b16 %v5453, %v5452
  %v5464 = vpack.c.b16 %v5455, %v5454
  %v5465 = vpack.c.b16 %v5457, %v5456
  %5474 = vmatprep.subr.bf16.mxu0 0
  %5475 = vmatpush1.bf16.msra.mxu0 %v5465
  %5476 = vmatprep.subr.bf16.mxu0 0
  %5477 = vmatpush1.bf16.msra.mxu0 %v5464
  %5478 = vmatprep.subr.bf16.mxu0 0
  %5479 = vmatpush1.bf16.msra.mxu0 %v5463
  %5480 = vmatprep.subr.bf16.mxu0 0
  %5481 = vmatpush1.bf16.msra.mxu0 %v5462
  %5482 = vmatprep.subr.bf16.mxu0 0
  %5483 = vmatpush1.bf16.msra.mxu0 %v5461
  %5484 = vmatprep.subr.bf16.mxu0 0
  %5485 = vmatpush1.bf16.msra.mxu0 %v5460
  %5486 = vmatprep.subr.bf16.mxu0 0
  %5487 = vmatpush1.bf16.msra.mxu0 %v5459
  %5488 = vmatprep.subr.bf16.mxu0 0
  %5489 = vmatpush1.bf16.msra.mxu0 %v5458
  %5490 = vmatprep.subr.bf16.mxu0 0
  %5491 = vmatpush2.bf16.msra.mxu0 0
  %5492 = vmatprep.subr.bf16.mxu0 0
  %5493 = vmatpush2.bf16.msra.mxu0 0
  %5494 = vmatprep.subr.bf16.mxu0 0
  %5495 = vmatpush2.bf16.msra.mxu0 0
  %5496 = vmatprep.subr.bf16.mxu0 0
  %5497 = vmatpush2.bf16.msra.mxu0 0
  %5498 = vmatprep.subr.bf16.mxu0 0
  %5499 = vmatpush2.bf16.msra.mxu0 0
  %5500 = vmatprep.subr.bf16.mxu0 0
  %5501 = vmatpush2.bf16.msra.mxu0 0
  %5502 = vmatprep.subr.bf16.mxu0 0
  %5503 = vmatpush2.bf16.msra.mxu0 0
  %5504 = vmatprep.subr.bf16.mxu0 0
  %5505 = vmatpush2.bf16.msra.mxu0 0
  %5506 = vmatprep.mubr.bf16.mxu0 0
  %5507 = vmatmul.mubr.bf16.gmra.mxu0 %v5362
  %v5508 = vpop.f32.mrf.mxu0
  %v5509 = vadd.f32 0.0, %v5508
  %v5510 = vpop.f32.mrf.mxu0
  %v5511 = vpop.f32.mrf.mxu0
  %v5512 = vadd.f32 0.0, %v5511
  %v5513 = vpop.f32.mrf.mxu0
  %5514 = vmatprep.mubr.bf16.mxu0 0
  %5515 = vmatmul.mubr.bf16.gmra.mxu0 %v5363
  %v5516 = vpop.f32.mrf.mxu0
  %v5517 = vadd.f32 0.0, %v5516
  %v5518 = vpop.f32.mrf.mxu0
  %v5519 = vpop.f32.mrf.mxu0
  %v5520 = vadd.f32 0.0, %v5519
  %v5521 = vpop.f32.mrf.mxu0
  %5522 = vmatprep.mubr.bf16.mxu0 0
  %5523 = vmatmul.mubr.bf16.gmra.mxu0 %v5364
  %v5524 = vpop.f32.mrf.mxu0
  %v5525 = vadd.f32 0.0, %v5524
  %v5526 = vpop.f32.mrf.mxu0
  %v5527 = vpop.f32.mrf.mxu0
  %v5528 = vadd.f32 0.0, %v5527
  %v5529 = vpop.f32.mrf.mxu0
  %5530 = vmatprep.mubr.bf16.mxu0 0
  %5531 = vmatmul.mubr.bf16.gmra.mxu0 %v5365
  %v5532 = vpop.f32.mrf.mxu0
  %v5533 = vadd.f32 0.0, %v5532
  %v5534 = vpop.f32.mrf.mxu0
  %v5535 = vpop.f32.mrf.mxu0
  %v5536 = vadd.f32 0.0, %v5535
  %v5537 = vpop.f32.mrf.mxu0
  %5538 = vmatprep.mubr.bf16.mxu0 0
  %5539 = vmatmul.mubr.bf16.gmra.mxu0 %v5366
  %v5540 = vpop.f32.mrf.mxu0
  %v5541 = vadd.f32 0.0, %v5540
  %v5542 = vpop.f32.mrf.mxu0
  %v5543 = vpop.f32.mrf.mxu0
  %v5544 = vadd.f32 0.0, %v5543
  %v5545 = vpop.f32.mrf.mxu0
  %5546 = vmatprep.mubr.bf16.mxu0 0
  %5547 = vmatmul.mubr.bf16.gmra.mxu0 %v5367
  %v5548 = vpop.f32.mrf.mxu0
  %v5549 = vadd.f32 0.0, %v5548
  %v5550 = vpop.f32.mrf.mxu0
  %v5551 = vpop.f32.mrf.mxu0
  %v5552 = vadd.f32 0.0, %v5551
  %v5553 = vpop.f32.mrf.mxu0
  %5554 = vmatprep.mubr.bf16.mxu0 0
  %5555 = vmatmul.mubr.bf16.gmra.mxu0 %v5368
  %v5556 = vpop.f32.mrf.mxu0
  %v5557 = vadd.f32 0.0, %v5556
  %v5558 = vpop.f32.mrf.mxu0
  %v5559 = vpop.f32.mrf.mxu0
  %v5560 = vadd.f32 0.0, %v5559
  %v5561 = vpop.f32.mrf.mxu0
  %5562 = vmatprep.mubr.bf16.mxu0 0
  %5563 = vmatmul.mubr.bf16.gmra.mxu0 %v5369
  %v5564 = vpop.f32.mrf.mxu0
  %v5565 = vadd.f32 0.0, %v5564
  %v5566 = vpop.f32.mrf.mxu0
  %v5567 = vpop.f32.mrf.mxu0
  %v5568 = vadd.f32 0.0, %v5567
  %v5569 = vpop.f32.mrf.mxu0
  %5570 = vmatprep.mubr.bf16.mxu0 0
  %5571 = vmatmul.mubr.bf16.gmra.mxu0 %v5370
  %v5572 = vpop.f32.mrf.mxu0
  %v5573 = vadd.f32 0.0, %v5572
  %v5574 = vpop.f32.mrf.mxu0
  %v5575 = vpop.f32.mrf.mxu0
  %v5576 = vadd.f32 0.0, %v5575
  %v5577 = vpop.f32.mrf.mxu0
  %5578 = vmatprep.mubr.bf16.mxu0 0
  %5579 = vmatmul.mubr.bf16.gmra.mxu0 %v5371
  %v5580 = vpop.f32.mrf.mxu0
  %v5581 = vadd.f32 0.0, %v5580
  %v5582 = vpop.f32.mrf.mxu0
  %v5583 = vpop.f32.mrf.mxu0
  %v5584 = vadd.f32 0.0, %v5583
  %v5585 = vpop.f32.mrf.mxu0
  %5586 = vmatprep.mubr.bf16.mxu0 0
  %5587 = vmatmul.mubr.bf16.gmra.mxu0 %v5372
  %v5588 = vpop.f32.mrf.mxu0
  %v5589 = vadd.f32 0.0, %v5588
  %v5590 = vpop.f32.mrf.mxu0
  %v5591 = vpop.f32.mrf.mxu0
  %v5592 = vadd.f32 0.0, %v5591
  %v5593 = vpop.f32.mrf.mxu0
  %5594 = vmatprep.mubr.bf16.mxu0 0
  %5595 = vmatmul.mubr.bf16.gmra.mxu0 %v5373
  %v5596 = vpop.f32.mrf.mxu0
  %v5597 = vadd.f32 0.0, %v5596
  %v5598 = vpop.f32.mrf.mxu0
  %v5599 = vpop.f32.mrf.mxu0
  %v5600 = vadd.f32 0.0, %v5599
  %v5601 = vpop.f32.mrf.mxu0
  %5602 = vmatprep.mubr.bf16.mxu0 0
  %5603 = vmatmul.mubr.bf16.gmra.mxu0 %v5374
  %v5604 = vpop.f32.mrf.mxu0
  %v5605 = vadd.f32 0.0, %v5604
  %v5606 = vpop.f32.mrf.mxu0
  %v5607 = vpop.f32.mrf.mxu0
  %v5608 = vadd.f32 0.0, %v5607
  %v5609 = vpop.f32.mrf.mxu0
  %5610 = vmatprep.mubr.bf16.mxu0 0
  %5611 = vmatmul.mubr.bf16.gmra.mxu0 %v5375
  %v5612 = vpop.f32.mrf.mxu0
  %v5613 = vadd.f32 0.0, %v5612
  %v5614 = vpop.f32.mrf.mxu0
  %v5615 = vpop.f32.mrf.mxu0
  %v5616 = vadd.f32 0.0, %v5615
  %v5617 = vpop.f32.mrf.mxu0
  %5618 = vmatprep.mubr.bf16.mxu0 0
  %5619 = vmatmul.mubr.bf16.gmra.mxu0 %v5376
  %v5620 = vpop.f32.mrf.mxu0
  %v5621 = vadd.f32 0.0, %v5620
  %v5622 = vpop.f32.mrf.mxu0
  %v5623 = vpop.f32.mrf.mxu0
  %v5624 = vadd.f32 0.0, %v5623
  %v5625 = vpop.f32.mrf.mxu0
  %5626 = vmatprep.mubr.bf16.mxu0 0
  %5627 = vmatmul.mubr.bf16.gmra.mxu0 %v5377
  %v5628 = vpop.f32.mrf.mxu0
  %v5629 = vadd.f32 0.0, %v5628
  %v5630 = vpop.f32.mrf.mxu0
  %v5631 = vpop.f32.mrf.mxu0
  %v5632 = vadd.f32 0.0, %v5631
  %v5633 = vpop.f32.mrf.mxu0
  %5634 = vmatprep.mubr.bf16.mxu0 0
  %5635 = vmatmul.mubr.bf16.gmra.mxu0 %v5378
  %v5636 = vpop.f32.mrf.mxu0
  %v5637 = vadd.f32 0.0, %v5636
  %v5638 = vpop.f32.mrf.mxu0
  %v5639 = vpop.f32.mrf.mxu0
  %v5640 = vadd.f32 0.0, %v5639
  %v5641 = vpop.f32.mrf.mxu0
  %5642 = vmatprep.mubr.bf16.mxu0 0
  %5643 = vmatmul.mubr.bf16.gmra.mxu0 %v5379
  %v5644 = vpop.f32.mrf.mxu0
  %v5645 = vadd.f32 0.0, %v5644
  %v5646 = vpop.f32.mrf.mxu0
  %v5647 = vpop.f32.mrf.mxu0
  %v5648 = vadd.f32 0.0, %v5647
  %v5649 = vpop.f32.mrf.mxu0
  %5650 = vmatprep.mubr.bf16.mxu0 0
  %5651 = vmatmul.mubr.bf16.gmra.mxu0 %v5380
  %v5652 = vpop.f32.mrf.mxu0
  %v5653 = vadd.f32 0.0, %v5652
  %v5654 = vpop.f32.mrf.mxu0
  %v5655 = vpop.f32.mrf.mxu0
  %v5656 = vadd.f32 0.0, %v5655
  %v5657 = vpop.f32.mrf.mxu0
  %5658 = vmatprep.mubr.bf16.mxu0 0
  %5659 = vmatmul.mubr.bf16.gmra.mxu0 %v5381
  %v5660 = vpop.f32.mrf.mxu0
  %v5661 = vadd.f32 0.0, %v5660
  %v5662 = vpop.f32.mrf.mxu0
  %v5663 = vpop.f32.mrf.mxu0
  %v5664 = vadd.f32 0.0, %v5663
  %v5665 = vpop.f32.mrf.mxu0
  %5666 = vmatprep.mubr.bf16.mxu0 0
  %5667 = vmatmul.mubr.bf16.gmra.mxu0 %v5382
  %v5668 = vpop.f32.mrf.mxu0
  %v5669 = vadd.f32 0.0, %v5668
  %v5670 = vpop.f32.mrf.mxu0
  %v5671 = vpop.f32.mrf.mxu0
  %v5672 = vadd.f32 0.0, %v5671
  %v5673 = vpop.f32.mrf.mxu0
  %5674 = vmatprep.mubr.bf16.mxu0 0
  %5675 = vmatmul.mubr.bf16.gmra.mxu0 %v5383
  %v5676 = vpop.f32.mrf.mxu0
  %v5677 = vadd.f32 0.0, %v5676
  %v5678 = vpop.f32.mrf.mxu0
  %v5679 = vpop.f32.mrf.mxu0
  %v5680 = vadd.f32 0.0, %v5679
  %v5681 = vpop.f32.mrf.mxu0
  %5682 = vmatprep.mubr.bf16.mxu0 0
  %5683 = vmatmul.mubr.bf16.gmra.mxu0 %v5384
  %v5684 = vpop.f32.mrf.mxu0
  %v5685 = vadd.f32 0.0, %v5684
  %v5686 = vpop.f32.mrf.mxu0
  %v5687 = vpop.f32.mrf.mxu0
  %v5688 = vadd.f32 0.0, %v5687
  %v5689 = vpop.f32.mrf.mxu0
  %5690 = vmatprep.mubr.bf16.mxu0 0
  %5691 = vmatmul.mubr.bf16.gmra.mxu0 %v5385
  %v5692 = vpop.f32.mrf.mxu0
  %v5693 = vadd.f32 0.0, %v5692
  %v5694 = vpop.f32.mrf.mxu0
  %v5695 = vpop.f32.mrf.mxu0
  %v5696 = vadd.f32 0.0, %v5695
  %v5697 = vpop.f32.mrf.mxu0
  %5698 = vmatprep.mubr.bf16.mxu0 0
  %5699 = vmatmul.mubr.bf16.gmra.mxu0 %v5386
  %v5700 = vpop.f32.mrf.mxu0
  %v5701 = vadd.f32 0.0, %v5700
  %v5702 = vpop.f32.mrf.mxu0
  %v5703 = vpop.f32.mrf.mxu0
  %v5704 = vadd.f32 0.0, %v5703
  %v5705 = vpop.f32.mrf.mxu0
  %5706 = vmatprep.mubr.bf16.mxu0 0
  %5707 = vmatmul.mubr.bf16.gmra.mxu0 %v5387
  %v5708 = vpop.f32.mrf.mxu0
  %v5709 = vadd.f32 0.0, %v5708
  %v5710 = vpop.f32.mrf.mxu0
  %v5711 = vpop.f32.mrf.mxu0
  %v5712 = vadd.f32 0.0, %v5711
  %v5713 = vpop.f32.mrf.mxu0
  %5714 = vmatprep.mubr.bf16.mxu0 0
  %5715 = vmatmul.mubr.bf16.gmra.mxu0 %v5388
  %v5716 = vpop.f32.mrf.mxu0
  %v5717 = vadd.f32 0.0, %v5716
  %v5718 = vpop.f32.mrf.mxu0
  %v5719 = vpop.f32.mrf.mxu0
  %v5720 = vadd.f32 0.0, %v5719
  %v5721 = vpop.f32.mrf.mxu0
  %5722 = vmatprep.mubr.bf16.mxu0 0
  %5723 = vmatmul.mubr.bf16.gmra.mxu0 %v5389
  %v5724 = vpop.f32.mrf.mxu0
  %v5725 = vadd.f32 0.0, %v5724
  %v5726 = vpop.f32.mrf.mxu0
  %v5727 = vpop.f32.mrf.mxu0
  %v5728 = vadd.f32 0.0, %v5727
  %v5729 = vpop.f32.mrf.mxu0
  %5730 = vmatprep.mubr.bf16.mxu0 0
  %5731 = vmatmul.mubr.bf16.gmra.mxu0 %v5390
  %v5732 = vpop.f32.mrf.mxu0
  %v5733 = vadd.f32 0.0, %v5732
  %v5734 = vpop.f32.mrf.mxu0
  %v5735 = vpop.f32.mrf.mxu0
  %v5736 = vadd.f32 0.0, %v5735
  %v5737 = vpop.f32.mrf.mxu0
  %5738 = vmatprep.mubr.bf16.mxu0 0
  %5739 = vmatmul.mubr.bf16.gmra.mxu0 %v5391
  %v5740 = vpop.f32.mrf.mxu0
  %v5741 = vadd.f32 0.0, %v5740
  %v5742 = vpop.f32.mrf.mxu0
  %v5743 = vpop.f32.mrf.mxu0
  %v5744 = vadd.f32 0.0, %v5743
  %v5745 = vpop.f32.mrf.mxu0
  %5746 = vmatprep.mubr.bf16.mxu0 0
  %5747 = vmatmul.mubr.bf16.gmra.mxu0 %v5392
  %v5748 = vpop.f32.mrf.mxu0
  %v5749 = vadd.f32 0.0, %v5748
  %v5750 = vpop.f32.mrf.mxu0
  %v5751 = vpop.f32.mrf.mxu0
  %v5752 = vadd.f32 0.0, %v5751
  %v5753 = vpop.f32.mrf.mxu0
  %5754 = vmatprep.mubr.bf16.mxu0 0
  %5755 = vmatmul.mubr.bf16.gmra.mxu0 %v5393
  %v5756 = vpop.f32.mrf.mxu0
  %v5757 = vadd.f32 0.0, %v5756
  %v5758 = vpop.f32.mrf.mxu0
  %v5759 = vpop.f32.mrf.mxu0
  %v5760 = vadd.f32 0.0, %v5759
  %v5761 = vpop.f32.mrf.mxu0
  %5762 = vdwg.mxu0
  %v5763 = vadd.f32 %v4801, %v5509
  %v5764 = vadd.f32 %v4802, %v5512
  %v5765 = vadd.f32 %v4803, %v5517
  %v5766 = vadd.f32 %v4804, %v5520
  %v5767 = vadd.f32 %v4805, %v5525
  %v5768 = vadd.f32 %v4806, %v5528
  %v5769 = vadd.f32 %v4807, %v5533
  %v5770 = vadd.f32 %v4808, %v5536
  %v5771 = vadd.f32 %v4809, %v5541
  %v5772 = vadd.f32 %v4810, %v5544
  %v5773 = vadd.f32 %v4811, %v5549
  %v5774 = vadd.f32 %v4812, %v5552
  %v5775 = vadd.f32 %v4813, %v5557
  %v5776 = vadd.f32 %v4814, %v5560
  %v5777 = vadd.f32 %v4815, %v5565
  %v5778 = vadd.f32 %v4816, %v5568
  %v5779 = vadd.f32 %v4817, %v5573
  %v5780 = vadd.f32 %v4818, %v5576
  %v5781 = vadd.f32 %v4819, %v5581
  %v5782 = vadd.f32 %v4820, %v5584
  %v5783 = vadd.f32 %v4821, %v5589
  %v5784 = vadd.f32 %v4822, %v5592
  %v5785 = vadd.f32 %v4823, %v5597
  %v5786 = vadd.f32 %v4824, %v5600
  %v5787 = vadd.f32 %v4825, %v5605
  %v5788 = vadd.f32 %v4826, %v5608
  %v5789 = vadd.f32 %v4827, %v5613
  %v5790 = vadd.f32 %v4828, %v5616
  %v5791 = vadd.f32 %v4829, %v5621
  %v5792 = vadd.f32 %v4830, %v5624
  %v5793 = vadd.f32 %v4831, %v5629
  %v5794 = vadd.f32 %v4832, %v5632
  %v5795 = vadd.f32 %v4833, %v5637
  %v5796 = vadd.f32 %v4834, %v5640
  %v5797 = vadd.f32 %v4835, %v5645
  %v5798 = vadd.f32 %v4836, %v5648
  %v5799 = vadd.f32 %v4837, %v5653
  %v5800 = vadd.f32 %v4838, %v5656
  %v5801 = vadd.f32 %v4839, %v5661
  %v5802 = vadd.f32 %v4840, %v5664
  %v5803 = vadd.f32 %v4841, %v5669
  %v5804 = vadd.f32 %v4842, %v5672
  %v5805 = vadd.f32 %v4843, %v5677
  %v5806 = vadd.f32 %v4844, %v5680
  %v5807 = vadd.f32 %v4845, %v5685
  %v5808 = vadd.f32 %v4846, %v5688
  %v5809 = vadd.f32 %v4847, %v5693
  %v5810 = vadd.f32 %v4848, %v5696
  %v5811 = vadd.f32 %v4849, %v5701
  %v5812 = vadd.f32 %v4850, %v5704
  %v5813 = vadd.f32 %v4851, %v5709
  %v5814 = vadd.f32 %v4852, %v5712
  %v5815 = vadd.f32 %v4853, %v5717
  %v5816 = vadd.f32 %v4854, %v5720
  %v5817 = vadd.f32 %v4855, %v5725
  %v5818 = vadd.f32 %v4856, %v5728
  %v5819 = vadd.f32 %v4857, %v5733
  %v5820 = vadd.f32 %v4858, %v5736
  %v5821 = vadd.f32 %v4859, %v5741
  %v5822 = vadd.f32 %v4860, %v5744
  %v5823 = vadd.f32 %v4861, %v5749
  %v5824 = vadd.f32 %v4862, %v5752
  %v5825 = vadd.f32 %v4863, %v5757
  %v5826 = vadd.f32 %v4864, %v5760
  %v5827 = vld [vmem:[%s1232] sm:$0xc]
  %v5828 = vld [vmem:[%s1232 + $0x8] sm:$0x3]
  %v5829 = vld [vmem:[%s1232 + $0xc] sm:$0xc]
  %v5830 = vld [vmem:[%s1232 + $0x14] sm:$0x3]
  %v5831 = vld [vmem:[%s1232 + $0x18] sm:$0xc]
  %v5832 = vld [vmem:[%s1232 + $0x20] sm:$0x3]
  %v5833 = vld [vmem:[%s1232 + $0x24] sm:$0xc]
  %v5834 = vld [vmem:[%s1232 + $0x2c] sm:$0x3]
  %v5835 = vld [vmem:[%s1232 + $0x30] sm:$0xc]
  %v5836 = vld [vmem:[%s1232 + $0x38] sm:$0x3]
  %v5837 = vld [vmem:[%s1232 + $0x3c] sm:$0xc]
  %v5838 = vld [vmem:[%s1232 + $0x44] sm:$0x3]
  %v5839 = vld [vmem:[%s1232 + $0x48] sm:$0xc]
  %v5840 = vld [vmem:[%s1232 + $0x50] sm:$0x3]
  %v5841 = vld [vmem:[%s1232 + $0x54] sm:$0xc]
  %v5842 = vld [vmem:[%s1232 + $0x5c] sm:$0x3]
  %v5843 = vld [vmem:[%s1232 + $0x60] sm:$0xc]
  %v5844 = vld [vmem:[%s1232 + $0x68] sm:$0x3]
  %v5845 = vld [vmem:[%s1232 + $0x6c] sm:$0xc]
  %v5846 = vld [vmem:[%s1232 + $0x74] sm:$0x3]
  %v5847 = vld [vmem:[%s1232 + $0x78] sm:$0xc]
  %v5848 = vld [vmem:[%s1232 + $0x80] sm:$0x3]
  %v5849 = vld [vmem:[%s1232 + $0x84] sm:$0xc]
  %v5850 = vld [vmem:[%s1232 + $0x8c] sm:$0x3]
  %v5851 = vld [vmem:[%s1232 + $0x90] sm:$0xc]
  %v5852 = vld [vmem:[%s1232 + $0x98] sm:$0x3]
  %v5853 = vld [vmem:[%s1232 + $0x9c] sm:$0xc]
  %v5854 = vld [vmem:[%s1232 + $0xa4] sm:$0x3]
  %v5855 = vld [vmem:[%s1232 + $0xa8] sm:$0xc]
  %v5856 = vld [vmem:[%s1232 + $0xb0] sm:$0x3]
  %v5857 = vld [vmem:[%s1232 + $0xb4] sm:$0xc]
  %v5858 = vld [vmem:[%s1232 + $0xbc] sm:$0x3]
  %v5859 = vld [vmem:[%s1232 + $0xf0] sm:$0xc]
  %v5860 = vld [vmem:[%s1232 + $0xf8] sm:$0x3]
  %v5861 = vld [vmem:[%s1232 + $0xfc] sm:$0xc]
  %v5862 = vld [vmem:[%s1232 + $0x104] sm:$0x3]
  %v5863 = vld [vmem:[%s1232 + $0x108] sm:$0xc]
  %v5864 = vld [vmem:[%s1232 + $0x110] sm:$0x3]
  %v5865 = vld [vmem:[%s1232 + $0x114] sm:$0xc]
  %v5866 = vld [vmem:[%s1232 + $0x11c] sm:$0x3]
  %v5867 = vld [vmem:[%s1232 + $0x120] sm:$0xc]
  %v5868 = vld [vmem:[%s1232 + $0x128] sm:$0x3]
  %v5869 = vld [vmem:[%s1232 + $0x12c] sm:$0xc]
  %v5870 = vld [vmem:[%s1232 + $0x134] sm:$0x3]
  %v5871 = vld [vmem:[%s1232 + $0x138] sm:$0xc]
  %v5872 = vld [vmem:[%s1232 + $0x140] sm:$0x3]
  %v5873 = vld [vmem:[%s1232 + $0x144] sm:$0xc]
  %v5874 = vld [vmem:[%s1232 + $0x14c] sm:$0x3]
  %v5875 = vld [vmem:[%s1232 + $0x150] sm:$0xc]
  %v5876 = vld [vmem:[%s1232 + $0x158] sm:$0x3]
  %v5877 = vld [vmem:[%s1232 + $0x15c] sm:$0xc]
  %v5878 = vld [vmem:[%s1232 + $0x164] sm:$0x3]
  %v5879 = vld [vmem:[%s1232 + $0x168] sm:$0xc]
  %v5880 = vld [vmem:[%s1232 + $0x170] sm:$0x3]
  %v5881 = vld [vmem:[%s1232 + $0x174] sm:$0xc]
  %v5882 = vld [vmem:[%s1232 + $0x17c] sm:$0x3]
  %v5883 = vld [vmem:[%s1232 + $0x180] sm:$0xc]
  %v5884 = vld [vmem:[%s1232 + $0x188] sm:$0x3]
  %v5885 = vld [vmem:[%s1232 + $0x18c] sm:$0xc]
  %v5886 = vld [vmem:[%s1232 + $0x194] sm:$0x3]
  %v5887 = vld [vmem:[%s1232 + $0x198] sm:$0xc]
  %v5888 = vld [vmem:[%s1232 + $0x1a0] sm:$0x3]
  %v5889 = vld [vmem:[%s1232 + $0x1a4] sm:$0xc]
  %v5890 = vld [vmem:[%s1232 + $0x1ac] sm:$0x3]
  %v5955 = vrot.slane %v5827, 6
  %v5956 = vrot.slane %v5955, 4
  %v5957 = vrot.slane %v4866, 6
  %v5958 = vsel %vm3420, %v5956, %v5957
  %v5959 = vrot.slane %v5957, 4
  %v5960 = vrot.slane %v5828, 6
  %v5961 = vsel %vm3420, %v5959, %v5960
  %v5962 = vrot.slane %v5829, 6
  %v5963 = vrot.slane %v5962, 4
  %v5964 = vrot.slane %v4869, 6
  %v5965 = vsel %vm3420, %v5963, %v5964
  %v5966 = vrot.slane %v5964, 4
  %v5967 = vrot.slane %v5830, 6
  %v5968 = vsel %vm3420, %v5966, %v5967
  %v5969 = vrot.slane %v5831, 6
  %v5970 = vrot.slane %v5969, 4
  %v5971 = vrot.slane %v4872, 6
  %v5972 = vsel %vm3420, %v5970, %v5971
  %v5973 = vrot.slane %v5971, 4
  %v5974 = vrot.slane %v5832, 6
  %v5975 = vsel %vm3420, %v5973, %v5974
  %v5976 = vrot.slane %v5833, 6
  %v5977 = vrot.slane %v5976, 4
  %v5978 = vrot.slane %v4875, 6
  %v5979 = vsel %vm3420, %v5977, %v5978
  %v5980 = vrot.slane %v5978, 4
  %v5981 = vrot.slane %v5834, 6
  %v5982 = vsel %vm3420, %v5980, %v5981
  %v5983 = vrot.slane %v5835, 6
  %v5984 = vrot.slane %v5983, 4
  %v5985 = vrot.slane %v4878, 6
  %v5986 = vsel %vm3420, %v5984, %v5985
  %v5987 = vrot.slane %v5985, 4
  %v5988 = vrot.slane %v5836, 6
  %v5989 = vsel %vm3420, %v5987, %v5988
  %v5990 = vrot.slane %v5837, 6
  %v5991 = vrot.slane %v5990, 4
  %v5992 = vrot.slane %v4881, 6
  %v5993 = vsel %vm3420, %v5991, %v5992
  %v5994 = vrot.slane %v5992, 4
  %v5995 = vrot.slane %v5838, 6
  %v5996 = vsel %vm3420, %v5994, %v5995
  %v5997 = vrot.slane %v5839, 6
  %v5998 = vrot.slane %v5997, 4
  %v5999 = vrot.slane %v4884, 6
  %v6000 = vsel %vm3420, %v5998, %v5999
  %v6001 = vrot.slane %v5999, 4
  %v6002 = vrot.slane %v5840, 6
  %v6003 = vsel %vm3420, %v6001, %v6002
  %v6004 = vrot.slane %v5841, 6
  %v6005 = vrot.slane %v6004, 4
  %v6006 = vrot.slane %v4887, 6
  %v6007 = vsel %vm3420, %v6005, %v6006
  %v6008 = vrot.slane %v6006, 4
  %v6009 = vrot.slane %v5842, 6
  %v6010 = vsel %vm3420, %v6008, %v6009
  %v6011 = vrot.slane %v5843, 6
  %v6012 = vrot.slane %v6011, 4
  %v6013 = vrot.slane %v4890, 6
  %v6014 = vsel %vm3420, %v6012, %v6013
  %v6015 = vrot.slane %v6013, 4
  %v6016 = vrot.slane %v5844, 6
  %v6017 = vsel %vm3420, %v6015, %v6016
  %v6018 = vrot.slane %v5845, 6
  %v6019 = vrot.slane %v6018, 4
  %v6020 = vrot.slane %v4893, 6
  %v6021 = vsel %vm3420, %v6019, %v6020
  %v6022 = vrot.slane %v6020, 4
  %v6023 = vrot.slane %v5846, 6
  %v6024 = vsel %vm3420, %v6022, %v6023
  %v6025 = vrot.slane %v5847, 6
  %v6026 = vrot.slane %v6025, 4
  %v6027 = vrot.slane %v4896, 6
  %v6028 = vsel %vm3420, %v6026, %v6027
  %v6029 = vrot.slane %v6027, 4
  %v6030 = vrot.slane %v5848, 6
  %v6031 = vsel %vm3420, %v6029, %v6030
  %v6032 = vrot.slane %v5849, 6
  %v6033 = vrot.slane %v6032, 4
  %v6034 = vrot.slane %v4899, 6
  %v6035 = vsel %vm3420, %v6033, %v6034
  %v6036 = vrot.slane %v6034, 4
  %v6037 = vrot.slane %v5850, 6
  %v6038 = vsel %vm3420, %v6036, %v6037
  %v6039 = vrot.slane %v5851, 6
  %v6040 = vrot.slane %v6039, 4
  %v6041 = vrot.slane %v4902, 6
  %v6042 = vsel %vm3420, %v6040, %v6041
  %v6043 = vrot.slane %v6041, 4
  %v6044 = vrot.slane %v5852, 6
  %v6045 = vsel %vm3420, %v6043, %v6044
  %v6046 = vrot.slane %v5853, 6
  %v6047 = vrot.slane %v6046, 4
  %v6048 = vrot.slane %v4905, 6
  %v6049 = vsel %vm3420, %v6047, %v6048
  %v6050 = vrot.slane %v6048, 4
  %v6051 = vrot.slane %v5854, 6
  %v6052 = vsel %vm3420, %v6050, %v6051
  %v6053 = vrot.slane %v5855, 6
  %v6054 = vrot.slane %v6053, 4
  %v6055 = vrot.slane %v4908, 6
  %v6056 = vsel %vm3420, %v6054, %v6055
  %v6057 = vrot.slane %v6055, 4
  %v6058 = vrot.slane %v5856, 6
  %v6059 = vsel %vm3420, %v6057, %v6058
  %v6060 = vrot.slane %v5857, 6
  %v6061 = vrot.slane %v6060, 4
  %v6062 = vrot.slane %v4911, 6
  %v6063 = vsel %vm3420, %v6061, %v6062
  %v6064 = vrot.slane %v6062, 4
  %v6065 = vrot.slane %v5858, 6
  %v6066 = vsel %vm3420, %v6064, %v6065
  %v6067 = vrot.slane %v5859, 6
  %v6068 = vrot.slane %v6067, 4
  %v6069 = vrot.slane %v4914, 6
  %v6070 = vsel %vm3420, %v6068, %v6069
  %v6071 = vrot.slane %v6069, 4
  %v6072 = vrot.slane %v5860, 6
  %v6073 = vsel %vm3420, %v6071, %v6072
  %v6074 = vrot.slane %v5861, 6
  %v6075 = vrot.slane %v6074, 4
  %v6076 = vrot.slane %v4917, 6
  %v6077 = vsel %vm3420, %v6075, %v6076
  %v6078 = vrot.slane %v6076, 4
  %v6079 = vrot.slane %v5862, 6
  %v6080 = vsel %vm3420, %v6078, %v6079
  %v6081 = vrot.slane %v5863, 6
  %v6082 = vrot.slane %v6081, 4
  %v6083 = vrot.slane %v4920, 6
  %v6084 = vsel %vm3420, %v6082, %v6083
  %v6085 = vrot.slane %v6083, 4
  %v6086 = vrot.slane %v5864, 6
  %v6087 = vsel %vm3420, %v6085, %v6086
  %v6088 = vrot.slane %v5865, 6
  %v6089 = vrot.slane %v6088, 4
  %v6090 = vrot.slane %v4923, 6
  %v6091 = vsel %vm3420, %v6089, %v6090
  %v6092 = vrot.slane %v6090, 4
  %v6093 = vrot.slane %v5866, 6
  %v6094 = vsel %vm3420, %v6092, %v6093
  %v6095 = vrot.slane %v5867, 6
  %v6096 = vrot.slane %v6095, 4
  %v6097 = vrot.slane %v4926, 6
  %v6098 = vsel %vm3420, %v6096, %v6097
  %v6099 = vrot.slane %v6097, 4
  %v6100 = vrot.slane %v5868, 6
  %v6101 = vsel %vm3420, %v6099, %v6100
  %v6102 = vrot.slane %v5869, 6
  %v6103 = vrot.slane %v6102, 4
  %v6104 = vrot.slane %v4929, 6
  %v6105 = vsel %vm3420, %v6103, %v6104
  %v6106 = vrot.slane %v6104, 4
  %v6107 = vrot.slane %v5870, 6
  %v6108 = vsel %vm3420, %v6106, %v6107
  %v6109 = vrot.slane %v5871, 6
  %v6110 = vrot.slane %v6109, 4
  %v6111 = vrot.slane %v4932, 6
  %v6112 = vsel %vm3420, %v6110, %v6111
  %v6113 = vrot.slane %v6111, 4
  %v6114 = vrot.slane %v5872, 6
  %v6115 = vsel %vm3420, %v6113, %v6114
  %v6116 = vrot.slane %v5873, 6
  %v6117 = vrot.slane %v6116, 4
  %v6118 = vrot.slane %v4935, 6
  %v6119 = vsel %vm3420, %v6117, %v6118
  %v6120 = vrot.slane %v6118, 4
  %v6121 = vrot.slane %v5874, 6
  %v6122 = vsel %vm3420, %v6120, %v6121
  %v6123 = vrot.slane %v5875, 6
  %v6124 = vrot.slane %v6123, 4
  %v6125 = vrot.slane %v4938, 6
  %v6126 = vsel %vm3420, %v6124, %v6125
  %v6127 = vrot.slane %v6125, 4
  %v6128 = vrot.slane %v5876, 6
  %v6129 = vsel %vm3420, %v6127, %v6128
  %v6130 = vrot.slane %v5877, 6
  %v6131 = vrot.slane %v6130, 4
  %v6132 = vrot.slane %v4941, 6
  %v6133 = vsel %vm3420, %v6131, %v6132
  %v6134 = vrot.slane %v6132, 4
  %v6135 = vrot.slane %v5878, 6
  %v6136 = vsel %vm3420, %v6134, %v6135
  %v6137 = vrot.slane %v5879, 6
  %v6138 = vrot.slane %v6137, 4
  %v6139 = vrot.slane %v4944, 6
  %v6140 = vsel %vm3420, %v6138, %v6139
  %v6141 = vrot.slane %v6139, 4
  %v6142 = vrot.slane %v5880, 6
  %v6143 = vsel %vm3420, %v6141, %v6142
  %v6144 = vrot.slane %v5881, 6
  %v6145 = vrot.slane %v6144, 4
  %v6146 = vrot.slane %v4947, 6
  %v6147 = vsel %vm3420, %v6145, %v6146
  %v6148 = vrot.slane %v6146, 4
  %v6149 = vrot.slane %v5882, 6
  %v6150 = vsel %vm3420, %v6148, %v6149
  %v6151 = vrot.slane %v5883, 6
  %v6152 = vrot.slane %v6151, 4
  %v6153 = vrot.slane %v4950, 6
  %v6154 = vsel %vm3420, %v6152, %v6153
  %v6155 = vrot.slane %v6153, 4
  %v6156 = vrot.slane %v5884, 6
  %v6157 = vsel %vm3420, %v6155, %v6156
  %v6158 = vrot.slane %v5885, 6
  %v6159 = vrot.slane %v6158, 4
  %v6160 = vrot.slane %v4953, 6
  %v6161 = vsel %vm3420, %v6159, %v6160
  %v6162 = vrot.slane %v6160, 4
  %v6163 = vrot.slane %v5886, 6
  %v6164 = vsel %vm3420, %v6162, %v6163
  %v6165 = vrot.slane %v5887, 6
  %v6166 = vrot.slane %v6165, 4
  %v6167 = vrot.slane %v4956, 6
  %v6168 = vsel %vm3420, %v6166, %v6167
  %v6169 = vrot.slane %v6167, 4
  %v6170 = vrot.slane %v5888, 6
  %v6171 = vsel %vm3420, %v6169, %v6170
  %v6172 = vrot.slane %v5889, 6
  %v6173 = vrot.slane %v6172, 4
  %v6174 = vrot.slane %v4959, 6
  %v6175 = vsel %vm3420, %v6173, %v6174
  %v6176 = vrot.slane %v6174, 4
  %v6177 = vrot.slane %v5890, 6
  %v6178 = vsel %vm3420, %v6176, %v6177
  %s6179 = scalar_lea.vmem %s4, 320
  %v6180 = vld [vmem:[%s6179] sm:$0xf]
  %v6181 = vld [vmem:[%s6179 + $0x4] sm:$0xf]
  %v6182 = vld [vmem:[%s6179 + $0x8] sm:$0xf]
  %v6183 = vld [vmem:[%s6179 + $0xc] sm:$0xf]
  %v6184 = vld [vmem:[%s6179 + $0x10] sm:$0xf]
  %v6185 = vld [vmem:[%s6179 + $0x14] sm:$0xf]
  %v6186 = vld [vmem:[%s6179 + $0x18] sm:$0xf]
  %v6187 = vld [vmem:[%s6179 + $0x1c] sm:$0xf]
  %v6188 = vld [vmem:[%s6179 + $0x20] sm:$0xf]
  %v6189 = vld [vmem:[%s6179 + $0x24] sm:$0xf]
  %v6190 = vld [vmem:[%s6179 + $0x28] sm:$0xf]
  %v6191 = vld [vmem:[%s6179 + $0x2c] sm:$0xf]
  %v6192 = vld [vmem:[%s6179 + $0x30] sm:$0xf]
  %v6193 = vld [vmem:[%s6179 + $0x34] sm:$0xf]
  %v6194 = vld [vmem:[%s6179 + $0x38] sm:$0xf]
  %v6195 = vld [vmem:[%s6179 + $0x3c] sm:$0xf]
  %v6196 = vunpack.c.l.b16 %v5958
  %v6197 = vunpack.c.l.b16 %v5961
  %v6198 = vunpack.c.l.b16 %v5965
  %v6199 = vunpack.c.l.b16 %v5968
  %v6200 = vunpack.c.l.b16 %v5972
  %v6201 = vunpack.c.l.b16 %v5975
  %v6202 = vunpack.c.l.b16 %v5979
  %v6203 = vunpack.c.l.b16 %v5982
  %v6204 = vunpack.c.l.b16 %v5986
  %v6205 = vunpack.c.l.b16 %v5989
  %v6206 = vunpack.c.l.b16 %v5993
  %v6207 = vunpack.c.l.b16 %v5996
  %v6208 = vunpack.c.l.b16 %v6000
  %v6209 = vunpack.c.l.b16 %v6003
  %v6210 = vunpack.c.l.b16 %v6007
  %v6211 = vunpack.c.l.b16 %v6010
  %v6212 = vunpack.c.l.b16 %v6014
  %v6213 = vunpack.c.l.b16 %v6017
  %v6214 = vunpack.c.l.b16 %v6021
  %v6215 = vunpack.c.l.b16 %v6024
  %v6216 = vunpack.c.l.b16 %v6028
  %v6217 = vunpack.c.l.b16 %v6031
  %v6218 = vunpack.c.l.b16 %v6035
  %v6219 = vunpack.c.l.b16 %v6038
  %v6220 = vunpack.c.l.b16 %v6042
  %v6221 = vunpack.c.l.b16 %v6045
  %v6222 = vunpack.c.l.b16 %v6049
  %v6223 = vunpack.c.l.b16 %v6052
  %v6224 = vunpack.c.l.b16 %v6056
  %v6225 = vunpack.c.l.b16 %v6059
  %v6226 = vunpack.c.l.b16 %v6063
  %v6227 = vunpack.c.l.b16 %v6066
  %v6228 = vunpack.c.l.b16 %v6070
  %v6229 = vunpack.c.l.b16 %v6073
  %v6230 = vunpack.c.l.b16 %v6077
  %v6231 = vunpack.c.l.b16 %v6080
  %v6232 = vunpack.c.l.b16 %v6084
  %v6233 = vunpack.c.l.b16 %v6087
  %v6234 = vunpack.c.l.b16 %v6091
  %v6235 = vunpack.c.l.b16 %v6094
  %v6236 = vunpack.c.l.b16 %v6098
  %v6237 = vunpack.c.l.b16 %v6101
  %v6238 = vunpack.c.l.b16 %v6105
  %v6239 = vunpack.c.l.b16 %v6108
  %v6240 = vunpack.c.l.b16 %v6112
  %v6241 = vunpack.c.l.b16 %v6115
  %v6242 = vunpack.c.l.b16 %v6119
  %v6243 = vunpack.c.l.b16 %v6122
  %v6244 = vunpack.c.l.b16 %v6126
  %v6245 = vunpack.c.l.b16 %v6129
  %v6246 = vunpack.c.l.b16 %v6133
  %v6247 = vunpack.c.l.b16 %v6136
  %v6248 = vunpack.c.l.b16 %v6140
  %v6249 = vunpack.c.l.b16 %v6143
  %v6250 = vunpack.c.l.b16 %v6147
  %v6251 = vunpack.c.l.b16 %v6150
  %v6252 = vunpack.c.l.b16 %v6154
  %v6253 = vunpack.c.l.b16 %v6157
  %v6254 = vunpack.c.l.b16 %v6161
  %v6255 = vunpack.c.l.b16 %v6164
  %v6256 = vunpack.c.l.b16 %v6168
  %v6257 = vunpack.c.l.b16 %v6171
  %v6258 = vunpack.c.l.b16 %v6175
  %v6259 = vunpack.c.l.b16 %v6178
  %v6260 = vpack.c.b16 %v6197, %v6196
  %v6261 = vpack.c.b16 %v6199, %v6198
  %v6262 = vpack.c.b16 %v6201, %v6200
  %v6263 = vpack.c.b16 %v6203, %v6202
  %v6264 = vpack.c.b16 %v6205, %v6204
  %v6265 = vpack.c.b16 %v6207, %v6206
  %v6266 = vpack.c.b16 %v6209, %v6208
  %v6267 = vpack.c.b16 %v6211, %v6210
  %v6268 = vpack.c.b16 %v6213, %v6212
  %v6269 = vpack.c.b16 %v6215, %v6214
  %v6270 = vpack.c.b16 %v6217, %v6216
  %v6271 = vpack.c.b16 %v6219, %v6218
  %v6272 = vpack.c.b16 %v6221, %v6220
  %v6273 = vpack.c.b16 %v6223, %v6222
  %v6274 = vpack.c.b16 %v6225, %v6224
  %v6275 = vpack.c.b16 %v6227, %v6226
  %v6276 = vpack.c.b16 %v6229, %v6228
  %v6277 = vpack.c.b16 %v6231, %v6230
  %v6278 = vpack.c.b16 %v6233, %v6232
  %v6279 = vpack.c.b16 %v6235, %v6234
  %v6280 = vpack.c.b16 %v6237, %v6236
  %v6281 = vpack.c.b16 %v6239, %v6238
  %v6282 = vpack.c.b16 %v6241, %v6240
  %v6283 = vpack.c.b16 %v6243, %v6242
  %v6284 = vpack.c.b16 %v6245, %v6244
  %v6285 = vpack.c.b16 %v6247, %v6246
  %v6286 = vpack.c.b16 %v6249, %v6248
  %v6287 = vpack.c.b16 %v6251, %v6250
  %v6288 = vpack.c.b16 %v6253, %v6252
  %v6289 = vpack.c.b16 %v6255, %v6254
  %v6290 = vpack.c.b16 %v6257, %v6256
  %v6291 = vpack.c.b16 %v6259, %v6258
  %v6340 = vunpack.c.l.b16 %v6180
  %v6341 = vunpack.c.l.b16 %v6181
  %v6342 = vunpack.c.l.b16 %v6182
  %v6343 = vunpack.c.l.b16 %v6183
  %v6344 = vunpack.c.l.b16 %v6184
  %v6345 = vunpack.c.l.b16 %v6185
  %v6346 = vunpack.c.l.b16 %v6186
  %v6347 = vunpack.c.l.b16 %v6187
  %v6348 = vunpack.c.l.b16 %v6188
  %v6349 = vunpack.c.l.b16 %v6189
  %v6350 = vunpack.c.l.b16 %v6190
  %v6351 = vunpack.c.l.b16 %v6191
  %v6352 = vunpack.c.l.b16 %v6192
  %v6353 = vunpack.c.l.b16 %v6193
  %v6354 = vunpack.c.l.b16 %v6194
  %v6355 = vunpack.c.l.b16 %v6195
  %v6356 = vpack.c.b16 %v6341, %v6340
  %v6357 = vpack.c.b16 %v6343, %v6342
  %v6358 = vpack.c.b16 %v6345, %v6344
  %v6359 = vpack.c.b16 %v6347, %v6346
  %v6360 = vpack.c.b16 %v6349, %v6348
  %v6361 = vpack.c.b16 %v6351, %v6350
  %v6362 = vpack.c.b16 %v6353, %v6352
  %v6363 = vpack.c.b16 %v6355, %v6354
  %6372 = vmatprep.subr.bf16.mxu0 0
  %6373 = vmatpush1.bf16.msra.mxu0 %v6363
  %6374 = vmatprep.subr.bf16.mxu0 0
  %6375 = vmatpush1.bf16.msra.mxu0 %v6362
  %6376 = vmatprep.subr.bf16.mxu0 0
  %6377 = vmatpush1.bf16.msra.mxu0 %v6361
  %6378 = vmatprep.subr.bf16.mxu0 0
  %6379 = vmatpush1.bf16.msra.mxu0 %v6360
  %6380 = vmatprep.subr.bf16.mxu0 0
  %6381 = vmatpush1.bf16.msra.mxu0 %v6359
  %6382 = vmatprep.subr.bf16.mxu0 0
  %6383 = vmatpush1.bf16.msra.mxu0 %v6358
  %6384 = vmatprep.subr.bf16.mxu0 0
  %6385 = vmatpush1.bf16.msra.mxu0 %v6357
  %6386 = vmatprep.subr.bf16.mxu0 0
  %6387 = vmatpush1.bf16.msra.mxu0 %v6356
  %6388 = vmatprep.subr.bf16.mxu0 0
  %6389 = vmatpush2.bf16.msra.mxu0 0
  %6390 = vmatprep.subr.bf16.mxu0 0
  %6391 = vmatpush2.bf16.msra.mxu0 0
  %6392 = vmatprep.subr.bf16.mxu0 0
  %6393 = vmatpush2.bf16.msra.mxu0 0
  %6394 = vmatprep.subr.bf16.mxu0 0
  %6395 = vmatpush2.bf16.msra.mxu0 0
  %6396 = vmatprep.subr.bf16.mxu0 0
  %6397 = vmatpush2.bf16.msra.mxu0 0
  %6398 = vmatprep.subr.bf16.mxu0 0
  %6399 = vmatpush2.bf16.msra.mxu0 0
  %6400 = vmatprep.subr.bf16.mxu0 0
  %6401 = vmatpush2.bf16.msra.mxu0 0
  %6402 = vmatprep.subr.bf16.mxu0 0
  %6403 = vmatpush2.bf16.msra.mxu0 0
  %6404 = vmatprep.mubr.bf16.mxu0 0
  %6405 = vmatmul.mubr.bf16.gmra.mxu0 %v6260
  %v6406 = vpop.f32.mrf.mxu0
  %v6407 = vadd.f32 0.0, %v6406
  %v6408 = vpop.f32.mrf.mxu0
  %v6409 = vpop.f32.mrf.mxu0
  %v6410 = vadd.f32 0.0, %v6409
  %v6411 = vpop.f32.mrf.mxu0
  %6412 = vmatprep.mubr.bf16.mxu0 0
  %6413 = vmatmul.mubr.bf16.gmra.mxu0 %v6261
  %v6414 = vpop.f32.mrf.mxu0
  %v6415 = vadd.f32 0.0, %v6414
  %v6416 = vpop.f32.mrf.mxu0
  %v6417 = vpop.f32.mrf.mxu0
  %v6418 = vadd.f32 0.0, %v6417
  %v6419 = vpop.f32.mrf.mxu0
  %6420 = vmatprep.mubr.bf16.mxu0 0
  %6421 = vmatmul.mubr.bf16.gmra.mxu0 %v6262
  %v6422 = vpop.f32.mrf.mxu0
  %v6423 = vadd.f32 0.0, %v6422
  %v6424 = vpop.f32.mrf.mxu0
  %v6425 = vpop.f32.mrf.mxu0
  %v6426 = vadd.f32 0.0, %v6425
  %v6427 = vpop.f32.mrf.mxu0
  %6428 = vmatprep.mubr.bf16.mxu0 0
  %6429 = vmatmul.mubr.bf16.gmra.mxu0 %v6263
  %v6430 = vpop.f32.mrf.mxu0
  %v6431 = vadd.f32 0.0, %v6430
  %v6432 = vpop.f32.mrf.mxu0
  %v6433 = vpop.f32.mrf.mxu0
  %v6434 = vadd.f32 0.0, %v6433
  %v6435 = vpop.f32.mrf.mxu0
  %6436 = vmatprep.mubr.bf16.mxu0 0
  %6437 = vmatmul.mubr.bf16.gmra.mxu0 %v6264
  %v6438 = vpop.f32.mrf.mxu0
  %v6439 = vadd.f32 0.0, %v6438
  %v6440 = vpop.f32.mrf.mxu0
  %v6441 = vpop.f32.mrf.mxu0
  %v6442 = vadd.f32 0.0, %v6441
  %v6443 = vpop.f32.mrf.mxu0
  %6444 = vmatprep.mubr.bf16.mxu0 0
  %6445 = vmatmul.mubr.bf16.gmra.mxu0 %v6265
  %v6446 = vpop.f32.mrf.mxu0
  %v6447 = vadd.f32 0.0, %v6446
  %v6448 = vpop.f32.mrf.mxu0
  %v6449 = vpop.f32.mrf.mxu0
  %v6450 = vadd.f32 0.0, %v6449
  %v6451 = vpop.f32.mrf.mxu0
  %6452 = vmatprep.mubr.bf16.mxu0 0
  %6453 = vmatmul.mubr.bf16.gmra.mxu0 %v6266
  %v6454 = vpop.f32.mrf.mxu0
  %v6455 = vadd.f32 0.0, %v6454
  %v6456 = vpop.f32.mrf.mxu0
  %v6457 = vpop.f32.mrf.mxu0
  %v6458 = vadd.f32 0.0, %v6457
  %v6459 = vpop.f32.mrf.mxu0
  %6460 = vmatprep.mubr.bf16.mxu0 0
  %6461 = vmatmul.mubr.bf16.gmra.mxu0 %v6267
  %v6462 = vpop.f32.mrf.mxu0
  %v6463 = vadd.f32 0.0, %v6462
  %v6464 = vpop.f32.mrf.mxu0
  %v6465 = vpop.f32.mrf.mxu0
  %v6466 = vadd.f32 0.0, %v6465
  %v6467 = vpop.f32.mrf.mxu0
  %6468 = vmatprep.mubr.bf16.mxu0 0
  %6469 = vmatmul.mubr.bf16.gmra.mxu0 %v6268
  %v6470 = vpop.f32.mrf.mxu0
  %v6471 = vadd.f32 0.0, %v6470
  %v6472 = vpop.f32.mrf.mxu0
  %v6473 = vpop.f32.mrf.mxu0
  %v6474 = vadd.f32 0.0, %v6473
  %v6475 = vpop.f32.mrf.mxu0
  %6476 = vmatprep.mubr.bf16.mxu0 0
  %6477 = vmatmul.mubr.bf16.gmra.mxu0 %v6269
  %v6478 = vpop.f32.mrf.mxu0
  %v6479 = vadd.f32 0.0, %v6478
  %v6480 = vpop.f32.mrf.mxu0
  %v6481 = vpop.f32.mrf.mxu0
  %v6482 = vadd.f32 0.0, %v6481
  %v6483 = vpop.f32.mrf.mxu0
  %6484 = vmatprep.mubr.bf16.mxu0 0
  %6485 = vmatmul.mubr.bf16.gmra.mxu0 %v6270
  %v6486 = vpop.f32.mrf.mxu0
  %v6487 = vadd.f32 0.0, %v6486
  %v6488 = vpop.f32.mrf.mxu0
  %v6489 = vpop.f32.mrf.mxu0
  %v6490 = vadd.f32 0.0, %v6489
  %v6491 = vpop.f32.mrf.mxu0
  %6492 = vmatprep.mubr.bf16.mxu0 0
  %6493 = vmatmul.mubr.bf16.gmra.mxu0 %v6271
  %v6494 = vpop.f32.mrf.mxu0
  %v6495 = vadd.f32 0.0, %v6494
  %v6496 = vpop.f32.mrf.mxu0
  %v6497 = vpop.f32.mrf.mxu0
  %v6498 = vadd.f32 0.0, %v6497
  %v6499 = vpop.f32.mrf.mxu0
  %6500 = vmatprep.mubr.bf16.mxu0 0
  %6501 = vmatmul.mubr.bf16.gmra.mxu0 %v6272
  %v6502 = vpop.f32.mrf.mxu0
  %v6503 = vadd.f32 0.0, %v6502
  %v6504 = vpop.f32.mrf.mxu0
  %v6505 = vpop.f32.mrf.mxu0
  %v6506 = vadd.f32 0.0, %v6505
  %v6507 = vpop.f32.mrf.mxu0
  %6508 = vmatprep.mubr.bf16.mxu0 0
  %6509 = vmatmul.mubr.bf16.gmra.mxu0 %v6273
  %v6510 = vpop.f32.mrf.mxu0
  %v6511 = vadd.f32 0.0, %v6510
  %v6512 = vpop.f32.mrf.mxu0
  %v6513 = vpop.f32.mrf.mxu0
  %v6514 = vadd.f32 0.0, %v6513
  %v6515 = vpop.f32.mrf.mxu0
  %6516 = vmatprep.mubr.bf16.mxu0 0
  %6517 = vmatmul.mubr.bf16.gmra.mxu0 %v6274
  %v6518 = vpop.f32.mrf.mxu0
  %v6519 = vadd.f32 0.0, %v6518
  %v6520 = vpop.f32.mrf.mxu0
  %v6521 = vpop.f32.mrf.mxu0
  %v6522 = vadd.f32 0.0, %v6521
  %v6523 = vpop.f32.mrf.mxu0
  %6524 = vmatprep.mubr.bf16.mxu0 0
  %6525 = vmatmul.mubr.bf16.gmra.mxu0 %v6275
  %v6526 = vpop.f32.mrf.mxu0
  %v6527 = vadd.f32 0.0, %v6526
  %v6528 = vpop.f32.mrf.mxu0
  %v6529 = vpop.f32.mrf.mxu0
  %v6530 = vadd.f32 0.0, %v6529
  %v6531 = vpop.f32.mrf.mxu0
  %6532 = vmatprep.mubr.bf16.mxu0 0
  %6533 = vmatmul.mubr.bf16.gmra.mxu0 %v6276
  %v6534 = vpop.f32.mrf.mxu0
  %v6535 = vadd.f32 0.0, %v6534
  %v6536 = vpop.f32.mrf.mxu0
  %v6537 = vpop.f32.mrf.mxu0
  %v6538 = vadd.f32 0.0, %v6537
  %v6539 = vpop.f32.mrf.mxu0
  %6540 = vmatprep.mubr.bf16.mxu0 0
  %6541 = vmatmul.mubr.bf16.gmra.mxu0 %v6277
  %v6542 = vpop.f32.mrf.mxu0
  %v6543 = vadd.f32 0.0, %v6542
  %v6544 = vpop.f32.mrf.mxu0
  %v6545 = vpop.f32.mrf.mxu0
  %v6546 = vadd.f32 0.0, %v6545
  %v6547 = vpop.f32.mrf.mxu0
  %6548 = vmatprep.mubr.bf16.mxu0 0
  %6549 = vmatmul.mubr.bf16.gmra.mxu0 %v6278
  %v6550 = vpop.f32.mrf.mxu0
  %v6551 = vadd.f32 0.0, %v6550
  %v6552 = vpop.f32.mrf.mxu0
  %v6553 = vpop.f32.mrf.mxu0
  %v6554 = vadd.f32 0.0, %v6553
  %v6555 = vpop.f32.mrf.mxu0
  %6556 = vmatprep.mubr.bf16.mxu0 0
  %6557 = vmatmul.mubr.bf16.gmra.mxu0 %v6279
  %v6558 = vpop.f32.mrf.mxu0
  %v6559 = vadd.f32 0.0, %v6558
  %v6560 = vpop.f32.mrf.mxu0
  %v6561 = vpop.f32.mrf.mxu0
  %v6562 = vadd.f32 0.0, %v6561
  %v6563 = vpop.f32.mrf.mxu0
  %6564 = vmatprep.mubr.bf16.mxu0 0
  %6565 = vmatmul.mubr.bf16.gmra.mxu0 %v6280
  %v6566 = vpop.f32.mrf.mxu0
  %v6567 = vadd.f32 0.0, %v6566
  %v6568 = vpop.f32.mrf.mxu0
  %v6569 = vpop.f32.mrf.mxu0
  %v6570 = vadd.f32 0.0, %v6569
  %v6571 = vpop.f32.mrf.mxu0
  %6572 = vmatprep.mubr.bf16.mxu0 0
  %6573 = vmatmul.mubr.bf16.gmra.mxu0 %v6281
  %v6574 = vpop.f32.mrf.mxu0
  %v6575 = vadd.f32 0.0, %v6574
  %v6576 = vpop.f32.mrf.mxu0
  %v6577 = vpop.f32.mrf.mxu0
  %v6578 = vadd.f32 0.0, %v6577
  %v6579 = vpop.f32.mrf.mxu0
  %6580 = vmatprep.mubr.bf16.mxu0 0
  %6581 = vmatmul.mubr.bf16.gmra.mxu0 %v6282
  %v6582 = vpop.f32.mrf.mxu0
  %v6583 = vadd.f32 0.0, %v6582
  %v6584 = vpop.f32.mrf.mxu0
  %v6585 = vpop.f32.mrf.mxu0
  %v6586 = vadd.f32 0.0, %v6585
  %v6587 = vpop.f32.mrf.mxu0
  %6588 = vmatprep.mubr.bf16.mxu0 0
  %6589 = vmatmul.mubr.bf16.gmra.mxu0 %v6283
  %v6590 = vpop.f32.mrf.mxu0
  %v6591 = vadd.f32 0.0, %v6590
  %v6592 = vpop.f32.mrf.mxu0
  %v6593 = vpop.f32.mrf.mxu0
  %v6594 = vadd.f32 0.0, %v6593
  %v6595 = vpop.f32.mrf.mxu0
  %6596 = vmatprep.mubr.bf16.mxu0 0
  %6597 = vmatmul.mubr.bf16.gmra.mxu0 %v6284
  %v6598 = vpop.f32.mrf.mxu0
  %v6599 = vadd.f32 0.0, %v6598
  %v6600 = vpop.f32.mrf.mxu0
  %v6601 = vpop.f32.mrf.mxu0
  %v6602 = vadd.f32 0.0, %v6601
  %v6603 = vpop.f32.mrf.mxu0
  %6604 = vmatprep.mubr.bf16.mxu0 0
  %6605 = vmatmul.mubr.bf16.gmra.mxu0 %v6285
  %v6606 = vpop.f32.mrf.mxu0
  %v6607 = vadd.f32 0.0, %v6606
  %v6608 = vpop.f32.mrf.mxu0
  %v6609 = vpop.f32.mrf.mxu0
  %v6610 = vadd.f32 0.0, %v6609
  %v6611 = vpop.f32.mrf.mxu0
  %6612 = vmatprep.mubr.bf16.mxu0 0
  %6613 = vmatmul.mubr.bf16.gmra.mxu0 %v6286
  %v6614 = vpop.f32.mrf.mxu0
  %v6615 = vadd.f32 0.0, %v6614
  %v6616 = vpop.f32.mrf.mxu0
  %v6617 = vpop.f32.mrf.mxu0
  %v6618 = vadd.f32 0.0, %v6617
  %v6619 = vpop.f32.mrf.mxu0
  %6620 = vmatprep.mubr.bf16.mxu0 0
  %6621 = vmatmul.mubr.bf16.gmra.mxu0 %v6287
  %v6622 = vpop.f32.mrf.mxu0
  %v6623 = vadd.f32 0.0, %v6622
  %v6624 = vpop.f32.mrf.mxu0
  %v6625 = vpop.f32.mrf.mxu0
  %v6626 = vadd.f32 0.0, %v6625
  %v6627 = vpop.f32.mrf.mxu0
  %6628 = vmatprep.mubr.bf16.mxu0 0
  %6629 = vmatmul.mubr.bf16.gmra.mxu0 %v6288
  %v6630 = vpop.f32.mrf.mxu0
  %v6631 = vadd.f32 0.0, %v6630
  %v6632 = vpop.f32.mrf.mxu0
  %v6633 = vpop.f32.mrf.mxu0
  %v6634 = vadd.f32 0.0, %v6633
  %v6635 = vpop.f32.mrf.mxu0
  %6636 = vmatprep.mubr.bf16.mxu0 0
  %6637 = vmatmul.mubr.bf16.gmra.mxu0 %v6289
  %v6638 = vpop.f32.mrf.mxu0
  %v6639 = vadd.f32 0.0, %v6638
  %v6640 = vpop.f32.mrf.mxu0
  %v6641 = vpop.f32.mrf.mxu0
  %v6642 = vadd.f32 0.0, %v6641
  %v6643 = vpop.f32.mrf.mxu0
  %6644 = vmatprep.mubr.bf16.mxu0 0
  %6645 = vmatmul.mubr.bf16.gmra.mxu0 %v6290
  %v6646 = vpop.f32.mrf.mxu0
  %v6647 = vadd.f32 0.0, %v6646
  %v6648 = vpop.f32.mrf.mxu0
  %v6649 = vpop.f32.mrf.mxu0
  %v6650 = vadd.f32 0.0, %v6649
  %v6651 = vpop.f32.mrf.mxu0
  %6652 = vmatprep.mubr.bf16.mxu0 0
  %6653 = vmatmul.mubr.bf16.gmra.mxu0 %v6291
  %v6654 = vpop.f32.mrf.mxu0
  %v6655 = vadd.f32 0.0, %v6654
  %v6656 = vpop.f32.mrf.mxu0
  %v6657 = vpop.f32.mrf.mxu0
  %v6658 = vadd.f32 0.0, %v6657
  %v6659 = vpop.f32.mrf.mxu0
  %6660 = vdwg.mxu0
  %v6661 = vadd.f32 %v5763, %v6407
  %v6662 = vadd.f32 %v5764, %v6410
  %v6663 = vadd.f32 %v5765, %v6415
  %v6664 = vadd.f32 %v5766, %v6418
  %v6665 = vadd.f32 %v5767, %v6423
  %v6666 = vadd.f32 %v5768, %v6426
  %v6667 = vadd.f32 %v5769, %v6431
  %v6668 = vadd.f32 %v5770, %v6434
  %v6669 = vadd.f32 %v5771, %v6439
  %v6670 = vadd.f32 %v5772, %v6442
  %v6671 = vadd.f32 %v5773, %v6447
  %v6672 = vadd.f32 %v5774, %v6450
  %v6673 = vadd.f32 %v5775, %v6455
  %v6674 = vadd.f32 %v5776, %v6458
  %v6675 = vadd.f32 %v5777, %v6463
  %v6676 = vadd.f32 %v5778, %v6466
  %v6677 = vadd.f32 %v5779, %v6471
  %v6678 = vadd.f32 %v5780, %v6474
  %v6679 = vadd.f32 %v5781, %v6479
  %v6680 = vadd.f32 %v5782, %v6482
  %v6681 = vadd.f32 %v5783, %v6487
  %v6682 = vadd.f32 %v5784, %v6490
  %v6683 = vadd.f32 %v5785, %v6495
  %v6684 = vadd.f32 %v5786, %v6498
  %v6685 = vadd.f32 %v5787, %v6503
  %v6686 = vadd.f32 %v5788, %v6506
  %v6687 = vadd.f32 %v5789, %v6511
  %v6688 = vadd.f32 %v5790, %v6514
  %v6689 = vadd.f32 %v5791, %v6519
  %v6690 = vadd.f32 %v5792, %v6522
  %v6691 = vadd.f32 %v5793, %v6527
  %v6692 = vadd.f32 %v5794, %v6530
  %v6693 = vadd.f32 %v5795, %v6535
  %v6694 = vadd.f32 %v5796, %v6538
  %v6695 = vadd.f32 %v5797, %v6543
  %v6696 = vadd.f32 %v5798, %v6546
  %v6697 = vadd.f32 %v5799, %v6551
  %v6698 = vadd.f32 %v5800, %v6554
  %v6699 = vadd.f32 %v5801, %v6559
  %v6700 = vadd.f32 %v5802, %v6562
  %v6701 = vadd.f32 %v5803, %v6567
  %v6702 = vadd.f32 %v5804, %v6570
  %v6703 = vadd.f32 %v5805, %v6575
  %v6704 = vadd.f32 %v5806, %v6578
  %v6705 = vadd.f32 %v5807, %v6583
  %v6706 = vadd.f32 %v5808, %v6586
  %v6707 = vadd.f32 %v5809, %v6591
  %v6708 = vadd.f32 %v5810, %v6594
  %v6709 = vadd.f32 %v5811, %v6599
  %v6710 = vadd.f32 %v5812, %v6602
  %v6711 = vadd.f32 %v5813, %v6607
  %v6712 = vadd.f32 %v5814, %v6610
  %v6713 = vadd.f32 %v5815, %v6615
  %v6714 = vadd.f32 %v5816, %v6618
  %v6715 = vadd.f32 %v5817, %v6623
  %v6716 = vadd.f32 %v5818, %v6626
  %v6717 = vadd.f32 %v5819, %v6631
  %v6718 = vadd.f32 %v5820, %v6634
  %v6719 = vadd.f32 %v5821, %v6639
  %v6720 = vadd.f32 %v5822, %v6642
  %v6721 = vadd.f32 %v5823, %v6647
  %v6722 = vadd.f32 %v5824, %v6650
  %v6723 = vadd.f32 %v5825, %v6655
  %v6724 = vadd.f32 %v5826, %v6658
  %s6725 = scalar_lea.vmem [#allocation2], 48
  %v6726 = vld [vmem:[%s6725] sm:$0xf]
  %v6727 = vld [vmem:[%s6725 + $0x4] sm:$0xf]
  %v6728 = vld [vmem:[%s6725 + $0xc] sm:$0xf]
  %v6729 = vld [vmem:[%s6725 + $0x10] sm:$0xf]
  %v6730 = vld [vmem:[%s6725 + $0x18] sm:$0xf]
  %v6731 = vld [vmem:[%s6725 + $0x1c] sm:$0xf]
  %v6732 = vld [vmem:[%s6725 + $0x24] sm:$0xf]
  %v6733 = vld [vmem:[%s6725 + $0x28] sm:$0xf]
  %v6734 = vld [vmem:[%s6725 + $0x30] sm:$0xf]
  %v6735 = vld [vmem:[%s6725 + $0x34] sm:$0xf]
  %v6736 = vld [vmem:[%s6725 + $0x3c] sm:$0xf]
  %v6737 = vld [vmem:[%s6725 + $0x40] sm:$0xf]
  %v6738 = vld [vmem:[%s6725 + $0x48] sm:$0xf]
  %v6739 = vld [vmem:[%s6725 + $0x4c] sm:$0xf]
  %v6740 = vld [vmem:[%s6725 + $0x54] sm:$0xf]
  %v6741 = vld [vmem:[%s6725 + $0x58] sm:$0xf]
  %v6742 = vld [vmem:[%s6725 + $0x60] sm:$0xf]
  %v6743 = vld [vmem:[%s6725 + $0x64] sm:$0xf]
  %v6744 = vld [vmem:[%s6725 + $0x6c] sm:$0xf]
  %v6745 = vld [vmem:[%s6725 + $0x70] sm:$0xf]
  %v6746 = vld [vmem:[%s6725 + $0x78] sm:$0xf]
  %v6747 = vld [vmem:[%s6725 + $0x7c] sm:$0xf]
  %v6748 = vld [vmem:[%s6725 + $0x84] sm:$0xf]
  %v6749 = vld [vmem:[%s6725 + $0x88] sm:$0xf]
  %v6750 = vld [vmem:[%s6725 + $0x90] sm:$0xf]
  %v6751 = vld [vmem:[%s6725 + $0x94] sm:$0xf]
  %v6752 = vld [vmem:[%s6725 + $0x9c] sm:$0xf]
  %v6753 = vld [vmem:[%s6725 + $0xa0] sm:$0xf]
  %v6754 = vld [vmem:[%s6725 + $0xa8] sm:$0xf]
  %v6755 = vld [vmem:[%s6725 + $0xac] sm:$0xf]
  %v6756 = vld [vmem:[%s6725 + $0xb4] sm:$0xf]
  %v6757 = vld [vmem:[%s6725 + $0xb8] sm:$0xf]
  %v6758 = vld [vmem:[%s6725 + $0xf0] sm:$0xf]
  %v6759 = vld [vmem:[%s6725 + $0xf4] sm:$0xf]
  %v6760 = vld [vmem:[%s6725 + $0xfc] sm:$0xf]
  %v6761 = vld [vmem:[%s6725 + $0x100] sm:$0xf]
  %v6762 = vld [vmem:[%s6725 + $0x108] sm:$0xf]
  %v6763 = vld [vmem:[%s6725 + $0x10c] sm:$0xf]
  %v6764 = vld [vmem:[%s6725 + $0x114] sm:$0xf]
  %v6765 = vld [vmem:[%s6725 + $0x118] sm:$0xf]
  %v6766 = vld [vmem:[%s6725 + $0x120] sm:$0xf]
  %v6767 = vld [vmem:[%s6725 + $0x124] sm:$0xf]
  %v6768 = vld [vmem:[%s6725 + $0x12c] sm:$0xf]
  %v6769 = vld [vmem:[%s6725 + $0x130] sm:$0xf]
  %v6770 = vld [vmem:[%s6725 + $0x138] sm:$0xf]
  %v6771 = vld [vmem:[%s6725 + $0x13c] sm:$0xf]
  %v6772 = vld [vmem:[%s6725 + $0x144] sm:$0xf]
  %v6773 = vld [vmem:[%s6725 + $0x148] sm:$0xf]
  %v6774 = vld [vmem:[%s6725 + $0x150] sm:$0xf]
  %v6775 = vld [vmem:[%s6725 + $0x154] sm:$0xf]
  %v6776 = vld [vmem:[%s6725 + $0x15c] sm:$0xf]
  %v6777 = vld [vmem:[%s6725 + $0x160] sm:$0xf]
  %v6778 = vld [vmem:[%s6725 + $0x168] sm:$0xf]
  %v6779 = vld [vmem:[%s6725 + $0x16c] sm:$0xf]
  %v6780 = vld [vmem:[%s6725 + $0x174] sm:$0xf]
  %v6781 = vld [vmem:[%s6725 + $0x178] sm:$0xf]
  %v6782 = vld [vmem:[%s6725 + $0x180] sm:$0xf]
  %v6783 = vld [vmem:[%s6725 + $0x184] sm:$0xf]
  %v6784 = vld [vmem:[%s6725 + $0x18c] sm:$0xf]
  %v6785 = vld [vmem:[%s6725 + $0x190] sm:$0xf]
  %v6786 = vld [vmem:[%s6725 + $0x198] sm:$0xf]
  %v6787 = vld [vmem:[%s6725 + $0x19c] sm:$0xf]
  %v6788 = vld [vmem:[%s6725 + $0x1a4] sm:$0xf]
  %v6789 = vld [vmem:[%s6725 + $0x1a8] sm:$0xf]
  %s6790 = scalar_lea.vmem %s4, 384
  %v6791 = vld [vmem:[%s6790] sm:$0xf]
  %v6792 = vld [vmem:[%s6790 + $0x4] sm:$0xf]
  %v6793 = vld [vmem:[%s6790 + $0x8] sm:$0xf]
  %v6794 = vld [vmem:[%s6790 + $0xc] sm:$0xf]
  %v6795 = vld [vmem:[%s6790 + $0x10] sm:$0xf]
  %v6796 = vld [vmem:[%s6790 + $0x14] sm:$0xf]
  %v6797 = vld [vmem:[%s6790 + $0x18] sm:$0xf]
  %v6798 = vld [vmem:[%s6790 + $0x1c] sm:$0xf]
  %v6799 = vld [vmem:[%s6790 + $0x20] sm:$0xf]
  %v6800 = vld [vmem:[%s6790 + $0x24] sm:$0xf]
  %v6801 = vld [vmem:[%s6790 + $0x28] sm:$0xf]
  %v6802 = vld [vmem:[%s6790 + $0x2c] sm:$0xf]
  %v6803 = vld [vmem:[%s6790 + $0x30] sm:$0xf]
  %v6804 = vld [vmem:[%s6790 + $0x34] sm:$0xf]
  %v6805 = vld [vmem:[%s6790 + $0x38] sm:$0xf]
  %v6806 = vld [vmem:[%s6790 + $0x3c] sm:$0xf]
  %v6871 = vunpack.c.l.b16 %v6726
  %v6872 = vunpack.c.l.b16 %v6727
  %v6873 = vunpack.c.l.b16 %v6728
  %v6874 = vunpack.c.l.b16 %v6729
  %v6875 = vunpack.c.l.b16 %v6730
  %v6876 = vunpack.c.l.b16 %v6731
  %v6877 = vunpack.c.l.b16 %v6732
  %v6878 = vunpack.c.l.b16 %v6733
  %v6879 = vunpack.c.l.b16 %v6734
  %v6880 = vunpack.c.l.b16 %v6735
  %v6881 = vunpack.c.l.b16 %v6736
  %v6882 = vunpack.c.l.b16 %v6737
  %v6883 = vunpack.c.l.b16 %v6738
  %v6884 = vunpack.c.l.b16 %v6739
  %v6885 = vunpack.c.l.b16 %v6740
  %v6886 = vunpack.c.l.b16 %v6741
  %v6887 = vunpack.c.l.b16 %v6742
  %v6888 = vunpack.c.l.b16 %v6743
  %v6889 = vunpack.c.l.b16 %v6744
  %v6890 = vunpack.c.l.b16 %v6745
  %v6891 = vunpack.c.l.b16 %v6746
  %v6892 = vunpack.c.l.b16 %v6747
  %v6893 = vunpack.c.l.b16 %v6748
  %v6894 = vunpack.c.l.b16 %v6749
  %v6895 = vunpack.c.l.b16 %v6750
  %v6896 = vunpack.c.l.b16 %v6751
  %v6897 = vunpack.c.l.b16 %v6752
  %v6898 = vunpack.c.l.b16 %v6753
  %v6899 = vunpack.c.l.b16 %v6754
  %v6900 = vunpack.c.l.b16 %v6755
  %v6901 = vunpack.c.l.b16 %v6756
  %v6902 = vunpack.c.l.b16 %v6757
  %v6903 = vunpack.c.l.b16 %v6758
  %v6904 = vunpack.c.l.b16 %v6759
  %v6905 = vunpack.c.l.b16 %v6760
  %v6906 = vunpack.c.l.b16 %v6761
  %v6907 = vunpack.c.l.b16 %v6762
  %v6908 = vunpack.c.l.b16 %v6763
  %v6909 = vunpack.c.l.b16 %v6764
  %v6910 = vunpack.c.l.b16 %v6765
  %v6911 = vunpack.c.l.b16 %v6766
  %v6912 = vunpack.c.l.b16 %v6767
  %v6913 = vunpack.c.l.b16 %v6768
  %v6914 = vunpack.c.l.b16 %v6769
  %v6915 = vunpack.c.l.b16 %v6770
  %v6916 = vunpack.c.l.b16 %v6771
  %v6917 = vunpack.c.l.b16 %v6772
  %v6918 = vunpack.c.l.b16 %v6773
  %v6919 = vunpack.c.l.b16 %v6774
  %v6920 = vunpack.c.l.b16 %v6775
  %v6921 = vunpack.c.l.b16 %v6776
  %v6922 = vunpack.c.l.b16 %v6777
  %v6923 = vunpack.c.l.b16 %v6778
  %v6924 = vunpack.c.l.b16 %v6779
  %v6925 = vunpack.c.l.b16 %v6780
  %v6926 = vunpack.c.l.b16 %v6781
  %v6927 = vunpack.c.l.b16 %v6782
  %v6928 = vunpack.c.l.b16 %v6783
  %v6929 = vunpack.c.l.b16 %v6784
  %v6930 = vunpack.c.l.b16 %v6785
  %v6931 = vunpack.c.l.b16 %v6786
  %v6932 = vunpack.c.l.b16 %v6787
  %v6933 = vunpack.c.l.b16 %v6788
  %v6934 = vunpack.c.l.b16 %v6789
  %v6935 = vpack.c.b16 %v6872, %v6871
  %v6936 = vpack.c.b16 %v6874, %v6873
  %v6937 = vpack.c.b16 %v6876, %v6875
  %v6938 = vpack.c.b16 %v6878, %v6877
  %v6939 = vpack.c.b16 %v6880, %v6879
  %v6940 = vpack.c.b16 %v6882, %v6881
  %v6941 = vpack.c.b16 %v6884, %v6883
  %v6942 = vpack.c.b16 %v6886, %v6885
  %v6943 = vpack.c.b16 %v6888, %v6887
  %v6944 = vpack.c.b16 %v6890, %v6889
  %v6945 = vpack.c.b16 %v6892, %v6891
  %v6946 = vpack.c.b16 %v6894, %v6893
  %v6947 = vpack.c.b16 %v6896, %v6895
  %v6948 = vpack.c.b16 %v6898, %v6897
  %v6949 = vpack.c.b16 %v6900, %v6899
  %v6950 = vpack.c.b16 %v6902, %v6901
  %v6951 = vpack.c.b16 %v6904, %v6903
  %v6952 = vpack.c.b16 %v6906, %v6905
  %v6953 = vpack.c.b16 %v6908, %v6907
  %v6954 = vpack.c.b16 %v6910, %v6909
  %v6955 = vpack.c.b16 %v6912, %v6911
  %v6956 = vpack.c.b16 %v6914, %v6913
  %v6957 = vpack.c.b16 %v6916, %v6915
  %v6958 = vpack.c.b16 %v6918, %v6917
  %v6959 = vpack.c.b16 %v6920, %v6919
  %v6960 = vpack.c.b16 %v6922, %v6921
  %v6961 = vpack.c.b16 %v6924, %v6923
  %v6962 = vpack.c.b16 %v6926, %v6925
  %v6963 = vpack.c.b16 %v6928, %v6927
  %v6964 = vpack.c.b16 %v6930, %v6929
  %v6965 = vpack.c.b16 %v6932, %v6931
  %v6966 = vpack.c.b16 %v6934, %v6933
  %v7015 = vunpack.c.l.b16 %v6791
  %v7016 = vunpack.c.l.b16 %v6792
  %v7017 = vunpack.c.l.b16 %v6793
  %v7018 = vunpack.c.l.b16 %v6794
  %v7019 = vunpack.c.l.b16 %v6795
  %v7020 = vunpack.c.l.b16 %v6796
  %v7021 = vunpack.c.l.b16 %v6797
  %v7022 = vunpack.c.l.b16 %v6798
  %v7023 = vunpack.c.l.b16 %v6799
  %v7024 = vunpack.c.l.b16 %v6800
  %v7025 = vunpack.c.l.b16 %v6801
  %v7026 = vunpack.c.l.b16 %v6802
  %v7027 = vunpack.c.l.b16 %v6803
  %v7028 = vunpack.c.l.b16 %v6804
  %v7029 = vunpack.c.l.b16 %v6805
  %v7030 = vunpack.c.l.b16 %v6806
  %v7031 = vpack.c.b16 %v7016, %v7015
  %v7032 = vpack.c.b16 %v7018, %v7017
  %v7033 = vpack.c.b16 %v7020, %v7019
  %v7034 = vpack.c.b16 %v7022, %v7021
  %v7035 = vpack.c.b16 %v7024, %v7023
  %v7036 = vpack.c.b16 %v7026, %v7025
  %v7037 = vpack.c.b16 %v7028, %v7027
  %v7038 = vpack.c.b16 %v7030, %v7029
  %7047 = vmatprep.subr.bf16.mxu0 0
  %7048 = vmatpush1.bf16.msra.mxu0 %v7038
  %7049 = vmatprep.subr.bf16.mxu0 0
  %7050 = vmatpush1.bf16.msra.mxu0 %v7037
  %7051 = vmatprep.subr.bf16.mxu0 0
  %7052 = vmatpush1.bf16.msra.mxu0 %v7036
  %7053 = vmatprep.subr.bf16.mxu0 0
  %7054 = vmatpush1.bf16.msra.mxu0 %v7035
  %7055 = vmatprep.subr.bf16.mxu0 0
  %7056 = vmatpush1.bf16.msra.mxu0 %v7034
  %7057 = vmatprep.subr.bf16.mxu0 0
  %7058 = vmatpush1.bf16.msra.mxu0 %v7033
  %7059 = vmatprep.subr.bf16.mxu0 0
  %7060 = vmatpush1.bf16.msra.mxu0 %v7032
  %7061 = vmatprep.subr.bf16.mxu0 0
  %7062 = vmatpush1.bf16.msra.mxu0 %v7031
  %7063 = vmatprep.subr.bf16.mxu0 0
  %7064 = vmatpush2.bf16.msra.mxu0 0
  %7065 = vmatprep.subr.bf16.mxu0 0
  %7066 = vmatpush2.bf16.msra.mxu0 0
  %7067 = vmatprep.subr.bf16.mxu0 0
  %7068 = vmatpush2.bf16.msra.mxu0 0
  %7069 = vmatprep.subr.bf16.mxu0 0
  %7070 = vmatpush2.bf16.msra.mxu0 0
  %7071 = vmatprep.subr.bf16.mxu0 0
  %7072 = vmatpush2.bf16.msra.mxu0 0
  %7073 = vmatprep.subr.bf16.mxu0 0
  %7074 = vmatpush2.bf16.msra.mxu0 0
  %7075 = vmatprep.subr.bf16.mxu0 0
  %7076 = vmatpush2.bf16.msra.mxu0 0
  %7077 = vmatprep.subr.bf16.mxu0 0
  %7078 = vmatpush2.bf16.msra.mxu0 0
  %7079 = vmatprep.mubr.bf16.mxu0 0
  %7080 = vmatmul.mubr.bf16.gmra.mxu0 %v6935
  %v7081 = vpop.f32.mrf.mxu0
  %v7082 = vadd.f32 0.0, %v7081
  %v7083 = vpop.f32.mrf.mxu0
  %v7084 = vpop.f32.mrf.mxu0
  %v7085 = vadd.f32 0.0, %v7084
  %v7086 = vpop.f32.mrf.mxu0
  %7087 = vmatprep.mubr.bf16.mxu0 0
  %7088 = vmatmul.mubr.bf16.gmra.mxu0 %v6936
  %v7089 = vpop.f32.mrf.mxu0
  %v7090 = vadd.f32 0.0, %v7089
  %v7091 = vpop.f32.mrf.mxu0
  %v7092 = vpop.f32.mrf.mxu0
  %v7093 = vadd.f32 0.0, %v7092
  %v7094 = vpop.f32.mrf.mxu0
  %7095 = vmatprep.mubr.bf16.mxu0 0
  %7096 = vmatmul.mubr.bf16.gmra.mxu0 %v6937
  %v7097 = vpop.f32.mrf.mxu0
  %v7098 = vadd.f32 0.0, %v7097
  %v7099 = vpop.f32.mrf.mxu0
  %v7100 = vpop.f32.mrf.mxu0
  %v7101 = vadd.f32 0.0, %v7100
  %v7102 = vpop.f32.mrf.mxu0
  %7103 = vmatprep.mubr.bf16.mxu0 0
  %7104 = vmatmul.mubr.bf16.gmra.mxu0 %v6938
  %v7105 = vpop.f32.mrf.mxu0
  %v7106 = vadd.f32 0.0, %v7105
  %v7107 = vpop.f32.mrf.mxu0
  %v7108 = vpop.f32.mrf.mxu0
  %v7109 = vadd.f32 0.0, %v7108
  %v7110 = vpop.f32.mrf.mxu0
  %7111 = vmatprep.mubr.bf16.mxu0 0
  %7112 = vmatmul.mubr.bf16.gmra.mxu0 %v6939
  %v7113 = vpop.f32.mrf.mxu0
  %v7114 = vadd.f32 0.0, %v7113
  %v7115 = vpop.f32.mrf.mxu0
  %v7116 = vpop.f32.mrf.mxu0
  %v7117 = vadd.f32 0.0, %v7116
  %v7118 = vpop.f32.mrf.mxu0
  %7119 = vmatprep.mubr.bf16.mxu0 0
  %7120 = vmatmul.mubr.bf16.gmra.mxu0 %v6940
  %v7121 = vpop.f32.mrf.mxu0
  %v7122 = vadd.f32 0.0, %v7121
  %v7123 = vpop.f32.mrf.mxu0
  %v7124 = vpop.f32.mrf.mxu0
  %v7125 = vadd.f32 0.0, %v7124
  %v7126 = vpop.f32.mrf.mxu0
  %7127 = vmatprep.mubr.bf16.mxu0 0
  %7128 = vmatmul.mubr.bf16.gmra.mxu0 %v6941
  %v7129 = vpop.f32.mrf.mxu0
  %v7130 = vadd.f32 0.0, %v7129
  %v7131 = vpop.f32.mrf.mxu0
  %v7132 = vpop.f32.mrf.mxu0
  %v7133 = vadd.f32 0.0, %v7132
  %v7134 = vpop.f32.mrf.mxu0
  %7135 = vmatprep.mubr.bf16.mxu0 0
  %7136 = vmatmul.mubr.bf16.gmra.mxu0 %v6942
  %v7137 = vpop.f32.mrf.mxu0
  %v7138 = vadd.f32 0.0, %v7137
  %v7139 = vpop.f32.mrf.mxu0
  %v7140 = vpop.f32.mrf.mxu0
  %v7141 = vadd.f32 0.0, %v7140
  %v7142 = vpop.f32.mrf.mxu0
  %7143 = vmatprep.mubr.bf16.mxu0 0
  %7144 = vmatmul.mubr.bf16.gmra.mxu0 %v6943
  %v7145 = vpop.f32.mrf.mxu0
  %v7146 = vadd.f32 0.0, %v7145
  %v7147 = vpop.f32.mrf.mxu0
  %v7148 = vpop.f32.mrf.mxu0
  %v7149 = vadd.f32 0.0, %v7148
  %v7150 = vpop.f32.mrf.mxu0
  %7151 = vmatprep.mubr.bf16.mxu0 0
  %7152 = vmatmul.mubr.bf16.gmra.mxu0 %v6944
  %v7153 = vpop.f32.mrf.mxu0
  %v7154 = vadd.f32 0.0, %v7153
  %v7155 = vpop.f32.mrf.mxu0
  %v7156 = vpop.f32.mrf.mxu0
  %v7157 = vadd.f32 0.0, %v7156
  %v7158 = vpop.f32.mrf.mxu0
  %7159 = vmatprep.mubr.bf16.mxu0 0
  %7160 = vmatmul.mubr.bf16.gmra.mxu0 %v6945
  %v7161 = vpop.f32.mrf.mxu0
  %v7162 = vadd.f32 0.0, %v7161
  %v7163 = vpop.f32.mrf.mxu0
  %v7164 = vpop.f32.mrf.mxu0
  %v7165 = vadd.f32 0.0, %v7164
  %v7166 = vpop.f32.mrf.mxu0
  %7167 = vmatprep.mubr.bf16.mxu0 0
  %7168 = vmatmul.mubr.bf16.gmra.mxu0 %v6946
  %v7169 = vpop.f32.mrf.mxu0
  %v7170 = vadd.f32 0.0, %v7169
  %v7171 = vpop.f32.mrf.mxu0
  %v7172 = vpop.f32.mrf.mxu0
  %v7173 = vadd.f32 0.0, %v7172
  %v7174 = vpop.f32.mrf.mxu0
  %7175 = vmatprep.mubr.bf16.mxu0 0
  %7176 = vmatmul.mubr.bf16.gmra.mxu0 %v6947
  %v7177 = vpop.f32.mrf.mxu0
  %v7178 = vadd.f32 0.0, %v7177
  %v7179 = vpop.f32.mrf.mxu0
  %v7180 = vpop.f32.mrf.mxu0
  %v7181 = vadd.f32 0.0, %v7180
  %v7182 = vpop.f32.mrf.mxu0
  %7183 = vmatprep.mubr.bf16.mxu0 0
  %7184 = vmatmul.mubr.bf16.gmra.mxu0 %v6948
  %v7185 = vpop.f32.mrf.mxu0
  %v7186 = vadd.f32 0.0, %v7185
  %v7187 = vpop.f32.mrf.mxu0
  %v7188 = vpop.f32.mrf.mxu0
  %v7189 = vadd.f32 0.0, %v7188
  %v7190 = vpop.f32.mrf.mxu0
  %7191 = vmatprep.mubr.bf16.mxu0 0
  %7192 = vmatmul.mubr.bf16.gmra.mxu0 %v6949
  %v7193 = vpop.f32.mrf.mxu0
  %v7194 = vadd.f32 0.0, %v7193
  %v7195 = vpop.f32.mrf.mxu0
  %v7196 = vpop.f32.mrf.mxu0
  %v7197 = vadd.f32 0.0, %v7196
  %v7198 = vpop.f32.mrf.mxu0
  %7199 = vmatprep.mubr.bf16.mxu0 0
  %7200 = vmatmul.mubr.bf16.gmra.mxu0 %v6950
  %v7201 = vpop.f32.mrf.mxu0
  %v7202 = vadd.f32 0.0, %v7201
  %v7203 = vpop.f32.mrf.mxu0
  %v7204 = vpop.f32.mrf.mxu0
  %v7205 = vadd.f32 0.0, %v7204
  %v7206 = vpop.f32.mrf.mxu0
  %7207 = vmatprep.mubr.bf16.mxu0 0
  %7208 = vmatmul.mubr.bf16.gmra.mxu0 %v6951
  %v7209 = vpop.f32.mrf.mxu0
  %v7210 = vadd.f32 0.0, %v7209
  %v7211 = vpop.f32.mrf.mxu0
  %v7212 = vpop.f32.mrf.mxu0
  %v7213 = vadd.f32 0.0, %v7212
  %v7214 = vpop.f32.mrf.mxu0
  %7215 = vmatprep.mubr.bf16.mxu0 0
  %7216 = vmatmul.mubr.bf16.gmra.mxu0 %v6952
  %v7217 = vpop.f32.mrf.mxu0
  %v7218 = vadd.f32 0.0, %v7217
  %v7219 = vpop.f32.mrf.mxu0
  %v7220 = vpop.f32.mrf.mxu0
  %v7221 = vadd.f32 0.0, %v7220
  %v7222 = vpop.f32.mrf.mxu0
  %7223 = vmatprep.mubr.bf16.mxu0 0
  %7224 = vmatmul.mubr.bf16.gmra.mxu0 %v6953
  %v7225 = vpop.f32.mrf.mxu0
  %v7226 = vadd.f32 0.0, %v7225
  %v7227 = vpop.f32.mrf.mxu0
  %v7228 = vpop.f32.mrf.mxu0
  %v7229 = vadd.f32 0.0, %v7228
  %v7230 = vpop.f32.mrf.mxu0
  %7231 = vmatprep.mubr.bf16.mxu0 0
  %7232 = vmatmul.mubr.bf16.gmra.mxu0 %v6954
  %v7233 = vpop.f32.mrf.mxu0
  %v7234 = vadd.f32 0.0, %v7233
  %v7235 = vpop.f32.mrf.mxu0
  %v7236 = vpop.f32.mrf.mxu0
  %v7237 = vadd.f32 0.0, %v7236
  %v7238 = vpop.f32.mrf.mxu0
  %7239 = vmatprep.mubr.bf16.mxu0 0
  %7240 = vmatmul.mubr.bf16.gmra.mxu0 %v6955
  %v7241 = vpop.f32.mrf.mxu0
  %v7242 = vadd.f32 0.0, %v7241
  %v7243 = vpop.f32.mrf.mxu0
  %v7244 = vpop.f32.mrf.mxu0
  %v7245 = vadd.f32 0.0, %v7244
  %v7246 = vpop.f32.mrf.mxu0
  %7247 = vmatprep.mubr.bf16.mxu0 0
  %7248 = vmatmul.mubr.bf16.gmra.mxu0 %v6956
  %v7249 = vpop.f32.mrf.mxu0
  %v7250 = vadd.f32 0.0, %v7249
  %v7251 = vpop.f32.mrf.mxu0
  %v7252 = vpop.f32.mrf.mxu0
  %v7253 = vadd.f32 0.0, %v7252
  %v7254 = vpop.f32.mrf.mxu0
  %7255 = vmatprep.mubr.bf16.mxu0 0
  %7256 = vmatmul.mubr.bf16.gmra.mxu0 %v6957
  %v7257 = vpop.f32.mrf.mxu0
  %v7258 = vadd.f32 0.0, %v7257
  %v7259 = vpop.f32.mrf.mxu0
  %v7260 = vpop.f32.mrf.mxu0
  %v7261 = vadd.f32 0.0, %v7260
  %v7262 = vpop.f32.mrf.mxu0
  %7263 = vmatprep.mubr.bf16.mxu0 0
  %7264 = vmatmul.mubr.bf16.gmra.mxu0 %v6958
  %v7265 = vpop.f32.mrf.mxu0
  %v7266 = vadd.f32 0.0, %v7265
  %v7267 = vpop.f32.mrf.mxu0
  %v7268 = vpop.f32.mrf.mxu0
  %v7269 = vadd.f32 0.0, %v7268
  %v7270 = vpop.f32.mrf.mxu0
  %7271 = vmatprep.mubr.bf16.mxu0 0
  %7272 = vmatmul.mubr.bf16.gmra.mxu0 %v6959
  %v7273 = vpop.f32.mrf.mxu0
  %v7274 = vadd.f32 0.0, %v7273
  %v7275 = vpop.f32.mrf.mxu0
  %v7276 = vpop.f32.mrf.mxu0
  %v7277 = vadd.f32 0.0, %v7276
  %v7278 = vpop.f32.mrf.mxu0
  %7279 = vmatprep.mubr.bf16.mxu0 0
  %7280 = vmatmul.mubr.bf16.gmra.mxu0 %v6960
  %v7281 = vpop.f32.mrf.mxu0
  %v7282 = vadd.f32 0.0, %v7281
  %v7283 = vpop.f32.mrf.mxu0
  %v7284 = vpop.f32.mrf.mxu0
  %v7285 = vadd.f32 0.0, %v7284
  %v7286 = vpop.f32.mrf.mxu0
  %7287 = vmatprep.mubr.bf16.mxu0 0
  %7288 = vmatmul.mubr.bf16.gmra.mxu0 %v6961
  %v7289 = vpop.f32.mrf.mxu0
  %v7290 = vadd.f32 0.0, %v7289
  %v7291 = vpop.f32.mrf.mxu0
  %v7292 = vpop.f32.mrf.mxu0
  %v7293 = vadd.f32 0.0, %v7292
  %v7294 = vpop.f32.mrf.mxu0
  %7295 = vmatprep.mubr.bf16.mxu0 0
  %7296 = vmatmul.mubr.bf16.gmra.mxu0 %v6962
  %v7297 = vpop.f32.mrf.mxu0
  %v7298 = vadd.f32 0.0, %v7297
  %v7299 = vpop.f32.mrf.mxu0
  %v7300 = vpop.f32.mrf.mxu0
  %v7301 = vadd.f32 0.0, %v7300
  %v7302 = vpop.f32.mrf.mxu0
  %7303 = vmatprep.mubr.bf16.mxu0 0
  %7304 = vmatmul.mubr.bf16.gmra.mxu0 %v6963
  %v7305 = vpop.f32.mrf.mxu0
  %v7306 = vadd.f32 0.0, %v7305
  %v7307 = vpop.f32.mrf.mxu0
  %v7308 = vpop.f32.mrf.mxu0
  %v7309 = vadd.f32 0.0, %v7308
  %v7310 = vpop.f32.mrf.mxu0
  %7311 = vmatprep.mubr.bf16.mxu0 0
  %7312 = vmatmul.mubr.bf16.gmra.mxu0 %v6964
  %v7313 = vpop.f32.mrf.mxu0
  %v7314 = vadd.f32 0.0, %v7313
  %v7315 = vpop.f32.mrf.mxu0
  %v7316 = vpop.f32.mrf.mxu0
  %v7317 = vadd.f32 0.0, %v7316
  %v7318 = vpop.f32.mrf.mxu0
  %7319 = vmatprep.mubr.bf16.mxu0 0
  %7320 = vmatmul.mubr.bf16.gmra.mxu0 %v6965
  %v7321 = vpop.f32.mrf.mxu0
  %v7322 = vadd.f32 0.0, %v7321
  %v7323 = vpop.f32.mrf.mxu0
  %v7324 = vpop.f32.mrf.mxu0
  %v7325 = vadd.f32 0.0, %v7324
  %v7326 = vpop.f32.mrf.mxu0
  %7327 = vmatprep.mubr.bf16.mxu0 0
  %7328 = vmatmul.mubr.bf16.gmra.mxu0 %v6966
  %v7329 = vpop.f32.mrf.mxu0
  %v7330 = vadd.f32 0.0, %v7329
  %v7331 = vpop.f32.mrf.mxu0
  %v7332 = vpop.f32.mrf.mxu0
  %v7333 = vadd.f32 0.0, %v7332
  %v7334 = vpop.f32.mrf.mxu0
  %7335 = vdwg.mxu0
  %v7336 = vadd.f32 %v6661, %v7082
  %v7337 = vadd.f32 %v6662, %v7085
  %v7338 = vadd.f32 %v6663, %v7090
  %v7339 = vadd.f32 %v6664, %v7093
  %v7340 = vadd.f32 %v6665, %v7098
  %v7341 = vadd.f32 %v6666, %v7101
  %v7342 = vadd.f32 %v6667, %v7106
  %v7343 = vadd.f32 %v6668, %v7109
  %v7344 = vadd.f32 %v6669, %v7114
  %v7345 = vadd.f32 %v6670, %v7117
  %v7346 = vadd.f32 %v6671, %v7122
  %v7347 = vadd.f32 %v6672, %v7125
  %v7348 = vadd.f32 %v6673, %v7130
  %v7349 = vadd.f32 %v6674, %v7133
  %v7350 = vadd.f32 %v6675, %v7138
  %v7351 = vadd.f32 %v6676, %v7141
  %v7352 = vadd.f32 %v6677, %v7146
  %v7353 = vadd.f32 %v6678, %v7149
  %v7354 = vadd.f32 %v6679, %v7154
  %v7355 = vadd.f32 %v6680, %v7157
  %v7356 = vadd.f32 %v6681, %v7162
  %v7357 = vadd.f32 %v6682, %v7165
  %v7358 = vadd.f32 %v6683, %v7170
  %v7359 = vadd.f32 %v6684, %v7173
  %v7360 = vadd.f32 %v6685, %v7178
  %v7361 = vadd.f32 %v6686, %v7181
  %v7362 = vadd.f32 %v6687, %v7186
  %v7363 = vadd.f32 %v6688, %v7189
  %v7364 = vadd.f32 %v6689, %v7194
  %v7365 = vadd.f32 %v6690, %v7197
  %v7366 = vadd.f32 %v6691, %v7202
  %v7367 = vadd.f32 %v6692, %v7205
  %v7368 = vadd.f32 %v6693, %v7210
  %v7369 = vadd.f32 %v6694, %v7213
  %v7370 = vadd.f32 %v6695, %v7218
  %v7371 = vadd.f32 %v6696, %v7221
  %v7372 = vadd.f32 %v6697, %v7226
  %v7373 = vadd.f32 %v6698, %v7229
  %v7374 = vadd.f32 %v6699, %v7234
  %v7375 = vadd.f32 %v6700, %v7237
  %v7376 = vadd.f32 %v6701, %v7242
  %v7377 = vadd.f32 %v6702, %v7245
  %v7378 = vadd.f32 %v6703, %v7250
  %v7379 = vadd.f32 %v6704, %v7253
  %v7380 = vadd.f32 %v6705, %v7258
  %v7381 = vadd.f32 %v6706, %v7261
  %v7382 = vadd.f32 %v6707, %v7266
  %v7383 = vadd.f32 %v6708, %v7269
  %v7384 = vadd.f32 %v6709, %v7274
  %v7385 = vadd.f32 %v6710, %v7277
  %v7386 = vadd.f32 %v6711, %v7282
  %v7387 = vadd.f32 %v6712, %v7285
  %v7388 = vadd.f32 %v6713, %v7290
  %v7389 = vadd.f32 %v6714, %v7293
  %v7390 = vadd.f32 %v6715, %v7298
  %v7391 = vadd.f32 %v6716, %v7301
  %v7392 = vadd.f32 %v6717, %v7306
  %v7393 = vadd.f32 %v6718, %v7309
  %v7394 = vadd.f32 %v6719, %v7314
  %v7395 = vadd.f32 %v6720, %v7317
  %v7396 = vadd.f32 %v6721, %v7322
  %v7397 = vadd.f32 %v6722, %v7325
  %v7398 = vadd.f32 %v6723, %v7330
  %v7399 = vadd.f32 %v6724, %v7333
  %v7400 = vld [vmem:[%s6725] sm:$0xe]
  %v7401 = vld [vmem:[%s6725 + $0x4] sm:$0xf]
  %v7402 = vld [vmem:[%s6725 + $0x8] sm:$0x1]
  %v7403 = vld [vmem:[%s6725 + $0xc] sm:$0xe]
  %v7404 = vld [vmem:[%s6725 + $0x10] sm:$0xf]
  %v7405 = vld [vmem:[%s6725 + $0x14] sm:$0x1]
  %v7406 = vld [vmem:[%s6725 + $0x18] sm:$0xe]
  %v7407 = vld [vmem:[%s6725 + $0x1c] sm:$0xf]
  %v7408 = vld [vmem:[%s6725 + $0x20] sm:$0x1]
  %v7409 = vld [vmem:[%s6725 + $0x24] sm:$0xe]
  %v7410 = vld [vmem:[%s6725 + $0x28] sm:$0xf]
  %v7411 = vld [vmem:[%s6725 + $0x2c] sm:$0x1]
  %v7412 = vld [vmem:[%s6725 + $0x30] sm:$0xe]
  %v7413 = vld [vmem:[%s6725 + $0x34] sm:$0xf]
  %v7414 = vld [vmem:[%s6725 + $0x38] sm:$0x1]
  %v7415 = vld [vmem:[%s6725 + $0x3c] sm:$0xe]
  %v7416 = vld [vmem:[%s6725 + $0x40] sm:$0xf]
  %v7417 = vld [vmem:[%s6725 + $0x44] sm:$0x1]
  %v7418 = vld [vmem:[%s6725 + $0x48] sm:$0xe]
  %v7419 = vld [vmem:[%s6725 + $0x4c] sm:$0xf]
  %v7420 = vld [vmem:[%s6725 + $0x50] sm:$0x1]
  %v7421 = vld [vmem:[%s6725 + $0x54] sm:$0xe]
  %v7422 = vld [vmem:[%s6725 + $0x58] sm:$0xf]
  %v7423 = vld [vmem:[%s6725 + $0x5c] sm:$0x1]
  %v7424 = vld [vmem:[%s6725 + $0x60] sm:$0xe]
  %v7425 = vld [vmem:[%s6725 + $0x64] sm:$0xf]
  %v7426 = vld [vmem:[%s6725 + $0x68] sm:$0x1]
  %v7427 = vld [vmem:[%s6725 + $0x6c] sm:$0xe]
  %v7428 = vld [vmem:[%s6725 + $0x70] sm:$0xf]
  %v7429 = vld [vmem:[%s6725 + $0x74] sm:$0x1]
  %v7430 = vld [vmem:[%s6725 + $0x78] sm:$0xe]
  %v7431 = vld [vmem:[%s6725 + $0x7c] sm:$0xf]
  %v7432 = vld [vmem:[%s6725 + $0x80] sm:$0x1]
  %v7433 = vld [vmem:[%s6725 + $0x84] sm:$0xe]
  %v7434 = vld [vmem:[%s6725 + $0x88] sm:$0xf]
  %v7435 = vld [vmem:[%s6725 + $0x8c] sm:$0x1]
  %v7436 = vld [vmem:[%s6725 + $0x90] sm:$0xe]
  %v7437 = vld [vmem:[%s6725 + $0x94] sm:$0xf]
  %v7438 = vld [vmem:[%s6725 + $0x98] sm:$0x1]
  %v7439 = vld [vmem:[%s6725 + $0x9c] sm:$0xe]
  %v7440 = vld [vmem:[%s6725 + $0xa0] sm:$0xf]
  %v7441 = vld [vmem:[%s6725 + $0xa4] sm:$0x1]
  %v7442 = vld [vmem:[%s6725 + $0xa8] sm:$0xe]
  %v7443 = vld [vmem:[%s6725 + $0xac] sm:$0xf]
  %v7444 = vld [vmem:[%s6725 + $0xb0] sm:$0x1]
  %v7445 = vld [vmem:[%s6725 + $0xb4] sm:$0xe]
  %v7446 = vld [vmem:[%s6725 + $0xb8] sm:$0xf]
  %v7447 = vld [vmem:[%s6725 + $0xbc] sm:$0x1]
  %v7448 = vld [vmem:[%s6725 + $0xf0] sm:$0xe]
  %v7449 = vld [vmem:[%s6725 + $0xf4] sm:$0xf]
  %v7450 = vld [vmem:[%s6725 + $0xf8] sm:$0x1]
  %v7451 = vld [vmem:[%s6725 + $0xfc] sm:$0xe]
  %v7452 = vld [vmem:[%s6725 + $0x100] sm:$0xf]
  %v7453 = vld [vmem:[%s6725 + $0x104] sm:$0x1]
  %v7454 = vld [vmem:[%s6725 + $0x108] sm:$0xe]
  %v7455 = vld [vmem:[%s6725 + $0x10c] sm:$0xf]
  %v7456 = vld [vmem:[%s6725 + $0x110] sm:$0x1]
  %v7457 = vld [vmem:[%s6725 + $0x114] sm:$0xe]
  %v7458 = vld [vmem:[%s6725 + $0x118] sm:$0xf]
  %v7459 = vld [vmem:[%s6725 + $0x11c] sm:$0x1]
  %v7460 = vld [vmem:[%s6725 + $0x120] sm:$0xe]
  %v7461 = vld [vmem:[%s6725 + $0x124] sm:$0xf]
  %v7462 = vld [vmem:[%s6725 + $0x128] sm:$0x1]
  %v7463 = vld [vmem:[%s6725 + $0x12c] sm:$0xe]
  %v7464 = vld [vmem:[%s6725 + $0x130] sm:$0xf]
  %v7465 = vld [vmem:[%s6725 + $0x134] sm:$0x1]
  %v7466 = vld [vmem:[%s6725 + $0x138] sm:$0xe]
  %v7467 = vld [vmem:[%s6725 + $0x13c] sm:$0xf]
  %v7468 = vld [vmem:[%s6725 + $0x140] sm:$0x1]
  %v7469 = vld [vmem:[%s6725 + $0x144] sm:$0xe]
  %v7470 = vld [vmem:[%s6725 + $0x148] sm:$0xf]
  %v7471 = vld [vmem:[%s6725 + $0x14c] sm:$0x1]
  %v7472 = vld [vmem:[%s6725 + $0x150] sm:$0xe]
  %v7473 = vld [vmem:[%s6725 + $0x154] sm:$0xf]
  %v7474 = vld [vmem:[%s6725 + $0x158] sm:$0x1]
  %v7475 = vld [vmem:[%s6725 + $0x15c] sm:$0xe]
  %v7476 = vld [vmem:[%s6725 + $0x160] sm:$0xf]
  %v7477 = vld [vmem:[%s6725 + $0x164] sm:$0x1]
  %v7478 = vld [vmem:[%s6725 + $0x168] sm:$0xe]
  %v7479 = vld [vmem:[%s6725 + $0x16c] sm:$0xf]
  %v7480 = vld [vmem:[%s6725 + $0x170] sm:$0x1]
  %v7481 = vld [vmem:[%s6725 + $0x174] sm:$0xe]
  %v7482 = vld [vmem:[%s6725 + $0x178] sm:$0xf]
  %v7483 = vld [vmem:[%s6725 + $0x17c] sm:$0x1]
  %v7484 = vld [vmem:[%s6725 + $0x180] sm:$0xe]
  %v7485 = vld [vmem:[%s6725 + $0x184] sm:$0xf]
  %v7486 = vld [vmem:[%s6725 + $0x188] sm:$0x1]
  %v7487 = vld [vmem:[%s6725 + $0x18c] sm:$0xe]
  %v7488 = vld [vmem:[%s6725 + $0x190] sm:$0xf]
  %v7489 = vld [vmem:[%s6725 + $0x194] sm:$0x1]
  %v7490 = vld [vmem:[%s6725 + $0x198] sm:$0xe]
  %v7491 = vld [vmem:[%s6725 + $0x19c] sm:$0xf]
  %v7492 = vld [vmem:[%s6725 + $0x1a0] sm:$0x1]
  %v7493 = vld [vmem:[%s6725 + $0x1a4] sm:$0xe]
  %v7494 = vld [vmem:[%s6725 + $0x1a8] sm:$0xf]
  %v7495 = vld [vmem:[%s6725 + $0x1ac] sm:$0x1]
  %v7592 = vrot.slane %v7400, 5
  %v7593 = vrot.slane %v7592, 4
  %v7594 = vrot.slane %v7401, 5
  %v7595 = vsel %vm2086, %v7593, %v7594
  %v7596 = vrot.slane %v7594, 4
  %v7597 = vrot.slane %v7402, 5
  %v7598 = vsel %vm2086, %v7596, %v7597
  %v7599 = vrot.slane %v7403, 5
  %v7600 = vrot.slane %v7599, 4
  %v7601 = vrot.slane %v7404, 5
  %v7602 = vsel %vm2086, %v7600, %v7601
  %v7603 = vrot.slane %v7601, 4
  %v7604 = vrot.slane %v7405, 5
  %v7605 = vsel %vm2086, %v7603, %v7604
  %v7606 = vrot.slane %v7406, 5
  %v7607 = vrot.slane %v7606, 4
  %v7608 = vrot.slane %v7407, 5
  %v7609 = vsel %vm2086, %v7607, %v7608
  %v7610 = vrot.slane %v7608, 4
  %v7611 = vrot.slane %v7408, 5
  %v7612 = vsel %vm2086, %v7610, %v7611
  %v7613 = vrot.slane %v7409, 5
  %v7614 = vrot.slane %v7613, 4
  %v7615 = vrot.slane %v7410, 5
  %v7616 = vsel %vm2086, %v7614, %v7615
  %v7617 = vrot.slane %v7615, 4
  %v7618 = vrot.slane %v7411, 5
  %v7619 = vsel %vm2086, %v7617, %v7618
  %v7620 = vrot.slane %v7412, 5
  %v7621 = vrot.slane %v7620, 4
  %v7622 = vrot.slane %v7413, 5
  %v7623 = vsel %vm2086, %v7621, %v7622
  %v7624 = vrot.slane %v7622, 4
  %v7625 = vrot.slane %v7414, 5
  %v7626 = vsel %vm2086, %v7624, %v7625
  %v7627 = vrot.slane %v7415, 5
  %v7628 = vrot.slane %v7627, 4
  %v7629 = vrot.slane %v7416, 5
  %v7630 = vsel %vm2086, %v7628, %v7629
  %v7631 = vrot.slane %v7629, 4
  %v7632 = vrot.slane %v7417, 5
  %v7633 = vsel %vm2086, %v7631, %v7632
  %v7634 = vrot.slane %v7418, 5
  %v7635 = vrot.slane %v7634, 4
  %v7636 = vrot.slane %v7419, 5
  %v7637 = vsel %vm2086, %v7635, %v7636
  %v7638 = vrot.slane %v7636, 4
  %v7639 = vrot.slane %v7420, 5
  %v7640 = vsel %vm2086, %v7638, %v7639
  %v7641 = vrot.slane %v7421, 5
  %v7642 = vrot.slane %v7641, 4
  %v7643 = vrot.slane %v7422, 5
  %v7644 = vsel %vm2086, %v7642, %v7643
  %v7645 = vrot.slane %v7643, 4
  %v7646 = vrot.slane %v7423, 5
  %v7647 = vsel %vm2086, %v7645, %v7646
  %v7648 = vrot.slane %v7424, 5
  %v7649 = vrot.slane %v7648, 4
  %v7650 = vrot.slane %v7425, 5
  %v7651 = vsel %vm2086, %v7649, %v7650
  %v7652 = vrot.slane %v7650, 4
  %v7653 = vrot.slane %v7426, 5
  %v7654 = vsel %vm2086, %v7652, %v7653
  %v7655 = vrot.slane %v7427, 5
  %v7656 = vrot.slane %v7655, 4
  %v7657 = vrot.slane %v7428, 5
  %v7658 = vsel %vm2086, %v7656, %v7657
  %v7659 = vrot.slane %v7657, 4
  %v7660 = vrot.slane %v7429, 5
  %v7661 = vsel %vm2086, %v7659, %v7660
  %v7662 = vrot.slane %v7430, 5
  %v7663 = vrot.slane %v7662, 4
  %v7664 = vrot.slane %v7431, 5
  %v7665 = vsel %vm2086, %v7663, %v7664
  %v7666 = vrot.slane %v7664, 4
  %v7667 = vrot.slane %v7432, 5
  %v7668 = vsel %vm2086, %v7666, %v7667
  %v7669 = vrot.slane %v7433, 5
  %v7670 = vrot.slane %v7669, 4
  %v7671 = vrot.slane %v7434, 5
  %v7672 = vsel %vm2086, %v7670, %v7671
  %v7673 = vrot.slane %v7671, 4
  %v7674 = vrot.slane %v7435, 5
  %v7675 = vsel %vm2086, %v7673, %v7674
  %v7676 = vrot.slane %v7436, 5
  %v7677 = vrot.slane %v7676, 4
  %v7678 = vrot.slane %v7437, 5
  %v7679 = vsel %vm2086, %v7677, %v7678
  %v7680 = vrot.slane %v7678, 4
  %v7681 = vrot.slane %v7438, 5
  %v7682 = vsel %vm2086, %v7680, %v7681
  %v7683 = vrot.slane %v7439, 5
  %v7684 = vrot.slane %v7683, 4
  %v7685 = vrot.slane %v7440, 5
  %v7686 = vsel %vm2086, %v7684, %v7685
  %v7687 = vrot.slane %v7685, 4
  %v7688 = vrot.slane %v7441, 5
  %v7689 = vsel %vm2086, %v7687, %v7688
  %v7690 = vrot.slane %v7442, 5
  %v7691 = vrot.slane %v7690, 4
  %v7692 = vrot.slane %v7443, 5
  %v7693 = vsel %vm2086, %v7691, %v7692
  %v7694 = vrot.slane %v7692, 4
  %v7695 = vrot.slane %v7444, 5
  %v7696 = vsel %vm2086, %v7694, %v7695
  %v7697 = vrot.slane %v7445, 5
  %v7698 = vrot.slane %v7697, 4
  %v7699 = vrot.slane %v7446, 5
  %v7700 = vsel %vm2086, %v7698, %v7699
  %v7701 = vrot.slane %v7699, 4
  %v7702 = vrot.slane %v7447, 5
  %v7703 = vsel %vm2086, %v7701, %v7702
  %v7704 = vrot.slane %v7448, 5
  %v7705 = vrot.slane %v7704, 4
  %v7706 = vrot.slane %v7449, 5
  %v7707 = vsel %vm2086, %v7705, %v7706
  %v7708 = vrot.slane %v7706, 4
  %v7709 = vrot.slane %v7450, 5
  %v7710 = vsel %vm2086, %v7708, %v7709
  %v7711 = vrot.slane %v7451, 5
  %v7712 = vrot.slane %v7711, 4
  %v7713 = vrot.slane %v7452, 5
  %v7714 = vsel %vm2086, %v7712, %v7713
  %v7715 = vrot.slane %v7713, 4
  %v7716 = vrot.slane %v7453, 5
  %v7717 = vsel %vm2086, %v7715, %v7716
  %v7718 = vrot.slane %v7454, 5
  %v7719 = vrot.slane %v7718, 4
  %v7720 = vrot.slane %v7455, 5
  %v7721 = vsel %vm2086, %v7719, %v7720
  %v7722 = vrot.slane %v7720, 4
  %v7723 = vrot.slane %v7456, 5
  %v7724 = vsel %vm2086, %v7722, %v7723
  %v7725 = vrot.slane %v7457, 5
  %v7726 = vrot.slane %v7725, 4
  %v7727 = vrot.slane %v7458, 5
  %v7728 = vsel %vm2086, %v7726, %v7727
  %v7729 = vrot.slane %v7727, 4
  %v7730 = vrot.slane %v7459, 5
  %v7731 = vsel %vm2086, %v7729, %v7730
  %v7732 = vrot.slane %v7460, 5
  %v7733 = vrot.slane %v7732, 4
  %v7734 = vrot.slane %v7461, 5
  %v7735 = vsel %vm2086, %v7733, %v7734
  %v7736 = vrot.slane %v7734, 4
  %v7737 = vrot.slane %v7462, 5
  %v7738 = vsel %vm2086, %v7736, %v7737
  %v7739 = vrot.slane %v7463, 5
  %v7740 = vrot.slane %v7739, 4
  %v7741 = vrot.slane %v7464, 5
  %v7742 = vsel %vm2086, %v7740, %v7741
  %v7743 = vrot.slane %v7741, 4
  %v7744 = vrot.slane %v7465, 5
  %v7745 = vsel %vm2086, %v7743, %v7744
  %v7746 = vrot.slane %v7466, 5
  %v7747 = vrot.slane %v7746, 4
  %v7748 = vrot.slane %v7467, 5
  %v7749 = vsel %vm2086, %v7747, %v7748
  %v7750 = vrot.slane %v7748, 4
  %v7751 = vrot.slane %v7468, 5
  %v7752 = vsel %vm2086, %v7750, %v7751
  %v7753 = vrot.slane %v7469, 5
  %v7754 = vrot.slane %v7753, 4
  %v7755 = vrot.slane %v7470, 5
  %v7756 = vsel %vm2086, %v7754, %v7755
  %v7757 = vrot.slane %v7755, 4
  %v7758 = vrot.slane %v7471, 5
  %v7759 = vsel %vm2086, %v7757, %v7758
  %v7760 = vrot.slane %v7472, 5
  %v7761 = vrot.slane %v7760, 4
  %v7762 = vrot.slane %v7473, 5
  %v7763 = vsel %vm2086, %v7761, %v7762
  %v7764 = vrot.slane %v7762, 4
  %v7765 = vrot.slane %v7474, 5
  %v7766 = vsel %vm2086, %v7764, %v7765
  %v7767 = vrot.slane %v7475, 5
  %v7768 = vrot.slane %v7767, 4
  %v7769 = vrot.slane %v7476, 5
  %v7770 = vsel %vm2086, %v7768, %v7769
  %v7771 = vrot.slane %v7769, 4
  %v7772 = vrot.slane %v7477, 5
  %v7773 = vsel %vm2086, %v7771, %v7772
  %v7774 = vrot.slane %v7478, 5
  %v7775 = vrot.slane %v7774, 4
  %v7776 = vrot.slane %v7479, 5
  %v7777 = vsel %vm2086, %v7775, %v7776
  %v7778 = vrot.slane %v7776, 4
  %v7779 = vrot.slane %v7480, 5
  %v7780 = vsel %vm2086, %v7778, %v7779
  %v7781 = vrot.slane %v7481, 5
  %v7782 = vrot.slane %v7781, 4
  %v7783 = vrot.slane %v7482, 5
  %v7784 = vsel %vm2086, %v7782, %v7783
  %v7785 = vrot.slane %v7783, 4
  %v7786 = vrot.slane %v7483, 5
  %v7787 = vsel %vm2086, %v7785, %v7786
  %v7788 = vrot.slane %v7484, 5
  %v7789 = vrot.slane %v7788, 4
  %v7790 = vrot.slane %v7485, 5
  %v7791 = vsel %vm2086, %v7789, %v7790
  %v7792 = vrot.slane %v7790, 4
  %v7793 = vrot.slane %v7486, 5
  %v7794 = vsel %vm2086, %v7792, %v7793
  %v7795 = vrot.slane %v7487, 5
  %v7796 = vrot.slane %v7795, 4
  %v7797 = vrot.slane %v7488, 5
  %v7798 = vsel %vm2086, %v7796, %v7797
  %v7799 = vrot.slane %v7797, 4
  %v7800 = vrot.slane %v7489, 5
  %v7801 = vsel %vm2086, %v7799, %v7800
  %v7802 = vrot.slane %v7490, 5
  %v7803 = vrot.slane %v7802, 4
  %v7804 = vrot.slane %v7491, 5
  %v7805 = vsel %vm2086, %v7803, %v7804
  %v7806 = vrot.slane %v7804, 4
  %v7807 = vrot.slane %v7492, 5
  %v7808 = vsel %vm2086, %v7806, %v7807
  %v7809 = vrot.slane %v7493, 5
  %v7810 = vrot.slane %v7809, 4
  %v7811 = vrot.slane %v7494, 5
  %v7812 = vsel %vm2086, %v7810, %v7811
  %v7813 = vrot.slane %v7811, 4
  %v7814 = vrot.slane %v7495, 5
  %v7815 = vsel %vm2086, %v7813, %v7814
  %s7816 = scalar_lea.vmem %s4, 448
  %v7817 = vld [vmem:[%s7816] sm:$0xf]
  %v7818 = vld [vmem:[%s7816 + $0x4] sm:$0xf]
  %v7819 = vld [vmem:[%s7816 + $0x8] sm:$0xf]
  %v7820 = vld [vmem:[%s7816 + $0xc] sm:$0xf]
  %v7821 = vld [vmem:[%s7816 + $0x10] sm:$0xf]
  %v7822 = vld [vmem:[%s7816 + $0x14] sm:$0xf]
  %v7823 = vld [vmem:[%s7816 + $0x18] sm:$0xf]
  %v7824 = vld [vmem:[%s7816 + $0x1c] sm:$0xf]
  %v7825 = vld [vmem:[%s7816 + $0x20] sm:$0xf]
  %v7826 = vld [vmem:[%s7816 + $0x24] sm:$0xf]
  %v7827 = vld [vmem:[%s7816 + $0x28] sm:$0xf]
  %v7828 = vld [vmem:[%s7816 + $0x2c] sm:$0xf]
  %v7829 = vld [vmem:[%s7816 + $0x30] sm:$0xf]
  %v7830 = vld [vmem:[%s7816 + $0x34] sm:$0xf]
  %v7831 = vld [vmem:[%s7816 + $0x38] sm:$0xf]
  %v7832 = vld [vmem:[%s7816 + $0x3c] sm:$0xf]
  %v7833 = vunpack.c.l.b16 %v7595
  %v7834 = vunpack.c.l.b16 %v7598
  %v7835 = vunpack.c.l.b16 %v7602
  %v7836 = vunpack.c.l.b16 %v7605
  %v7837 = vunpack.c.l.b16 %v7609
  %v7838 = vunpack.c.l.b16 %v7612
  %v7839 = vunpack.c.l.b16 %v7616
  %v7840 = vunpack.c.l.b16 %v7619
  %v7841 = vunpack.c.l.b16 %v7623
  %v7842 = vunpack.c.l.b16 %v7626
  %v7843 = vunpack.c.l.b16 %v7630
  %v7844 = vunpack.c.l.b16 %v7633
  %v7845 = vunpack.c.l.b16 %v7637
  %v7846 = vunpack.c.l.b16 %v7640
  %v7847 = vunpack.c.l.b16 %v7644
  %v7848 = vunpack.c.l.b16 %v7647
  %v7849 = vunpack.c.l.b16 %v7651
  %v7850 = vunpack.c.l.b16 %v7654
  %v7851 = vunpack.c.l.b16 %v7658
  %v7852 = vunpack.c.l.b16 %v7661
  %v7853 = vunpack.c.l.b16 %v7665
  %v7854 = vunpack.c.l.b16 %v7668
  %v7855 = vunpack.c.l.b16 %v7672
  %v7856 = vunpack.c.l.b16 %v7675
  %v7857 = vunpack.c.l.b16 %v7679
  %v7858 = vunpack.c.l.b16 %v7682
  %v7859 = vunpack.c.l.b16 %v7686
  %v7860 = vunpack.c.l.b16 %v7689
  %v7861 = vunpack.c.l.b16 %v7693
  %v7862 = vunpack.c.l.b16 %v7696
  %v7863 = vunpack.c.l.b16 %v7700
  %v7864 = vunpack.c.l.b16 %v7703
  %v7865 = vunpack.c.l.b16 %v7707
  %v7866 = vunpack.c.l.b16 %v7710
  %v7867 = vunpack.c.l.b16 %v7714
  %v7868 = vunpack.c.l.b16 %v7717
  %v7869 = vunpack.c.l.b16 %v7721
  %v7870 = vunpack.c.l.b16 %v7724
  %v7871 = vunpack.c.l.b16 %v7728
  %v7872 = vunpack.c.l.b16 %v7731
  %v7873 = vunpack.c.l.b16 %v7735
  %v7874 = vunpack.c.l.b16 %v7738
  %v7875 = vunpack.c.l.b16 %v7742
  %v7876 = vunpack.c.l.b16 %v7745
  %v7877 = vunpack.c.l.b16 %v7749
  %v7878 = vunpack.c.l.b16 %v7752
  %v7879 = vunpack.c.l.b16 %v7756
  %v7880 = vunpack.c.l.b16 %v7759
  %v7881 = vunpack.c.l.b16 %v7763
  %v7882 = vunpack.c.l.b16 %v7766
  %v7883 = vunpack.c.l.b16 %v7770
  %v7884 = vunpack.c.l.b16 %v7773
  %v7885 = vunpack.c.l.b16 %v7777
  %v7886 = vunpack.c.l.b16 %v7780
  %v7887 = vunpack.c.l.b16 %v7784
  %v7888 = vunpack.c.l.b16 %v7787
  %v7889 = vunpack.c.l.b16 %v7791
  %v7890 = vunpack.c.l.b16 %v7794
  %v7891 = vunpack.c.l.b16 %v7798
  %v7892 = vunpack.c.l.b16 %v7801
  %v7893 = vunpack.c.l.b16 %v7805
  %v7894 = vunpack.c.l.b16 %v7808
  %v7895 = vunpack.c.l.b16 %v7812
  %v7896 = vunpack.c.l.b16 %v7815
  %v7897 = vpack.c.b16 %v7834, %v7833
  %v7898 = vpack.c.b16 %v7836, %v7835
  %v7899 = vpack.c.b16 %v7838, %v7837
  %v7900 = vpack.c.b16 %v7840, %v7839
  %v7901 = vpack.c.b16 %v7842, %v7841
  %v7902 = vpack.c.b16 %v7844, %v7843
  %v7903 = vpack.c.b16 %v7846, %v7845
  %v7904 = vpack.c.b16 %v7848, %v7847
  %v7905 = vpack.c.b16 %v7850, %v7849
  %v7906 = vpack.c.b16 %v7852, %v7851
  %v7907 = vpack.c.b16 %v7854, %v7853
  %v7908 = vpack.c.b16 %v7856, %v7855
  %v7909 = vpack.c.b16 %v7858, %v7857
  %v7910 = vpack.c.b16 %v7860, %v7859
  %v7911 = vpack.c.b16 %v7862, %v7861
  %v7912 = vpack.c.b16 %v7864, %v7863
  %v7913 = vpack.c.b16 %v7866, %v7865
  %v7914 = vpack.c.b16 %v7868, %v7867
  %v7915 = vpack.c.b16 %v7870, %v7869
  %v7916 = vpack.c.b16 %v7872, %v7871
  %v7917 = vpack.c.b16 %v7874, %v7873
  %v7918 = vpack.c.b16 %v7876, %v7875
  %v7919 = vpack.c.b16 %v7878, %v7877
  %v7920 = vpack.c.b16 %v7880, %v7879
  %v7921 = vpack.c.b16 %v7882, %v7881
  %v7922 = vpack.c.b16 %v7884, %v7883
  %v7923 = vpack.c.b16 %v7886, %v7885
  %v7924 = vpack.c.b16 %v7888, %v7887
  %v7925 = vpack.c.b16 %v7890, %v7889
  %v7926 = vpack.c.b16 %v7892, %v7891
  %v7927 = vpack.c.b16 %v7894, %v7893
  %v7928 = vpack.c.b16 %v7896, %v7895
  %v7977 = vunpack.c.l.b16 %v7817
  %v7978 = vunpack.c.l.b16 %v7818
  %v7979 = vunpack.c.l.b16 %v7819
  %v7980 = vunpack.c.l.b16 %v7820
  %v7981 = vunpack.c.l.b16 %v7821
  %v7982 = vunpack.c.l.b16 %v7822
  %v7983 = vunpack.c.l.b16 %v7823
  %v7984 = vunpack.c.l.b16 %v7824
  %v7985 = vunpack.c.l.b16 %v7825
  %v7986 = vunpack.c.l.b16 %v7826
  %v7987 = vunpack.c.l.b16 %v7827
  %v7988 = vunpack.c.l.b16 %v7828
  %v7989 = vunpack.c.l.b16 %v7829
  %v7990 = vunpack.c.l.b16 %v7830
  %v7991 = vunpack.c.l.b16 %v7831
  %v7992 = vunpack.c.l.b16 %v7832
  %v7993 = vpack.c.b16 %v7978, %v7977
  %v7994 = vpack.c.b16 %v7980, %v7979
  %v7995 = vpack.c.b16 %v7982, %v7981
  %v7996 = vpack.c.b16 %v7984, %v7983
  %v7997 = vpack.c.b16 %v7986, %v7985
  %v7998 = vpack.c.b16 %v7988, %v7987
  %v7999 = vpack.c.b16 %v7990, %v7989
  %v8000 = vpack.c.b16 %v7992, %v7991
  %8009 = vmatprep.subr.bf16.mxu0 0
  %8010 = vmatpush1.bf16.msra.mxu0 %v8000
  %8011 = vmatprep.subr.bf16.mxu0 0
  %8012 = vmatpush1.bf16.msra.mxu0 %v7999
  %8013 = vmatprep.subr.bf16.mxu0 0
  %8014 = vmatpush1.bf16.msra.mxu0 %v7998
  %8015 = vmatprep.subr.bf16.mxu0 0
  %8016 = vmatpush1.bf16.msra.mxu0 %v7997
  %8017 = vmatprep.subr.bf16.mxu0 0
  %8018 = vmatpush1.bf16.msra.mxu0 %v7996
  %8019 = vmatprep.subr.bf16.mxu0 0
  %8020 = vmatpush1.bf16.msra.mxu0 %v7995
  %8021 = vmatprep.subr.bf16.mxu0 0
  %8022 = vmatpush1.bf16.msra.mxu0 %v7994
  %8023 = vmatprep.subr.bf16.mxu0 0
  %8024 = vmatpush1.bf16.msra.mxu0 %v7993
  %8025 = vmatprep.subr.bf16.mxu0 0
  %8026 = vmatpush2.bf16.msra.mxu0 0
  %8027 = vmatprep.subr.bf16.mxu0 0
  %8028 = vmatpush2.bf16.msra.mxu0 0
  %8029 = vmatprep.subr.bf16.mxu0 0
  %8030 = vmatpush2.bf16.msra.mxu0 0
  %8031 = vmatprep.subr.bf16.mxu0 0
  %8032 = vmatpush2.bf16.msra.mxu0 0
  %8033 = vmatprep.subr.bf16.mxu0 0
  %8034 = vmatpush2.bf16.msra.mxu0 0
  %8035 = vmatprep.subr.bf16.mxu0 0
  %8036 = vmatpush2.bf16.msra.mxu0 0
  %8037 = vmatprep.subr.bf16.mxu0 0
  %8038 = vmatpush2.bf16.msra.mxu0 0
  %8039 = vmatprep.subr.bf16.mxu0 0
  %8040 = vmatpush2.bf16.msra.mxu0 0
  %8041 = vmatprep.mubr.bf16.mxu0 0
  %8042 = vmatmul.mubr.bf16.gmra.mxu0 %v7897
  %v8043 = vpop.f32.mrf.mxu0
  %v8044 = vadd.f32 0.0, %v8043
  %v8045 = vpop.f32.mrf.mxu0
  %v8046 = vpop.f32.mrf.mxu0
  %v8047 = vadd.f32 0.0, %v8046
  %v8048 = vpop.f32.mrf.mxu0
  %8049 = vmatprep.mubr.bf16.mxu0 0
  %8050 = vmatmul.mubr.bf16.gmra.mxu0 %v7898
  %v8051 = vpop.f32.mrf.mxu0
  %v8052 = vadd.f32 0.0, %v8051
  %v8053 = vpop.f32.mrf.mxu0
  %v8054 = vpop.f32.mrf.mxu0
  %v8055 = vadd.f32 0.0, %v8054
  %v8056 = vpop.f32.mrf.mxu0
  %8057 = vmatprep.mubr.bf16.mxu0 0
  %8058 = vmatmul.mubr.bf16.gmra.mxu0 %v7899
  %v8059 = vpop.f32.mrf.mxu0
  %v8060 = vadd.f32 0.0, %v8059
  %v8061 = vpop.f32.mrf.mxu0
  %v8062 = vpop.f32.mrf.mxu0
  %v8063 = vadd.f32 0.0, %v8062
  %v8064 = vpop.f32.mrf.mxu0
  %8065 = vmatprep.mubr.bf16.mxu0 0
  %8066 = vmatmul.mubr.bf16.gmra.mxu0 %v7900
  %v8067 = vpop.f32.mrf.mxu0
  %v8068 = vadd.f32 0.0, %v8067
  %v8069 = vpop.f32.mrf.mxu0
  %v8070 = vpop.f32.mrf.mxu0
  %v8071 = vadd.f32 0.0, %v8070
  %v8072 = vpop.f32.mrf.mxu0
  %8073 = vmatprep.mubr.bf16.mxu0 0
  %8074 = vmatmul.mubr.bf16.gmra.mxu0 %v7901
  %v8075 = vpop.f32.mrf.mxu0
  %v8076 = vadd.f32 0.0, %v8075
  %v8077 = vpop.f32.mrf.mxu0
  %v8078 = vpop.f32.mrf.mxu0
  %v8079 = vadd.f32 0.0, %v8078
  %v8080 = vpop.f32.mrf.mxu0
  %8081 = vmatprep.mubr.bf16.mxu0 0
  %8082 = vmatmul.mubr.bf16.gmra.mxu0 %v7902
  %v8083 = vpop.f32.mrf.mxu0
  %v8084 = vadd.f32 0.0, %v8083
  %v8085 = vpop.f32.mrf.mxu0
  %v8086 = vpop.f32.mrf.mxu0
  %v8087 = vadd.f32 0.0, %v8086
  %v8088 = vpop.f32.mrf.mxu0
  %8089 = vmatprep.mubr.bf16.mxu0 0
  %8090 = vmatmul.mubr.bf16.gmra.mxu0 %v7903
  %v8091 = vpop.f32.mrf.mxu0
  %v8092 = vadd.f32 0.0, %v8091
  %v8093 = vpop.f32.mrf.mxu0
  %v8094 = vpop.f32.mrf.mxu0
  %v8095 = vadd.f32 0.0, %v8094
  %v8096 = vpop.f32.mrf.mxu0
  %8097 = vmatprep.mubr.bf16.mxu0 0
  %8098 = vmatmul.mubr.bf16.gmra.mxu0 %v7904
  %v8099 = vpop.f32.mrf.mxu0
  %v8100 = vadd.f32 0.0, %v8099
  %v8101 = vpop.f32.mrf.mxu0
  %v8102 = vpop.f32.mrf.mxu0
  %v8103 = vadd.f32 0.0, %v8102
  %v8104 = vpop.f32.mrf.mxu0
  %8105 = vmatprep.mubr.bf16.mxu0 0
  %8106 = vmatmul.mubr.bf16.gmra.mxu0 %v7905
  %v8107 = vpop.f32.mrf.mxu0
  %v8108 = vadd.f32 0.0, %v8107
  %v8109 = vpop.f32.mrf.mxu0
  %v8110 = vpop.f32.mrf.mxu0
  %v8111 = vadd.f32 0.0, %v8110
  %v8112 = vpop.f32.mrf.mxu0
  %8113 = vmatprep.mubr.bf16.mxu0 0
  %8114 = vmatmul.mubr.bf16.gmra.mxu0 %v7906
  %v8115 = vpop.f32.mrf.mxu0
  %v8116 = vadd.f32 0.0, %v8115
  %v8117 = vpop.f32.mrf.mxu0
  %v8118 = vpop.f32.mrf.mxu0
  %v8119 = vadd.f32 0.0, %v8118
  %v8120 = vpop.f32.mrf.mxu0
  %8121 = vmatprep.mubr.bf16.mxu0 0
  %8122 = vmatmul.mubr.bf16.gmra.mxu0 %v7907
  %v8123 = vpop.f32.mrf.mxu0
  %v8124 = vadd.f32 0.0, %v8123
  %v8125 = vpop.f32.mrf.mxu0
  %v8126 = vpop.f32.mrf.mxu0
  %v8127 = vadd.f32 0.0, %v8126
  %v8128 = vpop.f32.mrf.mxu0
  %8129 = vmatprep.mubr.bf16.mxu0 0
  %8130 = vmatmul.mubr.bf16.gmra.mxu0 %v7908
  %v8131 = vpop.f32.mrf.mxu0
  %v8132 = vadd.f32 0.0, %v8131
  %v8133 = vpop.f32.mrf.mxu0
  %v8134 = vpop.f32.mrf.mxu0
  %v8135 = vadd.f32 0.0, %v8134
  %v8136 = vpop.f32.mrf.mxu0
  %8137 = vmatprep.mubr.bf16.mxu0 0
  %8138 = vmatmul.mubr.bf16.gmra.mxu0 %v7909
  %v8139 = vpop.f32.mrf.mxu0
  %v8140 = vadd.f32 0.0, %v8139
  %v8141 = vpop.f32.mrf.mxu0
  %v8142 = vpop.f32.mrf.mxu0
  %v8143 = vadd.f32 0.0, %v8142
  %v8144 = vpop.f32.mrf.mxu0
  %8145 = vmatprep.mubr.bf16.mxu0 0
  %8146 = vmatmul.mubr.bf16.gmra.mxu0 %v7910
  %v8147 = vpop.f32.mrf.mxu0
  %v8148 = vadd.f32 0.0, %v8147
  %v8149 = vpop.f32.mrf.mxu0
  %v8150 = vpop.f32.mrf.mxu0
  %v8151 = vadd.f32 0.0, %v8150
  %v8152 = vpop.f32.mrf.mxu0
  %8153 = vmatprep.mubr.bf16.mxu0 0
  %8154 = vmatmul.mubr.bf16.gmra.mxu0 %v7911
  %v8155 = vpop.f32.mrf.mxu0
  %v8156 = vadd.f32 0.0, %v8155
  %v8157 = vpop.f32.mrf.mxu0
  %v8158 = vpop.f32.mrf.mxu0
  %v8159 = vadd.f32 0.0, %v8158
  %v8160 = vpop.f32.mrf.mxu0
  %8161 = vmatprep.mubr.bf16.mxu0 0
  %8162 = vmatmul.mubr.bf16.gmra.mxu0 %v7912
  %v8163 = vpop.f32.mrf.mxu0
  %v8164 = vadd.f32 0.0, %v8163
  %v8165 = vpop.f32.mrf.mxu0
  %v8166 = vpop.f32.mrf.mxu0
  %v8167 = vadd.f32 0.0, %v8166
  %v8168 = vpop.f32.mrf.mxu0
  %8169 = vmatprep.mubr.bf16.mxu0 0
  %8170 = vmatmul.mubr.bf16.gmra.mxu0 %v7913
  %v8171 = vpop.f32.mrf.mxu0
  %v8172 = vadd.f32 0.0, %v8171
  %v8173 = vpop.f32.mrf.mxu0
  %v8174 = vpop.f32.mrf.mxu0
  %v8175 = vadd.f32 0.0, %v8174
  %v8176 = vpop.f32.mrf.mxu0
  %8177 = vmatprep.mubr.bf16.mxu0 0
  %8178 = vmatmul.mubr.bf16.gmra.mxu0 %v7914
  %v8179 = vpop.f32.mrf.mxu0
  %v8180 = vadd.f32 0.0, %v8179
  %v8181 = vpop.f32.mrf.mxu0
  %v8182 = vpop.f32.mrf.mxu0
  %v8183 = vadd.f32 0.0, %v8182
  %v8184 = vpop.f32.mrf.mxu0
  %8185 = vmatprep.mubr.bf16.mxu0 0
  %8186 = vmatmul.mubr.bf16.gmra.mxu0 %v7915
  %v8187 = vpop.f32.mrf.mxu0
  %v8188 = vadd.f32 0.0, %v8187
  %v8189 = vpop.f32.mrf.mxu0
  %v8190 = vpop.f32.mrf.mxu0
  %v8191 = vadd.f32 0.0, %v8190
  %v8192 = vpop.f32.mrf.mxu0
  %8193 = vmatprep.mubr.bf16.mxu0 0
  %8194 = vmatmul.mubr.bf16.gmra.mxu0 %v7916
  %v8195 = vpop.f32.mrf.mxu0
  %v8196 = vadd.f32 0.0, %v8195
  %v8197 = vpop.f32.mrf.mxu0
  %v8198 = vpop.f32.mrf.mxu0
  %v8199 = vadd.f32 0.0, %v8198
  %v8200 = vpop.f32.mrf.mxu0
  %8201 = vmatprep.mubr.bf16.mxu0 0
  %8202 = vmatmul.mubr.bf16.gmra.mxu0 %v7917
  %v8203 = vpop.f32.mrf.mxu0
  %v8204 = vadd.f32 0.0, %v8203
  %v8205 = vpop.f32.mrf.mxu0
  %v8206 = vpop.f32.mrf.mxu0
  %v8207 = vadd.f32 0.0, %v8206
  %v8208 = vpop.f32.mrf.mxu0
  %8209 = vmatprep.mubr.bf16.mxu0 0
  %8210 = vmatmul.mubr.bf16.gmra.mxu0 %v7918
  %v8211 = vpop.f32.mrf.mxu0
  %v8212 = vadd.f32 0.0, %v8211
  %v8213 = vpop.f32.mrf.mxu0
  %v8214 = vpop.f32.mrf.mxu0
  %v8215 = vadd.f32 0.0, %v8214
  %v8216 = vpop.f32.mrf.mxu0
  %8217 = vmatprep.mubr.bf16.mxu0 0
  %8218 = vmatmul.mubr.bf16.gmra.mxu0 %v7919
  %v8219 = vpop.f32.mrf.mxu0
  %v8220 = vadd.f32 0.0, %v8219
  %v8221 = vpop.f32.mrf.mxu0
  %v8222 = vpop.f32.mrf.mxu0
  %v8223 = vadd.f32 0.0, %v8222
  %v8224 = vpop.f32.mrf.mxu0
  %8225 = vmatprep.mubr.bf16.mxu0 0
  %8226 = vmatmul.mubr.bf16.gmra.mxu0 %v7920
  %v8227 = vpop.f32.mrf.mxu0
  %v8228 = vadd.f32 0.0, %v8227
  %v8229 = vpop.f32.mrf.mxu0
  %v8230 = vpop.f32.mrf.mxu0
  %v8231 = vadd.f32 0.0, %v8230
  %v8232 = vpop.f32.mrf.mxu0
  %8233 = vmatprep.mubr.bf16.mxu0 0
  %8234 = vmatmul.mubr.bf16.gmra.mxu0 %v7921
  %v8235 = vpop.f32.mrf.mxu0
  %v8236 = vadd.f32 0.0, %v8235
  %v8237 = vpop.f32.mrf.mxu0
  %v8238 = vpop.f32.mrf.mxu0
  %v8239 = vadd.f32 0.0, %v8238
  %v8240 = vpop.f32.mrf.mxu0
  %8241 = vmatprep.mubr.bf16.mxu0 0
  %8242 = vmatmul.mubr.bf16.gmra.mxu0 %v7922
  %v8243 = vpop.f32.mrf.mxu0
  %v8244 = vadd.f32 0.0, %v8243
  %v8245 = vpop.f32.mrf.mxu0
  %v8246 = vpop.f32.mrf.mxu0
  %v8247 = vadd.f32 0.0, %v8246
  %v8248 = vpop.f32.mrf.mxu0
  %8249 = vmatprep.mubr.bf16.mxu0 0
  %8250 = vmatmul.mubr.bf16.gmra.mxu0 %v7923
  %v8251 = vpop.f32.mrf.mxu0
  %v8252 = vadd.f32 0.0, %v8251
  %v8253 = vpop.f32.mrf.mxu0
  %v8254 = vpop.f32.mrf.mxu0
  %v8255 = vadd.f32 0.0, %v8254
  %v8256 = vpop.f32.mrf.mxu0
  %8257 = vmatprep.mubr.bf16.mxu0 0
  %8258 = vmatmul.mubr.bf16.gmra.mxu0 %v7924
  %v8259 = vpop.f32.mrf.mxu0
  %v8260 = vadd.f32 0.0, %v8259
  %v8261 = vpop.f32.mrf.mxu0
  %v8262 = vpop.f32.mrf.mxu0
  %v8263 = vadd.f32 0.0, %v8262
  %v8264 = vpop.f32.mrf.mxu0
  %8265 = vmatprep.mubr.bf16.mxu0 0
  %8266 = vmatmul.mubr.bf16.gmra.mxu0 %v7925
  %v8267 = vpop.f32.mrf.mxu0
  %v8268 = vadd.f32 0.0, %v8267
  %v8269 = vpop.f32.mrf.mxu0
  %v8270 = vpop.f32.mrf.mxu0
  %v8271 = vadd.f32 0.0, %v8270
  %v8272 = vpop.f32.mrf.mxu0
  %8273 = vmatprep.mubr.bf16.mxu0 0
  %8274 = vmatmul.mubr.bf16.gmra.mxu0 %v7926
  %v8275 = vpop.f32.mrf.mxu0
  %v8276 = vadd.f32 0.0, %v8275
  %v8277 = vpop.f32.mrf.mxu0
  %v8278 = vpop.f32.mrf.mxu0
  %v8279 = vadd.f32 0.0, %v8278
  %v8280 = vpop.f32.mrf.mxu0
  %8281 = vmatprep.mubr.bf16.mxu0 0
  %8282 = vmatmul.mubr.bf16.gmra.mxu0 %v7927
  %v8283 = vpop.f32.mrf.mxu0
  %v8284 = vadd.f32 0.0, %v8283
  %v8285 = vpop.f32.mrf.mxu0
  %v8286 = vpop.f32.mrf.mxu0
  %v8287 = vadd.f32 0.0, %v8286
  %v8288 = vpop.f32.mrf.mxu0
  %8289 = vmatprep.mubr.bf16.mxu0 0
  %8290 = vmatmul.mubr.bf16.gmra.mxu0 %v7928
  %v8291 = vpop.f32.mrf.mxu0
  %v8292 = vadd.f32 0.0, %v8291
  %v8293 = vpop.f32.mrf.mxu0
  %v8294 = vpop.f32.mrf.mxu0
  %v8295 = vadd.f32 0.0, %v8294
  %v8296 = vpop.f32.mrf.mxu0
  %8297 = vdwg.mxu0
  %v8298 = vadd.f32 %v7336, %v8044
  %v8299 = vadd.f32 %v7337, %v8047
  %v8300 = vadd.f32 %v7338, %v8052
  %v8301 = vadd.f32 %v7339, %v8055
  %v8302 = vadd.f32 %v7340, %v8060
  %v8303 = vadd.f32 %v7341, %v8063
  %v8304 = vadd.f32 %v7342, %v8068
  %v8305 = vadd.f32 %v7343, %v8071
  %v8306 = vadd.f32 %v7344, %v8076
  %v8307 = vadd.f32 %v7345, %v8079
  %v8308 = vadd.f32 %v7346, %v8084
  %v8309 = vadd.f32 %v7347, %v8087
  %v8310 = vadd.f32 %v7348, %v8092
  %v8311 = vadd.f32 %v7349, %v8095
  %v8312 = vadd.f32 %v7350, %v8100
  %v8313 = vadd.f32 %v7351, %v8103
  %v8314 = vadd.f32 %v7352, %v8108
  %v8315 = vadd.f32 %v7353, %v8111
  %v8316 = vadd.f32 %v7354, %v8116
  %v8317 = vadd.f32 %v7355, %v8119
  %v8318 = vadd.f32 %v7356, %v8124
  %v8319 = vadd.f32 %v7357, %v8127
  %v8320 = vadd.f32 %v7358, %v8132
  %v8321 = vadd.f32 %v7359, %v8135
  %v8322 = vadd.f32 %v7360, %v8140
  %v8323 = vadd.f32 %v7361, %v8143
  %v8324 = vadd.f32 %v7362, %v8148
  %v8325 = vadd.f32 %v7363, %v8151
  %v8326 = vadd.f32 %v7364, %v8156
  %v8327 = vadd.f32 %v7365, %v8159
  %v8328 = vadd.f32 %v7366, %v8164
  %v8329 = vadd.f32 %v7367, %v8167
  %v8330 = vadd.f32 %v7368, %v8172
  %v8331 = vadd.f32 %v7369, %v8175
  %v8332 = vadd.f32 %v7370, %v8180
  %v8333 = vadd.f32 %v7371, %v8183
  %v8334 = vadd.f32 %v7372, %v8188
  %v8335 = vadd.f32 %v7373, %v8191
  %v8336 = vadd.f32 %v7374, %v8196
  %v8337 = vadd.f32 %v7375, %v8199
  %v8338 = vadd.f32 %v7376, %v8204
  %v8339 = vadd.f32 %v7377, %v8207
  %v8340 = vadd.f32 %v7378, %v8212
  %v8341 = vadd.f32 %v7379, %v8215
  %v8342 = vadd.f32 %v7380, %v8220
  %v8343 = vadd.f32 %v7381, %v8223
  %v8344 = vadd.f32 %v7382, %v8228
  %v8345 = vadd.f32 %v7383, %v8231
  %v8346 = vadd.f32 %v7384, %v8236
  %v8347 = vadd.f32 %v7385, %v8239
  %v8348 = vadd.f32 %v7386, %v8244
  %v8349 = vadd.f32 %v7387, %v8247
  %v8350 = vadd.f32 %v7388, %v8252
  %v8351 = vadd.f32 %v7389, %v8255
  %v8352 = vadd.f32 %v7390, %v8260
  %v8353 = vadd.f32 %v7391, %v8263
  %v8354 = vadd.f32 %v7392, %v8268
  %v8355 = vadd.f32 %v7393, %v8271
  %v8356 = vadd.f32 %v7394, %v8276
  %v8357 = vadd.f32 %v7395, %v8279
  %v8358 = vadd.f32 %v7396, %v8284
  %v8359 = vadd.f32 %v7397, %v8287
  %v8360 = vadd.f32 %v7398, %v8292
  %v8361 = vadd.f32 %v7399, %v8295
  %v8362 = vld [vmem:[%s6725] sm:$0xc]
  %v8363 = vld [vmem:[%s6725 + $0x8] sm:$0x3]
  %v8364 = vld [vmem:[%s6725 + $0xc] sm:$0xc]
  %v8365 = vld [vmem:[%s6725 + $0x14] sm:$0x3]
  %v8366 = vld [vmem:[%s6725 + $0x18] sm:$0xc]
  %v8367 = vld [vmem:[%s6725 + $0x20] sm:$0x3]
  %v8368 = vld [vmem:[%s6725 + $0x24] sm:$0xc]
  %v8369 = vld [vmem:[%s6725 + $0x2c] sm:$0x3]
  %v8370 = vld [vmem:[%s6725 + $0x30] sm:$0xc]
  %v8371 = vld [vmem:[%s6725 + $0x38] sm:$0x3]
  %v8372 = vld [vmem:[%s6725 + $0x3c] sm:$0xc]
  %v8373 = vld [vmem:[%s6725 + $0x44] sm:$0x3]
  %v8374 = vld [vmem:[%s6725 + $0x48] sm:$0xc]
  %v8375 = vld [vmem:[%s6725 + $0x50] sm:$0x3]
  %v8376 = vld [vmem:[%s6725 + $0x54] sm:$0xc]
  %v8377 = vld [vmem:[%s6725 + $0x5c] sm:$0x3]
  %v8378 = vld [vmem:[%s6725 + $0x60] sm:$0xc]
  %v8379 = vld [vmem:[%s6725 + $0x68] sm:$0x3]
  %v8380 = vld [vmem:[%s6725 + $0x6c] sm:$0xc]
  %v8381 = vld [vmem:[%s6725 + $0x74] sm:$0x3]
  %v8382 = vld [vmem:[%s6725 + $0x78] sm:$0xc]
  %v8383 = vld [vmem:[%s6725 + $0x80] sm:$0x3]
  %v8384 = vld [vmem:[%s6725 + $0x84] sm:$0xc]
  %v8385 = vld [vmem:[%s6725 + $0x8c] sm:$0x3]
  %v8386 = vld [vmem:[%s6725 + $0x90] sm:$0xc]
  %v8387 = vld [vmem:[%s6725 + $0x98] sm:$0x3]
  %v8388 = vld [vmem:[%s6725 + $0x9c] sm:$0xc]
  %v8389 = vld [vmem:[%s6725 + $0xa4] sm:$0x3]
  %v8390 = vld [vmem:[%s6725 + $0xa8] sm:$0xc]
  %v8391 = vld [vmem:[%s6725 + $0xb0] sm:$0x3]
  %v8392 = vld [vmem:[%s6725 + $0xb4] sm:$0xc]
  %v8393 = vld [vmem:[%s6725 + $0xbc] sm:$0x3]
  %v8394 = vld [vmem:[%s6725 + $0xf0] sm:$0xc]
  %v8395 = vld [vmem:[%s6725 + $0xf8] sm:$0x3]
  %v8396 = vld [vmem:[%s6725 + $0xfc] sm:$0xc]
  %v8397 = vld [vmem:[%s6725 + $0x104] sm:$0x3]
  %v8398 = vld [vmem:[%s6725 + $0x108] sm:$0xc]
  %v8399 = vld [vmem:[%s6725 + $0x110] sm:$0x3]
  %v8400 = vld [vmem:[%s6725 + $0x114] sm:$0xc]
  %v8401 = vld [vmem:[%s6725 + $0x11c] sm:$0x3]
  %v8402 = vld [vmem:[%s6725 + $0x120] sm:$0xc]
  %v8403 = vld [vmem:[%s6725 + $0x128] sm:$0x3]
  %v8404 = vld [vmem:[%s6725 + $0x12c] sm:$0xc]
  %v8405 = vld [vmem:[%s6725 + $0x134] sm:$0x3]
  %v8406 = vld [vmem:[%s6725 + $0x138] sm:$0xc]
  %v8407 = vld [vmem:[%s6725 + $0x140] sm:$0x3]
  %v8408 = vld [vmem:[%s6725 + $0x144] sm:$0xc]
  %v8409 = vld [vmem:[%s6725 + $0x14c] sm:$0x3]
  %v8410 = vld [vmem:[%s6725 + $0x150] sm:$0xc]
  %v8411 = vld [vmem:[%s6725 + $0x158] sm:$0x3]
  %v8412 = vld [vmem:[%s6725 + $0x15c] sm:$0xc]
  %v8413 = vld [vmem:[%s6725 + $0x164] sm:$0x3]
  %v8414 = vld [vmem:[%s6725 + $0x168] sm:$0xc]
  %v8415 = vld [vmem:[%s6725 + $0x170] sm:$0x3]
  %v8416 = vld [vmem:[%s6725 + $0x174] sm:$0xc]
  %v8417 = vld [vmem:[%s6725 + $0x17c] sm:$0x3]
  %v8418 = vld [vmem:[%s6725 + $0x180] sm:$0xc]
  %v8419 = vld [vmem:[%s6725 + $0x188] sm:$0x3]
  %v8420 = vld [vmem:[%s6725 + $0x18c] sm:$0xc]
  %v8421 = vld [vmem:[%s6725 + $0x194] sm:$0x3]
  %v8422 = vld [vmem:[%s6725 + $0x198] sm:$0xc]
  %v8423 = vld [vmem:[%s6725 + $0x1a0] sm:$0x3]
  %v8424 = vld [vmem:[%s6725 + $0x1a4] sm:$0xc]
  %v8425 = vld [vmem:[%s6725 + $0x1ac] sm:$0x3]
  %v8490 = vrot.slane %v8362, 6
  %v8491 = vrot.slane %v8490, 4
  %v8492 = vrot.slane %v7401, 6
  %v8493 = vsel %vm3420, %v8491, %v8492
  %v8494 = vrot.slane %v8492, 4
  %v8495 = vrot.slane %v8363, 6
  %v8496 = vsel %vm3420, %v8494, %v8495
  %v8497 = vrot.slane %v8364, 6
  %v8498 = vrot.slane %v8497, 4
  %v8499 = vrot.slane %v7404, 6
  %v8500 = vsel %vm3420, %v8498, %v8499
  %v8501 = vrot.slane %v8499, 4
  %v8502 = vrot.slane %v8365, 6
  %v8503 = vsel %vm3420, %v8501, %v8502
  %v8504 = vrot.slane %v8366, 6
  %v8505 = vrot.slane %v8504, 4
  %v8506 = vrot.slane %v7407, 6
  %v8507 = vsel %vm3420, %v8505, %v8506
  %v8508 = vrot.slane %v8506, 4
  %v8509 = vrot.slane %v8367, 6
  %v8510 = vsel %vm3420, %v8508, %v8509
  %v8511 = vrot.slane %v8368, 6
  %v8512 = vrot.slane %v8511, 4
  %v8513 = vrot.slane %v7410, 6
  %v8514 = vsel %vm3420, %v8512, %v8513
  %v8515 = vrot.slane %v8513, 4
  %v8516 = vrot.slane %v8369, 6
  %v8517 = vsel %vm3420, %v8515, %v8516
  %v8518 = vrot.slane %v8370, 6
  %v8519 = vrot.slane %v8518, 4
  %v8520 = vrot.slane %v7413, 6
  %v8521 = vsel %vm3420, %v8519, %v8520
  %v8522 = vrot.slane %v8520, 4
  %v8523 = vrot.slane %v8371, 6
  %v8524 = vsel %vm3420, %v8522, %v8523
  %v8525 = vrot.slane %v8372, 6
  %v8526 = vrot.slane %v8525, 4
  %v8527 = vrot.slane %v7416, 6
  %v8528 = vsel %vm3420, %v8526, %v8527
  %v8529 = vrot.slane %v8527, 4
  %v8530 = vrot.slane %v8373, 6
  %v8531 = vsel %vm3420, %v8529, %v8530
  %v8532 = vrot.slane %v8374, 6
  %v8533 = vrot.slane %v8532, 4
  %v8534 = vrot.slane %v7419, 6
  %v8535 = vsel %vm3420, %v8533, %v8534
  %v8536 = vrot.slane %v8534, 4
  %v8537 = vrot.slane %v8375, 6
  %v8538 = vsel %vm3420, %v8536, %v8537
  %v8539 = vrot.slane %v8376, 6
  %v8540 = vrot.slane %v8539, 4
  %v8541 = vrot.slane %v7422, 6
  %v8542 = vsel %vm3420, %v8540, %v8541
  %v8543 = vrot.slane %v8541, 4
  %v8544 = vrot.slane %v8377, 6
  %v8545 = vsel %vm3420, %v8543, %v8544
  %v8546 = vrot.slane %v8378, 6
  %v8547 = vrot.slane %v8546, 4
  %v8548 = vrot.slane %v7425, 6
  %v8549 = vsel %vm3420, %v8547, %v8548
  %v8550 = vrot.slane %v8548, 4
  %v8551 = vrot.slane %v8379, 6
  %v8552 = vsel %vm3420, %v8550, %v8551
  %v8553 = vrot.slane %v8380, 6
  %v8554 = vrot.slane %v8553, 4
  %v8555 = vrot.slane %v7428, 6
  %v8556 = vsel %vm3420, %v8554, %v8555
  %v8557 = vrot.slane %v8555, 4
  %v8558 = vrot.slane %v8381, 6
  %v8559 = vsel %vm3420, %v8557, %v8558
  %v8560 = vrot.slane %v8382, 6
  %v8561 = vrot.slane %v8560, 4
  %v8562 = vrot.slane %v7431, 6
  %v8563 = vsel %vm3420, %v8561, %v8562
  %v8564 = vrot.slane %v8562, 4
  %v8565 = vrot.slane %v8383, 6
  %v8566 = vsel %vm3420, %v8564, %v8565
  %v8567 = vrot.slane %v8384, 6
  %v8568 = vrot.slane %v8567, 4
  %v8569 = vrot.slane %v7434, 6
  %v8570 = vsel %vm3420, %v8568, %v8569
  %v8571 = vrot.slane %v8569, 4
  %v8572 = vrot.slane %v8385, 6
  %v8573 = vsel %vm3420, %v8571, %v8572
  %v8574 = vrot.slane %v8386, 6
  %v8575 = vrot.slane %v8574, 4
  %v8576 = vrot.slane %v7437, 6
  %v8577 = vsel %vm3420, %v8575, %v8576
  %v8578 = vrot.slane %v8576, 4
  %v8579 = vrot.slane %v8387, 6
  %v8580 = vsel %vm3420, %v8578, %v8579
  %v8581 = vrot.slane %v8388, 6
  %v8582 = vrot.slane %v8581, 4
  %v8583 = vrot.slane %v7440, 6
  %v8584 = vsel %vm3420, %v8582, %v8583
  %v8585 = vrot.slane %v8583, 4
  %v8586 = vrot.slane %v8389, 6
  %v8587 = vsel %vm3420, %v8585, %v8586
  %v8588 = vrot.slane %v8390, 6
  %v8589 = vrot.slane %v8588, 4
  %v8590 = vrot.slane %v7443, 6
  %v8591 = vsel %vm3420, %v8589, %v8590
  %v8592 = vrot.slane %v8590, 4
  %v8593 = vrot.slane %v8391, 6
  %v8594 = vsel %vm3420, %v8592, %v8593
  %v8595 = vrot.slane %v8392, 6
  %v8596 = vrot.slane %v8595, 4
  %v8597 = vrot.slane %v7446, 6
  %v8598 = vsel %vm3420, %v8596, %v8597
  %v8599 = vrot.slane %v8597, 4
  %v8600 = vrot.slane %v8393, 6
  %v8601 = vsel %vm3420, %v8599, %v8600
  %v8602 = vrot.slane %v8394, 6
  %v8603 = vrot.slane %v8602, 4
  %v8604 = vrot.slane %v7449, 6
  %v8605 = vsel %vm3420, %v8603, %v8604
  %v8606 = vrot.slane %v8604, 4
  %v8607 = vrot.slane %v8395, 6
  %v8608 = vsel %vm3420, %v8606, %v8607
  %v8609 = vrot.slane %v8396, 6
  %v8610 = vrot.slane %v8609, 4
  %v8611 = vrot.slane %v7452, 6
  %v8612 = vsel %vm3420, %v8610, %v8611
  %v8613 = vrot.slane %v8611, 4
  %v8614 = vrot.slane %v8397, 6
  %v8615 = vsel %vm3420, %v8613, %v8614
  %v8616 = vrot.slane %v8398, 6
  %v8617 = vrot.slane %v8616, 4
  %v8618 = vrot.slane %v7455, 6
  %v8619 = vsel %vm3420, %v8617, %v8618
  %v8620 = vrot.slane %v8618, 4
  %v8621 = vrot.slane %v8399, 6
  %v8622 = vsel %vm3420, %v8620, %v8621
  %v8623 = vrot.slane %v8400, 6
  %v8624 = vrot.slane %v8623, 4
  %v8625 = vrot.slane %v7458, 6
  %v8626 = vsel %vm3420, %v8624, %v8625
  %v8627 = vrot.slane %v8625, 4
  %v8628 = vrot.slane %v8401, 6
  %v8629 = vsel %vm3420, %v8627, %v8628
  %v8630 = vrot.slane %v8402, 6
  %v8631 = vrot.slane %v8630, 4
  %v8632 = vrot.slane %v7461, 6
  %v8633 = vsel %vm3420, %v8631, %v8632
  %v8634 = vrot.slane %v8632, 4
  %v8635 = vrot.slane %v8403, 6
  %v8636 = vsel %vm3420, %v8634, %v8635
  %v8637 = vrot.slane %v8404, 6
  %v8638 = vrot.slane %v8637, 4
  %v8639 = vrot.slane %v7464, 6
  %v8640 = vsel %vm3420, %v8638, %v8639
  %v8641 = vrot.slane %v8639, 4
  %v8642 = vrot.slane %v8405, 6
  %v8643 = vsel %vm3420, %v8641, %v8642
  %v8644 = vrot.slane %v8406, 6
  %v8645 = vrot.slane %v8644, 4
  %v8646 = vrot.slane %v7467, 6
  %v8647 = vsel %vm3420, %v8645, %v8646
  %v8648 = vrot.slane %v8646, 4
  %v8649 = vrot.slane %v8407, 6
  %v8650 = vsel %vm3420, %v8648, %v8649
  %v8651 = vrot.slane %v8408, 6
  %v8652 = vrot.slane %v8651, 4
  %v8653 = vrot.slane %v7470, 6
  %v8654 = vsel %vm3420, %v8652, %v8653
  %v8655 = vrot.slane %v8653, 4
  %v8656 = vrot.slane %v8409, 6
  %v8657 = vsel %vm3420, %v8655, %v8656
  %v8658 = vrot.slane %v8410, 6
  %v8659 = vrot.slane %v8658, 4
  %v8660 = vrot.slane %v7473, 6
  %v8661 = vsel %vm3420, %v8659, %v8660
  %v8662 = vrot.slane %v8660, 4
  %v8663 = vrot.slane %v8411, 6
  %v8664 = vsel %vm3420, %v8662, %v8663
  %v8665 = vrot.slane %v8412, 6
  %v8666 = vrot.slane %v8665, 4
  %v8667 = vrot.slane %v7476, 6
  %v8668 = vsel %vm3420, %v8666, %v8667
  %v8669 = vrot.slane %v8667, 4
  %v8670 = vrot.slane %v8413, 6
  %v8671 = vsel %vm3420, %v8669, %v8670
  %v8672 = vrot.slane %v8414, 6
  %v8673 = vrot.slane %v8672, 4
  %v8674 = vrot.slane %v7479, 6
  %v8675 = vsel %vm3420, %v8673, %v8674
  %v8676 = vrot.slane %v8674, 4
  %v8677 = vrot.slane %v8415, 6
  %v8678 = vsel %vm3420, %v8676, %v8677
  %v8679 = vrot.slane %v8416, 6
  %v8680 = vrot.slane %v8679, 4
  %v8681 = vrot.slane %v7482, 6
  %v8682 = vsel %vm3420, %v8680, %v8681
  %v8683 = vrot.slane %v8681, 4
  %v8684 = vrot.slane %v8417, 6
  %v8685 = vsel %vm3420, %v8683, %v8684
  %v8686 = vrot.slane %v8418, 6
  %v8687 = vrot.slane %v8686, 4
  %v8688 = vrot.slane %v7485, 6
  %v8689 = vsel %vm3420, %v8687, %v8688
  %v8690 = vrot.slane %v8688, 4
  %v8691 = vrot.slane %v8419, 6
  %v8692 = vsel %vm3420, %v8690, %v8691
  %v8693 = vrot.slane %v8420, 6
  %v8694 = vrot.slane %v8693, 4
  %v8695 = vrot.slane %v7488, 6
  %v8696 = vsel %vm3420, %v8694, %v8695
  %v8697 = vrot.slane %v8695, 4
  %v8698 = vrot.slane %v8421, 6
  %v8699 = vsel %vm3420, %v8697, %v8698
  %v8700 = vrot.slane %v8422, 6
  %v8701 = vrot.slane %v8700, 4
  %v8702 = vrot.slane %v7491, 6
  %v8703 = vsel %vm3420, %v8701, %v8702
  %v8704 = vrot.slane %v8702, 4
  %v8705 = vrot.slane %v8423, 6
  %v8706 = vsel %vm3420, %v8704, %v8705
  %v8707 = vrot.slane %v8424, 6
  %v8708 = vrot.slane %v8707, 4
  %v8709 = vrot.slane %v7494, 6
  %v8710 = vsel %vm3420, %v8708, %v8709
  %v8711 = vrot.slane %v8709, 4
  %v8712 = vrot.slane %v8425, 6
  %v8713 = vsel %vm3420, %v8711, %v8712
  %s8714 = scalar_lea.vmem %s4, 512
  %v8715 = vld [vmem:[%s8714] sm:$0xf]
  %v8716 = vld [vmem:[%s8714 + $0x4] sm:$0xf]
  %v8717 = vld [vmem:[%s8714 + $0x8] sm:$0xf]
  %v8718 = vld [vmem:[%s8714 + $0xc] sm:$0xf]
  %v8719 = vld [vmem:[%s8714 + $0x10] sm:$0xf]
  %v8720 = vld [vmem:[%s8714 + $0x14] sm:$0xf]
  %v8721 = vld [vmem:[%s8714 + $0x18] sm:$0xf]
  %v8722 = vld [vmem:[%s8714 + $0x1c] sm:$0xf]
  %v8723 = vld [vmem:[%s8714 + $0x20] sm:$0xf]
  %v8724 = vld [vmem:[%s8714 + $0x24] sm:$0xf]
  %v8725 = vld [vmem:[%s8714 + $0x28] sm:$0xf]
  %v8726 = vld [vmem:[%s8714 + $0x2c] sm:$0xf]
  %v8727 = vld [vmem:[%s8714 + $0x30] sm:$0xf]
  %v8728 = vld [vmem:[%s8714 + $0x34] sm:$0xf]
  %v8729 = vld [vmem:[%s8714 + $0x38] sm:$0xf]
  %v8730 = vld [vmem:[%s8714 + $0x3c] sm:$0xf]
  %v8731 = vunpack.c.l.b16 %v8493
  %v8732 = vunpack.c.l.b16 %v8496
  %v8733 = vunpack.c.l.b16 %v8500
  %v8734 = vunpack.c.l.b16 %v8503
  %v8735 = vunpack.c.l.b16 %v8507
  %v8736 = vunpack.c.l.b16 %v8510
  %v8737 = vunpack.c.l.b16 %v8514
  %v8738 = vunpack.c.l.b16 %v8517
  %v8739 = vunpack.c.l.b16 %v8521
  %v8740 = vunpack.c.l.b16 %v8524
  %v8741 = vunpack.c.l.b16 %v8528
  %v8742 = vunpack.c.l.b16 %v8531
  %v8743 = vunpack.c.l.b16 %v8535
  %v8744 = vunpack.c.l.b16 %v8538
  %v8745 = vunpack.c.l.b16 %v8542
  %v8746 = vunpack.c.l.b16 %v8545
  %v8747 = vunpack.c.l.b16 %v8549
  %v8748 = vunpack.c.l.b16 %v8552
  %v8749 = vunpack.c.l.b16 %v8556
  %v8750 = vunpack.c.l.b16 %v8559
  %v8751 = vunpack.c.l.b16 %v8563
  %v8752 = vunpack.c.l.b16 %v8566
  %v8753 = vunpack.c.l.b16 %v8570
  %v8754 = vunpack.c.l.b16 %v8573
  %v8755 = vunpack.c.l.b16 %v8577
  %v8756 = vunpack.c.l.b16 %v8580
  %v8757 = vunpack.c.l.b16 %v8584
  %v8758 = vunpack.c.l.b16 %v8587
  %v8759 = vunpack.c.l.b16 %v8591
  %v8760 = vunpack.c.l.b16 %v8594
  %v8761 = vunpack.c.l.b16 %v8598
  %v8762 = vunpack.c.l.b16 %v8601
  %v8763 = vunpack.c.l.b16 %v8605
  %v8764 = vunpack.c.l.b16 %v8608
  %v8765 = vunpack.c.l.b16 %v8612
  %v8766 = vunpack.c.l.b16 %v8615
  %v8767 = vunpack.c.l.b16 %v8619
  %v8768 = vunpack.c.l.b16 %v8622
  %v8769 = vunpack.c.l.b16 %v8626
  %v8770 = vunpack.c.l.b16 %v8629
  %v8771 = vunpack.c.l.b16 %v8633
  %v8772 = vunpack.c.l.b16 %v8636
  %v8773 = vunpack.c.l.b16 %v8640
  %v8774 = vunpack.c.l.b16 %v8643
  %v8775 = vunpack.c.l.b16 %v8647
  %v8776 = vunpack.c.l.b16 %v8650
  %v8777 = vunpack.c.l.b16 %v8654
  %v8778 = vunpack.c.l.b16 %v8657
  %v8779 = vunpack.c.l.b16 %v8661
  %v8780 = vunpack.c.l.b16 %v8664
  %v8781 = vunpack.c.l.b16 %v8668
  %v8782 = vunpack.c.l.b16 %v8671
  %v8783 = vunpack.c.l.b16 %v8675
  %v8784 = vunpack.c.l.b16 %v8678
  %v8785 = vunpack.c.l.b16 %v8682
  %v8786 = vunpack.c.l.b16 %v8685
  %v8787 = vunpack.c.l.b16 %v8689
  %v8788 = vunpack.c.l.b16 %v8692
  %v8789 = vunpack.c.l.b16 %v8696
  %v8790 = vunpack.c.l.b16 %v8699
  %v8791 = vunpack.c.l.b16 %v8703
  %v8792 = vunpack.c.l.b16 %v8706
  %v8793 = vunpack.c.l.b16 %v8710
  %v8794 = vunpack.c.l.b16 %v8713
  %v8795 = vpack.c.b16 %v8732, %v8731
  %v8796 = vpack.c.b16 %v8734, %v8733
  %v8797 = vpack.c.b16 %v8736, %v8735
  %v8798 = vpack.c.b16 %v8738, %v8737
  %v8799 = vpack.c.b16 %v8740, %v8739
  %v8800 = vpack.c.b16 %v8742, %v8741
  %v8801 = vpack.c.b16 %v8744, %v8743
  %v8802 = vpack.c.b16 %v8746, %v8745
  %v8803 = vpack.c.b16 %v8748, %v8747
  %v8804 = vpack.c.b16 %v8750, %v8749
  %v8805 = vpack.c.b16 %v8752, %v8751
  %v8806 = vpack.c.b16 %v8754, %v8753
  %v8807 = vpack.c.b16 %v8756, %v8755
  %v8808 = vpack.c.b16 %v8758, %v8757
  %v8809 = vpack.c.b16 %v8760, %v8759
  %v8810 = vpack.c.b16 %v8762, %v8761
  %v8811 = vpack.c.b16 %v8764, %v8763
  %v8812 = vpack.c.b16 %v8766, %v8765
  %v8813 = vpack.c.b16 %v8768, %v8767
  %v8814 = vpack.c.b16 %v8770, %v8769
  %v8815 = vpack.c.b16 %v8772, %v8771
  %v8816 = vpack.c.b16 %v8774, %v8773
  %v8817 = vpack.c.b16 %v8776, %v8775
  %v8818 = vpack.c.b16 %v8778, %v8777
  %v8819 = vpack.c.b16 %v8780, %v8779
  %v8820 = vpack.c.b16 %v8782, %v8781
  %v8821 = vpack.c.b16 %v8784, %v8783
  %v8822 = vpack.c.b16 %v8786, %v8785
  %v8823 = vpack.c.b16 %v8788, %v8787
  %v8824 = vpack.c.b16 %v8790, %v8789
  %v8825 = vpack.c.b16 %v8792, %v8791
  %v8826 = vpack.c.b16 %v8794, %v8793
  %v8875 = vunpack.c.l.b16 %v8715
  %v8876 = vunpack.c.l.b16 %v8716
  %v8877 = vunpack.c.l.b16 %v8717
  %v8878 = vunpack.c.l.b16 %v8718
  %v8879 = vunpack.c.l.b16 %v8719
  %v8880 = vunpack.c.l.b16 %v8720
  %v8881 = vunpack.c.l.b16 %v8721
  %v8882 = vunpack.c.l.b16 %v8722
  %v8883 = vunpack.c.l.b16 %v8723
  %v8884 = vunpack.c.l.b16 %v8724
  %v8885 = vunpack.c.l.b16 %v8725
  %v8886 = vunpack.c.l.b16 %v8726
  %v8887 = vunpack.c.l.b16 %v8727
  %v8888 = vunpack.c.l.b16 %v8728
  %v8889 = vunpack.c.l.b16 %v8729
  %v8890 = vunpack.c.l.b16 %v8730
  %v8891 = vpack.c.b16 %v8876, %v8875
  %v8892 = vpack.c.b16 %v8878, %v8877
  %v8893 = vpack.c.b16 %v8880, %v8879
  %v8894 = vpack.c.b16 %v8882, %v8881
  %v8895 = vpack.c.b16 %v8884, %v8883
  %v8896 = vpack.c.b16 %v8886, %v8885
  %v8897 = vpack.c.b16 %v8888, %v8887
  %v8898 = vpack.c.b16 %v8890, %v8889
  %8907 = vmatprep.subr.bf16.mxu0 0
  %8908 = vmatpush1.bf16.msra.mxu0 %v8898
  %8909 = vmatprep.subr.bf16.mxu0 0
  %8910 = vmatpush1.bf16.msra.mxu0 %v8897
  %8911 = vmatprep.subr.bf16.mxu0 0
  %8912 = vmatpush1.bf16.msra.mxu0 %v8896
  %8913 = vmatprep.subr.bf16.mxu0 0
  %8914 = vmatpush1.bf16.msra.mxu0 %v8895
  %8915 = vmatprep.subr.bf16.mxu0 0
  %8916 = vmatpush1.bf16.msra.mxu0 %v8894
  %8917 = vmatprep.subr.bf16.mxu0 0
  %8918 = vmatpush1.bf16.msra.mxu0 %v8893
  %8919 = vmatprep.subr.bf16.mxu0 0
  %8920 = vmatpush1.bf16.msra.mxu0 %v8892
  %8921 = vmatprep.subr.bf16.mxu0 0
  %8922 = vmatpush1.bf16.msra.mxu0 %v8891
  %8923 = vmatprep.subr.bf16.mxu0 0
  %8924 = vmatpush2.bf16.msra.mxu0 0
  %8925 = vmatprep.subr.bf16.mxu0 0
  %8926 = vmatpush2.bf16.msra.mxu0 0
  %8927 = vmatprep.subr.bf16.mxu0 0
  %8928 = vmatpush2.bf16.msra.mxu0 0
  %8929 = vmatprep.subr.bf16.mxu0 0
  %8930 = vmatpush2.bf16.msra.mxu0 0
  %8931 = vmatprep.subr.bf16.mxu0 0
  %8932 = vmatpush2.bf16.msra.mxu0 0
  %8933 = vmatprep.subr.bf16.mxu0 0
  %8934 = vmatpush2.bf16.msra.mxu0 0
  %8935 = vmatprep.subr.bf16.mxu0 0
  %8936 = vmatpush2.bf16.msra.mxu0 0
  %8937 = vmatprep.subr.bf16.mxu0 0
  %8938 = vmatpush2.bf16.msra.mxu0 0
  %8939 = vmatprep.mubr.bf16.mxu0 0
  %8940 = vmatmul.mubr.bf16.gmra.mxu0 %v8795
  %v8941 = vpop.f32.mrf.mxu0
  %v8942 = vadd.f32 0.0, %v8941
  %v8943 = vpop.f32.mrf.mxu0
  %v8944 = vpop.f32.mrf.mxu0
  %v8945 = vadd.f32 0.0, %v8944
  %v8946 = vpop.f32.mrf.mxu0
  %8947 = vmatprep.mubr.bf16.mxu0 0
  %8948 = vmatmul.mubr.bf16.gmra.mxu0 %v8796
  %v8949 = vpop.f32.mrf.mxu0
  %v8950 = vadd.f32 0.0, %v8949
  %v8951 = vpop.f32.mrf.mxu0
  %v8952 = vpop.f32.mrf.mxu0
  %v8953 = vadd.f32 0.0, %v8952
  %v8954 = vpop.f32.mrf.mxu0
  %8955 = vmatprep.mubr.bf16.mxu0 0
  %8956 = vmatmul.mubr.bf16.gmra.mxu0 %v8797
  %v8957 = vpop.f32.mrf.mxu0
  %v8958 = vadd.f32 0.0, %v8957
  %v8959 = vpop.f32.mrf.mxu0
  %v8960 = vpop.f32.mrf.mxu0
  %v8961 = vadd.f32 0.0, %v8960
  %v8962 = vpop.f32.mrf.mxu0
  %8963 = vmatprep.mubr.bf16.mxu0 0
  %8964 = vmatmul.mubr.bf16.gmra.mxu0 %v8798
  %v8965 = vpop.f32.mrf.mxu0
  %v8966 = vadd.f32 0.0, %v8965
  %v8967 = vpop.f32.mrf.mxu0
  %v8968 = vpop.f32.mrf.mxu0
  %v8969 = vadd.f32 0.0, %v8968
  %v8970 = vpop.f32.mrf.mxu0
  %8971 = vmatprep.mubr.bf16.mxu0 0
  %8972 = vmatmul.mubr.bf16.gmra.mxu0 %v8799
  %v8973 = vpop.f32.mrf.mxu0
  %v8974 = vadd.f32 0.0, %v8973
  %v8975 = vpop.f32.mrf.mxu0
  %v8976 = vpop.f32.mrf.mxu0
  %v8977 = vadd.f32 0.0, %v8976
  %v8978 = vpop.f32.mrf.mxu0
  %8979 = vmatprep.mubr.bf16.mxu0 0
  %8980 = vmatmul.mubr.bf16.gmra.mxu0 %v8800
  %v8981 = vpop.f32.mrf.mxu0
  %v8982 = vadd.f32 0.0, %v8981
  %v8983 = vpop.f32.mrf.mxu0
  %v8984 = vpop.f32.mrf.mxu0
  %v8985 = vadd.f32 0.0, %v8984
  %v8986 = vpop.f32.mrf.mxu0
  %8987 = vmatprep.mubr.bf16.mxu0 0
  %8988 = vmatmul.mubr.bf16.gmra.mxu0 %v8801
  %v8989 = vpop.f32.mrf.mxu0
  %v8990 = vadd.f32 0.0, %v8989
  %v8991 = vpop.f32.mrf.mxu0
  %v8992 = vpop.f32.mrf.mxu0
  %v8993 = vadd.f32 0.0, %v8992
  %v8994 = vpop.f32.mrf.mxu0
  %8995 = vmatprep.mubr.bf16.mxu0 0
  %8996 = vmatmul.mubr.bf16.gmra.mxu0 %v8802
  %v8997 = vpop.f32.mrf.mxu0
  %v8998 = vadd.f32 0.0, %v8997
  %v8999 = vpop.f32.mrf.mxu0
  %v9000 = vpop.f32.mrf.mxu0
  %v9001 = vadd.f32 0.0, %v9000
  %v9002 = vpop.f32.mrf.mxu0
  %9003 = vmatprep.mubr.bf16.mxu0 0
  %9004 = vmatmul.mubr.bf16.gmra.mxu0 %v8803
  %v9005 = vpop.f32.mrf.mxu0
  %v9006 = vadd.f32 0.0, %v9005
  %v9007 = vpop.f32.mrf.mxu0
  %v9008 = vpop.f32.mrf.mxu0
  %v9009 = vadd.f32 0.0, %v9008
  %v9010 = vpop.f32.mrf.mxu0
  %9011 = vmatprep.mubr.bf16.mxu0 0
  %9012 = vmatmul.mubr.bf16.gmra.mxu0 %v8804
  %v9013 = vpop.f32.mrf.mxu0
  %v9014 = vadd.f32 0.0, %v9013
  %v9015 = vpop.f32.mrf.mxu0
  %v9016 = vpop.f32.mrf.mxu0
  %v9017 = vadd.f32 0.0, %v9016
  %v9018 = vpop.f32.mrf.mxu0
  %9019 = vmatprep.mubr.bf16.mxu0 0
  %9020 = vmatmul.mubr.bf16.gmra.mxu0 %v8805
  %v9021 = vpop.f32.mrf.mxu0
  %v9022 = vadd.f32 0.0, %v9021
  %v9023 = vpop.f32.mrf.mxu0
  %v9024 = vpop.f32.mrf.mxu0
  %v9025 = vadd.f32 0.0, %v9024
  %v9026 = vpop.f32.mrf.mxu0
  %9027 = vmatprep.mubr.bf16.mxu0 0
  %9028 = vmatmul.mubr.bf16.gmra.mxu0 %v8806
  %v9029 = vpop.f32.mrf.mxu0
  %v9030 = vadd.f32 0.0, %v9029
  %v9031 = vpop.f32.mrf.mxu0
  %v9032 = vpop.f32.mrf.mxu0
  %v9033 = vadd.f32 0.0, %v9032
  %v9034 = vpop.f32.mrf.mxu0
  %9035 = vmatprep.mubr.bf16.mxu0 0
  %9036 = vmatmul.mubr.bf16.gmra.mxu0 %v8807
  %v9037 = vpop.f32.mrf.mxu0
  %v9038 = vadd.f32 0.0, %v9037
  %v9039 = vpop.f32.mrf.mxu0
  %v9040 = vpop.f32.mrf.mxu0
  %v9041 = vadd.f32 0.0, %v9040
  %v9042 = vpop.f32.mrf.mxu0
  %9043 = vmatprep.mubr.bf16.mxu0 0
  %9044 = vmatmul.mubr.bf16.gmra.mxu0 %v8808
  %v9045 = vpop.f32.mrf.mxu0
  %v9046 = vadd.f32 0.0, %v9045
  %v9047 = vpop.f32.mrf.mxu0
  %v9048 = vpop.f32.mrf.mxu0
  %v9049 = vadd.f32 0.0, %v9048
  %v9050 = vpop.f32.mrf.mxu0
  %9051 = vmatprep.mubr.bf16.mxu0 0
  %9052 = vmatmul.mubr.bf16.gmra.mxu0 %v8809
  %v9053 = vpop.f32.mrf.mxu0
  %v9054 = vadd.f32 0.0, %v9053
  %v9055 = vpop.f32.mrf.mxu0
  %v9056 = vpop.f32.mrf.mxu0
  %v9057 = vadd.f32 0.0, %v9056
  %v9058 = vpop.f32.mrf.mxu0
  %9059 = vmatprep.mubr.bf16.mxu0 0
  %9060 = vmatmul.mubr.bf16.gmra.mxu0 %v8810
  %v9061 = vpop.f32.mrf.mxu0
  %v9062 = vadd.f32 0.0, %v9061
  %v9063 = vpop.f32.mrf.mxu0
  %v9064 = vpop.f32.mrf.mxu0
  %v9065 = vadd.f32 0.0, %v9064
  %v9066 = vpop.f32.mrf.mxu0
  %9067 = vmatprep.mubr.bf16.mxu0 0
  %9068 = vmatmul.mubr.bf16.gmra.mxu0 %v8811
  %v9069 = vpop.f32.mrf.mxu0
  %v9070 = vadd.f32 0.0, %v9069
  %v9071 = vpop.f32.mrf.mxu0
  %v9072 = vpop.f32.mrf.mxu0
  %v9073 = vadd.f32 0.0, %v9072
  %v9074 = vpop.f32.mrf.mxu0
  %9075 = vmatprep.mubr.bf16.mxu0 0
  %9076 = vmatmul.mubr.bf16.gmra.mxu0 %v8812
  %v9077 = vpop.f32.mrf.mxu0
  %v9078 = vadd.f32 0.0, %v9077
  %v9079 = vpop.f32.mrf.mxu0
  %v9080 = vpop.f32.mrf.mxu0
  %v9081 = vadd.f32 0.0, %v9080
  %v9082 = vpop.f32.mrf.mxu0
  %9083 = vmatprep.mubr.bf16.mxu0 0
  %9084 = vmatmul.mubr.bf16.gmra.mxu0 %v8813
  %v9085 = vpop.f32.mrf.mxu0
  %v9086 = vadd.f32 0.0, %v9085
  %v9087 = vpop.f32.mrf.mxu0
  %v9088 = vpop.f32.mrf.mxu0
  %v9089 = vadd.f32 0.0, %v9088
  %v9090 = vpop.f32.mrf.mxu0
  %9091 = vmatprep.mubr.bf16.mxu0 0
  %9092 = vmatmul.mubr.bf16.gmra.mxu0 %v8814
  %v9093 = vpop.f32.mrf.mxu0
  %v9094 = vadd.f32 0.0, %v9093
  %v9095 = vpop.f32.mrf.mxu0
  %v9096 = vpop.f32.mrf.mxu0
  %v9097 = vadd.f32 0.0, %v9096
  %v9098 = vpop.f32.mrf.mxu0
  %9099 = vmatprep.mubr.bf16.mxu0 0
  %9100 = vmatmul.mubr.bf16.gmra.mxu0 %v8815
  %v9101 = vpop.f32.mrf.mxu0
  %v9102 = vadd.f32 0.0, %v9101
  %v9103 = vpop.f32.mrf.mxu0
  %v9104 = vpop.f32.mrf.mxu0
  %v9105 = vadd.f32 0.0, %v9104
  %v9106 = vpop.f32.mrf.mxu0
  %9107 = vmatprep.mubr.bf16.mxu0 0
  %9108 = vmatmul.mubr.bf16.gmra.mxu0 %v8816
  %v9109 = vpop.f32.mrf.mxu0
  %v9110 = vadd.f32 0.0, %v9109
  %v9111 = vpop.f32.mrf.mxu0
  %v9112 = vpop.f32.mrf.mxu0
  %v9113 = vadd.f32 0.0, %v9112
  %v9114 = vpop.f32.mrf.mxu0
  %9115 = vmatprep.mubr.bf16.mxu0 0
  %9116 = vmatmul.mubr.bf16.gmra.mxu0 %v8817
  %v9117 = vpop.f32.mrf.mxu0
  %v9118 = vadd.f32 0.0, %v9117
  %v9119 = vpop.f32.mrf.mxu0
  %v9120 = vpop.f32.mrf.mxu0
  %v9121 = vadd.f32 0.0, %v9120
  %v9122 = vpop.f32.mrf.mxu0
  %9123 = vmatprep.mubr.bf16.mxu0 0
  %9124 = vmatmul.mubr.bf16.gmra.mxu0 %v8818
  %v9125 = vpop.f32.mrf.mxu0
  %v9126 = vadd.f32 0.0, %v9125
  %v9127 = vpop.f32.mrf.mxu0
  %v9128 = vpop.f32.mrf.mxu0
  %v9129 = vadd.f32 0.0, %v9128
  %v9130 = vpop.f32.mrf.mxu0
  %9131 = vmatprep.mubr.bf16.mxu0 0
  %9132 = vmatmul.mubr.bf16.gmra.mxu0 %v8819
  %v9133 = vpop.f32.mrf.mxu0
  %v9134 = vadd.f32 0.0, %v9133
  %v9135 = vpop.f32.mrf.mxu0
  %v9136 = vpop.f32.mrf.mxu0
  %v9137 = vadd.f32 0.0, %v9136
  %v9138 = vpop.f32.mrf.mxu0
  %9139 = vmatprep.mubr.bf16.mxu0 0
  %9140 = vmatmul.mubr.bf16.gmra.mxu0 %v8820
  %v9141 = vpop.f32.mrf.mxu0
  %v9142 = vadd.f32 0.0, %v9141
  %v9143 = vpop.f32.mrf.mxu0
  %v9144 = vpop.f32.mrf.mxu0
  %v9145 = vadd.f32 0.0, %v9144
  %v9146 = vpop.f32.mrf.mxu0
  %9147 = vmatprep.mubr.bf16.mxu0 0
  %9148 = vmatmul.mubr.bf16.gmra.mxu0 %v8821
  %v9149 = vpop.f32.mrf.mxu0
  %v9150 = vadd.f32 0.0, %v9149
  %v9151 = vpop.f32.mrf.mxu0
  %v9152 = vpop.f32.mrf.mxu0
  %v9153 = vadd.f32 0.0, %v9152
  %v9154 = vpop.f32.mrf.mxu0
  %9155 = vmatprep.mubr.bf16.mxu0 0
  %9156 = vmatmul.mubr.bf16.gmra.mxu0 %v8822
  %v9157 = vpop.f32.mrf.mxu0
  %v9158 = vadd.f32 0.0, %v9157
  %v9159 = vpop.f32.mrf.mxu0
  %v9160 = vpop.f32.mrf.mxu0
  %v9161 = vadd.f32 0.0, %v9160
  %v9162 = vpop.f32.mrf.mxu0
  %9163 = vmatprep.mubr.bf16.mxu0 0
  %9164 = vmatmul.mubr.bf16.gmra.mxu0 %v8823
  %v9165 = vpop.f32.mrf.mxu0
  %v9166 = vadd.f32 0.0, %v9165
  %v9167 = vpop.f32.mrf.mxu0
  %v9168 = vpop.f32.mrf.mxu0
  %v9169 = vadd.f32 0.0, %v9168
  %v9170 = vpop.f32.mrf.mxu0
  %9171 = vmatprep.mubr.bf16.mxu0 0
  %9172 = vmatmul.mubr.bf16.gmra.mxu0 %v8824
  %v9173 = vpop.f32.mrf.mxu0
  %v9174 = vadd.f32 0.0, %v9173
  %v9175 = vpop.f32.mrf.mxu0
  %v9176 = vpop.f32.mrf.mxu0
  %v9177 = vadd.f32 0.0, %v9176
  %v9178 = vpop.f32.mrf.mxu0
  %9179 = vmatprep.mubr.bf16.mxu0 0
  %9180 = vmatmul.mubr.bf16.gmra.mxu0 %v8825
  %v9181 = vpop.f32.mrf.mxu0
  %v9182 = vadd.f32 0.0, %v9181
  %v9183 = vpop.f32.mrf.mxu0
  %v9184 = vpop.f32.mrf.mxu0
  %v9185 = vadd.f32 0.0, %v9184
  %v9186 = vpop.f32.mrf.mxu0
  %9187 = vmatprep.mubr.bf16.mxu0 0
  %9188 = vmatmul.mubr.bf16.gmra.mxu0 %v8826
  %v9189 = vpop.f32.mrf.mxu0
  %v9190 = vadd.f32 0.0, %v9189
  %v9191 = vpop.f32.mrf.mxu0
  %v9192 = vpop.f32.mrf.mxu0
  %v9193 = vadd.f32 0.0, %v9192
  %v9194 = vpop.f32.mrf.mxu0
  %9195 = vdwg.mxu0
  %v9196 = vadd.f32 %v8298, %v8942
  %v9197 = vadd.f32 %v8299, %v8945
  %v9198 = vadd.f32 %v8300, %v8950
  %v9199 = vadd.f32 %v8301, %v8953
  %v9200 = vadd.f32 %v8302, %v8958
  %v9201 = vadd.f32 %v8303, %v8961
  %v9202 = vadd.f32 %v8304, %v8966
  %v9203 = vadd.f32 %v8305, %v8969
  %v9204 = vadd.f32 %v8306, %v8974
  %v9205 = vadd.f32 %v8307, %v8977
  %v9206 = vadd.f32 %v8308, %v8982
  %v9207 = vadd.f32 %v8309, %v8985
  %v9208 = vadd.f32 %v8310, %v8990
  %v9209 = vadd.f32 %v8311, %v8993
  %v9210 = vadd.f32 %v8312, %v8998
  %v9211 = vadd.f32 %v8313, %v9001
  %v9212 = vadd.f32 %v8314, %v9006
  %v9213 = vadd.f32 %v8315, %v9009
  %v9214 = vadd.f32 %v8316, %v9014
  %v9215 = vadd.f32 %v8317, %v9017
  %v9216 = vadd.f32 %v8318, %v9022
  %v9217 = vadd.f32 %v8319, %v9025
  %v9218 = vadd.f32 %v8320, %v9030
  %v9219 = vadd.f32 %v8321, %v9033
  %v9220 = vadd.f32 %v8322, %v9038
  %v9221 = vadd.f32 %v8323, %v9041
  %v9222 = vadd.f32 %v8324, %v9046
  %v9223 = vadd.f32 %v8325, %v9049
  %v9224 = vadd.f32 %v8326, %v9054
  %v9225 = vadd.f32 %v8327, %v9057
  %v9226 = vadd.f32 %v8328, %v9062
  %v9227 = vadd.f32 %v8329, %v9065
  %v9228 = vadd.f32 %v8330, %v9070
  %v9229 = vadd.f32 %v8331, %v9073
  %v9230 = vadd.f32 %v8332, %v9078
  %v9231 = vadd.f32 %v8333, %v9081
  %v9232 = vadd.f32 %v8334, %v9086
  %v9233 = vadd.f32 %v8335, %v9089
  %v9234 = vadd.f32 %v8336, %v9094
  %v9235 = vadd.f32 %v8337, %v9097
  %v9236 = vadd.f32 %v8338, %v9102
  %v9237 = vadd.f32 %v8339, %v9105
  %v9238 = vadd.f32 %v8340, %v9110
  %v9239 = vadd.f32 %v8341, %v9113
  %v9240 = vadd.f32 %v8342, %v9118
  %v9241 = vadd.f32 %v8343, %v9121
  %v9242 = vadd.f32 %v8344, %v9126
  %v9243 = vadd.f32 %v8345, %v9129
  %v9244 = vadd.f32 %v8346, %v9134
  %v9245 = vadd.f32 %v8347, %v9137
  %v9246 = vadd.f32 %v8348, %v9142
  %v9247 = vadd.f32 %v8349, %v9145
  %v9248 = vadd.f32 %v8350, %v9150
  %v9249 = vadd.f32 %v8351, %v9153
  %v9250 = vadd.f32 %v8352, %v9158
  %v9251 = vadd.f32 %v8353, %v9161
  %v9252 = vadd.f32 %v8354, %v9166
  %v9253 = vadd.f32 %v8355, %v9169
  %v9254 = vadd.f32 %v8356, %v9174
  %v9255 = vadd.f32 %v8357, %v9177
  %v9256 = vadd.f32 %v8358, %v9182
  %v9257 = vadd.f32 %v8359, %v9185
  %v9258 = vadd.f32 %v8360, %v9190
  %v9259 = vadd.f32 %v8361, %v9193
  %v9260 = vld [vmem:[%s5] sm:$0x1]
  %v9261 = vld [vmem:[%s6] sm:$0x1]
  %v9262 = vadd.f32 %v9196, %v9197
  %v9263 = vadd.f32 %v9262, %v9198
  %v9264 = vadd.f32 %v9263, %v9199
  %v9265 = vadd.f32 %v9264, %v9200
  %v9266 = vadd.f32 %v9265, %v9201
  %v9267 = vadd.f32 %v9266, %v9202
  %v9268 = vadd.f32 %v9267, %v9203
  %v9269 = vadd.f32 %v9268, %v9204
  %v9270 = vadd.f32 %v9269, %v9205
  %v9271 = vadd.f32 %v9270, %v9206
  %v9272 = vadd.f32 %v9271, %v9207
  %v9273 = vadd.f32 %v9272, %v9208
  %v9274 = vadd.f32 %v9273, %v9209
  %v9275 = vadd.f32 %v9274, %v9210
  %v9276 = vadd.f32 %v9275, %v9211
  %v9277 = vadd.f32 %v9276, %v9212
  %v9278 = vadd.f32 %v9277, %v9213
  %v9279 = vadd.f32 %v9278, %v9214
  %v9280 = vadd.f32 %v9279, %v9215
  %v9281 = vadd.f32 %v9280, %v9216
  %v9282 = vadd.f32 %v9281, %v9217
  %v9283 = vadd.f32 %v9282, %v9218
  %v9284 = vadd.f32 %v9283, %v9219
  %v9285 = vadd.f32 %v9284, %v9220
  %v9286 = vadd.f32 %v9285, %v9221
  %v9287 = vadd.f32 %v9286, %v9222
  %v9288 = vadd.f32 %v9287, %v9223
  %v9289 = vadd.f32 %v9288, %v9224
  %v9290 = vadd.f32 %v9289, %v9225
  %v9291 = vadd.f32 %v9290, %v9226
  %v9292 = vadd.f32 %v9291, %v9227
  %v9293 = vadd.f32 %v9292, %v9228
  %v9294 = vadd.f32 %v9293, %v9229
  %v9295 = vadd.f32 %v9294, %v9230
  %v9296 = vadd.f32 %v9295, %v9231
  %v9297 = vadd.f32 %v9296, %v9232
  %v9298 = vadd.f32 %v9297, %v9233
  %v9299 = vadd.f32 %v9298, %v9234
  %v9300 = vadd.f32 %v9299, %v9235
  %v9301 = vadd.f32 %v9300, %v9236
  %v9302 = vadd.f32 %v9301, %v9237
  %v9303 = vadd.f32 %v9302, %v9238
  %v9304 = vadd.f32 %v9303, %v9239
  %v9305 = vadd.f32 %v9304, %v9240
  %v9306 = vadd.f32 %v9305, %v9241
  %v9307 = vadd.f32 %v9306, %v9242
  %v9308 = vadd.f32 %v9307, %v9243
  %v9309 = vadd.f32 %v9308, %v9244
  %v9310 = vadd.f32 %v9309, %v9245
  %v9311 = vadd.f32 %v9310, %v9246
  %v9312 = vadd.f32 %v9311, %v9247
  %v9313 = vadd.f32 %v9312, %v9248
  %v9314 = vadd.f32 %v9313, %v9249
  %v9315 = vadd.f32 %v9314, %v9250
  %v9316 = vadd.f32 %v9315, %v9251
  %v9317 = vadd.f32 %v9316, %v9252
  %v9318 = vadd.f32 %v9317, %v9253
  %v9319 = vadd.f32 %v9318, %v9254
  %v9320 = vadd.f32 %v9319, %v9255
  %v9321 = vadd.f32 %v9320, %v9256
  %v9322 = vadd.f32 %v9321, %v9257
  %v9323 = vadd.f32 %v9322, %v9258
  %v9324 = vadd.f32 %v9323, %v9259
  %v9325 = vrot.slane %v9324, 4
  %v9326 = vadd.f32 %v9324, %v9325
  %v9327 = vrot.slane %v9326, 2
  %v9328 = vadd.f32 %v9326, %v9327
  %v9329 = vrot.slane %v9328, 1
  %v9330 = vadd.f32 %v9328, %v9329
  %v9331 = vmul.f32 %v9196, %v9196
  %v9332 = vmul.f32 %v9197, %v9197
  %v9333 = vmul.f32 %v9198, %v9198
  %v9334 = vmul.f32 %v9199, %v9199
  %v9335 = vmul.f32 %v9200, %v9200
  %v9336 = vmul.f32 %v9201, %v9201
  %v9337 = vmul.f32 %v9202, %v9202
  %v9338 = vmul.f32 %v9203, %v9203
  %v9339 = vmul.f32 %v9204, %v9204
  %v9340 = vmul.f32 %v9205, %v9205
  %v9341 = vmul.f32 %v9206, %v9206
  %v9342 = vmul.f32 %v9207, %v9207
  %v9343 = vmul.f32 %v9208, %v9208
  %v9344 = vmul.f32 %v9209, %v9209
  %v9345 = vmul.f32 %v9210, %v9210
  %v9346 = vmul.f32 %v9211, %v9211
  %v9347 = vmul.f32 %v9212, %v9212
  %v9348 = vmul.f32 %v9213, %v9213
  %v9349 = vmul.f32 %v9214, %v9214
  %v9350 = vmul.f32 %v9215, %v9215
  %v9351 = vmul.f32 %v9216, %v9216
  %v9352 = vmul.f32 %v9217, %v9217
  %v9353 = vmul.f32 %v9218, %v9218
  %v9354 = vmul.f32 %v9219, %v9219
  %v9355 = vmul.f32 %v9220, %v9220
  %v9356 = vmul.f32 %v9221, %v9221
  %v9357 = vmul.f32 %v9222, %v9222
  %v9358 = vmul.f32 %v9223, %v9223
  %v9359 = vmul.f32 %v9224, %v9224
  %v9360 = vmul.f32 %v9225, %v9225
  %v9361 = vmul.f32 %v9226, %v9226
  %v9362 = vmul.f32 %v9227, %v9227
  %v9363 = vmul.f32 %v9228, %v9228
  %v9364 = vmul.f32 %v9229, %v9229
  %v9365 = vmul.f32 %v9230, %v9230
  %v9366 = vmul.f32 %v9231, %v9231
  %v9367 = vmul.f32 %v9232, %v9232
  %v9368 = vmul.f32 %v9233, %v9233
  %v9369 = vmul.f32 %v9234, %v9234
  %v9370 = vmul.f32 %v9235, %v9235
  %v9371 = vmul.f32 %v9236, %v9236
  %v9372 = vmul.f32 %v9237, %v9237
  %v9373 = vmul.f32 %v9238, %v9238
  %v9374 = vmul.f32 %v9239, %v9239
  %v9375 = vmul.f32 %v9240, %v9240
  %v9376 = vmul.f32 %v9241, %v9241
  %v9377 = vmul.f32 %v9242, %v9242
  %v9378 = vmul.f32 %v9243, %v9243
  %v9379 = vmul.f32 %v9244, %v9244
  %v9380 = vmul.f32 %v9245, %v9245
  %v9381 = vmul.f32 %v9246, %v9246
  %v9382 = vmul.f32 %v9247, %v9247
  %v9383 = vmul.f32 %v9248, %v9248
  %v9384 = vmul.f32 %v9249, %v9249
  %v9385 = vmul.f32 %v9250, %v9250
  %v9386 = vmul.f32 %v9251, %v9251
  %v9387 = vmul.f32 %v9252, %v9252
  %v9388 = vmul.f32 %v9253, %v9253
  %v9389 = vmul.f32 %v9254, %v9254
  %v9390 = vmul.f32 %v9255, %v9255
  %v9391 = vmul.f32 %v9256, %v9256
  %v9392 = vmul.f32 %v9257, %v9257
  %v9393 = vmul.f32 %v9258, %v9258
  %v9394 = vmul.f32 %v9259, %v9259
  %v9395 = vadd.f32 %v9331, %v9332
  %v9396 = vadd.f32 %v9395, %v9333
  %v9397 = vadd.f32 %v9396, %v9334
  %v9398 = vadd.f32 %v9397, %v9335
  %v9399 = vadd.f32 %v9398, %v9336
  %v9400 = vadd.f32 %v9399, %v9337
  %v9401 = vadd.f32 %v9400, %v9338
  %v9402 = vadd.f32 %v9401, %v9339
  %v9403 = vadd.f32 %v9402, %v9340
  %v9404 = vadd.f32 %v9403, %v9341
  %v9405 = vadd.f32 %v9404, %v9342
  %v9406 = vadd.f32 %v9405, %v9343
  %v9407 = vadd.f32 %v9406, %v9344
  %v9408 = vadd.f32 %v9407, %v9345
  %v9409 = vadd.f32 %v9408, %v9346
  %v9410 = vadd.f32 %v9409, %v9347
  %v9411 = vadd.f32 %v9410, %v9348
  %v9412 = vadd.f32 %v9411, %v9349
  %v9413 = vadd.f32 %v9412, %v9350
  %v9414 = vadd.f32 %v9413, %v9351
  %v9415 = vadd.f32 %v9414, %v9352
  %v9416 = vadd.f32 %v9415, %v9353
  %v9417 = vadd.f32 %v9416, %v9354
  %v9418 = vadd.f32 %v9417, %v9355
  %v9419 = vadd.f32 %v9418, %v9356
  %v9420 = vadd.f32 %v9419, %v9357
  %v9421 = vadd.f32 %v9420, %v9358
  %v9422 = vadd.f32 %v9421, %v9359
  %v9423 = vadd.f32 %v9422, %v9360
  %v9424 = vadd.f32 %v9423, %v9361
  %v9425 = vadd.f32 %v9424, %v9362
  %v9426 = vadd.f32 %v9425, %v9363
  %v9427 = vadd.f32 %v9426, %v9364
  %v9428 = vadd.f32 %v9427, %v9365
  %v9429 = vadd.f32 %v9428, %v9366
  %v9430 = vadd.f32 %v9429, %v9367
  %v9431 = vadd.f32 %v9430, %v9368
  %v9432 = vadd.f32 %v9431, %v9369
  %v9433 = vadd.f32 %v9432, %v9370
  %v9434 = vadd.f32 %v9433, %v9371
  %v9435 = vadd.f32 %v9434, %v9372
  %v9436 = vadd.f32 %v9435, %v9373
  %v9437 = vadd.f32 %v9436, %v9374
  %v9438 = vadd.f32 %v9437, %v9375
  %v9439 = vadd.f32 %v9438, %v9376
  %v9440 = vadd.f32 %v9439, %v9377
  %v9441 = vadd.f32 %v9440, %v9378
  %v9442 = vadd.f32 %v9441, %v9379
  %v9443 = vadd.f32 %v9442, %v9380
  %v9444 = vadd.f32 %v9443, %v9381
  %v9445 = vadd.f32 %v9444, %v9382
  %v9446 = vadd.f32 %v9445, %v9383
  %v9447 = vadd.f32 %v9446, %v9384
  %v9448 = vadd.f32 %v9447, %v9385
  %v9449 = vadd.f32 %v9448, %v9386
  %v9450 = vadd.f32 %v9449, %v9387
  %v9451 = vadd.f32 %v9450, %v9388
  %v9452 = vadd.f32 %v9451, %v9389
  %v9453 = vadd.f32 %v9452, %v9390
  %v9454 = vadd.f32 %v9453, %v9391
  %v9455 = vadd.f32 %v9454, %v9392
  %v9456 = vadd.f32 %v9455, %v9393
  %v9457 = vadd.f32 %v9456, %v9394
  %v9458 = vrot.slane %v9457, 4
  %v9459 = vadd.f32 %v9457, %v9458
  %v9460 = vrot.slane %v9459, 2
  %v9461 = vadd.f32 %v9459, %v9460
  %v9462 = vrot.slane %v9461, 1
  %v9463 = vadd.f32 %v9461, %v9462
  %v9464 = vmul.f32 %v9330, 0.001953125
  %v9465 = vmul.f32 %v9463, 0.001953125
  %v9466 = vmul.f32 %v9464, %v9464
  %v9467 = vsub.f32 %v9465, %v9466
  %v9468 = vmax.f32 %v9467, 0.0
  %v9469 = vadd.f32 %v9468, 1e-05
  %v9470 = vrsqrt.pop %v9469
  %v9471 = vmul.f32 %v9470, %v9260
  %v9472 = vlaneseq
  %v9473 = vshrl.u32 %v9472, 7
  %v9474 = vsub.s32 0, %v9473
  %v9475 = vrot.slane %v9471, %v9474
  %v9476 = vmul.f32 %v9196, %v9475
  %v9477 = vmul.f32 %v9197, %v9475
  %v9478 = vmul.f32 %v9198, %v9475
  %v9479 = vmul.f32 %v9199, %v9475
  %v9480 = vmul.f32 %v9200, %v9475
  %v9481 = vmul.f32 %v9201, %v9475
  %v9482 = vmul.f32 %v9202, %v9475
  %v9483 = vmul.f32 %v9203, %v9475
  %v9484 = vmul.f32 %v9204, %v9475
  %v9485 = vmul.f32 %v9205, %v9475
  %v9486 = vmul.f32 %v9206, %v9475
  %v9487 = vmul.f32 %v9207, %v9475
  %v9488 = vmul.f32 %v9208, %v9475
  %v9489 = vmul.f32 %v9209, %v9475
  %v9490 = vmul.f32 %v9210, %v9475
  %v9491 = vmul.f32 %v9211, %v9475
  %v9492 = vmul.f32 %v9212, %v9475
  %v9493 = vmul.f32 %v9213, %v9475
  %v9494 = vmul.f32 %v9214, %v9475
  %v9495 = vmul.f32 %v9215, %v9475
  %v9496 = vmul.f32 %v9216, %v9475
  %v9497 = vmul.f32 %v9217, %v9475
  %v9498 = vmul.f32 %v9218, %v9475
  %v9499 = vmul.f32 %v9219, %v9475
  %v9500 = vmul.f32 %v9220, %v9475
  %v9501 = vmul.f32 %v9221, %v9475
  %v9502 = vmul.f32 %v9222, %v9475
  %v9503 = vmul.f32 %v9223, %v9475
  %v9504 = vmul.f32 %v9224, %v9475
  %v9505 = vmul.f32 %v9225, %v9475
  %v9506 = vmul.f32 %v9226, %v9475
  %v9507 = vmul.f32 %v9227, %v9475
  %v9508 = vmul.f32 %v9228, %v9475
  %v9509 = vmul.f32 %v9229, %v9475
  %v9510 = vmul.f32 %v9230, %v9475
  %v9511 = vmul.f32 %v9231, %v9475
  %v9512 = vmul.f32 %v9232, %v9475
  %v9513 = vmul.f32 %v9233, %v9475
  %v9514 = vmul.f32 %v9234, %v9475
  %v9515 = vmul.f32 %v9235, %v9475
  %v9516 = vmul.f32 %v9236, %v9475
  %v9517 = vmul.f32 %v9237, %v9475
  %v9518 = vmul.f32 %v9238, %v9475
  %v9519 = vmul.f32 %v9239, %v9475
  %v9520 = vmul.f32 %v9240, %v9475
  %v9521 = vmul.f32 %v9241, %v9475
  %v9522 = vmul.f32 %v9242, %v9475
  %v9523 = vmul.f32 %v9243, %v9475
  %v9524 = vmul.f32 %v9244, %v9475
  %v9525 = vmul.f32 %v9245, %v9475
  %v9526 = vmul.f32 %v9246, %v9475
  %v9527 = vmul.f32 %v9247, %v9475
  %v9528 = vmul.f32 %v9248, %v9475
  %v9529 = vmul.f32 %v9249, %v9475
  %v9530 = vmul.f32 %v9250, %v9475
  %v9531 = vmul.f32 %v9251, %v9475
  %v9532 = vmul.f32 %v9252, %v9475
  %v9533 = vmul.f32 %v9253, %v9475
  %v9534 = vmul.f32 %v9254, %v9475
  %v9535 = vmul.f32 %v9255, %v9475
  %v9536 = vmul.f32 %v9256, %v9475
  %v9537 = vmul.f32 %v9257, %v9475
  %v9538 = vmul.f32 %v9258, %v9475
  %v9539 = vmul.f32 %v9259, %v9475
  %v9540 = vmul.f32 %v9464, %v9471
  %v9541 = vsub.f32 %v9261, %v9540
  %v9543 = vlaneseq
  %v9544 = vshrl.u32 %v9543, 7
  %v9545 = vsub.s32 0, %v9544
  %v9546 = vrot.slane %v9541, %v9545
  %v9548 = vadd.f32 %v9476, %v9546
  %v9549 = vadd.f32 %v9477, %v9546
  %v9550 = vadd.f32 %v9478, %v9546
  %v9551 = vadd.f32 %v9479, %v9546
  %v9552 = vadd.f32 %v9480, %v9546
  %v9553 = vadd.f32 %v9481, %v9546
  %v9554 = vadd.f32 %v9482, %v9546
  %v9555 = vadd.f32 %v9483, %v9546
  %v9556 = vadd.f32 %v9484, %v9546
  %v9557 = vadd.f32 %v9485, %v9546
  %v9558 = vadd.f32 %v9486, %v9546
  %v9559 = vadd.f32 %v9487, %v9546
  %v9560 = vadd.f32 %v9488, %v9546
  %v9561 = vadd.f32 %v9489, %v9546
  %v9562 = vadd.f32 %v9490, %v9546
  %v9563 = vadd.f32 %v9491, %v9546
  %v9564 = vadd.f32 %v9492, %v9546
  %v9565 = vadd.f32 %v9493, %v9546
  %v9566 = vadd.f32 %v9494, %v9546
  %v9567 = vadd.f32 %v9495, %v9546
  %v9568 = vadd.f32 %v9496, %v9546
  %v9569 = vadd.f32 %v9497, %v9546
  %v9570 = vadd.f32 %v9498, %v9546
  %v9571 = vadd.f32 %v9499, %v9546
  %v9572 = vadd.f32 %v9500, %v9546
  %v9573 = vadd.f32 %v9501, %v9546
  %v9574 = vadd.f32 %v9502, %v9546
  %v9575 = vadd.f32 %v9503, %v9546
  %v9576 = vadd.f32 %v9504, %v9546
  %v9577 = vadd.f32 %v9505, %v9546
  %v9578 = vadd.f32 %v9506, %v9546
  %v9579 = vadd.f32 %v9507, %v9546
  %v9580 = vadd.f32 %v9508, %v9546
  %v9581 = vadd.f32 %v9509, %v9546
  %v9582 = vadd.f32 %v9510, %v9546
  %v9583 = vadd.f32 %v9511, %v9546
  %v9584 = vadd.f32 %v9512, %v9546
  %v9585 = vadd.f32 %v9513, %v9546
  %v9586 = vadd.f32 %v9514, %v9546
  %v9587 = vadd.f32 %v9515, %v9546
  %v9588 = vadd.f32 %v9516, %v9546
  %v9589 = vadd.f32 %v9517, %v9546
  %v9590 = vadd.f32 %v9518, %v9546
  %v9591 = vadd.f32 %v9519, %v9546
  %v9592 = vadd.f32 %v9520, %v9546
  %v9593 = vadd.f32 %v9521, %v9546
  %v9594 = vadd.f32 %v9522, %v9546
  %v9595 = vadd.f32 %v9523, %v9546
  %v9596 = vadd.f32 %v9524, %v9546
  %v9597 = vadd.f32 %v9525, %v9546
  %v9598 = vadd.f32 %v9526, %v9546
  %v9599 = vadd.f32 %v9527, %v9546
  %v9600 = vadd.f32 %v9528, %v9546
  %v9601 = vadd.f32 %v9529, %v9546
  %v9602 = vadd.f32 %v9530, %v9546
  %v9603 = vadd.f32 %v9531, %v9546
  %v9604 = vadd.f32 %v9532, %v9546
  %v9605 = vadd.f32 %v9533, %v9546
  %v9606 = vadd.f32 %v9534, %v9546
  %v9607 = vadd.f32 %v9535, %v9546
  %v9608 = vadd.f32 %v9536, %v9546
  %v9609 = vadd.f32 %v9537, %v9546
  %v9610 = vadd.f32 %v9538, %v9546
  %v9611 = vadd.f32 %v9539, %v9546
  %vm9612 = vcmp.ge.f32.partialorder %v9548, 0.0
  %vm9613 = vcmp.ge.f32.partialorder %v9549, 0.0
  %vm9614 = vcmp.ge.f32.partialorder %v9550, 0.0
  %vm9615 = vcmp.ge.f32.partialorder %v9551, 0.0
  %vm9616 = vcmp.ge.f32.partialorder %v9552, 0.0
  %vm9617 = vcmp.ge.f32.partialorder %v9553, 0.0
  %vm9618 = vcmp.ge.f32.partialorder %v9554, 0.0
  %vm9619 = vcmp.ge.f32.partialorder %v9555, 0.0
  %vm9620 = vcmp.ge.f32.partialorder %v9556, 0.0
  %vm9621 = vcmp.ge.f32.partialorder %v9557, 0.0
  %vm9622 = vcmp.ge.f32.partialorder %v9558, 0.0
  %vm9623 = vcmp.ge.f32.partialorder %v9559, 0.0
  %vm9624 = vcmp.ge.f32.partialorder %v9560, 0.0
  %vm9625 = vcmp.ge.f32.partialorder %v9561, 0.0
  %vm9626 = vcmp.ge.f32.partialorder %v9562, 0.0
  %vm9627 = vcmp.ge.f32.partialorder %v9563, 0.0
  %vm9628 = vcmp.ge.f32.partialorder %v9564, 0.0
  %vm9629 = vcmp.ge.f32.partialorder %v9565, 0.0
  %vm9630 = vcmp.ge.f32.partialorder %v9566, 0.0
  %vm9631 = vcmp.ge.f32.partialorder %v9567, 0.0
  %vm9632 = vcmp.ge.f32.partialorder %v9568, 0.0
  %vm9633 = vcmp.ge.f32.partialorder %v9569, 0.0
  %vm9634 = vcmp.ge.f32.partialorder %v9570, 0.0
  %vm9635 = vcmp.ge.f32.partialorder %v9571, 0.0
  %vm9636 = vcmp.ge.f32.partialorder %v9572, 0.0
  %vm9637 = vcmp.ge.f32.partialorder %v9573, 0.0
  %vm9638 = vcmp.ge.f32.partialorder %v9574, 0.0
  %vm9639 = vcmp.ge.f32.partialorder %v9575, 0.0
  %vm9640 = vcmp.ge.f32.partialorder %v9576, 0.0
  %vm9641 = vcmp.ge.f32.partialorder %v9577, 0.0
  %vm9642 = vcmp.ge.f32.partialorder %v9578, 0.0
  %vm9643 = vcmp.ge.f32.partialorder %v9579, 0.0
  %vm9644 = vcmp.ge.f32.partialorder %v9580, 0.0
  %vm9645 = vcmp.ge.f32.partialorder %v9581, 0.0
  %vm9646 = vcmp.ge.f32.partialorder %v9582, 0.0
  %vm9647 = vcmp.ge.f32.partialorder %v9583, 0.0
  %vm9648 = vcmp.ge.f32.partialorder %v9584, 0.0
  %vm9649 = vcmp.ge.f32.partialorder %v9585, 0.0
  %vm9650 = vcmp.ge.f32.partialorder %v9586, 0.0
  %vm9651 = vcmp.ge.f32.partialorder %v9587, 0.0
  %vm9652 = vcmp.ge.f32.partialorder %v9588, 0.0
  %vm9653 = vcmp.ge.f32.partialorder %v9589, 0.0
  %vm9654 = vcmp.ge.f32.partialorder %v9590, 0.0
  %vm9655 = vcmp.ge.f32.partialorder %v9591, 0.0
  %vm9656 = vcmp.ge.f32.partialorder %v9592, 0.0
  %vm9657 = vcmp.ge.f32.partialorder %v9593, 0.0
  %vm9658 = vcmp.ge.f32.partialorder %v9594, 0.0
  %vm9659 = vcmp.ge.f32.partialorder %v9595, 0.0
  %vm9660 = vcmp.ge.f32.partialorder %v9596, 0.0
  %vm9661 = vcmp.ge.f32.partialorder %v9597, 0.0
  %vm9662 = vcmp.ge.f32.partialorder %v9598, 0.0
  %vm9663 = vcmp.ge.f32.partialorder %v9599, 0.0
  %vm9664 = vcmp.ge.f32.partialorder %v9600, 0.0
  %vm9665 = vcmp.ge.f32.partialorder %v9601, 0.0
  %vm9666 = vcmp.ge.f32.partialorder %v9602, 0.0
  %vm9667 = vcmp.ge.f32.partialorder %v9603, 0.0
  %vm9668 = vcmp.ge.f32.partialorder %v9604, 0.0
  %vm9669 = vcmp.ge.f32.partialorder %v9605, 0.0
  %vm9670 = vcmp.ge.f32.partialorder %v9606, 0.0
  %vm9671 = vcmp.ge.f32.partialorder %v9607, 0.0
  %vm9672 = vcmp.ge.f32.partialorder %v9608, 0.0
  %vm9673 = vcmp.ge.f32.partialorder %v9609, 0.0
  %vm9674 = vcmp.ge.f32.partialorder %v9610, 0.0
  %vm9675 = vcmp.ge.f32.partialorder %v9611, 0.0
  %v9676 = vmul.f32 %v9548, 0.01
  %v9677 = vmul.f32 %v9549, 0.01
  %v9678 = vmul.f32 %v9550, 0.01
  %v9679 = vmul.f32 %v9551, 0.01
  %v9680 = vmul.f32 %v9552, 0.01
  %v9681 = vmul.f32 %v9553, 0.01
  %v9682 = vmul.f32 %v9554, 0.01
  %v9683 = vmul.f32 %v9555, 0.01
  %v9684 = vmul.f32 %v9556, 0.01
  %v9685 = vmul.f32 %v9557, 0.01
  %v9686 = vmul.f32 %v9558, 0.01
  %v9687 = vmul.f32 %v9559, 0.01
  %v9688 = vmul.f32 %v9560, 0.01
  %v9689 = vmul.f32 %v9561, 0.01
  %v9690 = vmul.f32 %v9562, 0.01
  %v9691 = vmul.f32 %v9563, 0.01
  %v9692 = vmul.f32 %v9564, 0.01
  %v9693 = vmul.f32 %v9565, 0.01
  %v9694 = vmul.f32 %v9566, 0.01
  %v9695 = vmul.f32 %v9567, 0.01
  %v9696 = vmul.f32 %v9568, 0.01
  %v9697 = vmul.f32 %v9569, 0.01
  %v9698 = vmul.f32 %v9570, 0.01
  %v9699 = vmul.f32 %v9571, 0.01
  %v9700 = vmul.f32 %v9572, 0.01
  %v9701 = vmul.f32 %v9573, 0.01
  %v9702 = vmul.f32 %v9574, 0.01
  %v9703 = vmul.f32 %v9575, 0.01
  %v9704 = vmul.f32 %v9576, 0.01
  %v9705 = vmul.f32 %v9577, 0.01
  %v9706 = vmul.f32 %v9578, 0.01
  %v9707 = vmul.f32 %v9579, 0.01
  %v9708 = vmul.f32 %v9580, 0.01
  %v9709 = vmul.f32 %v9581, 0.01
  %v9710 = vmul.f32 %v9582, 0.01
  %v9711 = vmul.f32 %v9583, 0.01
  %v9712 = vmul.f32 %v9584, 0.01
  %v9713 = vmul.f32 %v9585, 0.01
  %v9714 = vmul.f32 %v9586, 0.01
  %v9715 = vmul.f32 %v9587, 0.01
  %v9716 = vmul.f32 %v9588, 0.01
  %v9717 = vmul.f32 %v9589, 0.01
  %v9718 = vmul.f32 %v9590, 0.01
  %v9719 = vmul.f32 %v9591, 0.01
  %v9720 = vmul.f32 %v9592, 0.01
  %v9721 = vmul.f32 %v9593, 0.01
  %v9722 = vmul.f32 %v9594, 0.01
  %v9723 = vmul.f32 %v9595, 0.01
  %v9724 = vmul.f32 %v9596, 0.01
  %v9725 = vmul.f32 %v9597, 0.01
  %v9726 = vmul.f32 %v9598, 0.01
  %v9727 = vmul.f32 %v9599, 0.01
  %v9728 = vmul.f32 %v9600, 0.01
  %v9729 = vmul.f32 %v9601, 0.01
  %v9730 = vmul.f32 %v9602, 0.01
  %v9731 = vmul.f32 %v9603, 0.01
  %v9732 = vmul.f32 %v9604, 0.01
  %v9733 = vmul.f32 %v9605, 0.01
  %v9734 = vmul.f32 %v9606, 0.01
  %v9735 = vmul.f32 %v9607, 0.01
  %v9736 = vmul.f32 %v9608, 0.01
  %v9737 = vmul.f32 %v9609, 0.01
  %v9738 = vmul.f32 %v9610, 0.01
  %v9739 = vmul.f32 %v9611, 0.01
  %v9740 = vsel %vm9612, %v9548, %v9676
  %v9741 = vsel %vm9613, %v9549, %v9677
  %v9742 = vsel %vm9614, %v9550, %v9678
  %v9743 = vsel %vm9615, %v9551, %v9679
  %v9744 = vsel %vm9616, %v9552, %v9680
  %v9745 = vsel %vm9617, %v9553, %v9681
  %v9746 = vsel %vm9618, %v9554, %v9682
  %v9747 = vsel %vm9619, %v9555, %v9683
  %v9748 = vsel %vm9620, %v9556, %v9684
  %v9749 = vsel %vm9621, %v9557, %v9685
  %v9750 = vsel %vm9622, %v9558, %v9686
  %v9751 = vsel %vm9623, %v9559, %v9687
  %v9752 = vsel %vm9624, %v9560, %v9688
  %v9753 = vsel %vm9625, %v9561, %v9689
  %v9754 = vsel %vm9626, %v9562, %v9690
  %v9755 = vsel %vm9627, %v9563, %v9691
  %v9756 = vsel %vm9628, %v9564, %v9692
  %v9757 = vsel %vm9629, %v9565, %v9693
  %v9758 = vsel %vm9630, %v9566, %v9694
  %v9759 = vsel %vm9631, %v9567, %v9695
  %v9760 = vsel %vm9632, %v9568, %v9696
  %v9761 = vsel %vm9633, %v9569, %v9697
  %v9762 = vsel %vm9634, %v9570, %v9698
  %v9763 = vsel %vm9635, %v9571, %v9699
  %v9764 = vsel %vm9636, %v9572, %v9700
  %v9765 = vsel %vm9637, %v9573, %v9701
  %v9766 = vsel %vm9638, %v9574, %v9702
  %v9767 = vsel %vm9639, %v9575, %v9703
  %v9768 = vsel %vm9640, %v9576, %v9704
  %v9769 = vsel %vm9641, %v9577, %v9705
  %v9770 = vsel %vm9642, %v9578, %v9706
  %v9771 = vsel %vm9643, %v9579, %v9707
  %v9772 = vsel %vm9644, %v9580, %v9708
  %v9773 = vsel %vm9645, %v9581, %v9709
  %v9774 = vsel %vm9646, %v9582, %v9710
  %v9775 = vsel %vm9647, %v9583, %v9711
  %v9776 = vsel %vm9648, %v9584, %v9712
  %v9777 = vsel %vm9649, %v9585, %v9713
  %v9778 = vsel %vm9650, %v9586, %v9714
  %v9779 = vsel %vm9651, %v9587, %v9715
  %v9780 = vsel %vm9652, %v9588, %v9716
  %v9781 = vsel %vm9653, %v9589, %v9717
  %v9782 = vsel %vm9654, %v9590, %v9718
  %v9783 = vsel %vm9655, %v9591, %v9719
  %v9784 = vsel %vm9656, %v9592, %v9720
  %v9785 = vsel %vm9657, %v9593, %v9721
  %v9786 = vsel %vm9658, %v9594, %v9722
  %v9787 = vsel %vm9659, %v9595, %v9723
  %v9788 = vsel %vm9660, %v9596, %v9724
  %v9789 = vsel %vm9661, %v9597, %v9725
  %v9790 = vsel %vm9662, %v9598, %v9726
  %v9791 = vsel %vm9663, %v9599, %v9727
  %v9792 = vsel %vm9664, %v9600, %v9728
  %v9793 = vsel %vm9665, %v9601, %v9729
  %v9794 = vsel %vm9666, %v9602, %v9730
  %v9795 = vsel %vm9667, %v9603, %v9731
  %v9796 = vsel %vm9668, %v9604, %v9732
  %v9797 = vsel %vm9669, %v9605, %v9733
  %v9798 = vsel %vm9670, %v9606, %v9734
  %v9799 = vsel %vm9671, %v9607, %v9735
  %v9800 = vsel %vm9672, %v9608, %v9736
  %v9801 = vsel %vm9673, %v9609, %v9737
  %v9802 = vsel %vm9674, %v9610, %v9738
  %v9803 = vsel %vm9675, %v9611, %v9739
  %v9804 = vpack.c.bf16 %v9741, %v9740
  %v9805 = vpack.c.bf16 %v9743, %v9742
  %v9806 = vpack.c.bf16 %v9745, %v9744
  %v9807 = vpack.c.bf16 %v9747, %v9746
  %v9808 = vpack.c.bf16 %v9749, %v9748
  %v9809 = vpack.c.bf16 %v9751, %v9750
  %v9810 = vpack.c.bf16 %v9753, %v9752
  %v9811 = vpack.c.bf16 %v9755, %v9754
  %v9812 = vpack.c.bf16 %v9757, %v9756
  %v9813 = vpack.c.bf16 %v9759, %v9758
  %v9814 = vpack.c.bf16 %v9761, %v9760
  %v9815 = vpack.c.bf16 %v9763, %v9762
  %v9816 = vpack.c.bf16 %v9765, %v9764
  %v9817 = vpack.c.bf16 %v9767, %v9766
  %v9818 = vpack.c.bf16 %v9769, %v9768
  %v9819 = vpack.c.bf16 %v9771, %v9770
  %v9820 = vpack.c.bf16 %v9773, %v9772
  %v9821 = vpack.c.bf16 %v9775, %v9774
  %v9822 = vpack.c.bf16 %v9777, %v9776
  %v9823 = vpack.c.bf16 %v9779, %v9778
  %v9824 = vpack.c.bf16 %v9781, %v9780
  %v9825 = vpack.c.bf16 %v9783, %v9782
  %v9826 = vpack.c.bf16 %v9785, %v9784
  %v9827 = vpack.c.bf16 %v9787, %v9786
  %v9828 = vpack.c.bf16 %v9789, %v9788
  %v9829 = vpack.c.bf16 %v9791, %v9790
  %v9830 = vpack.c.bf16 %v9793, %v9792
  %v9831 = vpack.c.bf16 %v9795, %v9794
  %v9832 = vpack.c.bf16 %v9797, %v9796
  %v9833 = vpack.c.bf16 %v9799, %v9798
  %v9834 = vpack.c.bf16 %v9801, %v9800
  %v9835 = vpack.c.bf16 %v9803, %v9802
  %v9836 = vld [vmem:[%s7] sm:$0xf]
  %v9837 = vld [vmem:[%s7 + $0x4] sm:$0xf]
  %v9838 = vld [vmem:[%s7 + $0x8] sm:$0xf]
  %v9839 = vld [vmem:[%s7 + $0xc] sm:$0xf]
  %v9840 = vld [vmem:[%s7 + $0x10] sm:$0xf]
  %v9841 = vld [vmem:[%s7 + $0x14] sm:$0xf]
  %v9842 = vld [vmem:[%s7 + $0x18] sm:$0xf]
  %v9843 = vld [vmem:[%s7 + $0x1c] sm:$0xf]
  %v9844 = vld [vmem:[%s7 + $0x20] sm:$0xf]
  %v9845 = vld [vmem:[%s7 + $0x24] sm:$0xf]
  %v9846 = vld [vmem:[%s7 + $0x28] sm:$0xf]
  %v9847 = vld [vmem:[%s7 + $0x2c] sm:$0xf]
  %v9848 = vld [vmem:[%s7 + $0x30] sm:$0xf]
  %v9849 = vld [vmem:[%s7 + $0x34] sm:$0xf]
  %v9850 = vld [vmem:[%s7 + $0x38] sm:$0xf]
  %v9851 = vld [vmem:[%s7 + $0x3c] sm:$0xf]
  %v9868 = vunpack.c.l.b16 %v9836
  %v9869 = vunpack.c.l.b16 %v9837
  %v9870 = vunpack.c.l.b16 %v9838
  %v9871 = vunpack.c.l.b16 %v9839
  %v9872 = vunpack.c.l.b16 %v9840
  %v9873 = vunpack.c.l.b16 %v9841
  %v9874 = vunpack.c.l.b16 %v9842
  %v9875 = vunpack.c.l.b16 %v9843
  %v9876 = vunpack.c.l.b16 %v9844
  %v9877 = vunpack.c.l.b16 %v9845
  %v9878 = vunpack.c.l.b16 %v9846
  %v9879 = vunpack.c.l.b16 %v9847
  %v9880 = vunpack.c.l.b16 %v9848
  %v9881 = vunpack.c.l.b16 %v9849
  %v9882 = vunpack.c.l.b16 %v9850
  %v9883 = vunpack.c.l.b16 %v9851
  %v9884 = vpack.c.b16 %v9869, %v9868
  %v9885 = vpack.c.b16 %v9871, %v9870
  %v9886 = vpack.c.b16 %v9873, %v9872
  %v9887 = vpack.c.b16 %v9875, %v9874
  %v9888 = vpack.c.b16 %v9877, %v9876
  %v9889 = vpack.c.b16 %v9879, %v9878
  %v9890 = vpack.c.b16 %v9881, %v9880
  %v9891 = vpack.c.b16 %v9883, %v9882
  %9900 = vmatprep.subr.bf16.mxu0 0
  %9901 = vmatpush1.bf16.msra.mxu0 %v9891
  %9902 = vmatprep.subr.bf16.mxu0 0
  %9903 = vmatpush1.bf16.msra.mxu0 %v9890
  %9904 = vmatprep.subr.bf16.mxu0 0
  %9905 = vmatpush1.bf16.msra.mxu0 %v9889
  %9906 = vmatprep.subr.bf16.mxu0 0
  %9907 = vmatpush1.bf16.msra.mxu0 %v9888
  %9908 = vmatprep.subr.bf16.mxu0 0
  %9909 = vmatpush1.bf16.msra.mxu0 %v9887
  %9910 = vmatprep.subr.bf16.mxu0 0
  %9911 = vmatpush1.bf16.msra.mxu0 %v9886
  %9912 = vmatprep.subr.bf16.mxu0 0
  %9913 = vmatpush1.bf16.msra.mxu0 %v9885
  %9914 = vmatprep.subr.bf16.mxu0 0
  %9915 = vmatpush1.bf16.msra.mxu0 %v9884
  %9916 = vmatprep.subr.bf16.mxu0 0
  %9917 = vmatpush2.bf16.msra.mxu0 0
  %9918 = vmatprep.subr.bf16.mxu0 0
  %9919 = vmatpush2.bf16.msra.mxu0 0
  %9920 = vmatprep.subr.bf16.mxu0 0
  %9921 = vmatpush2.bf16.msra.mxu0 0
  %9922 = vmatprep.subr.bf16.mxu0 0
  %9923 = vmatpush2.bf16.msra.mxu0 0
  %9924 = vmatprep.subr.bf16.mxu0 0
  %9925 = vmatpush2.bf16.msra.mxu0 0
  %9926 = vmatprep.subr.bf16.mxu0 0
  %9927 = vmatpush2.bf16.msra.mxu0 0
  %9928 = vmatprep.subr.bf16.mxu0 0
  %9929 = vmatpush2.bf16.msra.mxu0 0
  %9930 = vmatprep.subr.bf16.mxu0 0
  %9931 = vmatpush2.bf16.msra.mxu0 0
  %9932 = vmatprep.mubr.bf16.mxu0 0
  %9933 = vmatmul.mubr.bf16.gmra.mxu0 %v9804
  %v9934 = vpop.f32.mrf.mxu0
  %v9935 = vadd.f32 0.0, %v9934
  %v9936 = vpop.f32.mrf.mxu0
  %v9937 = vpop.f32.mrf.mxu0
  %v9938 = vadd.f32 0.0, %v9937
  %v9939 = vpop.f32.mrf.mxu0
  %9940 = vmatprep.mubr.bf16.mxu0 0
  %9941 = vmatmul.mubr.bf16.gmra.mxu0 %v9805
  %v9942 = vpop.f32.mrf.mxu0
  %v9943 = vadd.f32 0.0, %v9942
  %v9944 = vpop.f32.mrf.mxu0
  %v9945 = vpop.f32.mrf.mxu0
  %v9946 = vadd.f32 0.0, %v9945
  %v9947 = vpop.f32.mrf.mxu0
  %9948 = vmatprep.mubr.bf16.mxu0 0
  %9949 = vmatmul.mubr.bf16.gmra.mxu0 %v9806
  %v9950 = vpop.f32.mrf.mxu0
  %v9951 = vadd.f32 0.0, %v9950
  %v9952 = vpop.f32.mrf.mxu0
  %v9953 = vpop.f32.mrf.mxu0
  %v9954 = vadd.f32 0.0, %v9953
  %v9955 = vpop.f32.mrf.mxu0
  %9956 = vmatprep.mubr.bf16.mxu0 0
  %9957 = vmatmul.mubr.bf16.gmra.mxu0 %v9807
  %v9958 = vpop.f32.mrf.mxu0
  %v9959 = vadd.f32 0.0, %v9958
  %v9960 = vpop.f32.mrf.mxu0
  %v9961 = vpop.f32.mrf.mxu0
  %v9962 = vadd.f32 0.0, %v9961
  %v9963 = vpop.f32.mrf.mxu0
  %9964 = vmatprep.mubr.bf16.mxu0 0
  %9965 = vmatmul.mubr.bf16.gmra.mxu0 %v9808
  %v9966 = vpop.f32.mrf.mxu0
  %v9967 = vadd.f32 0.0, %v9966
  %v9968 = vpop.f32.mrf.mxu0
  %v9969 = vpop.f32.mrf.mxu0
  %v9970 = vadd.f32 0.0, %v9969
  %v9971 = vpop.f32.mrf.mxu0
  %9972 = vmatprep.mubr.bf16.mxu0 0
  %9973 = vmatmul.mubr.bf16.gmra.mxu0 %v9809
  %v9974 = vpop.f32.mrf.mxu0
  %v9975 = vadd.f32 0.0, %v9974
  %v9976 = vpop.f32.mrf.mxu0
  %v9977 = vpop.f32.mrf.mxu0
  %v9978 = vadd.f32 0.0, %v9977
  %v9979 = vpop.f32.mrf.mxu0
  %9980 = vmatprep.mubr.bf16.mxu0 0
  %9981 = vmatmul.mubr.bf16.gmra.mxu0 %v9810
  %v9982 = vpop.f32.mrf.mxu0
  %v9983 = vadd.f32 0.0, %v9982
  %v9984 = vpop.f32.mrf.mxu0
  %v9985 = vpop.f32.mrf.mxu0
  %v9986 = vadd.f32 0.0, %v9985
  %v9987 = vpop.f32.mrf.mxu0
  %9988 = vmatprep.mubr.bf16.mxu0 0
  %9989 = vmatmul.mubr.bf16.gmra.mxu0 %v9811
  %v9990 = vpop.f32.mrf.mxu0
  %v9991 = vadd.f32 0.0, %v9990
  %v9992 = vpop.f32.mrf.mxu0
  %v9993 = vpop.f32.mrf.mxu0
  %v9994 = vadd.f32 0.0, %v9993
  %v9995 = vpop.f32.mrf.mxu0
  %9996 = vmatprep.mubr.bf16.mxu0 0
  %9997 = vmatmul.mubr.bf16.gmra.mxu0 %v9812
  %v9998 = vpop.f32.mrf.mxu0
  %v9999 = vadd.f32 0.0, %v9998
  %v10000 = vpop.f32.mrf.mxu0
  %v10001 = vpop.f32.mrf.mxu0
  %v10002 = vadd.f32 0.0, %v10001
  %v10003 = vpop.f32.mrf.mxu0
  %10004 = vmatprep.mubr.bf16.mxu0 0
  %10005 = vmatmul.mubr.bf16.gmra.mxu0 %v9813
  %v10006 = vpop.f32.mrf.mxu0
  %v10007 = vadd.f32 0.0, %v10006
  %v10008 = vpop.f32.mrf.mxu0
  %v10009 = vpop.f32.mrf.mxu0
  %v10010 = vadd.f32 0.0, %v10009
  %v10011 = vpop.f32.mrf.mxu0
  %10012 = vmatprep.mubr.bf16.mxu0 0
  %10013 = vmatmul.mubr.bf16.gmra.mxu0 %v9814
  %v10014 = vpop.f32.mrf.mxu0
  %v10015 = vadd.f32 0.0, %v10014
  %v10016 = vpop.f32.mrf.mxu0
  %v10017 = vpop.f32.mrf.mxu0
  %v10018 = vadd.f32 0.0, %v10017
  %v10019 = vpop.f32.mrf.mxu0
  %10020 = vmatprep.mubr.bf16.mxu0 0
  %10021 = vmatmul.mubr.bf16.gmra.mxu0 %v9815
  %v10022 = vpop.f32.mrf.mxu0
  %v10023 = vadd.f32 0.0, %v10022
  %v10024 = vpop.f32.mrf.mxu0
  %v10025 = vpop.f32.mrf.mxu0
  %v10026 = vadd.f32 0.0, %v10025
  %v10027 = vpop.f32.mrf.mxu0
  %10028 = vmatprep.mubr.bf16.mxu0 0
  %10029 = vmatmul.mubr.bf16.gmra.mxu0 %v9816
  %v10030 = vpop.f32.mrf.mxu0
  %v10031 = vadd.f32 0.0, %v10030
  %v10032 = vpop.f32.mrf.mxu0
  %v10033 = vpop.f32.mrf.mxu0
  %v10034 = vadd.f32 0.0, %v10033
  %v10035 = vpop.f32.mrf.mxu0
  %10036 = vmatprep.mubr.bf16.mxu0 0
  %10037 = vmatmul.mubr.bf16.gmra.mxu0 %v9817
  %v10038 = vpop.f32.mrf.mxu0
  %v10039 = vadd.f32 0.0, %v10038
  %v10040 = vpop.f32.mrf.mxu0
  %v10041 = vpop.f32.mrf.mxu0
  %v10042 = vadd.f32 0.0, %v10041
  %v10043 = vpop.f32.mrf.mxu0
  %10044 = vmatprep.mubr.bf16.mxu0 0
  %10045 = vmatmul.mubr.bf16.gmra.mxu0 %v9818
  %v10046 = vpop.f32.mrf.mxu0
  %v10047 = vadd.f32 0.0, %v10046
  %v10048 = vpop.f32.mrf.mxu0
  %v10049 = vpop.f32.mrf.mxu0
  %v10050 = vadd.f32 0.0, %v10049
  %v10051 = vpop.f32.mrf.mxu0
  %10052 = vmatprep.mubr.bf16.mxu0 0
  %10053 = vmatmul.mubr.bf16.gmra.mxu0 %v9819
  %v10054 = vpop.f32.mrf.mxu0
  %v10055 = vadd.f32 0.0, %v10054
  %v10056 = vpop.f32.mrf.mxu0
  %v10057 = vpop.f32.mrf.mxu0
  %v10058 = vadd.f32 0.0, %v10057
  %v10059 = vpop.f32.mrf.mxu0
  %10060 = vmatprep.mubr.bf16.mxu0 0
  %10061 = vmatmul.mubr.bf16.gmra.mxu0 %v9820
  %v10062 = vpop.f32.mrf.mxu0
  %v10063 = vadd.f32 0.0, %v10062
  %v10064 = vpop.f32.mrf.mxu0
  %v10065 = vpop.f32.mrf.mxu0
  %v10066 = vadd.f32 0.0, %v10065
  %v10067 = vpop.f32.mrf.mxu0
  %10068 = vmatprep.mubr.bf16.mxu0 0
  %10069 = vmatmul.mubr.bf16.gmra.mxu0 %v9821
  %v10070 = vpop.f32.mrf.mxu0
  %v10071 = vadd.f32 0.0, %v10070
  %v10072 = vpop.f32.mrf.mxu0
  %v10073 = vpop.f32.mrf.mxu0
  %v10074 = vadd.f32 0.0, %v10073
  %v10075 = vpop.f32.mrf.mxu0
  %10076 = vmatprep.mubr.bf16.mxu0 0
  %10077 = vmatmul.mubr.bf16.gmra.mxu0 %v9822
  %v10078 = vpop.f32.mrf.mxu0
  %v10079 = vadd.f32 0.0, %v10078
  %v10080 = vpop.f32.mrf.mxu0
  %v10081 = vpop.f32.mrf.mxu0
  %v10082 = vadd.f32 0.0, %v10081
  %v10083 = vpop.f32.mrf.mxu0
  %10084 = vmatprep.mubr.bf16.mxu0 0
  %10085 = vmatmul.mubr.bf16.gmra.mxu0 %v9823
  %v10086 = vpop.f32.mrf.mxu0
  %v10087 = vadd.f32 0.0, %v10086
  %v10088 = vpop.f32.mrf.mxu0
  %v10089 = vpop.f32.mrf.mxu0
  %v10090 = vadd.f32 0.0, %v10089
  %v10091 = vpop.f32.mrf.mxu0
  %10092 = vmatprep.mubr.bf16.mxu0 0
  %10093 = vmatmul.mubr.bf16.gmra.mxu0 %v9824
  %v10094 = vpop.f32.mrf.mxu0
  %v10095 = vadd.f32 0.0, %v10094
  %v10096 = vpop.f32.mrf.mxu0
  %v10097 = vpop.f32.mrf.mxu0
  %v10098 = vadd.f32 0.0, %v10097
  %v10099 = vpop.f32.mrf.mxu0
  %10100 = vmatprep.mubr.bf16.mxu0 0
  %10101 = vmatmul.mubr.bf16.gmra.mxu0 %v9825
  %v10102 = vpop.f32.mrf.mxu0
  %v10103 = vadd.f32 0.0, %v10102
  %v10104 = vpop.f32.mrf.mxu0
  %v10105 = vpop.f32.mrf.mxu0
  %v10106 = vadd.f32 0.0, %v10105
  %v10107 = vpop.f32.mrf.mxu0
  %10108 = vmatprep.mubr.bf16.mxu0 0
  %10109 = vmatmul.mubr.bf16.gmra.mxu0 %v9826
  %v10110 = vpop.f32.mrf.mxu0
  %v10111 = vadd.f32 0.0, %v10110
  %v10112 = vpop.f32.mrf.mxu0
  %v10113 = vpop.f32.mrf.mxu0
  %v10114 = vadd.f32 0.0, %v10113
  %v10115 = vpop.f32.mrf.mxu0
  %10116 = vmatprep.mubr.bf16.mxu0 0
  %10117 = vmatmul.mubr.bf16.gmra.mxu0 %v9827
  %v10118 = vpop.f32.mrf.mxu0
  %v10119 = vadd.f32 0.0, %v10118
  %v10120 = vpop.f32.mrf.mxu0
  %v10121 = vpop.f32.mrf.mxu0
  %v10122 = vadd.f32 0.0, %v10121
  %v10123 = vpop.f32.mrf.mxu0
  %10124 = vmatprep.mubr.bf16.mxu0 0
  %10125 = vmatmul.mubr.bf16.gmra.mxu0 %v9828
  %v10126 = vpop.f32.mrf.mxu0
  %v10127 = vadd.f32 0.0, %v10126
  %v10128 = vpop.f32.mrf.mxu0
  %v10129 = vpop.f32.mrf.mxu0
  %v10130 = vadd.f32 0.0, %v10129
  %v10131 = vpop.f32.mrf.mxu0
  %10132 = vmatprep.mubr.bf16.mxu0 0
  %10133 = vmatmul.mubr.bf16.gmra.mxu0 %v9829
  %v10134 = vpop.f32.mrf.mxu0
  %v10135 = vadd.f32 0.0, %v10134
  %v10136 = vpop.f32.mrf.mxu0
  %v10137 = vpop.f32.mrf.mxu0
  %v10138 = vadd.f32 0.0, %v10137
  %v10139 = vpop.f32.mrf.mxu0
  %10140 = vmatprep.mubr.bf16.mxu0 0
  %10141 = vmatmul.mubr.bf16.gmra.mxu0 %v9830
  %v10142 = vpop.f32.mrf.mxu0
  %v10143 = vadd.f32 0.0, %v10142
  %v10144 = vpop.f32.mrf.mxu0
  %v10145 = vpop.f32.mrf.mxu0
  %v10146 = vadd.f32 0.0, %v10145
  %v10147 = vpop.f32.mrf.mxu0
  %10148 = vmatprep.mubr.bf16.mxu0 0
  %10149 = vmatmul.mubr.bf16.gmra.mxu0 %v9831
  %v10150 = vpop.f32.mrf.mxu0
  %v10151 = vadd.f32 0.0, %v10150
  %v10152 = vpop.f32.mrf.mxu0
  %v10153 = vpop.f32.mrf.mxu0
  %v10154 = vadd.f32 0.0, %v10153
  %v10155 = vpop.f32.mrf.mxu0
  %10156 = vmatprep.mubr.bf16.mxu0 0
  %10157 = vmatmul.mubr.bf16.gmra.mxu0 %v9832
  %v10158 = vpop.f32.mrf.mxu0
  %v10159 = vadd.f32 0.0, %v10158
  %v10160 = vpop.f32.mrf.mxu0
  %v10161 = vpop.f32.mrf.mxu0
  %v10162 = vadd.f32 0.0, %v10161
  %v10163 = vpop.f32.mrf.mxu0
  %10164 = vmatprep.mubr.bf16.mxu0 0
  %10165 = vmatmul.mubr.bf16.gmra.mxu0 %v9833
  %v10166 = vpop.f32.mrf.mxu0
  %v10167 = vadd.f32 0.0, %v10166
  %v10168 = vpop.f32.mrf.mxu0
  %v10169 = vpop.f32.mrf.mxu0
  %v10170 = vadd.f32 0.0, %v10169
  %v10171 = vpop.f32.mrf.mxu0
  %10172 = vmatprep.mubr.bf16.mxu0 0
  %10173 = vmatmul.mubr.bf16.gmra.mxu0 %v9834
  %v10174 = vpop.f32.mrf.mxu0
  %v10175 = vadd.f32 0.0, %v10174
  %v10176 = vpop.f32.mrf.mxu0
  %v10177 = vpop.f32.mrf.mxu0
  %v10178 = vadd.f32 0.0, %v10177
  %v10179 = vpop.f32.mrf.mxu0
  %10180 = vmatprep.mubr.bf16.mxu0 0
  %10181 = vmatmul.mubr.bf16.gmra.mxu0 %v9835
  %v10182 = vpop.f32.mrf.mxu0
  %v10183 = vadd.f32 0.0, %v10182
  %v10184 = vpop.f32.mrf.mxu0
  %v10185 = vpop.f32.mrf.mxu0
  %v10186 = vadd.f32 0.0, %v10185
  %v10187 = vpop.f32.mrf.mxu0
  %10188 = vdwg.mxu0
  %v10189 = vld [vmem:[%s8] sm:$0x1]
  %v10190 = vld [vmem:[%s9] sm:$0x1]
  %v10191 = vadd.f32 %v9935, %v9938
  %v10192 = vadd.f32 %v10191, %v9943
  %v10193 = vadd.f32 %v10192, %v9946
  %v10194 = vadd.f32 %v10193, %v9951
  %v10195 = vadd.f32 %v10194, %v9954
  %v10196 = vadd.f32 %v10195, %v9959
  %v10197 = vadd.f32 %v10196, %v9962
  %v10198 = vadd.f32 %v10197, %v9967
  %v10199 = vadd.f32 %v10198, %v9970
  %v10200 = vadd.f32 %v10199, %v9975
  %v10201 = vadd.f32 %v10200, %v9978
  %v10202 = vadd.f32 %v10201, %v9983
  %v10203 = vadd.f32 %v10202, %v9986
  %v10204 = vadd.f32 %v10203, %v9991
  %v10205 = vadd.f32 %v10204, %v9994
  %v10206 = vadd.f32 %v10205, %v9999
  %v10207 = vadd.f32 %v10206, %v10002
  %v10208 = vadd.f32 %v10207, %v10007
  %v10209 = vadd.f32 %v10208, %v10010
  %v10210 = vadd.f32 %v10209, %v10015
  %v10211 = vadd.f32 %v10210, %v10018
  %v10212 = vadd.f32 %v10211, %v10023
  %v10213 = vadd.f32 %v10212, %v10026
  %v10214 = vadd.f32 %v10213, %v10031
  %v10215 = vadd.f32 %v10214, %v10034
  %v10216 = vadd.f32 %v10215, %v10039
  %v10217 = vadd.f32 %v10216, %v10042
  %v10218 = vadd.f32 %v10217, %v10047
  %v10219 = vadd.f32 %v10218, %v10050
  %v10220 = vadd.f32 %v10219, %v10055
  %v10221 = vadd.f32 %v10220, %v10058
  %v10222 = vadd.f32 %v10221, %v10063
  %v10223 = vadd.f32 %v10222, %v10066
  %v10224 = vadd.f32 %v10223, %v10071
  %v10225 = vadd.f32 %v10224, %v10074
  %v10226 = vadd.f32 %v10225, %v10079
  %v10227 = vadd.f32 %v10226, %v10082
  %v10228 = vadd.f32 %v10227, %v10087
  %v10229 = vadd.f32 %v10228, %v10090
  %v10230 = vadd.f32 %v10229, %v10095
  %v10231 = vadd.f32 %v10230, %v10098
  %v10232 = vadd.f32 %v10231, %v10103
  %v10233 = vadd.f32 %v10232, %v10106
  %v10234 = vadd.f32 %v10233, %v10111
  %v10235 = vadd.f32 %v10234, %v10114
  %v10236 = vadd.f32 %v10235, %v10119
  %v10237 = vadd.f32 %v10236, %v10122
  %v10238 = vadd.f32 %v10237, %v10127
  %v10239 = vadd.f32 %v10238, %v10130
  %v10240 = vadd.f32 %v10239, %v10135
  %v10241 = vadd.f32 %v10240, %v10138
  %v10242 = vadd.f32 %v10241, %v10143
  %v10243 = vadd.f32 %v10242, %v10146
  %v10244 = vadd.f32 %v10243, %v10151
  %v10245 = vadd.f32 %v10244, %v10154
  %v10246 = vadd.f32 %v10245, %v10159
  %v10247 = vadd.f32 %v10246, %v10162
  %v10248 = vadd.f32 %v10247, %v10167
  %v10249 = vadd.f32 %v10248, %v10170
  %v10250 = vadd.f32 %v10249, %v10175
  %v10251 = vadd.f32 %v10250, %v10178
  %v10252 = vadd.f32 %v10251, %v10183
  %v10253 = vadd.f32 %v10252, %v10186
  %v10254 = vrot.slane %v10253, 4
  %v10255 = vadd.f32 %v10253, %v10254
  %v10256 = vrot.slane %v10255, 2
  %v10257 = vadd.f32 %v10255, %v10256
  %v10258 = vrot.slane %v10257, 1
  %v10259 = vadd.f32 %v10257, %v10258
  %v10260 = vmul.f32 %v9935, %v9935
  %v10261 = vmul.f32 %v9938, %v9938
  %v10262 = vmul.f32 %v9943, %v9943
  %v10263 = vmul.f32 %v9946, %v9946
  %v10264 = vmul.f32 %v9951, %v9951
  %v10265 = vmul.f32 %v9954, %v9954
  %v10266 = vmul.f32 %v9959, %v9959
  %v10267 = vmul.f32 %v9962, %v9962
  %v10268 = vmul.f32 %v9967, %v9967
  %v10269 = vmul.f32 %v9970, %v9970
  %v10270 = vmul.f32 %v9975, %v9975
  %v10271 = vmul.f32 %v9978, %v9978
  %v10272 = vmul.f32 %v9983, %v9983
  %v10273 = vmul.f32 %v9986, %v9986
  %v10274 = vmul.f32 %v9991, %v9991
  %v10275 = vmul.f32 %v9994, %v9994
  %v10276 = vmul.f32 %v9999, %v9999
  %v10277 = vmul.f32 %v10002, %v10002
  %v10278 = vmul.f32 %v10007, %v10007
  %v10279 = vmul.f32 %v10010, %v10010
  %v10280 = vmul.f32 %v10015, %v10015
  %v10281 = vmul.f32 %v10018, %v10018
  %v10282 = vmul.f32 %v10023, %v10023
  %v10283 = vmul.f32 %v10026, %v10026
  %v10284 = vmul.f32 %v10031, %v10031
  %v10285 = vmul.f32 %v10034, %v10034
  %v10286 = vmul.f32 %v10039, %v10039
  %v10287 = vmul.f32 %v10042, %v10042
  %v10288 = vmul.f32 %v10047, %v10047
  %v10289 = vmul.f32 %v10050, %v10050
  %v10290 = vmul.f32 %v10055, %v10055
  %v10291 = vmul.f32 %v10058, %v10058
  %v10292 = vmul.f32 %v10063, %v10063
  %v10293 = vmul.f32 %v10066, %v10066
  %v10294 = vmul.f32 %v10071, %v10071
  %v10295 = vmul.f32 %v10074, %v10074
  %v10296 = vmul.f32 %v10079, %v10079
  %v10297 = vmul.f32 %v10082, %v10082
  %v10298 = vmul.f32 %v10087, %v10087
  %v10299 = vmul.f32 %v10090, %v10090
  %v10300 = vmul.f32 %v10095, %v10095
  %v10301 = vmul.f32 %v10098, %v10098
  %v10302 = vmul.f32 %v10103, %v10103
  %v10303 = vmul.f32 %v10106, %v10106
  %v10304 = vmul.f32 %v10111, %v10111
  %v10305 = vmul.f32 %v10114, %v10114
  %v10306 = vmul.f32 %v10119, %v10119
  %v10307 = vmul.f32 %v10122, %v10122
  %v10308 = vmul.f32 %v10127, %v10127
  %v10309 = vmul.f32 %v10130, %v10130
  %v10310 = vmul.f32 %v10135, %v10135
  %v10311 = vmul.f32 %v10138, %v10138
  %v10312 = vmul.f32 %v10143, %v10143
  %v10313 = vmul.f32 %v10146, %v10146
  %v10314 = vmul.f32 %v10151, %v10151
  %v10315 = vmul.f32 %v10154, %v10154
  %v10316 = vmul.f32 %v10159, %v10159
  %v10317 = vmul.f32 %v10162, %v10162
  %v10318 = vmul.f32 %v10167, %v10167
  %v10319 = vmul.f32 %v10170, %v10170
  %v10320 = vmul.f32 %v10175, %v10175
  %v10321 = vmul.f32 %v10178, %v10178
  %v10322 = vmul.f32 %v10183, %v10183
  %v10323 = vmul.f32 %v10186, %v10186
  %v10324 = vadd.f32 %v10260, %v10261
  %v10325 = vadd.f32 %v10324, %v10262
  %v10326 = vadd.f32 %v10325, %v10263
  %v10327 = vadd.f32 %v10326, %v10264
  %v10328 = vadd.f32 %v10327, %v10265
  %v10329 = vadd.f32 %v10328, %v10266
  %v10330 = vadd.f32 %v10329, %v10267
  %v10331 = vadd.f32 %v10330, %v10268
  %v10332 = vadd.f32 %v10331, %v10269
  %v10333 = vadd.f32 %v10332, %v10270
  %v10334 = vadd.f32 %v10333, %v10271
  %v10335 = vadd.f32 %v10334, %v10272
  %v10336 = vadd.f32 %v10335, %v10273
  %v10337 = vadd.f32 %v10336, %v10274
  %v10338 = vadd.f32 %v10337, %v10275
  %v10339 = vadd.f32 %v10338, %v10276
  %v10340 = vadd.f32 %v10339, %v10277
  %v10341 = vadd.f32 %v10340, %v10278
  %v10342 = vadd.f32 %v10341, %v10279
  %v10343 = vadd.f32 %v10342, %v10280
  %v10344 = vadd.f32 %v10343, %v10281
  %v10345 = vadd.f32 %v10344, %v10282
  %v10346 = vadd.f32 %v10345, %v10283
  %v10347 = vadd.f32 %v10346, %v10284
  %v10348 = vadd.f32 %v10347, %v10285
  %v10349 = vadd.f32 %v10348, %v10286
  %v10350 = vadd.f32 %v10349, %v10287
  %v10351 = vadd.f32 %v10350, %v10288
  %v10352 = vadd.f32 %v10351, %v10289
  %v10353 = vadd.f32 %v10352, %v10290
  %v10354 = vadd.f32 %v10353, %v10291
  %v10355 = vadd.f32 %v10354, %v10292
  %v10356 = vadd.f32 %v10355, %v10293
  %v10357 = vadd.f32 %v10356, %v10294
  %v10358 = vadd.f32 %v10357, %v10295
  %v10359 = vadd.f32 %v10358, %v10296
  %v10360 = vadd.f32 %v10359, %v10297
  %v10361 = vadd.f32 %v10360, %v10298
  %v10362 = vadd.f32 %v10361, %v10299
  %v10363 = vadd.f32 %v10362, %v10300
  %v10364 = vadd.f32 %v10363, %v10301
  %v10365 = vadd.f32 %v10364, %v10302
  %v10366 = vadd.f32 %v10365, %v10303
  %v10367 = vadd.f32 %v10366, %v10304
  %v10368 = vadd.f32 %v10367, %v10305
  %v10369 = vadd.f32 %v10368, %v10306
  %v10370 = vadd.f32 %v10369, %v10307
  %v10371 = vadd.f32 %v10370, %v10308
  %v10372 = vadd.f32 %v10371, %v10309
  %v10373 = vadd.f32 %v10372, %v10310
  %v10374 = vadd.f32 %v10373, %v10311
  %v10375 = vadd.f32 %v10374, %v10312
  %v10376 = vadd.f32 %v10375, %v10313
  %v10377 = vadd.f32 %v10376, %v10314
  %v10378 = vadd.f32 %v10377, %v10315
  %v10379 = vadd.f32 %v10378, %v10316
  %v10380 = vadd.f32 %v10379, %v10317
  %v10381 = vadd.f32 %v10380, %v10318
  %v10382 = vadd.f32 %v10381, %v10319
  %v10383 = vadd.f32 %v10382, %v10320
  %v10384 = vadd.f32 %v10383, %v10321
  %v10385 = vadd.f32 %v10384, %v10322
  %v10386 = vadd.f32 %v10385, %v10323
  %v10387 = vrot.slane %v10386, 4
  %v10388 = vadd.f32 %v10386, %v10387
  %v10389 = vrot.slane %v10388, 2
  %v10390 = vadd.f32 %v10388, %v10389
  %v10391 = vrot.slane %v10390, 1
  %v10392 = vadd.f32 %v10390, %v10391
  %v10393 = vmul.f32 %v10259, 0.001953125
  %v10394 = vmul.f32 %v10392, 0.001953125
  %v10395 = vmul.f32 %v10393, %v10393
  %v10396 = vsub.f32 %v10394, %v10395
  %v10397 = vmax.f32 %v10396, 0.0
  %v10398 = vadd.f32 %v10397, 1e-05
  %v10399 = vrsqrt.pop %v10398
  %v10400 = vmul.f32 %v10399, %v10189
  %v10401 = vlaneseq
  %v10402 = vshrl.u32 %v10401, 7
  %v10403 = vsub.s32 0, %v10402
  %v10404 = vrot.slane %v10400, %v10403
  %v10405 = vmul.f32 %v9935, %v10404
  %v10406 = vmul.f32 %v9938, %v10404
  %v10407 = vmul.f32 %v9943, %v10404
  %v10408 = vmul.f32 %v9946, %v10404
  %v10409 = vmul.f32 %v9951, %v10404
  %v10410 = vmul.f32 %v9954, %v10404
  %v10411 = vmul.f32 %v9959, %v10404
  %v10412 = vmul.f32 %v9962, %v10404
  %v10413 = vmul.f32 %v9967, %v10404
  %v10414 = vmul.f32 %v9970, %v10404
  %v10415 = vmul.f32 %v9975, %v10404
  %v10416 = vmul.f32 %v9978, %v10404
  %v10417 = vmul.f32 %v9983, %v10404
  %v10418 = vmul.f32 %v9986, %v10404
  %v10419 = vmul.f32 %v9991, %v10404
  %v10420 = vmul.f32 %v9994, %v10404
  %v10421 = vmul.f32 %v9999, %v10404
  %v10422 = vmul.f32 %v10002, %v10404
  %v10423 = vmul.f32 %v10007, %v10404
  %v10424 = vmul.f32 %v10010, %v10404
  %v10425 = vmul.f32 %v10015, %v10404
  %v10426 = vmul.f32 %v10018, %v10404
  %v10427 = vmul.f32 %v10023, %v10404
  %v10428 = vmul.f32 %v10026, %v10404
  %v10429 = vmul.f32 %v10031, %v10404
  %v10430 = vmul.f32 %v10034, %v10404
  %v10431 = vmul.f32 %v10039, %v10404
  %v10432 = vmul.f32 %v10042, %v10404
  %v10433 = vmul.f32 %v10047, %v10404
  %v10434 = vmul.f32 %v10050, %v10404
  %v10435 = vmul.f32 %v10055, %v10404
  %v10436 = vmul.f32 %v10058, %v10404
  %v10437 = vmul.f32 %v10063, %v10404
  %v10438 = vmul.f32 %v10066, %v10404
  %v10439 = vmul.f32 %v10071, %v10404
  %v10440 = vmul.f32 %v10074, %v10404
  %v10441 = vmul.f32 %v10079, %v10404
  %v10442 = vmul.f32 %v10082, %v10404
  %v10443 = vmul.f32 %v10087, %v10404
  %v10444 = vmul.f32 %v10090, %v10404
  %v10445 = vmul.f32 %v10095, %v10404
  %v10446 = vmul.f32 %v10098, %v10404
  %v10447 = vmul.f32 %v10103, %v10404
  %v10448 = vmul.f32 %v10106, %v10404
  %v10449 = vmul.f32 %v10111, %v10404
  %v10450 = vmul.f32 %v10114, %v10404
  %v10451 = vmul.f32 %v10119, %v10404
  %v10452 = vmul.f32 %v10122, %v10404
  %v10453 = vmul.f32 %v10127, %v10404
  %v10454 = vmul.f32 %v10130, %v10404
  %v10455 = vmul.f32 %v10135, %v10404
  %v10456 = vmul.f32 %v10138, %v10404
  %v10457 = vmul.f32 %v10143, %v10404
  %v10458 = vmul.f32 %v10146, %v10404
  %v10459 = vmul.f32 %v10151, %v10404
  %v10460 = vmul.f32 %v10154, %v10404
  %v10461 = vmul.f32 %v10159, %v10404
  %v10462 = vmul.f32 %v10162, %v10404
  %v10463 = vmul.f32 %v10167, %v10404
  %v10464 = vmul.f32 %v10170, %v10404
  %v10465 = vmul.f32 %v10175, %v10404
  %v10466 = vmul.f32 %v10178, %v10404
  %v10467 = vmul.f32 %v10183, %v10404
  %v10468 = vmul.f32 %v10186, %v10404
  %v10469 = vmul.f32 %v10393, %v10400
  %v10470 = vsub.f32 %v10190, %v10469
  %v10472 = vlaneseq
  %v10473 = vshrl.u32 %v10472, 7
  %v10474 = vsub.s32 0, %v10473
  %v10475 = vrot.slane %v10470, %v10474
  %v10477 = vadd.f32 %v10405, %v10475
  %v10478 = vadd.f32 %v10406, %v10475
  %v10479 = vadd.f32 %v10407, %v10475
  %v10480 = vadd.f32 %v10408, %v10475
  %v10481 = vadd.f32 %v10409, %v10475
  %v10482 = vadd.f32 %v10410, %v10475
  %v10483 = vadd.f32 %v10411, %v10475
  %v10484 = vadd.f32 %v10412, %v10475
  %v10485 = vadd.f32 %v10413, %v10475
  %v10486 = vadd.f32 %v10414, %v10475
  %v10487 = vadd.f32 %v10415, %v10475
  %v10488 = vadd.f32 %v10416, %v10475
  %v10489 = vadd.f32 %v10417, %v10475
  %v10490 = vadd.f32 %v10418, %v10475
  %v10491 = vadd.f32 %v10419, %v10475
  %v10492 = vadd.f32 %v10420, %v10475
  %v10493 = vadd.f32 %v10421, %v10475
  %v10494 = vadd.f32 %v10422, %v10475
  %v10495 = vadd.f32 %v10423, %v10475
  %v10496 = vadd.f32 %v10424, %v10475
  %v10497 = vadd.f32 %v10425, %v10475
  %v10498 = vadd.f32 %v10426, %v10475
  %v10499 = vadd.f32 %v10427, %v10475
  %v10500 = vadd.f32 %v10428, %v10475
  %v10501 = vadd.f32 %v10429, %v10475
  %v10502 = vadd.f32 %v10430, %v10475
  %v10503 = vadd.f32 %v10431, %v10475
  %v10504 = vadd.f32 %v10432, %v10475
  %v10505 = vadd.f32 %v10433, %v10475
  %v10506 = vadd.f32 %v10434, %v10475
  %v10507 = vadd.f32 %v10435, %v10475
  %v10508 = vadd.f32 %v10436, %v10475
  %v10509 = vadd.f32 %v10437, %v10475
  %v10510 = vadd.f32 %v10438, %v10475
  %v10511 = vadd.f32 %v10439, %v10475
  %v10512 = vadd.f32 %v10440, %v10475
  %v10513 = vadd.f32 %v10441, %v10475
  %v10514 = vadd.f32 %v10442, %v10475
  %v10515 = vadd.f32 %v10443, %v10475
  %v10516 = vadd.f32 %v10444, %v10475
  %v10517 = vadd.f32 %v10445, %v10475
  %v10518 = vadd.f32 %v10446, %v10475
  %v10519 = vadd.f32 %v10447, %v10475
  %v10520 = vadd.f32 %v10448, %v10475
  %v10521 = vadd.f32 %v10449, %v10475
  %v10522 = vadd.f32 %v10450, %v10475
  %v10523 = vadd.f32 %v10451, %v10475
  %v10524 = vadd.f32 %v10452, %v10475
  %v10525 = vadd.f32 %v10453, %v10475
  %v10526 = vadd.f32 %v10454, %v10475
  %v10527 = vadd.f32 %v10455, %v10475
  %v10528 = vadd.f32 %v10456, %v10475
  %v10529 = vadd.f32 %v10457, %v10475
  %v10530 = vadd.f32 %v10458, %v10475
  %v10531 = vadd.f32 %v10459, %v10475
  %v10532 = vadd.f32 %v10460, %v10475
  %v10533 = vadd.f32 %v10461, %v10475
  %v10534 = vadd.f32 %v10462, %v10475
  %v10535 = vadd.f32 %v10463, %v10475
  %v10536 = vadd.f32 %v10464, %v10475
  %v10537 = vadd.f32 %v10465, %v10475
  %v10538 = vadd.f32 %v10466, %v10475
  %v10539 = vadd.f32 %v10467, %v10475
  %v10540 = vadd.f32 %v10468, %v10475
  %v10541 = vld [vmem:[%s10] sm:$0x3]
  %v10542 = vld [vmem:[%s11] sm:$0x1]
  %v10544 = vlaneseq
  %v10545 = vshrl.u32 %v10544, 7
  %v10546 = vsub.s32 0, %v10545
  %v10547 = vrot.slane %v10542, %v10546
  %v10550 = vsel %vm370, %v10541, 0
  %10552 = vmatprep.subr.bf16.mxu0 0
  %10553 = vmatpush1.bf16.msra.mxu0 0
  %10554 = vmatprep.subr.bf16.mxu0 0
  %10555 = vmatpush1.bf16.msra.mxu0 0
  %10556 = vmatprep.subr.bf16.mxu0 0
  %10557 = vmatpush1.bf16.msra.mxu0 0
  %10558 = vmatprep.subr.bf16.mxu0 0
  %10559 = vmatpush1.bf16.msra.mxu0 0
  %10560 = vmatprep.subr.bf16.mxu0 0
  %10561 = vmatpush1.bf16.msra.mxu0 0
  %10562 = vmatprep.subr.bf16.mxu0 0
  %10563 = vmatpush1.bf16.msra.mxu0 0
  %10564 = vmatprep.subr.bf16.mxu0 0
  %10565 = vmatpush1.bf16.msra.mxu0 0
  %10566 = vmatprep.subr.bf16.mxu0 0
  %10567 = vmatpush1.bf16.msra.mxu0 %v10550
  %10568 = vmatprep.subr.bf16.mxu0 0
  %10569 = vmatpush2.bf16.msra.mxu0 0
  %10570 = vmatprep.subr.bf16.mxu0 0
  %10571 = vmatpush2.bf16.msra.mxu0 0
  %10572 = vmatprep.subr.bf16.mxu0 0
  %10573 = vmatpush2.bf16.msra.mxu0 0
  %10574 = vmatprep.subr.bf16.mxu0 0
  %10575 = vmatpush2.bf16.msra.mxu0 0
  %10576 = vmatprep.subr.bf16.mxu0 0
  %10577 = vmatpush2.bf16.msra.mxu0 0
  %10578 = vmatprep.subr.bf16.mxu0 0
  %10579 = vmatpush2.bf16.msra.mxu0 0
  %10580 = vmatprep.subr.bf16.mxu0 0
  %10581 = vmatpush2.bf16.msra.mxu0 0
  %10582 = vmatprep.subr.bf16.mxu0 0
  %10583 = vmatpush2.bf16.msra.mxu0 0
  %10584 = vmatprep.mubr.bf16.mxu0 0
  %10585 = vmatmul.mubr.bf16.gmra.mxu0 %v275
  %v10586 = vpop.f32.mrf.mxu0
  %v10587 = vadd.f32 %v10547, %v10586
  %v10588 = vpop.f32.mrf.mxu0
  %v10589 = vpop.f32.mrf.mxu0
  %v10590 = vadd.f32 %v10547, %v10589
  %v10591 = vpop.f32.mrf.mxu0
  %10592 = vmatprep.mubr.bf16.mxu0 0
  %10593 = vmatmul.mubr.bf16.gmra.mxu0 %v278
  %v10594 = vpop.f32.mrf.mxu0
  %v10595 = vadd.f32 %v10547, %v10594
  %v10596 = vpop.f32.mrf.mxu0
  %v10597 = vpop.f32.mrf.mxu0
  %v10598 = vadd.f32 %v10547, %v10597
  %v10599 = vpop.f32.mrf.mxu0
  %10600 = vmatprep.mubr.bf16.mxu0 0
  %10601 = vmatmul.mubr.bf16.gmra.mxu0 %v281
  %v10602 = vpop.f32.mrf.mxu0
  %v10603 = vadd.f32 %v10547, %v10602
  %v10604 = vpop.f32.mrf.mxu0
  %v10605 = vpop.f32.mrf.mxu0
  %v10606 = vadd.f32 %v10547, %v10605
  %v10607 = vpop.f32.mrf.mxu0
  %10608 = vmatprep.mubr.bf16.mxu0 0
  %10609 = vmatmul.mubr.bf16.gmra.mxu0 %v284
  %v10610 = vpop.f32.mrf.mxu0
  %v10611 = vadd.f32 %v10547, %v10610
  %v10612 = vpop.f32.mrf.mxu0
  %v10613 = vpop.f32.mrf.mxu0
  %v10614 = vadd.f32 %v10547, %v10613
  %v10615 = vpop.f32.mrf.mxu0
  %10616 = vmatprep.mubr.bf16.mxu0 0
  %10617 = vmatmul.mubr.bf16.gmra.mxu0 %v287
  %v10618 = vpop.f32.mrf.mxu0
  %v10619 = vadd.f32 %v10547, %v10618
  %v10620 = vpop.f32.mrf.mxu0
  %v10621 = vpop.f32.mrf.mxu0
  %v10622 = vadd.f32 %v10547, %v10621
  %v10623 = vpop.f32.mrf.mxu0
  %10624 = vmatprep.mubr.bf16.mxu0 0
  %10625 = vmatmul.mubr.bf16.gmra.mxu0 %v290
  %v10626 = vpop.f32.mrf.mxu0
  %v10627 = vadd.f32 %v10547, %v10626
  %v10628 = vpop.f32.mrf.mxu0
  %v10629 = vpop.f32.mrf.mxu0
  %v10630 = vadd.f32 %v10547, %v10629
  %v10631 = vpop.f32.mrf.mxu0
  %10632 = vmatprep.mubr.bf16.mxu0 0
  %10633 = vmatmul.mubr.bf16.gmra.mxu0 %v293
  %v10634 = vpop.f32.mrf.mxu0
  %v10635 = vadd.f32 %v10547, %v10634
  %v10636 = vpop.f32.mrf.mxu0
  %v10637 = vpop.f32.mrf.mxu0
  %v10638 = vadd.f32 %v10547, %v10637
  %v10639 = vpop.f32.mrf.mxu0
  %10640 = vmatprep.mubr.bf16.mxu0 0
  %10641 = vmatmul.mubr.bf16.gmra.mxu0 %v296
  %v10642 = vpop.f32.mrf.mxu0
  %v10643 = vadd.f32 %v10547, %v10642
  %v10644 = vpop.f32.mrf.mxu0
  %v10645 = vpop.f32.mrf.mxu0
  %v10646 = vadd.f32 %v10547, %v10645
  %v10647 = vpop.f32.mrf.mxu0
  %10648 = vmatprep.mubr.bf16.mxu0 0
  %10649 = vmatmul.mubr.bf16.gmra.mxu0 %v299
  %v10650 = vpop.f32.mrf.mxu0
  %v10651 = vadd.f32 %v10547, %v10650
  %v10652 = vpop.f32.mrf.mxu0
  %v10653 = vpop.f32.mrf.mxu0
  %v10654 = vadd.f32 %v10547, %v10653
  %v10655 = vpop.f32.mrf.mxu0
  %10656 = vmatprep.mubr.bf16.mxu0 0
  %10657 = vmatmul.mubr.bf16.gmra.mxu0 %v302
  %v10658 = vpop.f32.mrf.mxu0
  %v10659 = vadd.f32 %v10547, %v10658
  %v10660 = vpop.f32.mrf.mxu0
  %v10661 = vpop.f32.mrf.mxu0
  %v10662 = vadd.f32 %v10547, %v10661
  %v10663 = vpop.f32.mrf.mxu0
  %10664 = vmatprep.mubr.bf16.mxu0 0
  %10665 = vmatmul.mubr.bf16.gmra.mxu0 %v305
  %v10666 = vpop.f32.mrf.mxu0
  %v10667 = vadd.f32 %v10547, %v10666
  %v10668 = vpop.f32.mrf.mxu0
  %v10669 = vpop.f32.mrf.mxu0
  %v10670 = vadd.f32 %v10547, %v10669
  %v10671 = vpop.f32.mrf.mxu0
  %10672 = vmatprep.mubr.bf16.mxu0 0
  %10673 = vmatmul.mubr.bf16.gmra.mxu0 %v308
  %v10674 = vpop.f32.mrf.mxu0
  %v10675 = vadd.f32 %v10547, %v10674
  %v10676 = vpop.f32.mrf.mxu0
  %v10677 = vpop.f32.mrf.mxu0
  %v10678 = vadd.f32 %v10547, %v10677
  %v10679 = vpop.f32.mrf.mxu0
  %10680 = vmatprep.mubr.bf16.mxu0 0
  %10681 = vmatmul.mubr.bf16.gmra.mxu0 %v311
  %v10682 = vpop.f32.mrf.mxu0
  %v10683 = vadd.f32 %v10547, %v10682
  %v10684 = vpop.f32.mrf.mxu0
  %v10685 = vpop.f32.mrf.mxu0
  %v10686 = vadd.f32 %v10547, %v10685
  %v10687 = vpop.f32.mrf.mxu0
  %10688 = vmatprep.mubr.bf16.mxu0 0
  %10689 = vmatmul.mubr.bf16.gmra.mxu0 %v314
  %v10690 = vpop.f32.mrf.mxu0
  %v10691 = vadd.f32 %v10547, %v10690
  %v10692 = vpop.f32.mrf.mxu0
  %v10693 = vpop.f32.mrf.mxu0
  %v10694 = vadd.f32 %v10547, %v10693
  %v10695 = vpop.f32.mrf.mxu0
  %10696 = vmatprep.mubr.bf16.mxu0 0
  %10697 = vmatmul.mubr.bf16.gmra.mxu0 %v317
  %v10698 = vpop.f32.mrf.mxu0
  %v10699 = vadd.f32 %v10547, %v10698
  %v10700 = vpop.f32.mrf.mxu0
  %v10701 = vpop.f32.mrf.mxu0
  %v10702 = vadd.f32 %v10547, %v10701
  %v10703 = vpop.f32.mrf.mxu0
  %10704 = vmatprep.mubr.bf16.mxu0 0
  %10705 = vmatmul.mubr.bf16.gmra.mxu0 %v320
  %v10706 = vpop.f32.mrf.mxu0
  %v10707 = vadd.f32 %v10547, %v10706
  %v10708 = vpop.f32.mrf.mxu0
  %v10709 = vpop.f32.mrf.mxu0
  %v10710 = vadd.f32 %v10547, %v10709
  %v10711 = vpop.f32.mrf.mxu0
  %10712 = vmatprep.mubr.bf16.mxu0 0
  %10713 = vmatmul.mubr.bf16.gmra.mxu0 %v323
  %v10714 = vpop.f32.mrf.mxu0
  %v10715 = vadd.f32 %v10547, %v10714
  %v10716 = vpop.f32.mrf.mxu0
  %v10717 = vpop.f32.mrf.mxu0
  %v10718 = vadd.f32 %v10547, %v10717
  %v10719 = vpop.f32.mrf.mxu0
  %10720 = vmatprep.mubr.bf16.mxu0 0
  %10721 = vmatmul.mubr.bf16.gmra.mxu0 %v326
  %v10722 = vpop.f32.mrf.mxu0
  %v10723 = vadd.f32 %v10547, %v10722
  %v10724 = vpop.f32.mrf.mxu0
  %v10725 = vpop.f32.mrf.mxu0
  %v10726 = vadd.f32 %v10547, %v10725
  %v10727 = vpop.f32.mrf.mxu0
  %10728 = vmatprep.mubr.bf16.mxu0 0
  %10729 = vmatmul.mubr.bf16.gmra.mxu0 %v329
  %v10730 = vpop.f32.mrf.mxu0
  %v10731 = vadd.f32 %v10547, %v10730
  %v10732 = vpop.f32.mrf.mxu0
  %v10733 = vpop.f32.mrf.mxu0
  %v10734 = vadd.f32 %v10547, %v10733
  %v10735 = vpop.f32.mrf.mxu0
  %10736 = vmatprep.mubr.bf16.mxu0 0
  %10737 = vmatmul.mubr.bf16.gmra.mxu0 %v332
  %v10738 = vpop.f32.mrf.mxu0
  %v10739 = vadd.f32 %v10547, %v10738
  %v10740 = vpop.f32.mrf.mxu0
  %v10741 = vpop.f32.mrf.mxu0
  %v10742 = vadd.f32 %v10547, %v10741
  %v10743 = vpop.f32.mrf.mxu0
  %10744 = vmatprep.mubr.bf16.mxu0 0
  %10745 = vmatmul.mubr.bf16.gmra.mxu0 %v335
  %v10746 = vpop.f32.mrf.mxu0
  %v10747 = vadd.f32 %v10547, %v10746
  %v10748 = vpop.f32.mrf.mxu0
  %v10749 = vpop.f32.mrf.mxu0
  %v10750 = vadd.f32 %v10547, %v10749
  %v10751 = vpop.f32.mrf.mxu0
  %10752 = vmatprep.mubr.bf16.mxu0 0
  %10753 = vmatmul.mubr.bf16.gmra.mxu0 %v338
  %v10754 = vpop.f32.mrf.mxu0
  %v10755 = vadd.f32 %v10547, %v10754
  %v10756 = vpop.f32.mrf.mxu0
  %v10757 = vpop.f32.mrf.mxu0
  %v10758 = vadd.f32 %v10547, %v10757
  %v10759 = vpop.f32.mrf.mxu0
  %10760 = vmatprep.mubr.bf16.mxu0 0
  %10761 = vmatmul.mubr.bf16.gmra.mxu0 %v341
  %v10762 = vpop.f32.mrf.mxu0
  %v10763 = vadd.f32 %v10547, %v10762
  %v10764 = vpop.f32.mrf.mxu0
  %v10765 = vpop.f32.mrf.mxu0
  %v10766 = vadd.f32 %v10547, %v10765
  %v10767 = vpop.f32.mrf.mxu0
  %10768 = vmatprep.mubr.bf16.mxu0 0
  %10769 = vmatmul.mubr.bf16.gmra.mxu0 %v344
  %v10770 = vpop.f32.mrf.mxu0
  %v10771 = vadd.f32 %v10547, %v10770
  %v10772 = vpop.f32.mrf.mxu0
  %v10773 = vpop.f32.mrf.mxu0
  %v10774 = vadd.f32 %v10547, %v10773
  %v10775 = vpop.f32.mrf.mxu0
  %10776 = vmatprep.mubr.bf16.mxu0 0
  %10777 = vmatmul.mubr.bf16.gmra.mxu0 %v347
  %v10778 = vpop.f32.mrf.mxu0
  %v10779 = vadd.f32 %v10547, %v10778
  %v10780 = vpop.f32.mrf.mxu0
  %v10781 = vpop.f32.mrf.mxu0
  %v10782 = vadd.f32 %v10547, %v10781
  %v10783 = vpop.f32.mrf.mxu0
  %10784 = vmatprep.mubr.bf16.mxu0 0
  %10785 = vmatmul.mubr.bf16.gmra.mxu0 %v350
  %v10786 = vpop.f32.mrf.mxu0
  %v10787 = vadd.f32 %v10547, %v10786
  %v10788 = vpop.f32.mrf.mxu0
  %v10789 = vpop.f32.mrf.mxu0
  %v10790 = vadd.f32 %v10547, %v10789
  %v10791 = vpop.f32.mrf.mxu0
  %10792 = vmatprep.mubr.bf16.mxu0 0
  %10793 = vmatmul.mubr.bf16.gmra.mxu0 %v353
  %v10794 = vpop.f32.mrf.mxu0
  %v10795 = vadd.f32 %v10547, %v10794
  %v10796 = vpop.f32.mrf.mxu0
  %v10797 = vpop.f32.mrf.mxu0
  %v10798 = vadd.f32 %v10547, %v10797
  %v10799 = vpop.f32.mrf.mxu0
  %10800 = vmatprep.mubr.bf16.mxu0 0
  %10801 = vmatmul.mubr.bf16.gmra.mxu0 %v356
  %v10802 = vpop.f32.mrf.mxu0
  %v10803 = vadd.f32 %v10547, %v10802
  %v10804 = vpop.f32.mrf.mxu0
  %v10805 = vpop.f32.mrf.mxu0
  %v10806 = vadd.f32 %v10547, %v10805
  %v10807 = vpop.f32.mrf.mxu0
  %10808 = vmatprep.mubr.bf16.mxu0 0
  %10809 = vmatmul.mubr.bf16.gmra.mxu0 %v359
  %v10810 = vpop.f32.mrf.mxu0
  %v10811 = vadd.f32 %v10547, %v10810
  %v10812 = vpop.f32.mrf.mxu0
  %v10813 = vpop.f32.mrf.mxu0
  %v10814 = vadd.f32 %v10547, %v10813
  %v10815 = vpop.f32.mrf.mxu0
  %10816 = vmatprep.mubr.bf16.mxu0 0
  %10817 = vmatmul.mubr.bf16.gmra.mxu0 %v362
  %v10818 = vpop.f32.mrf.mxu0
  %v10819 = vadd.f32 %v10547, %v10818
  %v10820 = vpop.f32.mrf.mxu0
  %v10821 = vpop.f32.mrf.mxu0
  %v10822 = vadd.f32 %v10547, %v10821
  %v10823 = vpop.f32.mrf.mxu0
  %10824 = vmatprep.mubr.bf16.mxu0 0
  %10825 = vmatmul.mubr.bf16.gmra.mxu0 %v365
  %v10826 = vpop.f32.mrf.mxu0
  %v10827 = vadd.f32 %v10547, %v10826
  %v10828 = vpop.f32.mrf.mxu0
  %v10829 = vpop.f32.mrf.mxu0
  %v10830 = vadd.f32 %v10547, %v10829
  %v10831 = vpop.f32.mrf.mxu0
  %10832 = vmatprep.mubr.bf16.mxu0 0
  %10833 = vmatmul.mubr.bf16.gmra.mxu0 %v368
  %v10834 = vpop.f32.mrf.mxu0
  %v10835 = vadd.f32 %v10547, %v10834
  %v10836 = vpop.f32.mrf.mxu0
  %v10837 = vpop.f32.mrf.mxu0
  %v10838 = vadd.f32 %v10547, %v10837
  %v10839 = vpop.f32.mrf.mxu0
  %10840 = vdwg.mxu0
  %v10841 = vadd.f32 %v10477, %v10587
  %v10842 = vadd.f32 %v10478, %v10590
  %v10843 = vadd.f32 %v10479, %v10595
  %v10844 = vadd.f32 %v10480, %v10598
  %v10845 = vadd.f32 %v10481, %v10603
  %v10846 = vadd.f32 %v10482, %v10606
  %v10847 = vadd.f32 %v10483, %v10611
  %v10848 = vadd.f32 %v10484, %v10614
  %v10849 = vadd.f32 %v10485, %v10619
  %v10850 = vadd.f32 %v10486, %v10622
  %v10851 = vadd.f32 %v10487, %v10627
  %v10852 = vadd.f32 %v10488, %v10630
  %v10853 = vadd.f32 %v10489, %v10635
  %v10854 = vadd.f32 %v10490, %v10638
  %v10855 = vadd.f32 %v10491, %v10643
  %v10856 = vadd.f32 %v10492, %v10646
  %v10857 = vadd.f32 %v10493, %v10651
  %v10858 = vadd.f32 %v10494, %v10654
  %v10859 = vadd.f32 %v10495, %v10659
  %v10860 = vadd.f32 %v10496, %v10662
  %v10861 = vadd.f32 %v10497, %v10667
  %v10862 = vadd.f32 %v10498, %v10670
  %v10863 = vadd.f32 %v10499, %v10675
  %v10864 = vadd.f32 %v10500, %v10678
  %v10865 = vadd.f32 %v10501, %v10683
  %v10866 = vadd.f32 %v10502, %v10686
  %v10867 = vadd.f32 %v10503, %v10691
  %v10868 = vadd.f32 %v10504, %v10694
  %v10869 = vadd.f32 %v10505, %v10699
  %v10870 = vadd.f32 %v10506, %v10702
  %v10871 = vadd.f32 %v10507, %v10707
  %v10872 = vadd.f32 %v10508, %v10710
  %v10873 = vadd.f32 %v10509, %v10715
  %v10874 = vadd.f32 %v10510, %v10718
  %v10875 = vadd.f32 %v10511, %v10723
  %v10876 = vadd.f32 %v10512, %v10726
  %v10877 = vadd.f32 %v10513, %v10731
  %v10878 = vadd.f32 %v10514, %v10734
  %v10879 = vadd.f32 %v10515, %v10739
  %v10880 = vadd.f32 %v10516, %v10742
  %v10881 = vadd.f32 %v10517, %v10747
  %v10882 = vadd.f32 %v10518, %v10750
  %v10883 = vadd.f32 %v10519, %v10755
  %v10884 = vadd.f32 %v10520, %v10758
  %v10885 = vadd.f32 %v10521, %v10763
  %v10886 = vadd.f32 %v10522, %v10766
  %v10887 = vadd.f32 %v10523, %v10771
  %v10888 = vadd.f32 %v10524, %v10774
  %v10889 = vadd.f32 %v10525, %v10779
  %v10890 = vadd.f32 %v10526, %v10782
  %v10891 = vadd.f32 %v10527, %v10787
  %v10892 = vadd.f32 %v10528, %v10790
  %v10893 = vadd.f32 %v10529, %v10795
  %v10894 = vadd.f32 %v10530, %v10798
  %v10895 = vadd.f32 %v10531, %v10803
  %v10896 = vadd.f32 %v10532, %v10806
  %v10897 = vadd.f32 %v10533, %v10811
  %v10898 = vadd.f32 %v10534, %v10814
  %v10899 = vadd.f32 %v10535, %v10819
  %v10900 = vadd.f32 %v10536, %v10822
  %v10901 = vadd.f32 %v10537, %v10827
  %v10902 = vadd.f32 %v10538, %v10830
  %v10903 = vadd.f32 %v10539, %v10835
  %v10904 = vadd.f32 %v10540, %v10838
  %v10905 = vld [vmem:[%s12] sm:$0x1]
  %v10906 = vld [vmem:[%s13] sm:$0x1]
  %v10907 = vadd.f32 %v10841, %v10842
  %v10908 = vadd.f32 %v10907, %v10843
  %v10909 = vadd.f32 %v10908, %v10844
  %v10910 = vadd.f32 %v10909, %v10845
  %v10911 = vadd.f32 %v10910, %v10846
  %v10912 = vadd.f32 %v10911, %v10847
  %v10913 = vadd.f32 %v10912, %v10848
  %v10914 = vadd.f32 %v10913, %v10849
  %v10915 = vadd.f32 %v10914, %v10850
  %v10916 = vadd.f32 %v10915, %v10851
  %v10917 = vadd.f32 %v10916, %v10852
  %v10918 = vadd.f32 %v10917, %v10853
  %v10919 = vadd.f32 %v10918, %v10854
  %v10920 = vadd.f32 %v10919, %v10855
  %v10921 = vadd.f32 %v10920, %v10856
  %v10922 = vadd.f32 %v10921, %v10857
  %v10923 = vadd.f32 %v10922, %v10858
  %v10924 = vadd.f32 %v10923, %v10859
  %v10925 = vadd.f32 %v10924, %v10860
  %v10926 = vadd.f32 %v10925, %v10861
  %v10927 = vadd.f32 %v10926, %v10862
  %v10928 = vadd.f32 %v10927, %v10863
  %v10929 = vadd.f32 %v10928, %v10864
  %v10930 = vadd.f32 %v10929, %v10865
  %v10931 = vadd.f32 %v10930, %v10866
  %v10932 = vadd.f32 %v10931, %v10867
  %v10933 = vadd.f32 %v10932, %v10868
  %v10934 = vadd.f32 %v10933, %v10869
  %v10935 = vadd.f32 %v10934, %v10870
  %v10936 = vadd.f32 %v10935, %v10871
  %v10937 = vadd.f32 %v10936, %v10872
  %v10938 = vadd.f32 %v10937, %v10873
  %v10939 = vadd.f32 %v10938, %v10874
  %v10940 = vadd.f32 %v10939, %v10875
  %v10941 = vadd.f32 %v10940, %v10876
  %v10942 = vadd.f32 %v10941, %v10877
  %v10943 = vadd.f32 %v10942, %v10878
  %v10944 = vadd.f32 %v10943, %v10879
  %v10945 = vadd.f32 %v10944, %v10880
  %v10946 = vadd.f32 %v10945, %v10881
  %v10947 = vadd.f32 %v10946, %v10882
  %v10948 = vadd.f32 %v10947, %v10883
  %v10949 = vadd.f32 %v10948, %v10884
  %v10950 = vadd.f32 %v10949, %v10885
  %v10951 = vadd.f32 %v10950, %v10886
  %v10952 = vadd.f32 %v10951, %v10887
  %v10953 = vadd.f32 %v10952, %v10888
  %v10954 = vadd.f32 %v10953, %v10889
  %v10955 = vadd.f32 %v10954, %v10890
  %v10956 = vadd.f32 %v10955, %v10891
  %v10957 = vadd.f32 %v10956, %v10892
  %v10958 = vadd.f32 %v10957, %v10893
  %v10959 = vadd.f32 %v10958, %v10894
  %v10960 = vadd.f32 %v10959, %v10895
  %v10961 = vadd.f32 %v10960, %v10896
  %v10962 = vadd.f32 %v10961, %v10897
  %v10963 = vadd.f32 %v10962, %v10898
  %v10964 = vadd.f32 %v10963, %v10899
  %v10965 = vadd.f32 %v10964, %v10900
  %v10966 = vadd.f32 %v10965, %v10901
  %v10967 = vadd.f32 %v10966, %v10902
  %v10968 = vadd.f32 %v10967, %v10903
  %v10969 = vadd.f32 %v10968, %v10904
  %v10970 = vrot.slane %v10969, 4
  %v10971 = vadd.f32 %v10969, %v10970
  %v10972 = vrot.slane %v10971, 2
  %v10973 = vadd.f32 %v10971, %v10972
  %v10974 = vrot.slane %v10973, 1
  %v10975 = vadd.f32 %v10973, %v10974
  %v10976 = vmul.f32 %v10841, %v10841
  %v10977 = vmul.f32 %v10842, %v10842
  %v10978 = vmul.f32 %v10843, %v10843
  %v10979 = vmul.f32 %v10844, %v10844
  %v10980 = vmul.f32 %v10845, %v10845
  %v10981 = vmul.f32 %v10846, %v10846
  %v10982 = vmul.f32 %v10847, %v10847
  %v10983 = vmul.f32 %v10848, %v10848
  %v10984 = vmul.f32 %v10849, %v10849
  %v10985 = vmul.f32 %v10850, %v10850
  %v10986 = vmul.f32 %v10851, %v10851
  %v10987 = vmul.f32 %v10852, %v10852
  %v10988 = vmul.f32 %v10853, %v10853
  %v10989 = vmul.f32 %v10854, %v10854
  %v10990 = vmul.f32 %v10855, %v10855
  %v10991 = vmul.f32 %v10856, %v10856
  %v10992 = vmul.f32 %v10857, %v10857
  %v10993 = vmul.f32 %v10858, %v10858
  %v10994 = vmul.f32 %v10859, %v10859
  %v10995 = vmul.f32 %v10860, %v10860
  %v10996 = vmul.f32 %v10861, %v10861
  %v10997 = vmul.f32 %v10862, %v10862
  %v10998 = vmul.f32 %v10863, %v10863
  %v10999 = vmul.f32 %v10864, %v10864
  %v11000 = vmul.f32 %v10865, %v10865
  %v11001 = vmul.f32 %v10866, %v10866
  %v11002 = vmul.f32 %v10867, %v10867
  %v11003 = vmul.f32 %v10868, %v10868
  %v11004 = vmul.f32 %v10869, %v10869
  %v11005 = vmul.f32 %v10870, %v10870
  %v11006 = vmul.f32 %v10871, %v10871
  %v11007 = vmul.f32 %v10872, %v10872
  %v11008 = vmul.f32 %v10873, %v10873
  %v11009 = vmul.f32 %v10874, %v10874
  %v11010 = vmul.f32 %v10875, %v10875
  %v11011 = vmul.f32 %v10876, %v10876
  %v11012 = vmul.f32 %v10877, %v10877
  %v11013 = vmul.f32 %v10878, %v10878
  %v11014 = vmul.f32 %v10879, %v10879
  %v11015 = vmul.f32 %v10880, %v10880
  %v11016 = vmul.f32 %v10881, %v10881
  %v11017 = vmul.f32 %v10882, %v10882
  %v11018 = vmul.f32 %v10883, %v10883
  %v11019 = vmul.f32 %v10884, %v10884
  %v11020 = vmul.f32 %v10885, %v10885
  %v11021 = vmul.f32 %v10886, %v10886
  %v11022 = vmul.f32 %v10887, %v10887
  %v11023 = vmul.f32 %v10888, %v10888
  %v11024 = vmul.f32 %v10889, %v10889
  %v11025 = vmul.f32 %v10890, %v10890
  %v11026 = vmul.f32 %v10891, %v10891
  %v11027 = vmul.f32 %v10892, %v10892
  %v11028 = vmul.f32 %v10893, %v10893
  %v11029 = vmul.f32 %v10894, %v10894
  %v11030 = vmul.f32 %v10895, %v10895
  %v11031 = vmul.f32 %v10896, %v10896
  %v11032 = vmul.f32 %v10897, %v10897
  %v11033 = vmul.f32 %v10898, %v10898
  %v11034 = vmul.f32 %v10899, %v10899
  %v11035 = vmul.f32 %v10900, %v10900
  %v11036 = vmul.f32 %v10901, %v10901
  %v11037 = vmul.f32 %v10902, %v10902
  %v11038 = vmul.f32 %v10903, %v10903
  %v11039 = vmul.f32 %v10904, %v10904
  %v11040 = vadd.f32 %v10976, %v10977
  %v11041 = vadd.f32 %v11040, %v10978
  %v11042 = vadd.f32 %v11041, %v10979
  %v11043 = vadd.f32 %v11042, %v10980
  %v11044 = vadd.f32 %v11043, %v10981
  %v11045 = vadd.f32 %v11044, %v10982
  %v11046 = vadd.f32 %v11045, %v10983
  %v11047 = vadd.f32 %v11046, %v10984
  %v11048 = vadd.f32 %v11047, %v10985
  %v11049 = vadd.f32 %v11048, %v10986
  %v11050 = vadd.f32 %v11049, %v10987
  %v11051 = vadd.f32 %v11050, %v10988
  %v11052 = vadd.f32 %v11051, %v10989
  %v11053 = vadd.f32 %v11052, %v10990
  %v11054 = vadd.f32 %v11053, %v10991
  %v11055 = vadd.f32 %v11054, %v10992
  %v11056 = vadd.f32 %v11055, %v10993
  %v11057 = vadd.f32 %v11056, %v10994
  %v11058 = vadd.f32 %v11057, %v10995
  %v11059 = vadd.f32 %v11058, %v10996
  %v11060 = vadd.f32 %v11059, %v10997
  %v11061 = vadd.f32 %v11060, %v10998
  %v11062 = vadd.f32 %v11061, %v10999
  %v11063 = vadd.f32 %v11062, %v11000
  %v11064 = vadd.f32 %v11063, %v11001
  %v11065 = vadd.f32 %v11064, %v11002
  %v11066 = vadd.f32 %v11065, %v11003
  %v11067 = vadd.f32 %v11066, %v11004
  %v11068 = vadd.f32 %v11067, %v11005
  %v11069 = vadd.f32 %v11068, %v11006
  %v11070 = vadd.f32 %v11069, %v11007
  %v11071 = vadd.f32 %v11070, %v11008
  %v11072 = vadd.f32 %v11071, %v11009
  %v11073 = vadd.f32 %v11072, %v11010
  %v11074 = vadd.f32 %v11073, %v11011
  %v11075 = vadd.f32 %v11074, %v11012
  %v11076 = vadd.f32 %v11075, %v11013
  %v11077 = vadd.f32 %v11076, %v11014
  %v11078 = vadd.f32 %v11077, %v11015
  %v11079 = vadd.f32 %v11078, %v11016
  %v11080 = vadd.f32 %v11079, %v11017
  %v11081 = vadd.f32 %v11080, %v11018
  %v11082 = vadd.f32 %v11081, %v11019
  %v11083 = vadd.f32 %v11082, %v11020
  %v11084 = vadd.f32 %v11083, %v11021
  %v11085 = vadd.f32 %v11084, %v11022
  %v11086 = vadd.f32 %v11085, %v11023
  %v11087 = vadd.f32 %v11086, %v11024
  %v11088 = vadd.f32 %v11087, %v11025
  %v11089 = vadd.f32 %v11088, %v11026
  %v11090 = vadd.f32 %v11089, %v11027
  %v11091 = vadd.f32 %v11090, %v11028
  %v11092 = vadd.f32 %v11091, %v11029
  %v11093 = vadd.f32 %v11092, %v11030
  %v11094 = vadd.f32 %v11093, %v11031
  %v11095 = vadd.f32 %v11094, %v11032
  %v11096 = vadd.f32 %v11095, %v11033
  %v11097 = vadd.f32 %v11096, %v11034
  %v11098 = vadd.f32 %v11097, %v11035
  %v11099 = vadd.f32 %v11098, %v11036
  %v11100 = vadd.f32 %v11099, %v11037
  %v11101 = vadd.f32 %v11100, %v11038
  %v11102 = vadd.f32 %v11101, %v11039
  %v11103 = vrot.slane %v11102, 4
  %v11104 = vadd.f32 %v11102, %v11103
  %v11105 = vrot.slane %v11104, 2
  %v11106 = vadd.f32 %v11104, %v11105
  %v11107 = vrot.slane %v11106, 1
  %v11108 = vadd.f32 %v11106, %v11107
  %v11109 = vmul.f32 %v10975, 0.001953125
  %v11110 = vmul.f32 %v11108, 0.001953125
  %v11111 = vmul.f32 %v11109, %v11109
  %v11112 = vsub.f32 %v11110, %v11111
  %v11113 = vmax.f32 %v11112, 0.0
  %v11114 = vadd.f32 %v11113, 1e-05
  %v11115 = vrsqrt.pop %v11114
  %v11116 = vmul.f32 %v11115, %v10905
  %v11117 = vlaneseq
  %v11118 = vshrl.u32 %v11117, 7
  %v11119 = vsub.s32 0, %v11118
  %v11120 = vrot.slane %v11116, %v11119
  %v11121 = vmul.f32 %v10841, %v11120
  %v11122 = vmul.f32 %v10842, %v11120
  %v11123 = vmul.f32 %v10843, %v11120
  %v11124 = vmul.f32 %v10844, %v11120
  %v11125 = vmul.f32 %v10845, %v11120
  %v11126 = vmul.f32 %v10846, %v11120
  %v11127 = vmul.f32 %v10847, %v11120
  %v11128 = vmul.f32 %v10848, %v11120
  %v11129 = vmul.f32 %v10849, %v11120
  %v11130 = vmul.f32 %v10850, %v11120
  %v11131 = vmul.f32 %v10851, %v11120
  %v11132 = vmul.f32 %v10852, %v11120
  %v11133 = vmul.f32 %v10853, %v11120
  %v11134 = vmul.f32 %v10854, %v11120
  %v11135 = vmul.f32 %v10855, %v11120
  %v11136 = vmul.f32 %v10856, %v11120
  %v11137 = vmul.f32 %v10857, %v11120
  %v11138 = vmul.f32 %v10858, %v11120
  %v11139 = vmul.f32 %v10859, %v11120
  %v11140 = vmul.f32 %v10860, %v11120
  %v11141 = vmul.f32 %v10861, %v11120
  %v11142 = vmul.f32 %v10862, %v11120
  %v11143 = vmul.f32 %v10863, %v11120
  %v11144 = vmul.f32 %v10864, %v11120
  %v11145 = vmul.f32 %v10865, %v11120
  %v11146 = vmul.f32 %v10866, %v11120
  %v11147 = vmul.f32 %v10867, %v11120
  %v11148 = vmul.f32 %v10868, %v11120
  %v11149 = vmul.f32 %v10869, %v11120
  %v11150 = vmul.f32 %v10870, %v11120
  %v11151 = vmul.f32 %v10871, %v11120
  %v11152 = vmul.f32 %v10872, %v11120
  %v11153 = vmul.f32 %v10873, %v11120
  %v11154 = vmul.f32 %v10874, %v11120
  %v11155 = vmul.f32 %v10875, %v11120
  %v11156 = vmul.f32 %v10876, %v11120
  %v11157 = vmul.f32 %v10877, %v11120
  %v11158 = vmul.f32 %v10878, %v11120
  %v11159 = vmul.f32 %v10879, %v11120
  %v11160 = vmul.f32 %v10880, %v11120
  %v11161 = vmul.f32 %v10881, %v11120
  %v11162 = vmul.f32 %v10882, %v11120
  %v11163 = vmul.f32 %v10883, %v11120
  %v11164 = vmul.f32 %v10884, %v11120
  %v11165 = vmul.f32 %v10885, %v11120
  %v11166 = vmul.f32 %v10886, %v11120
  %v11167 = vmul.f32 %v10887, %v11120
  %v11168 = vmul.f32 %v10888, %v11120
  %v11169 = vmul.f32 %v10889, %v11120
  %v11170 = vmul.f32 %v10890, %v11120
  %v11171 = vmul.f32 %v10891, %v11120
  %v11172 = vmul.f32 %v10892, %v11120
  %v11173 = vmul.f32 %v10893, %v11120
  %v11174 = vmul.f32 %v10894, %v11120
  %v11175 = vmul.f32 %v10895, %v11120
  %v11176 = vmul.f32 %v10896, %v11120
  %v11177 = vmul.f32 %v10897, %v11120
  %v11178 = vmul.f32 %v10898, %v11120
  %v11179 = vmul.f32 %v10899, %v11120
  %v11180 = vmul.f32 %v10900, %v11120
  %v11181 = vmul.f32 %v10901, %v11120
  %v11182 = vmul.f32 %v10902, %v11120
  %v11183 = vmul.f32 %v10903, %v11120
  %v11184 = vmul.f32 %v10904, %v11120
  %v11185 = vmul.f32 %v11109, %v11116
  %v11186 = vsub.f32 %v10906, %v11185
  %v11188 = vlaneseq
  %v11189 = vshrl.u32 %v11188, 7
  %v11190 = vsub.s32 0, %v11189
  %v11191 = vrot.slane %v11186, %v11190
  %v11193 = vadd.f32 %v11121, %v11191
  %v11194 = vadd.f32 %v11122, %v11191
  %v11195 = vadd.f32 %v11123, %v11191
  %v11196 = vadd.f32 %v11124, %v11191
  %v11197 = vadd.f32 %v11125, %v11191
  %v11198 = vadd.f32 %v11126, %v11191
  %v11199 = vadd.f32 %v11127, %v11191
  %v11200 = vadd.f32 %v11128, %v11191
  %v11201 = vadd.f32 %v11129, %v11191
  %v11202 = vadd.f32 %v11130, %v11191
  %v11203 = vadd.f32 %v11131, %v11191
  %v11204 = vadd.f32 %v11132, %v11191
  %v11205 = vadd.f32 %v11133, %v11191
  %v11206 = vadd.f32 %v11134, %v11191
  %v11207 = vadd.f32 %v11135, %v11191
  %v11208 = vadd.f32 %v11136, %v11191
  %v11209 = vadd.f32 %v11137, %v11191
  %v11210 = vadd.f32 %v11138, %v11191
  %v11211 = vadd.f32 %v11139, %v11191
  %v11212 = vadd.f32 %v11140, %v11191
  %v11213 = vadd.f32 %v11141, %v11191
  %v11214 = vadd.f32 %v11142, %v11191
  %v11215 = vadd.f32 %v11143, %v11191
  %v11216 = vadd.f32 %v11144, %v11191
  %v11217 = vadd.f32 %v11145, %v11191
  %v11218 = vadd.f32 %v11146, %v11191
  %v11219 = vadd.f32 %v11147, %v11191
  %v11220 = vadd.f32 %v11148, %v11191
  %v11221 = vadd.f32 %v11149, %v11191
  %v11222 = vadd.f32 %v11150, %v11191
  %v11223 = vadd.f32 %v11151, %v11191
  %v11224 = vadd.f32 %v11152, %v11191
  %v11225 = vadd.f32 %v11153, %v11191
  %v11226 = vadd.f32 %v11154, %v11191
  %v11227 = vadd.f32 %v11155, %v11191
  %v11228 = vadd.f32 %v11156, %v11191
  %v11229 = vadd.f32 %v11157, %v11191
  %v11230 = vadd.f32 %v11158, %v11191
  %v11231 = vadd.f32 %v11159, %v11191
  %v11232 = vadd.f32 %v11160, %v11191
  %v11233 = vadd.f32 %v11161, %v11191
  %v11234 = vadd.f32 %v11162, %v11191
  %v11235 = vadd.f32 %v11163, %v11191
  %v11236 = vadd.f32 %v11164, %v11191
  %v11237 = vadd.f32 %v11165, %v11191
  %v11238 = vadd.f32 %v11166, %v11191
  %v11239 = vadd.f32 %v11167, %v11191
  %v11240 = vadd.f32 %v11168, %v11191
  %v11241 = vadd.f32 %v11169, %v11191
  %v11242 = vadd.f32 %v11170, %v11191
  %v11243 = vadd.f32 %v11171, %v11191
  %v11244 = vadd.f32 %v11172, %v11191
  %v11245 = vadd.f32 %v11173, %v11191
  %v11246 = vadd.f32 %v11174, %v11191
  %v11247 = vadd.f32 %v11175, %v11191
  %v11248 = vadd.f32 %v11176, %v11191
  %v11249 = vadd.f32 %v11177, %v11191
  %v11250 = vadd.f32 %v11178, %v11191
  %v11251 = vadd.f32 %v11179, %v11191
  %v11252 = vadd.f32 %v11180, %v11191
  %v11253 = vadd.f32 %v11181, %v11191
  %v11254 = vadd.f32 %v11182, %v11191
  %v11255 = vadd.f32 %v11183, %v11191
  %v11256 = vadd.f32 %v11184, %v11191
  %v11257 = vmax.f32 %v11193, 0.0
  %v11258 = vmax.f32 %v11194, 0.0
  %v11259 = vmax.f32 %v11195, 0.0
  %v11260 = vmax.f32 %v11196, 0.0
  %v11261 = vmax.f32 %v11197, 0.0
  %v11262 = vmax.f32 %v11198, 0.0
  %v11263 = vmax.f32 %v11199, 0.0
  %v11264 = vmax.f32 %v11200, 0.0
  %v11265 = vmax.f32 %v11201, 0.0
  %v11266 = vmax.f32 %v11202, 0.0
  %v11267 = vmax.f32 %v11203, 0.0
  %v11268 = vmax.f32 %v11204, 0.0
  %v11269 = vmax.f32 %v11205, 0.0
  %v11270 = vmax.f32 %v11206, 0.0
  %v11271 = vmax.f32 %v11207, 0.0
  %v11272 = vmax.f32 %v11208, 0.0
  %v11273 = vmax.f32 %v11209, 0.0
  %v11274 = vmax.f32 %v11210, 0.0
  %v11275 = vmax.f32 %v11211, 0.0
  %v11276 = vmax.f32 %v11212, 0.0
  %v11277 = vmax.f32 %v11213, 0.0
  %v11278 = vmax.f32 %v11214, 0.0
  %v11279 = vmax.f32 %v11215, 0.0
  %v11280 = vmax.f32 %v11216, 0.0
  %v11281 = vmax.f32 %v11217, 0.0
  %v11282 = vmax.f32 %v11218, 0.0
  %v11283 = vmax.f32 %v11219, 0.0
  %v11284 = vmax.f32 %v11220, 0.0
  %v11285 = vmax.f32 %v11221, 0.0
  %v11286 = vmax.f32 %v11222, 0.0
  %v11287 = vmax.f32 %v11223, 0.0
  %v11288 = vmax.f32 %v11224, 0.0
  %v11289 = vmax.f32 %v11225, 0.0
  %v11290 = vmax.f32 %v11226, 0.0
  %v11291 = vmax.f32 %v11227, 0.0
  %v11292 = vmax.f32 %v11228, 0.0
  %v11293 = vmax.f32 %v11229, 0.0
  %v11294 = vmax.f32 %v11230, 0.0
  %v11295 = vmax.f32 %v11231, 0.0
  %v11296 = vmax.f32 %v11232, 0.0
  %v11297 = vmax.f32 %v11233, 0.0
  %v11298 = vmax.f32 %v11234, 0.0
  %v11299 = vmax.f32 %v11235, 0.0
  %v11300 = vmax.f32 %v11236, 0.0
  %v11301 = vmax.f32 %v11237, 0.0
  %v11302 = vmax.f32 %v11238, 0.0
  %v11303 = vmax.f32 %v11239, 0.0
  %v11304 = vmax.f32 %v11240, 0.0
  %v11305 = vmax.f32 %v11241, 0.0
  %v11306 = vmax.f32 %v11242, 0.0
  %v11307 = vmax.f32 %v11243, 0.0
  %v11308 = vmax.f32 %v11244, 0.0
  %v11309 = vmax.f32 %v11245, 0.0
  %v11310 = vmax.f32 %v11246, 0.0
  %v11311 = vmax.f32 %v11247, 0.0
  %v11312 = vmax.f32 %v11248, 0.0
  %v11313 = vmax.f32 %v11249, 0.0
  %v11314 = vmax.f32 %v11250, 0.0
  %v11315 = vmax.f32 %v11251, 0.0
  %v11316 = vmax.f32 %v11252, 0.0
  %v11317 = vmax.f32 %v11253, 0.0
  %v11318 = vmax.f32 %v11254, 0.0
  %v11319 = vmax.f32 %v11255, 0.0
  %v11320 = vmax.f32 %v11256, 0.0
  %v11321 = vpack.c.bf16 %v11258, %v11257
  %v11322 = vpack.c.bf16 %v11260, %v11259
  %v11323 = vpack.c.bf16 %v11262, %v11261
  %v11324 = vpack.c.bf16 %v11264, %v11263
  %v11325 = vpack.c.bf16 %v11266, %v11265
  %v11326 = vpack.c.bf16 %v11268, %v11267
  %v11327 = vpack.c.bf16 %v11270, %v11269
  %v11328 = vpack.c.bf16 %v11272, %v11271
  %v11329 = vpack.c.bf16 %v11274, %v11273
  %v11330 = vpack.c.bf16 %v11276, %v11275
  %v11331 = vpack.c.bf16 %v11278, %v11277
  %v11332 = vpack.c.bf16 %v11280, %v11279
  %v11333 = vpack.c.bf16 %v11282, %v11281
  %v11334 = vpack.c.bf16 %v11284, %v11283
  %v11335 = vpack.c.bf16 %v11286, %v11285
  %v11336 = vpack.c.bf16 %v11288, %v11287
  %v11337 = vpack.c.bf16 %v11290, %v11289
  %v11338 = vpack.c.bf16 %v11292, %v11291
  %v11339 = vpack.c.bf16 %v11294, %v11293
  %v11340 = vpack.c.bf16 %v11296, %v11295
  %v11341 = vpack.c.bf16 %v11298, %v11297
  %v11342 = vpack.c.bf16 %v11300, %v11299
  %v11343 = vpack.c.bf16 %v11302, %v11301
  %v11344 = vpack.c.bf16 %v11304, %v11303
  %v11345 = vpack.c.bf16 %v11306, %v11305
  %v11346 = vpack.c.bf16 %v11308, %v11307
  %v11347 = vpack.c.bf16 %v11310, %v11309
  %v11348 = vpack.c.bf16 %v11312, %v11311
  %v11349 = vpack.c.bf16 %v11314, %v11313
  %v11350 = vpack.c.bf16 %v11316, %v11315
  %v11351 = vpack.c.bf16 %v11318, %v11317
  %v11352 = vpack.c.bf16 %v11320, %v11319
  %v11385 = vunpack.c.l.b16 %v11321
  %v11386 = vunpack.c.h.b16 %v11321
  %v11387 = vunpack.c.l.b16 %v11322
  %v11388 = vunpack.c.h.b16 %v11322
  %v11389 = vunpack.c.l.b16 %v11323
  %v11390 = vunpack.c.h.b16 %v11323
  %v11391 = vunpack.c.l.b16 %v11324
  %v11392 = vunpack.c.h.b16 %v11324
  %v11393 = vunpack.c.l.b16 %v11325
  %v11394 = vunpack.c.h.b16 %v11325
  %v11395 = vunpack.c.l.b16 %v11326
  %v11396 = vunpack.c.h.b16 %v11326
  %v11397 = vunpack.c.l.b16 %v11327
  %v11398 = vunpack.c.h.b16 %v11327
  %v11399 = vunpack.c.l.b16 %v11328
  %v11400 = vunpack.c.h.b16 %v11328
  %v11401 = vunpack.c.l.b16 %v11329
  %v11402 = vunpack.c.h.b16 %v11329
  %v11403 = vunpack.c.l.b16 %v11330
  %v11404 = vunpack.c.h.b16 %v11330
  %v11405 = vunpack.c.l.b16 %v11331
  %v11406 = vunpack.c.h.b16 %v11331
  %v11407 = vunpack.c.l.b16 %v11332
  %v11408 = vunpack.c.h.b16 %v11332
  %v11409 = vunpack.c.l.b16 %v11333
  %v11410 = vunpack.c.h.b16 %v11333
  %v11411 = vunpack.c.l.b16 %v11334
  %v11412 = vunpack.c.h.b16 %v11334
  %v11413 = vunpack.c.l.b16 %v11335
  %v11414 = vunpack.c.h.b16 %v11335
  %v11415 = vunpack.c.l.b16 %v11336
  %v11416 = vunpack.c.h.b16 %v11336
  %v11417 = vunpack.c.l.b16 %v11337
  %v11418 = vunpack.c.h.b16 %v11337
  %v11419 = vunpack.c.l.b16 %v11338
  %v11420 = vunpack.c.h.b16 %v11338
  %v11421 = vunpack.c.l.b16 %v11339
  %v11422 = vunpack.c.h.b16 %v11339
  %v11423 = vunpack.c.l.b16 %v11340
  %v11424 = vunpack.c.h.b16 %v11340
  %v11425 = vunpack.c.l.b16 %v11341
  %v11426 = vunpack.c.h.b16 %v11341
  %v11427 = vunpack.c.l.b16 %v11342
  %v11428 = vunpack.c.h.b16 %v11342
  %v11429 = vunpack.c.l.b16 %v11343
  %v11430 = vunpack.c.h.b16 %v11343
  %v11431 = vunpack.c.l.b16 %v11344
  %v11432 = vunpack.c.h.b16 %v11344
  %v11433 = vunpack.c.l.b16 %v11345
  %v11434 = vunpack.c.h.b16 %v11345
  %v11435 = vunpack.c.l.b16 %v11346
  %v11436 = vunpack.c.h.b16 %v11346
  %v11437 = vunpack.c.l.b16 %v11347
  %v11438 = vunpack.c.h.b16 %v11347
  %v11439 = vunpack.c.l.b16 %v11348
  %v11440 = vunpack.c.h.b16 %v11348
  %v11441 = vunpack.c.l.b16 %v11349
  %v11442 = vunpack.c.h.b16 %v11349
  %v11443 = vunpack.c.l.b16 %v11350
  %v11444 = vunpack.c.h.b16 %v11350
  %v11445 = vunpack.c.l.b16 %v11351
  %v11446 = vunpack.c.h.b16 %v11351
  %v11447 = vunpack.c.l.b16 %v11352
  %v11448 = vunpack.c.h.b16 %v11352
  %v11449 = vpack.c.b16 %v11385, %v11385
  %v11450 = vpack.c.b16 %v11386, %v11386
  %v11451 = vpack.c.b16 %v11387, %v11387
  %v11452 = vpack.c.b16 %v11388, %v11388
  %v11453 = vpack.c.b16 %v11389, %v11389
  %v11454 = vpack.c.b16 %v11390, %v11390
  %v11455 = vpack.c.b16 %v11391, %v11391
  %v11456 = vpack.c.b16 %v11392, %v11392
  %v11457 = vpack.c.b16 %v11393, %v11393
  %v11458 = vpack.c.b16 %v11394, %v11394
  %v11459 = vpack.c.b16 %v11395, %v11395
  %v11460 = vpack.c.b16 %v11396, %v11396
  %v11461 = vpack.c.b16 %v11397, %v11397
  %v11462 = vpack.c.b16 %v11398, %v11398
  %v11463 = vpack.c.b16 %v11399, %v11399
  %v11464 = vpack.c.b16 %v11400, %v11400
  %v11465 = vpack.c.b16 %v11401, %v11401
  %v11466 = vpack.c.b16 %v11402, %v11402
  %v11467 = vpack.c.b16 %v11403, %v11403
  %v11468 = vpack.c.b16 %v11404, %v11404
  %v11469 = vpack.c.b16 %v11405, %v11405
  %v11470 = vpack.c.b16 %v11406, %v11406
  %v11471 = vpack.c.b16 %v11407, %v11407
  %v11472 = vpack.c.b16 %v11408, %v11408
  %v11473 = vpack.c.b16 %v11409, %v11409
  %v11474 = vpack.c.b16 %v11410, %v11410
  %v11475 = vpack.c.b16 %v11411, %v11411
  %v11476 = vpack.c.b16 %v11412, %v11412
  %v11477 = vpack.c.b16 %v11413, %v11413
  %v11478 = vpack.c.b16 %v11414, %v11414
  %v11479 = vpack.c.b16 %v11415, %v11415
  %v11480 = vpack.c.b16 %v11416, %v11416
  %v11481 = vpack.c.b16 %v11417, %v11417
  %v11482 = vpack.c.b16 %v11418, %v11418
  %v11483 = vpack.c.b16 %v11419, %v11419
  %v11484 = vpack.c.b16 %v11420, %v11420
  %v11485 = vpack.c.b16 %v11421, %v11421
  %v11486 = vpack.c.b16 %v11422, %v11422
  %v11487 = vpack.c.b16 %v11423, %v11423
  %v11488 = vpack.c.b16 %v11424, %v11424
  %v11489 = vpack.c.b16 %v11425, %v11425
  %v11490 = vpack.c.b16 %v11426, %v11426
  %v11491 = vpack.c.b16 %v11427, %v11427
  %v11492 = vpack.c.b16 %v11428, %v11428
  %v11493 = vpack.c.b16 %v11429, %v11429
  %v11494 = vpack.c.b16 %v11430, %v11430
  %v11495 = vpack.c.b16 %v11431, %v11431
  %v11496 = vpack.c.b16 %v11432, %v11432
  %v11497 = vpack.c.b16 %v11433, %v11433
  %v11498 = vpack.c.b16 %v11434, %v11434
  %v11499 = vpack.c.b16 %v11435, %v11435
  %v11500 = vpack.c.b16 %v11436, %v11436
  %v11501 = vpack.c.b16 %v11437, %v11437
  %v11502 = vpack.c.b16 %v11438, %v11438
  %v11503 = vpack.c.b16 %v11439, %v11439
  %v11504 = vpack.c.b16 %v11440, %v11440
  %v11505 = vpack.c.b16 %v11441, %v11441
  %v11506 = vpack.c.b16 %v11442, %v11442
  %v11507 = vpack.c.b16 %v11443, %v11443
  %v11508 = vpack.c.b16 %v11444, %v11444
  %v11509 = vpack.c.b16 %v11445, %v11445
  %v11510 = vpack.c.b16 %v11446, %v11446
  %v11511 = vpack.c.b16 %v11447, %v11447
  %v11512 = vpack.c.b16 %v11448, %v11448
  %11577 = vst [vmem:[%s14] sm:$0xf] %v11449
  %11578 = vst [vmem:[%s14 + $0x4] sm:$0xf] %v11450
  %11579 = vst [vmem:[%s14 + $0x8] sm:$0xf] %v11451
  %11580 = vst [vmem:[%s14 + $0xc] sm:$0xf] %v11452
  %11581 = vst [vmem:[%s14 + $0x10] sm:$0xf] %v11453
  %11582 = vst [vmem:[%s14 + $0x14] sm:$0xf] %v11454
  %11583 = vst [vmem:[%s14 + $0x18] sm:$0xf] %v11455
  %11584 = vst [vmem:[%s14 + $0x1c] sm:$0xf] %v11456
  %11585 = vst [vmem:[%s14 + $0x20] sm:$0xf] %v11457
  %11586 = vst [vmem:[%s14 + $0x24] sm:$0xf] %v11458
  %11587 = vst [vmem:[%s14 + $0x28] sm:$0xf] %v11459
  %11588 = vst [vmem:[%s14 + $0x2c] sm:$0xf] %v11460
  %11589 = vst [vmem:[%s14 + $0x30] sm:$0xf] %v11461
  %11590 = vst [vmem:[%s14 + $0x34] sm:$0xf] %v11462
  %11591 = vst [vmem:[%s14 + $0x38] sm:$0xf] %v11463
  %11592 = vst [vmem:[%s14 + $0x3c] sm:$0xf] %v11464
  %11593 = vst [vmem:[%s14 + $0x40] sm:$0xf] %v11465
  %11594 = vst [vmem:[%s14 + $0x44] sm:$0xf] %v11466
  %11595 = vst [vmem:[%s14 + $0x48] sm:$0xf] %v11467
  %11596 = vst [vmem:[%s14 + $0x4c] sm:$0xf] %v11468
  %11597 = vst [vmem:[%s14 + $0x50] sm:$0xf] %v11469
  %11598 = vst [vmem:[%s14 + $0x54] sm:$0xf] %v11470
  %11599 = vst [vmem:[%s14 + $0x58] sm:$0xf] %v11471
  %11600 = vst [vmem:[%s14 + $0x5c] sm:$0xf] %v11472
  %11601 = vst [vmem:[%s14 + $0x60] sm:$0xf] %v11473
  %11602 = vst [vmem:[%s14 + $0x64] sm:$0xf] %v11474
  %11603 = vst [vmem:[%s14 + $0x68] sm:$0xf] %v11475
  %11604 = vst [vmem:[%s14 + $0x6c] sm:$0xf] %v11476
  %11605 = vst [vmem:[%s14 + $0x70] sm:$0xf] %v11477
  %11606 = vst [vmem:[%s14 + $0x74] sm:$0xf] %v11478
  %11607 = vst [vmem:[%s14 + $0x78] sm:$0xf] %v11479
  %11608 = vst [vmem:[%s14 + $0x7c] sm:$0xf] %v11480
  %11609 = vst [vmem:[%s14 + $0x80] sm:$0xf] %v11481
  %11610 = vst [vmem:[%s14 + $0x84] sm:$0xf] %v11482
  %11611 = vst [vmem:[%s14 + $0x88] sm:$0xf] %v11483
  %11612 = vst [vmem:[%s14 + $0x8c] sm:$0xf] %v11484
  %11613 = vst [vmem:[%s14 + $0x90] sm:$0xf] %v11485
  %11614 = vst [vmem:[%s14 + $0x94] sm:$0xf] %v11486
  %11615 = vst [vmem:[%s14 + $0x98] sm:$0xf] %v11487
  %11616 = vst [vmem:[%s14 + $0x9c] sm:$0xf] %v11488
  %11617 = vst [vmem:[%s14 + $0xa0] sm:$0xf] %v11489
  %11618 = vst [vmem:[%s14 + $0xa4] sm:$0xf] %v11490
  %11619 = vst [vmem:[%s14 + $0xa8] sm:$0xf] %v11491
  %11620 = vst [vmem:[%s14 + $0xac] sm:$0xf] %v11492
  %11621 = vst [vmem:[%s14 + $0xb0] sm:$0xf] %v11493
  %11622 = vst [vmem:[%s14 + $0xb4] sm:$0xf] %v11494
  %11623 = vst [vmem:[%s14 + $0xb8] sm:$0xf] %v11495
  %11624 = vst [vmem:[%s14 + $0xbc] sm:$0xf] %v11496
  %11625 = vst [vmem:[%s14 + $0xc0] sm:$0xf] %v11497
  %11626 = vst [vmem:[%s14 + $0xc4] sm:$0xf] %v11498
  %11627 = vst [vmem:[%s14 + $0xc8] sm:$0xf] %v11499
  %11628 = vst [vmem:[%s14 + $0xcc] sm:$0xf] %v11500
  %11629 = vst [vmem:[%s14 + $0xd0] sm:$0xf] %v11501
  %11630 = vst [vmem:[%s14 + $0xd4] sm:$0xf] %v11502
  %11631 = vst [vmem:[%s14 + $0xd8] sm:$0xf] %v11503
  %11632 = vst [vmem:[%s14 + $0xdc] sm:$0xf] %v11504
  %11633 = vst [vmem:[%s14 + $0xe0] sm:$0xf] %v11505
  %11634 = vst [vmem:[%s14 + $0xe4] sm:$0xf] %v11506
  %11635 = vst [vmem:[%s14 + $0xe8] sm:$0xf] %v11507
  %11636 = vst [vmem:[%s14 + $0xec] sm:$0xf] %v11508
  %11637 = vst [vmem:[%s14 + $0xf0] sm:$0xf] %v11509
  %11638 = vst [vmem:[%s14 + $0xf4] sm:$0xf] %v11510
  %11639 = vst [vmem:[%s14 + $0xf8] sm:$0xf] %v11511
  %11640 = vst [vmem:[%s14 + $0xfc] sm:$0xf] %v11512
  // Predicated region
  $region58: #{dilated_resnext_block.1} parent=0 // pred_check
    _
  $region59: #{dilated_resnext_block.1} parent=0 // pred_check_branch
    %11642 = sbr.rel (0) target = $region61
  $region60: #{dilated_resnext_block.1} parent=0 // pred_region
    _
  $region61: #{dilated_resnext_block.1} parent=0 // pred_fallthru
    _
  // Predicated region
  $region62: #{dilated_resnext_block.1} parent=0 // pred_check
    _
  $region63: #{dilated_resnext_block.1} parent=0 // pred_check_branch
    %11644 = sbr.rel (0) target = $region65
  $region64: #{dilated_resnext_block.1} parent=0 // pred_region
    _
  $region65: #{dilated_resnext_block.1} parent=0 // pred_fallthru
    _

</llo_original>
